<compile_context>
chip_gen: v6e
topology: v6e:2x2x1
jax: 0.10.0
libtpu: 0.0.40
codegen_flags: <defaults>
</compile_context>

<pallas_src>
import math
import functools

import numpy as np
import jax
import jax.numpy as jnp
from jax import lax
from jax.experimental import pallas as pl
from jax.experimental.pallas import tpu as pltpu


# ----------------------------- fused kernel ----------------------------------

def _fused_kernel(xk_ref, w1_ref, b1_ref, selw_ref, w2_ref, b2_ref, o_ref, *,
                  H, W, neg_slope):
    """One batch element: conv1(3x3,s1,p1)+bias+LeakyReLU+conv2(4x4,s2,p1)+bias.

    xk_ref  : (1, (H+2)*W, 3*Cin) bf16  kw-shift-concatenated, halo-padded, pre-flattened
    w1_ref  : (3, 3*Cin, C1)      bf16  conv1 weights, one (K, C1) matrix per kh
    b1_ref  : (1, C1)             f32
    selw_ref: (4*W2, W)           bf16  constant 0/1 per-row column-selection matrix
    w2_ref  : (16*C1, C2)         bf16  conv2 weights, (kh, kw, cin)-major rows
    b2_ref  : (1, C2)             f32
    o_ref   : (1, H2*W2, C2)      f32
    """
    HW = H * W
    H2, W2 = H // 2, W // 2
    M2 = H2 * W2
    C1 = w1_ref.shape[-1]

    # ---- conv1: 3 accumulating matmuls over kh; LHS is an aligned row-slice view ----
    acc1 = None
    for kh in range(3):
        lhs = xk_ref[0, pl.ds(kh * W, HW), :]            # (H*W, 3*Cin) bf16, offset kh*W
        d = jnp.dot(lhs, w1_ref[kh], preferred_element_type=jnp.float32)
        acc1 = d if acc1 is None else acc1 + d
    y = acc1 + b1_ref[...]                               # (H*W, C1) f32
    y = jnp.maximum(y, neg_slope * y)                    # LeakyReLU(0.2)
    y3 = y.reshape(H, W, C1).astype(jnp.bfloat16)        # (H, W, C1) bf16

    # ---- conv2 tap gather along W: tiny per-row 0/1 selection, batched over H -------
    # g[h, kw*W2 + j, :] = y[h, 2j+kw-1, :]   (exact zeros where 2j+kw-1 is padding)
    selw = jnp.broadcast_to(selw_ref[...][None], (H, 4 * W2, W))     # (H, 32, W) bf16
    g = jnp.einsum('huw,hwc->huc', selw, y3,
                   preferred_element_type=jnp.float32)   # (H, 4*W2, C1) f32

    # ---- conv2 tap gather along H: zero halo + parity split, leading-axis only ------
    zrow = jnp.zeros((1, 4 * W2, C1), jnp.float32)
    gp = jnp.concatenate([zrow, g, zrow], axis=0)        # (H+2, 4*W2, C1)
    gp2 = gp.reshape(H2 + 1, 2, 4 * W2, C1)              # gp2[q, p] = gp[2q + p]

    # ---- single merged conv2 matmul: LHS (M2, 16*C1) from aligned slices ------------
    blocks = []
    for kh in range(4):
        a, p = kh // 2, kh % 2
        slab = gp2[a:a + H2, p]                          # (H2, 4*W2, C1) leading slices
        for kw in range(4):
            blk = slab[:, kw * W2:(kw + 1) * W2, :]      # (H2, W2, C1), offsets 0/8/16/24
            blocks.append(blk.reshape(M2, C1))           # (M2, C1)
    lhs2 = jnp.concatenate(blocks, axis=-1).astype(jnp.bfloat16)     # (M2, 16*C1)

    out = jnp.dot(lhs2, w2_ref[...], preferred_element_type=jnp.float32) + b2_ref[...]
    o_ref[0] = out.astype(o_ref.dtype)


# ----------------------------- wrapper ---------------------------------------

def _build_selw(W):
    """(4*W2, W) 0/1 matrix: row kw*W2+j selects conv1 column 2j+kw-1 (0 if padding)."""
    W2 = W // 2
    s = np.zeros((4 * W2, W), np.float32)
    for kw in range(4):
        for j in range(W2):
            w = 2 * j + kw - 1
            if 0 <= w < W:
                s[kw * W2 + j, w] = 1.0
    return jnp.asarray(s, jnp.bfloat16)


def analysis_prior_forward(x_nchw, params):
    w1, b1, w2, b2 = params               # w1: (3,3,Cin,C1) HWIO, w2: (4,4,C1,C2) HWIO
    N, Cin, H, W = x_nchw.shape
    C1, C2 = w1.shape[-1], w2.shape[-1]
    H2, W2 = H // 2, W // 2
    K1 = 3 * Cin
    M2 = H2 * W2

    # NCHW -> NHWC bf16, 1-pixel zero halo, kw-shift copies concatenated along channels,
    # pre-flattened so the kernel's conv1 LHS is an aligned row-slice view.
    x = jnp.transpose(x_nchw, (0, 2, 3, 1)).astype(jnp.bfloat16)
    xp = jnp.pad(x, ((0, 0), (1, 1), (1, 1), (0, 0)))                   # (N,H+2,W+2,Cin)
    xk = jnp.concatenate([xp[:, :, kw:kw + W, :] for kw in range(3)],
                         axis=-1).reshape(N, (H + 2) * W, K1)           # (N,(H+2)*W,3Cin)

    w1m = w1.reshape(3, K1, C1).astype(jnp.bfloat16)                    # (3, 3*Cin, C1)
    w2m = w2.reshape(16 * C1, C2).astype(jnp.bfloat16)                  # (16*C1, C2)
    b1m = b1.reshape(1, C1).astype(jnp.float32)
    b2m = b2.reshape(1, C2).astype(jnp.float32)
    selw = _build_selw(W)                                               # (4*W2, W)

    flops = 2 * N * (3 * H * W * K1 * C1 + H * (4 * W2) * W * C1 + M2 * 16 * C1 * C2)
    bytes_accessed = (xk.size * 2 + w1m.size * 2 + w2m.size * 2 + selw.size * 2
                      + (b1m.size + b2m.size) * 4 + N * M2 * C2 * 4)

    out = pl.pallas_call(
        functools.partial(_fused_kernel, H=H, W=W, neg_slope=0.2),
        out_shape=jax.ShapeDtypeStruct((N, M2, C2), jnp.float32),
        grid=(N,),
        in_specs=[
            pl.BlockSpec((1, (H + 2) * W, K1), lambda n: (n, 0, 0)),
            pl.BlockSpec((3, K1, C1), lambda n: (0, 0, 0)),
            pl.BlockSpec((1, C1), lambda n: (0, 0)),
            pl.BlockSpec((4 * W2, W), lambda n: (0, 0)),
            pl.BlockSpec((16 * C1, C2), lambda n: (0, 0)),
            pl.BlockSpec((1, C2), lambda n: (0, 0)),
        ],
        out_specs=pl.BlockSpec((1, M2, C2), lambda n: (n, 0, 0)),
        compiler_params=pltpu.CompilerParams(
            dimension_semantics=("parallel",)),
        cost_estimate=pl.CostEstimate(
            flops=flops, transcendentals=0, bytes_accessed=bytes_accessed),
    )(xk, w1m, b1m, selw, w2m, b2m)

    return jnp.transpose(out.reshape(N, H2, W2, C2), (0, 3, 1, 2))      # NHWC -> NCHW


# ----------------------------- params / reference ----------------------------

def init_params(key):
    k1, k2 = jax.random.split(key)
    # conv1: xavier_normal_ with gain sqrt(2*(320+128)/(320+320))
    gain1 = math.sqrt(2 * (320 + 128) / (320 + 320))
    fan_in1, fan_out1 = 320 * 3 * 3, 128 * 3 * 3
    std1 = gain1 * math.sqrt(2.0 / (fan_in1 + fan_out1))
    w1 = (std1 * jax.random.normal(k1, (3, 3, 320, 128))).astype(jnp.float32)
    b1 = jnp.full((128,), 0.01, jnp.float32)
    # conv2: xavier_normal_ with gain sqrt(2)
    gain2 = math.sqrt(2.0)
    fan_in2, fan_out2 = 128 * 4 * 4, 128 * 4 * 4
    std2 = gain2 * math.sqrt(2.0 / (fan_in2 + fan_out2))
    w2 = (std2 * jax.random.normal(k2, (4, 4, 128, 128))).astype(jnp.float32)
    b2 = jnp.full((128,), 0.01, jnp.float32)
    return w1, b1, w2, b2


def reference_forward(x_nchw, params):
    w1, b1, w2, b2 = params
    dn = ('NHWC', 'HWIO', 'NHWC')
    x = jnp.transpose(x_nchw, (0, 2, 3, 1))
    y = lax.conv_general_dilated(x, w1, (1, 1), ((1, 1), (1, 1)),
                                 dimension_numbers=dn,
                                 precision=lax.Precision.HIGHEST) + b1
    y = jnp.where(y > 0, y, 0.2 * y)
    y = lax.conv_general_dilated(y, w2, (2, 2), ((1, 1), (1, 1)),
                                 dimension_numbers=dn,
                                 precision=lax.Precision.HIGHEST) + b2
    return jnp.transpose(y, (0, 3, 1, 2))


# ----------------------------- main -------------------------------------------

if __name__ == "__main__":
    key = jax.random.PRNGKey(0)
    k_param, k_x = jax.random.split(key)
    params = init_params(k_param)

    # PyTorch-style NCHW input: batch=2, channels=320 (fixed by the module), 16x16 spatial.
    x = jax.random.normal(k_x, (2, 320, 16, 16), jnp.float32)

    fwd = jax.jit(analysis_prior_forward)
    out = jax.block_until_ready(fwd(x, params))

    ref = reference_forward(x, params)
    assert out.shape == (2, 128, 8, 8), out.shape
    max_err = float(jnp.max(jnp.abs(out - ref)))
    # bf16 MXU operands + bf16 intermediate between the convs vs f32 HIGHEST reference.
    assert max_err < 1e-1, f"max abs err {max_err}"

    print("KERNEL_OK")
</pallas_src>

<mosaic_0001>
module attributes {stable_mosaic.version = 11 : i64} {
  func.func @_fused_kernel(%arg0: i32, %arg1: memref<1x288x960xbf16, #tpu.memory_space<vmem>>, %arg2: memref<3x960x128xbf16, #tpu.memory_space<vmem>>, %arg3: memref<1x128xf32, #tpu.memory_space<vmem>>, %arg4: memref<32x16xbf16, #tpu.memory_space<vmem>>, %arg5: memref<2048x128xbf16, #tpu.memory_space<vmem>>, %arg6: memref<1x128xf32, #tpu.memory_space<vmem>>, %arg7: memref<1x64x128xf32, #tpu.memory_space<vmem>>) attributes {dimension_semantics = [#tpu.dimension_semantics<parallel>], iteration_bounds = array<i64: 2>, scalar_prefetch = 0 : i64, scratch_operands = 0 : i64, tpu.core_type = #tpu.core_type<tc>, window_params = [{transform_indices = @transform_0, window_bounds = array<i64: 1, 288, 960>}, {pipeline_mode = #tpu.pipeline_mode<synchronous>, transform_indices = @transform_1, window_bounds = array<i64: 3, 960, 128>}, {pipeline_mode = #tpu.pipeline_mode<synchronous>, transform_indices = @transform_2, window_bounds = array<i64: 1, 128>}, {pipeline_mode = #tpu.pipeline_mode<synchronous>, transform_indices = @transform_3, window_bounds = array<i64: 32, 16>}, {pipeline_mode = #tpu.pipeline_mode<synchronous>, transform_indices = @transform_4, window_bounds = array<i64: 2048, 128>}, {pipeline_mode = #tpu.pipeline_mode<synchronous>, transform_indices = @transform_5, window_bounds = array<i64: 1, 128>}, {transform_indices = @transform_6, window_bounds = array<i64: 1, 64, 128>}]} {
    %c0 = arith.constant 0 : index
    %c0_0 = arith.constant 0 : index
    %c0_1 = arith.constant 0 : index
    %0 = vector.load %arg1[%c0, %c0_0, %c0_1] : memref<1x288x960xbf16, #tpu.memory_space<vmem>>, vector<1x256x960xbf16>
    %1 = vector.shape_cast %0 : vector<1x256x960xbf16> to vector<256x960xbf16>
    %c0_2 = arith.constant 0 : index
    %c0_3 = arith.constant 0 : index
    %c0_4 = arith.constant 0 : index
    %2 = vector.load %arg2[%c0_2, %c0_3, %c0_4] : memref<3x960x128xbf16, #tpu.memory_space<vmem>>, vector<1x960x128xbf16>
    %3 = vector.shape_cast %2 : vector<1x960x128xbf16> to vector<960x128xbf16>
    %cst = arith.constant dense<0.000000e+00> : vector<256x128xf32>
    %4 = tpu.matmul %1, %3, %cst {dimension_numbers = #tpu.dot_dimension_numbers<[1], [0], [0], [1], [0, 0, 1, 1], [], []>} : vector<256x960xbf16>, vector<960x128xbf16>, vector<256x128xf32> -> vector<256x128xf32>
    %c0_5 = arith.constant 0 : index
    %c16 = arith.constant 16 : index
    %c0_6 = arith.constant 0 : index
    %5 = vector.load %arg1[%c0_5, %c16, %c0_6] : memref<1x288x960xbf16, #tpu.memory_space<vmem>>, vector<1x256x960xbf16>
    %6 = vector.shape_cast %5 : vector<1x256x960xbf16> to vector<256x960xbf16>
    %c1 = arith.constant 1 : index
    %c0_7 = arith.constant 0 : index
    %c0_8 = arith.constant 0 : index
    %7 = vector.load %arg2[%c1, %c0_7, %c0_8] : memref<3x960x128xbf16, #tpu.memory_space<vmem>>, vector<1x960x128xbf16>
    %8 = vector.shape_cast %7 : vector<1x960x128xbf16> to vector<960x128xbf16>
    %cst_9 = arith.constant dense<0.000000e+00> : vector<256x128xf32>
    %9 = tpu.matmul %6, %8, %cst_9 {dimension_numbers = #tpu.dot_dimension_numbers<[1], [0], [0], [1], [0, 0, 1, 1], [], []>} : vector<256x960xbf16>, vector<960x128xbf16>, vector<256x128xf32> -> vector<256x128xf32>
    %10 = arith.addf %4, %9 : vector<256x128xf32>
    %c0_10 = arith.constant 0 : index
    %c32 = arith.constant 32 : index
    %c0_11 = arith.constant 0 : index
    %11 = vector.load %arg1[%c0_10, %c32, %c0_11] : memref<1x288x960xbf16, #tpu.memory_space<vmem>>, vector<1x256x960xbf16>
    %12 = vector.shape_cast %11 : vector<1x256x960xbf16> to vector<256x960xbf16>
    %c2 = arith.constant 2 : index
    %c0_12 = arith.constant 0 : index
    %c0_13 = arith.constant 0 : index
    %13 = vector.load %arg2[%c2, %c0_12, %c0_13] : memref<3x960x128xbf16, #tpu.memory_space<vmem>>, vector<1x960x128xbf16>
    %14 = vector.shape_cast %13 : vector<1x960x128xbf16> to vector<960x128xbf16>
    %cst_14 = arith.constant dense<0.000000e+00> : vector<256x128xf32>
    %15 = tpu.matmul %12, %14, %cst_14 {dimension_numbers = #tpu.dot_dimension_numbers<[1], [0], [0], [1], [0, 0, 1, 1], [], []>} : vector<256x960xbf16>, vector<960x128xbf16>, vector<256x128xf32> -> vector<256x128xf32>
    %16 = arith.addf %10, %15 : vector<256x128xf32>
    %c0_15 = arith.constant 0 : index
    %c0_16 = arith.constant 0 : index
    %17 = vector.load %arg3[%c0_15, %c0_16] : memref<1x128xf32, #tpu.memory_space<vmem>>, vector<1x128xf32>
    %18 = vector.broadcast %17 : vector<1x128xf32> to vector<256x128xf32>
    %19 = arith.addf %16, %18 : vector<256x128xf32>
    %cst_17 = arith.constant 2.000000e-01 : f32
    %20 = vector.broadcast %cst_17 : f32 to vector<256x128xf32>
    %21 = arith.mulf %20, %19 : vector<256x128xf32>
    %22 = arith.maximumf %19, %21 : vector<256x128xf32>
    %23 = vector.shape_cast %22 : vector<256x128xf32> to vector<16x16x128xf32>
    %24 = arith.truncf %23 : vector<16x16x128xf32> to vector<16x16x128xbf16>
    %c0_18 = arith.constant 0 : index
    %c0_19 = arith.constant 0 : index
    %25 = vector.load %arg4[%c0_18, %c0_19] : memref<32x16xbf16, #tpu.memory_space<vmem>>, vector<32x16xbf16>
    %26 = vector.shape_cast %25 : vector<32x16xbf16> to vector<1x32x16xbf16>
    %27 = vector.shape_cast %26 : vector<1x32x16xbf16> to vector<1x32x16xbf16>
    %28 = vector.broadcast %27 : vector<1x32x16xbf16> to vector<16x32x16xbf16>
    "tpu.trace_start"() <{level = 10 : i32, message = "huw,hwc->huc"}> : () -> ()
    %cst_20 = arith.constant dense<0.000000e+00> : vector<16x32x128xf32>
    %29 = tpu.matmul %28, %24, %cst_20 {dimension_numbers = #tpu.dot_dimension_numbers<[2], [1], [1], [2], [0, 0, 0, 1, 1, 2], [0], [0]>} : vector<16x32x16xbf16>, vector<16x16x128xbf16>, vector<16x32x128xf32> -> vector<16x32x128xf32>
    %cst_21 = arith.constant 0.000000e+00 : f32
    "tpu.trace_stop"() : () -> ()
    %30 = vector.broadcast %cst_21 : f32 to vector<1x32x128xf32>
    %31 = tpu.concatenate %30, %29, %30 in 0 : vector<1x32x128xf32>, vector<16x32x128xf32>, vector<1x32x128xf32> -> vector<18x32x128xf32>
    %32 = vector.shape_cast %31 : vector<18x32x128xf32> to vector<9x2x32x128xf32>
    %33 = vector.extract_strided_slice %32 {offsets = [0, 0, 0, 0], sizes = [8, 1, 32, 128], strides = [1, 1, 1, 1]} : vector<9x2x32x128xf32> to vector<8x1x32x128xf32>
    %34 = vector.shape_cast %33 : vector<8x1x32x128xf32> to vector<8x32x128xf32>
    %35 = vector.extract_strided_slice %34 {offsets = [0, 0, 0], sizes = [8, 8, 128], strides = [1, 1, 1]} : vector<8x32x128xf32> to vector<8x8x128xf32>
    %36 = vector.shape_cast %35 : vector<8x8x128xf32> to vector<64x128xf32>
    %37 = vector.extract_strided_slice %34 {offsets = [0, 8, 0], sizes = [8, 8, 128], strides = [1, 1, 1]} : vector<8x32x128xf32> to vector<8x8x128xf32>
    %38 = vector.shape_cast %37 : vector<8x8x128xf32> to vector<64x128xf32>
    %39 = vector.extract_strided_slice %34 {offsets = [0, 16, 0], sizes = [8, 8, 128], strides = [1, 1, 1]} : vector<8x32x128xf32> to vector<8x8x128xf32>
    %40 = vector.shape_cast %39 : vector<8x8x128xf32> to vector<64x128xf32>
    %41 = vector.extract_strided_slice %34 {offsets = [0, 24, 0], sizes = [8, 8, 128], strides = [1, 1, 1]} : vector<8x32x128xf32> to vector<8x8x128xf32>
    %42 = vector.shape_cast %41 : vector<8x8x128xf32> to vector<64x128xf32>
    %43 = vector.extract_strided_slice %32 {offsets = [0, 1, 0, 0], sizes = [8, 1, 32, 128], strides = [1, 1, 1, 1]} : vector<9x2x32x128xf32> to vector<8x1x32x128xf32>
    %44 = vector.shape_cast %43 : vector<8x1x32x128xf32> to vector<8x32x128xf32>
    %45 = vector.extract_strided_slice %44 {offsets = [0, 0, 0], sizes = [8, 8, 128], strides = [1, 1, 1]} : vector<8x32x128xf32> to vector<8x8x128xf32>
    %46 = vector.shape_cast %45 : vector<8x8x128xf32> to vector<64x128xf32>
    %47 = vector.extract_strided_slice %44 {offsets = [0, 8, 0], sizes = [8, 8, 128], strides = [1, 1, 1]} : vector<8x32x128xf32> to vector<8x8x128xf32>
    %48 = vector.shape_cast %47 : vector<8x8x128xf32> to vector<64x128xf32>
    %49 = vector.extract_strided_slice %44 {offsets = [0, 16, 0], sizes = [8, 8, 128], strides = [1, 1, 1]} : vector<8x32x128xf32> to vector<8x8x128xf32>
    %50 = vector.shape_cast %49 : vector<8x8x128xf32> to vector<64x128xf32>
    %51 = vector.extract_strided_slice %44 {offsets = [0, 24, 0], sizes = [8, 8, 128], strides = [1, 1, 1]} : vector<8x32x128xf32> to vector<8x8x128xf32>
    %52 = vector.shape_cast %51 : vector<8x8x128xf32> to vector<64x128xf32>
    %53 = vector.extract_strided_slice %32 {offsets = [1, 0, 0, 0], sizes = [8, 1, 32, 128], strides = [1, 1, 1, 1]} : vector<9x2x32x128xf32> to vector<8x1x32x128xf32>
    %54 = vector.shape_cast %53 : vector<8x1x32x128xf32> to vector<8x32x128xf32>
    %55 = vector.extract_strided_slice %54 {offsets = [0, 0, 0], sizes = [8, 8, 128], strides = [1, 1, 1]} : vector<8x32x128xf32> to vector<8x8x128xf32>
    %56 = vector.shape_cast %55 : vector<8x8x128xf32> to vector<64x128xf32>
    %57 = vector.extract_strided_slice %54 {offsets = [0, 8, 0], sizes = [8, 8, 128], strides = [1, 1, 1]} : vector<8x32x128xf32> to vector<8x8x128xf32>
    %58 = vector.shape_cast %57 : vector<8x8x128xf32> to vector<64x128xf32>
    %59 = vector.extract_strided_slice %54 {offsets = [0, 16, 0], sizes = [8, 8, 128], strides = [1, 1, 1]} : vector<8x32x128xf32> to vector<8x8x128xf32>
    %60 = vector.shape_cast %59 : vector<8x8x128xf32> to vector<64x128xf32>
    %61 = vector.extract_strided_slice %54 {offsets = [0, 24, 0], sizes = [8, 8, 128], strides = [1, 1, 1]} : vector<8x32x128xf32> to vector<8x8x128xf32>
    %62 = vector.shape_cast %61 : vector<8x8x128xf32> to vector<64x128xf32>
    %63 = vector.extract_strided_slice %32 {offsets = [1, 1, 0, 0], sizes = [8, 1, 32, 128], strides = [1, 1, 1, 1]} : vector<9x2x32x128xf32> to vector<8x1x32x128xf32>
    %64 = vector.shape_cast %63 : vector<8x1x32x128xf32> to vector<8x32x128xf32>
    %65 = vector.extract_strided_slice %64 {offsets = [0, 0, 0], sizes = [8, 8, 128], strides = [1, 1, 1]} : vector<8x32x128xf32> to vector<8x8x128xf32>
    %66 = vector.shape_cast %65 : vector<8x8x128xf32> to vector<64x128xf32>
    %67 = vector.extract_strided_slice %64 {offsets = [0, 8, 0], sizes = [8, 8, 128], strides = [1, 1, 1]} : vector<8x32x128xf32> to vector<8x8x128xf32>
    %68 = vector.shape_cast %67 : vector<8x8x128xf32> to vector<64x128xf32>
    %69 = vector.extract_strided_slice %64 {offsets = [0, 16, 0], sizes = [8, 8, 128], strides = [1, 1, 1]} : vector<8x32x128xf32> to vector<8x8x128xf32>
    %70 = vector.shape_cast %69 : vector<8x8x128xf32> to vector<64x128xf32>
    %71 = vector.extract_strided_slice %64 {offsets = [0, 24, 0], sizes = [8, 8, 128], strides = [1, 1, 1]} : vector<8x32x128xf32> to vector<8x8x128xf32>
    %72 = vector.shape_cast %71 : vector<8x8x128xf32> to vector<64x128xf32>
    %73 = tpu.concatenate %36, %38, %40, %42, %46, %48, %50, %52, %56, %58, %60, %62, %66, %68, %70, %72 in 1 : vector<64x128xf32>, vector<64x128xf32>, vector<64x128xf32>, vector<64x128xf32>, vector<64x128xf32>, vector<64x128xf32>, vector<64x128xf32>, vector<64x128xf32>, vector<64x128xf32>, vector<64x128xf32>, vector<64x128xf32>, vector<64x128xf32>, vector<64x128xf32>, vector<64x128xf32>, vector<64x128xf32>, vector<64x128xf32> -> vector<64x2048xf32>
    %74 = arith.truncf %73 : vector<64x2048xf32> to vector<64x2048xbf16>
    %c0_22 = arith.constant 0 : index
    %c0_23 = arith.constant 0 : index
    %75 = vector.load %arg5[%c0_22, %c0_23] : memref<2048x128xbf16, #tpu.memory_space<vmem>>, vector<2048x128xbf16>
    %cst_24 = arith.constant dense<0.000000e+00> : vector<64x128xf32>
    %76 = tpu.matmul %74, %75, %cst_24 {dimension_numbers = #tpu.dot_dimension_numbers<[1], [0], [0], [1], [0, 0, 1, 1], [], []>} : vector<64x2048xbf16>, vector<2048x128xbf16>, vector<64x128xf32> -> vector<64x128xf32>
    %c0_25 = arith.constant 0 : index
    %c0_26 = arith.constant 0 : index
    %77 = vector.load %arg6[%c0_25, %c0_26] : memref<1x128xf32, #tpu.memory_space<vmem>>, vector<1x128xf32>
    %78 = vector.broadcast %77 : vector<1x128xf32> to vector<64x128xf32>
    %79 = arith.addf %76, %78 : vector<64x128xf32>
    %c0_27 = arith.constant 0 : index
    %c0_28 = arith.constant 0 : index
    %c0_29 = arith.constant 0 : index
    %80 = vector.load %arg7[%c0_27, %c0_28, %c0_29] : memref<1x64x128xf32, #tpu.memory_space<vmem>>, vector<1x64x128xf32>
    %81 = vector.shape_cast %80 : vector<1x64x128xf32> to vector<64x128xf32>
    %82 = vector.shape_cast %79 : vector<64x128xf32> to vector<1x64x128xf32>
    tpu.vector_store %arg7[%c0_27, %c0_28, %c0_29], %82 {strides = array<i32>} : memref<1x64x128xf32, #tpu.memory_space<vmem>>, vector<1x64x128xf32>,
    return
  }
  func.func @transform_0(%arg0: i32) -> (i32, i32, i32) {
    %c0_i32 = arith.constant 0 : i32
    %c0_i32_0 = arith.constant 0 : i32
    %c0_i32_1 = arith.constant 0 : i32
    return %arg0, %c0_i32, %c0_i32_0 : i32, i32, i32
  }
  func.func @transform_1(%arg0: i32) -> (i32, i32, i32) {
    %c0_i32 = arith.constant 0 : i32
    %c0_i32_0 = arith.constant 0 : i32
    %c0_i32_1 = arith.constant 0 : i32
    %c0_i32_2 = arith.constant 0 : i32
    return %c0_i32, %c0_i32_0, %c0_i32_1 : i32, i32, i32
  }
  func.func @transform_2(%arg0: i32) -> (i32, i32) {
    %c0_i32 = arith.constant 0 : i32
    %c0_i32_0 = arith.constant 0 : i32
    %c0_i32_1 = arith.constant 0 : i32
    return %c0_i32, %c0_i32_0 : i32, i32
  }
  func.func @transform_3(%arg0: i32) -> (i32, i32) {
    %c0_i32 = arith.constant 0 : i32
    %c0_i32_0 = arith.constant 0 : i32
    %c0_i32_1 = arith.constant 0 : i32
    return %c0_i32, %c0_i32_0 : i32, i32
  }
  func.func @transform_4(%arg0: i32) -> (i32, i32) {
    %c0_i32 = arith.constant 0 : i32
    %c0_i32_0 = arith.constant 0 : i32
    %c0_i32_1 = arith.constant 0 : i32
    return %c0_i32, %c0_i32_0 : i32, i32
  }
  func.func @transform_5(%arg0: i32) -> (i32, i32) {
    %c0_i32 = arith.constant 0 : i32
    %c0_i32_0 = arith.constant 0 : i32
    %c0_i32_1 = arith.constant 0 : i32
    return %c0_i32, %c0_i32_0 : i32, i32
  }
  func.func @transform_6(%arg0: i32) -> (i32, i32, i32) {
    %c0_i32 = arith.constant 0 : i32
    %c0_i32_0 = arith.constant 0 : i32
    %c0_i32_1 = arith.constant 0 : i32
    return %arg0, %c0_i32, %c0_i32_0 : i32, i32, i32
  }
}

</mosaic_0001>

<llo_original>
// kernel: analysis_prior_forward.1
$region0: #{analysis_prior_forward.1}
  #allocation0 [shape = 'u32[]', space=smem, size = 0x4, offset = 0x4, fixed_abs, tag = 'smem constant byte address 0x4 - core index']
  #allocation1 [shape = 'u32[144,128]{1,0:T(1,128)}', space=vmem, size = 0x12000, scoped, tag = 'internal scratch']
  %s0 = inlined_call_operand.vmem [shape: bf16[2,288,960], index: 0, kind: input, shape index: {}]
  %s1 = inlined_call_operand.vmem [shape: bf16[3,960,128], index: 1, kind: input, shape index: {}]
  %s2 = inlined_call_operand.vmem [shape: f32[1,128], index: 2, kind: input, shape index: {}]
  %s3 = inlined_call_operand.vmem [shape: bf16[32,16], index: 3, kind: input, shape index: {}]
  %s4 = inlined_call_operand.vmem [shape: bf16[2048,128], index: 4, kind: input, shape index: {}]
  %s5 = inlined_call_operand.vmem [shape: f32[1,128], index: 5, kind: input, shape index: {}]
  %s6 = inlined_call_operand.hbm [shape: f32[2,64,128], index: 6, kind: output, shape index: {}]
  %s7 = sld [smem:[#allocation0]]
  $region57: #{analysis_prior_forward.1} parent=0
    _
  %s9 = ssub.s32 1, %s7
  %s10 = scalar_select 0, %s9, %s7
  $region1: #{analysis_prior_forward.1} parent=0
    #allocation2 [shape = 'u8[65536]{0}', space=vmem, size = 0x10000, scoped, tag = 'output window, operand 0']
    #allocation3 [shape = 's32[2]{0}', space=sflag, size = 0x8, scoped, tag = 'scoped memory for analysis_prior_forward.1']
    %11 = vsyncpa [#allocation3], 0
    %s12 = scalar_lea.sflag [#allocation3], 1
    %13 = vsyncpa %s12, 0
    loop: start=0, step=1, limit=4
    $region2: #{analysis_prior_forward.1} parent=1 // loop_pre_header
      _
    $region3: #{analysis_prior_forward.1} parent=1 // loop_header
      %s15 = sphi 0, %s19
      %p16 = scmp.ge.s32.totalorder %s15, 4
      %s25 = sphi 0, %s27
      %s28 = sphi 0, %s25
      %s29 = sphi 0, %s28
      %s45 = sphi 0, %s29
      %s49 = sphi 0, %s49
      %s51 = sphi 0, %s49
      %s52 = sphi 0, %s51
      %s66 = sphi 0, %s52
      %s70 = sphi 0, %s70
      %s72 = sphi 0, %s70
      %s73 = sphi 0, %s72
      %s87 = sphi 0, %s73
      %s91 = sphi 0, %s91
      %s93 = sphi 0, %s91
      %s94 = sphi 0, %s93
      %s108 = sphi 0, %s94
      %s112 = sphi 0, %s112
      %s114 = sphi 0, %s112
      %s115 = sphi 0, %s114
      %s129 = sphi 0, %s115
      %s133 = sphi 0, %s133
      %s135 = sphi 0, %s133
      %s136 = sphi 0, %s135
      %s150 = sphi 0, %s136
      %s156 = sphi 0, %s158
      %s159 = sphi 0, %s156
      %s160 = sphi 0, %s159
      %s176 = sphi 0, %s160
    $region4: #{analysis_prior_forward.1} parent=1 // loop_header_branch
      %18 = sbr.rel (%p16) target = $region8
    $region5: #{analysis_prior_forward.1} parent=1 // loop_body
      %s20 = ssub.s32 %s15, 1
      %s21 = ssub.s32 %s15, 2
      %s22 = sadd.s32 %s15, 1
      %s23 = ssub.s32 %s15, %s22
      %p24 = scmp.eq.s32.totalorder %s23, 0
      %s26 = sadd.s32 %s25, 1
      %s27 = scalar_select %p24, %s25, %s26
      %p30 = pneg %p24
      %p31 = scmp.eq.s32.totalorder %s15, 1
      %p32 = por %p30, %p31
      %p33 = scmp.ne.s32.totalorder %s25, %s28
      %p34 = scmp.eq.s32.totalorder %s15, 0
      %p35 = por %p33, %p34
      %p36 = scmp.ne.s32.totalorder %s25, %s28
      %p37 = scmp.eq.s32.totalorder %s20, 1
      %p38 = por %p36, %p37
      %p39 = scmp.ne.s32.totalorder %s28, %s29
      %p40 = scmp.eq.s32.totalorder %s20, 0
      %p41 = por %p39, %p40
      %p42 = scmp.ne.s32.totalorder %s28, %s29
      %p43 = scmp.eq.s32.totalorder %s21, 1
      %p44 = por %p42, %p43
      %p46 = scmp.ne.s32.totalorder %s29, %s45
      %p47 = scmp.eq.s32.totalorder %s21, 0
      %p48 = por %p46, %p47
      %s50 = sadd.s32 %s49, 1
      %p53 = scmp.eq.s32.totalorder %s15, 1
      %p54 = scmp.ne.s32.totalorder %s49, %s51
      %p55 = scmp.eq.s32.totalorder %s15, 0
      %p56 = por %p54, %p55
      %p57 = scmp.ne.s32.totalorder %s49, %s51
      %p58 = scmp.eq.s32.totalorder %s20, 1
      %p59 = por %p57, %p58
      %p60 = scmp.ne.s32.totalorder %s51, %s52
      %p61 = scmp.eq.s32.totalorder %s20, 0
      %p62 = por %p60, %p61
      %p63 = scmp.ne.s32.totalorder %s51, %s52
      %p64 = scmp.eq.s32.totalorder %s21, 1
      %p65 = por %p63, %p64
      %p67 = scmp.ne.s32.totalorder %s52, %s66
      %p68 = scmp.eq.s32.totalorder %s21, 0
      %p69 = por %p67, %p68
      %s71 = sadd.s32 %s70, 1
      %p74 = scmp.eq.s32.totalorder %s15, 1
      %p75 = scmp.ne.s32.totalorder %s70, %s72
      %p76 = scmp.eq.s32.totalorder %s15, 0
      %p77 = por %p75, %p76
      %p78 = scmp.ne.s32.totalorder %s70, %s72
      %p79 = scmp.eq.s32.totalorder %s20, 1
      %p80 = por %p78, %p79
      %p81 = scmp.ne.s32.totalorder %s72, %s73
      %p82 = scmp.eq.s32.totalorder %s20, 0
      %p83 = por %p81, %p82
      %p84 = scmp.ne.s32.totalorder %s72, %s73
      %p85 = scmp.eq.s32.totalorder %s21, 1
      %p86 = por %p84, %p85
      %p88 = scmp.ne.s32.totalorder %s73, %s87
      %p89 = scmp.eq.s32.totalorder %s21, 0
      %p90 = por %p88, %p89
      %s92 = sadd.s32 %s91, 1
      %p95 = scmp.eq.s32.totalorder %s15, 1
      %p96 = scmp.ne.s32.totalorder %s91, %s93
      %p97 = scmp.eq.s32.totalorder %s15, 0
      %p98 = por %p96, %p97
      %p99 = scmp.ne.s32.totalorder %s91, %s93
      %p100 = scmp.eq.s32.totalorder %s20, 1
      %p101 = por %p99, %p100
      %p102 = scmp.ne.s32.totalorder %s93, %s94
      %p103 = scmp.eq.s32.totalorder %s20, 0
      %p104 = por %p102, %p103
      %p105 = scmp.ne.s32.totalorder %s93, %s94
      %p106 = scmp.eq.s32.totalorder %s21, 1
      %p107 = por %p105, %p106
      %p109 = scmp.ne.s32.totalorder %s94, %s108
      %p110 = scmp.eq.s32.totalorder %s21, 0
      %p111 = por %p109, %p110
      %s113 = sadd.s32 %s112, 1
      %p116 = scmp.eq.s32.totalorder %s15, 1
      %p117 = scmp.ne.s32.totalorder %s112, %s114
      %p118 = scmp.eq.s32.totalorder %s15, 0
      %p119 = por %p117, %p118
      %p120 = scmp.ne.s32.totalorder %s112, %s114
      %p121 = scmp.eq.s32.totalorder %s20, 1
      %p122 = por %p120, %p121
      %p123 = scmp.ne.s32.totalorder %s114, %s115
      %p124 = scmp.eq.s32.totalorder %s20, 0
      %p125 = por %p123, %p124
      %p126 = scmp.ne.s32.totalorder %s114, %s115
      %p127 = scmp.eq.s32.totalorder %s21, 1
      %p128 = por %p126, %p127
      %p130 = scmp.ne.s32.totalorder %s115, %s129
      %p131 = scmp.eq.s32.totalorder %s21, 0
      %p132 = por %p130, %p131
      %s134 = sadd.s32 %s133, 1
      %p137 = scmp.eq.s32.totalorder %s15, 1
      %p138 = scmp.ne.s32.totalorder %s133, %s135
      %p139 = scmp.eq.s32.totalorder %s15, 0
      %p140 = por %p138, %p139
      %p141 = scmp.ne.s32.totalorder %s133, %s135
      %p142 = scmp.eq.s32.totalorder %s20, 1
      %p143 = por %p141, %p142
      %p144 = scmp.ne.s32.totalorder %s135, %s136
      %p145 = scmp.eq.s32.totalorder %s20, 0
      %p146 = por %p144, %p145
      %p147 = scmp.ne.s32.totalorder %s135, %s136
      %p148 = scmp.eq.s32.totalorder %s21, 1
      %p149 = por %p147, %p148
      %p151 = scmp.ne.s32.totalorder %s136, %s150
      %p152 = scmp.eq.s32.totalorder %s21, 0
      %p153 = por %p151, %p152
      %s154 = ssub.s32 %s15, %s22
      %p155 = scmp.eq.s32.totalorder %s154, 0
      %s157 = sadd.s32 %s156, 1
      %s158 = scalar_select %p155, %s156, %s157
      %p161 = pneg %p155
      %p162 = scmp.eq.s32.totalorder %s15, 1
      %p163 = por %p161, %p162
      %p164 = scmp.ne.s32.totalorder %s156, %s159
      %p165 = scmp.eq.s32.totalorder %s15, 0
      %p166 = por %p164, %p165
      %p167 = scmp.ne.s32.totalorder %s156, %s159
      %p168 = scmp.eq.s32.totalorder %s20, 1
      %p169 = por %p167, %p168
      %p170 = scmp.ne.s32.totalorder %s159, %s160
      %p171 = scmp.eq.s32.totalorder %s20, 0
      %p172 = por %p170, %p171
      %p173 = scmp.ne.s32.totalorder %s159, %s160
      %p174 = scmp.eq.s32.totalorder %s21, 1
      %p175 = por %p173, %p174
      %p177 = scmp.ne.s32.totalorder %s160, %s176
      %p178 = scmp.eq.s32.totalorder %s21, 0
      %p179 = por %p177, %p178
      %p180 = scmp.le.s32.totalorder 1, %s15
      %p181 = scmp.lt.s32.totalorder %s15, 3
      %p182 = pnand %p180, %p181
      %p183 = pneg %p182
      // Predicated region
      $region9: #{analysis_prior_forward.1} parent=5 // pred_check
        _
      $region10: #{analysis_prior_forward.1} parent=5 // pred_check_branch
        %185 = sbr.rel (%p182) target = $region12
      $region11: #{analysis_prior_forward.1} parent=5 // pred_region
        %s186 = ssub.s32 %s15, 1
        // Predicated region
        $region13: #{analysis_prior_forward.1} parent=11 // pred_check
          %p187 = pneg %p62
        $region14: #{analysis_prior_forward.1} parent=11 // pred_check_branch
          %189 = sbr.rel (%p187) target = $region16
        $region15: #{analysis_prior_forward.1} parent=11 // pred_region
          _
        $region16: #{analysis_prior_forward.1} parent=11 // pred_fallthru
          _
        // Predicated region
        $region17: #{analysis_prior_forward.1} parent=11 // pred_check
          %p190 = pneg %p83
        $region18: #{analysis_prior_forward.1} parent=11 // pred_check_branch
          %192 = sbr.rel (%p190) target = $region20
        $region19: #{analysis_prior_forward.1} parent=11 // pred_region
          _
        $region20: #{analysis_prior_forward.1} parent=11 // pred_fallthru
          _
        // Predicated region
        $region21: #{analysis_prior_forward.1} parent=11 // pred_check
          %p193 = pneg %p104
        $region22: #{analysis_prior_forward.1} parent=11 // pred_check_branch
          %195 = sbr.rel (%p193) target = $region24
        $region23: #{analysis_prior_forward.1} parent=11 // pred_region
          _
        $region24: #{analysis_prior_forward.1} parent=11 // pred_fallthru
          _
        // Predicated region
        $region25: #{analysis_prior_forward.1} parent=11 // pred_check
          %p196 = pneg %p125
        $region26: #{analysis_prior_forward.1} parent=11 // pred_check_branch
          %198 = sbr.rel (%p196) target = $region28
        $region27: #{analysis_prior_forward.1} parent=11 // pred_region
          _
        $region28: #{analysis_prior_forward.1} parent=11 // pred_fallthru
          _
        // Predicated region
        $region29: #{analysis_prior_forward.1} parent=11 // pred_check
          %p199 = pneg %p146
        $region30: #{analysis_prior_forward.1} parent=11 // pred_check_branch
          %201 = sbr.rel (%p199) target = $region32
        $region31: #{analysis_prior_forward.1} parent=11 // pred_region
          _
        $region32: #{analysis_prior_forward.1} parent=11 // pred_fallthru
          _
      $region12: #{analysis_prior_forward.1} parent=5 // pred_fallthru
        _
      %p202 = scmp.lt.s32.totalorder %s15, 2
      // Predicated region
      $region33: #{analysis_prior_forward.1} parent=5 // pred_check
        %p203 = pneg %p202
      $region34: #{analysis_prior_forward.1} parent=5 // pred_check_branch
        %205 = sbr.rel (%p203) target = $region36
      $region35: #{analysis_prior_forward.1} parent=5 // pred_region
        // Predicated region
        $region37: #{analysis_prior_forward.1} parent=35 // pred_check
          %p206 = pneg %p35
        $region38: #{analysis_prior_forward.1} parent=35 // pred_check_branch
          %208 = sbr.rel (%p206) target = $region40
        $region39: #{analysis_prior_forward.1} parent=35 // pred_region
          %p209 = scmp.lt.s32.totalorder %s15, 1
          %s210 = scalar_select %p209, %s15, 1
          %s211 = smul.addr %s210, 288
          %s212 = smul.addr %s211, 4
          %s213 = scalar_lea.vmem %s0, %s212
        $region40: #{analysis_prior_forward.1} parent=35 // pred_fallthru
          _
      $region36: #{analysis_prior_forward.1} parent=5 // pred_fallthru
        _
      %p214 = scmp.le.s32.totalorder 1, %s15
      %p215 = scmp.lt.s32.totalorder %s15, 3
      %p216 = pnand %p214, %p215
      %p217 = pneg %p216
      // Predicated region
      $region41: #{analysis_prior_forward.1} parent=5 // pred_check
        _
      $region42: #{analysis_prior_forward.1} parent=5 // pred_check_branch
        %219 = sbr.rel (%p216) target = $region44
      $region43: #{analysis_prior_forward.1} parent=5 // pred_region
        %s220 = ssub.s32 %s15, 1
        %p221 = scmp.lt.s32.totalorder %s20, 1
        %s222 = scalar_select %p221, %s20, 1
        %s223 = smul.addr %s222, 288
        %s224 = smul.addr %s223, 4
        %s225 = scalar_lea.vmem %s0, %s224
        %p226 = pneg %p41
        %p227 = pneg %p38
        %p228 = pneg %p62
        %p229 = pneg %p59
        %p230 = pneg %p83
        %p231 = pneg %p80
        %p232 = pneg %p104
        %p233 = pneg %p101
        %p234 = pneg %p125
        %p235 = pneg %p122
        %p236 = pneg %p146
        %p237 = pneg %p143
        %p238 = pneg %p172
        %p239 = pneg %p169
        %s240 = sand.u32 %s159, 1
        %s241 = scalar_lea.sflag [#allocation3], %s240
        %s242 = sand.u32 %s159, 1
        %s243 = smul.addr %s242, 64
        %s244 = scalar_lea.vmem [#allocation2], %s243
        %p245 = scmp.lt.s32.totalorder %s20, 1
        %s246 = scalar_select %p245, %s20, 1
        %s247 = smul.addr %s246, 288
        %s248 = smul.addr %s247, 4
        %s249 = scalar_lea.vmem %s0, %s248
        %v251 = vld [vmem:[%s249] sm:$0xff]
        %v252 = vld [vmem:[%s249 + $0x8] sm:$0xff]
        %v253 = vld [vmem:[%s249 + $0x10] sm:$0xff]
        %v254 = vld [vmem:[%s249 + $0x18] sm:$0xff]
        %v255 = vld [vmem:[%s249 + $0x20] sm:$0xff]
        %v256 = vld [vmem:[%s249 + $0x28] sm:$0xff]
        %v257 = vld [vmem:[%s249 + $0x30] sm:$0xff]
        %v258 = vld [vmem:[%s249 + $0x38] sm:$0xff]
        %v259 = vld [vmem:[%s249 + $0x40] sm:$0xff]
        %v260 = vld [vmem:[%s249 + $0x48] sm:$0xff]
        %v261 = vld [vmem:[%s249 + $0x50] sm:$0xff]
        %v262 = vld [vmem:[%s249 + $0x58] sm:$0xff]
        %v263 = vld [vmem:[%s249 + $0x60] sm:$0xff]
        %v264 = vld [vmem:[%s249 + $0x68] sm:$0xff]
        %v265 = vld [vmem:[%s249 + $0x70] sm:$0xff]
        %v266 = vld [vmem:[%s249 + $0x78] sm:$0xff]
        %v267 = vld [vmem:[%s249 + $0x80] sm:$0xff]
        %v268 = vld [vmem:[%s249 + $0x88] sm:$0xff]
        %v269 = vld [vmem:[%s249 + $0x90] sm:$0xff]
        %v270 = vld [vmem:[%s249 + $0x98] sm:$0xff]
        %v271 = vld [vmem:[%s249 + $0xa0] sm:$0xff]
        %v272 = vld [vmem:[%s249 + $0xa8] sm:$0xff]
        %v273 = vld [vmem:[%s249 + $0xb0] sm:$0xff]
        %v274 = vld [vmem:[%s249 + $0xb8] sm:$0xff]
        %v275 = vld [vmem:[%s249 + $0xc0] sm:$0xff]
        %v276 = vld [vmem:[%s249 + $0xc8] sm:$0xff]
        %v277 = vld [vmem:[%s249 + $0xd0] sm:$0xff]
        %v278 = vld [vmem:[%s249 + $0xd8] sm:$0xff]
        %v279 = vld [vmem:[%s249 + $0xe0] sm:$0xff]
        %v280 = vld [vmem:[%s249 + $0xe8] sm:$0xff]
        %v281 = vld [vmem:[%s249 + $0xf0] sm:$0xff]
        %v282 = vld [vmem:[%s249 + $0xf8] sm:$0xff]
        %v283 = vld [vmem:[%s249 + $0x100] sm:$0xff]
        %v284 = vld [vmem:[%s249 + $0x108] sm:$0xff]
        %v285 = vld [vmem:[%s249 + $0x110] sm:$0xff]
        %v286 = vld [vmem:[%s249 + $0x118] sm:$0xff]
        %v287 = vld [vmem:[%s249 + $0x120] sm:$0xff]
        %v288 = vld [vmem:[%s249 + $0x128] sm:$0xff]
        %v289 = vld [vmem:[%s249 + $0x130] sm:$0xff]
        %v290 = vld [vmem:[%s249 + $0x138] sm:$0xff]
        %v291 = vld [vmem:[%s249 + $0x140] sm:$0xff]
        %v292 = vld [vmem:[%s249 + $0x148] sm:$0xff]
        %v293 = vld [vmem:[%s249 + $0x150] sm:$0xff]
        %v294 = vld [vmem:[%s249 + $0x158] sm:$0xff]
        %v295 = vld [vmem:[%s249 + $0x160] sm:$0xff]
        %v296 = vld [vmem:[%s249 + $0x168] sm:$0xff]
        %v297 = vld [vmem:[%s249 + $0x170] sm:$0xff]
        %v298 = vld [vmem:[%s249 + $0x178] sm:$0xff]
        %v299 = vld [vmem:[%s249 + $0x180] sm:$0xff]
        %v300 = vld [vmem:[%s249 + $0x188] sm:$0xff]
        %v301 = vld [vmem:[%s249 + $0x190] sm:$0xff]
        %v302 = vld [vmem:[%s249 + $0x198] sm:$0xff]
        %v303 = vld [vmem:[%s249 + $0x1a0] sm:$0xff]
        %v304 = vld [vmem:[%s249 + $0x1a8] sm:$0xff]
        %v305 = vld [vmem:[%s249 + $0x1b0] sm:$0xff]
        %v306 = vld [vmem:[%s249 + $0x1b8] sm:$0xff]
        %v307 = vld [vmem:[%s249 + $0x1c0] sm:$0xff]
        %v308 = vld [vmem:[%s249 + $0x1c8] sm:$0xff]
        %v309 = vld [vmem:[%s249 + $0x1d0] sm:$0xff]
        %v310 = vld [vmem:[%s249 + $0x1d8] sm:$0xff]
        %v311 = vld [vmem:[%s249 + $0x1e0] sm:$0xff]
        %v312 = vld [vmem:[%s249 + $0x1e8] sm:$0xff]
        %v313 = vld [vmem:[%s249 + $0x1f0] sm:$0xff]
        %v314 = vld [vmem:[%s249 + $0x1f8] sm:$0xff]
        %v315 = vld [vmem:[%s249 + $0x200] sm:$0xff]
        %v316 = vld [vmem:[%s249 + $0x208] sm:$0xff]
        %v317 = vld [vmem:[%s249 + $0x210] sm:$0xff]
        %v318 = vld [vmem:[%s249 + $0x218] sm:$0xff]
        %v319 = vld [vmem:[%s249 + $0x220] sm:$0xff]
        %v320 = vld [vmem:[%s249 + $0x228] sm:$0xff]
        %v321 = vld [vmem:[%s249 + $0x230] sm:$0xff]
        %v322 = vld [vmem:[%s249 + $0x238] sm:$0xff]
        %v323 = vld [vmem:[%s249 + $0x240] sm:$0xff]
        %v324 = vld [vmem:[%s249 + $0x248] sm:$0xff]
        %v325 = vld [vmem:[%s249 + $0x250] sm:$0xff]
        %v326 = vld [vmem:[%s249 + $0x258] sm:$0xff]
        %v327 = vld [vmem:[%s249 + $0x260] sm:$0xff]
        %v328 = vld [vmem:[%s249 + $0x268] sm:$0xff]
        %v329 = vld [vmem:[%s249 + $0x270] sm:$0xff]
        %v330 = vld [vmem:[%s249 + $0x278] sm:$0xff]
        %v331 = vld [vmem:[%s249 + $0x280] sm:$0xff]
        %v332 = vld [vmem:[%s249 + $0x288] sm:$0xff]
        %v333 = vld [vmem:[%s249 + $0x290] sm:$0xff]
        %v334 = vld [vmem:[%s249 + $0x298] sm:$0xff]
        %v335 = vld [vmem:[%s249 + $0x2a0] sm:$0xff]
        %v336 = vld [vmem:[%s249 + $0x2a8] sm:$0xff]
        %v337 = vld [vmem:[%s249 + $0x2b0] sm:$0xff]
        %v338 = vld [vmem:[%s249 + $0x2b8] sm:$0xff]
        %v339 = vld [vmem:[%s249 + $0x2c0] sm:$0xff]
        %v340 = vld [vmem:[%s249 + $0x2c8] sm:$0xff]
        %v341 = vld [vmem:[%s249 + $0x2d0] sm:$0xff]
        %v342 = vld [vmem:[%s249 + $0x2d8] sm:$0xff]
        %v343 = vld [vmem:[%s249 + $0x2e0] sm:$0xff]
        %v344 = vld [vmem:[%s249 + $0x2e8] sm:$0xff]
        %v345 = vld [vmem:[%s249 + $0x2f0] sm:$0xff]
        %v346 = vld [vmem:[%s249 + $0x2f8] sm:$0xff]
        %v347 = vld [vmem:[%s249 + $0x300] sm:$0xff]
        %v348 = vld [vmem:[%s249 + $0x308] sm:$0xff]
        %v349 = vld [vmem:[%s249 + $0x310] sm:$0xff]
        %v350 = vld [vmem:[%s249 + $0x318] sm:$0xff]
        %v351 = vld [vmem:[%s249 + $0x320] sm:$0xff]
        %v352 = vld [vmem:[%s249 + $0x328] sm:$0xff]
        %v353 = vld [vmem:[%s249 + $0x330] sm:$0xff]
        %v354 = vld [vmem:[%s249 + $0x338] sm:$0xff]
        %v355 = vld [vmem:[%s249 + $0x340] sm:$0xff]
        %v356 = vld [vmem:[%s249 + $0x348] sm:$0xff]
        %v357 = vld [vmem:[%s249 + $0x350] sm:$0xff]
        %v358 = vld [vmem:[%s249 + $0x358] sm:$0xff]
        %v359 = vld [vmem:[%s249 + $0x360] sm:$0xff]
        %v360 = vld [vmem:[%s249 + $0x368] sm:$0xff]
        %v361 = vld [vmem:[%s249 + $0x370] sm:$0xff]
        %v362 = vld [vmem:[%s249 + $0x378] sm:$0xff]
        %v363 = vld [vmem:[%s249 + $0x380] sm:$0xff]
        %v364 = vld [vmem:[%s249 + $0x388] sm:$0xff]
        %v365 = vld [vmem:[%s249 + $0x390] sm:$0xff]
        %v366 = vld [vmem:[%s249 + $0x398] sm:$0xff]
        %v367 = vld [vmem:[%s249 + $0x3a0] sm:$0xff]
        %v368 = vld [vmem:[%s249 + $0x3a8] sm:$0xff]
        %v369 = vld [vmem:[%s249 + $0x3b0] sm:$0xff]
        %v370 = vld [vmem:[%s249 + $0x3b8] sm:$0xff]
        %v371 = vld [vmem:[%s249 + $0x3c0] sm:$0xff]
        %v372 = vld [vmem:[%s249 + $0x3c8] sm:$0xff]
        %v373 = vld [vmem:[%s249 + $0x3d0] sm:$0xff]
        %v374 = vld [vmem:[%s249 + $0x3d8] sm:$0xff]
        %v375 = vld [vmem:[%s249 + $0x3e0] sm:$0xff]
        %v376 = vld [vmem:[%s249 + $0x3e8] sm:$0xff]
        %v377 = vld [vmem:[%s249 + $0x3f0] sm:$0xff]
        %v378 = vld [vmem:[%s249 + $0x3f8] sm:$0xff]
        %v379 = vld [vmem:[%s1] sm:$0xf]
        %v380 = vld [vmem:[%s1 + $0x4] sm:$0xf]
        %v381 = vld [vmem:[%s1 + $0x8] sm:$0xf]
        %v382 = vld [vmem:[%s1 + $0xc] sm:$0xf]
        %v383 = vld [vmem:[%s1 + $0x10] sm:$0xf]
        %v384 = vld [vmem:[%s1 + $0x14] sm:$0xf]
        %v385 = vld [vmem:[%s1 + $0x18] sm:$0xf]
        %v386 = vld [vmem:[%s1 + $0x1c] sm:$0xf]
        %v387 = vld [vmem:[%s1 + $0x20] sm:$0xf]
        %v388 = vld [vmem:[%s1 + $0x24] sm:$0xf]
        %v389 = vld [vmem:[%s1 + $0x28] sm:$0xf]
        %v390 = vld [vmem:[%s1 + $0x2c] sm:$0xf]
        %v391 = vld [vmem:[%s1 + $0x30] sm:$0xf]
        %v392 = vld [vmem:[%s1 + $0x34] sm:$0xf]
        %v393 = vld [vmem:[%s1 + $0x38] sm:$0xf]
        %v394 = vld [vmem:[%s1 + $0x3c] sm:$0xf]
        %v395 = vld [vmem:[%s1 + $0x40] sm:$0xf]
        %v396 = vld [vmem:[%s1 + $0x44] sm:$0xf]
        %v397 = vld [vmem:[%s1 + $0x48] sm:$0xf]
        %v398 = vld [vmem:[%s1 + $0x4c] sm:$0xf]
        %v399 = vld [vmem:[%s1 + $0x50] sm:$0xf]
        %v400 = vld [vmem:[%s1 + $0x54] sm:$0xf]
        %v401 = vld [vmem:[%s1 + $0x58] sm:$0xf]
        %v402 = vld [vmem:[%s1 + $0x5c] sm:$0xf]
        %v403 = vld [vmem:[%s1 + $0x60] sm:$0xf]
        %v404 = vld [vmem:[%s1 + $0x64] sm:$0xf]
        %v405 = vld [vmem:[%s1 + $0x68] sm:$0xf]
        %v406 = vld [vmem:[%s1 + $0x6c] sm:$0xf]
        %v407 = vld [vmem:[%s1 + $0x70] sm:$0xf]
        %v408 = vld [vmem:[%s1 + $0x74] sm:$0xf]
        %v409 = vld [vmem:[%s1 + $0x78] sm:$0xf]
        %v410 = vld [vmem:[%s1 + $0x7c] sm:$0xf]
        %v411 = vld [vmem:[%s1 + $0x80] sm:$0xf]
        %v412 = vld [vmem:[%s1 + $0x84] sm:$0xf]
        %v413 = vld [vmem:[%s1 + $0x88] sm:$0xf]
        %v414 = vld [vmem:[%s1 + $0x8c] sm:$0xf]
        %v415 = vld [vmem:[%s1 + $0x90] sm:$0xf]
        %v416 = vld [vmem:[%s1 + $0x94] sm:$0xf]
        %v417 = vld [vmem:[%s1 + $0x98] sm:$0xf]
        %v418 = vld [vmem:[%s1 + $0x9c] sm:$0xf]
        %v419 = vld [vmem:[%s1 + $0xa0] sm:$0xf]
        %v420 = vld [vmem:[%s1 + $0xa4] sm:$0xf]
        %v421 = vld [vmem:[%s1 + $0xa8] sm:$0xf]
        %v422 = vld [vmem:[%s1 + $0xac] sm:$0xf]
        %v423 = vld [vmem:[%s1 + $0xb0] sm:$0xf]
        %v424 = vld [vmem:[%s1 + $0xb4] sm:$0xf]
        %v425 = vld [vmem:[%s1 + $0xb8] sm:$0xf]
        %v426 = vld [vmem:[%s1 + $0xbc] sm:$0xf]
        %v427 = vld [vmem:[%s1 + $0xc0] sm:$0xf]
        %v428 = vld [vmem:[%s1 + $0xc4] sm:$0xf]
        %v429 = vld [vmem:[%s1 + $0xc8] sm:$0xf]
        %v430 = vld [vmem:[%s1 + $0xcc] sm:$0xf]
        %v431 = vld [vmem:[%s1 + $0xd0] sm:$0xf]
        %v432 = vld [vmem:[%s1 + $0xd4] sm:$0xf]
        %v433 = vld [vmem:[%s1 + $0xd8] sm:$0xf]
        %v434 = vld [vmem:[%s1 + $0xdc] sm:$0xf]
        %v435 = vld [vmem:[%s1 + $0xe0] sm:$0xf]
        %v436 = vld [vmem:[%s1 + $0xe4] sm:$0xf]
        %v437 = vld [vmem:[%s1 + $0xe8] sm:$0xf]
        %v438 = vld [vmem:[%s1 + $0xec] sm:$0xf]
        %v439 = vld [vmem:[%s1 + $0xf0] sm:$0xf]
        %v440 = vld [vmem:[%s1 + $0xf4] sm:$0xf]
        %v441 = vld [vmem:[%s1 + $0xf8] sm:$0xf]
        %v442 = vld [vmem:[%s1 + $0xfc] sm:$0xf]
        %v443 = vld [vmem:[%s1 + $0x100] sm:$0xf]
        %v444 = vld [vmem:[%s1 + $0x104] sm:$0xf]
        %v445 = vld [vmem:[%s1 + $0x108] sm:$0xf]
        %v446 = vld [vmem:[%s1 + $0x10c] sm:$0xf]
        %v447 = vld [vmem:[%s1 + $0x110] sm:$0xf]
        %v448 = vld [vmem:[%s1 + $0x114] sm:$0xf]
        %v449 = vld [vmem:[%s1 + $0x118] sm:$0xf]
        %v450 = vld [vmem:[%s1 + $0x11c] sm:$0xf]
        %v451 = vld [vmem:[%s1 + $0x120] sm:$0xf]
        %v452 = vld [vmem:[%s1 + $0x124] sm:$0xf]
        %v453 = vld [vmem:[%s1 + $0x128] sm:$0xf]
        %v454 = vld [vmem:[%s1 + $0x12c] sm:$0xf]
        %v455 = vld [vmem:[%s1 + $0x130] sm:$0xf]
        %v456 = vld [vmem:[%s1 + $0x134] sm:$0xf]
        %v457 = vld [vmem:[%s1 + $0x138] sm:$0xf]
        %v458 = vld [vmem:[%s1 + $0x13c] sm:$0xf]
        %v459 = vld [vmem:[%s1 + $0x140] sm:$0xf]
        %v460 = vld [vmem:[%s1 + $0x144] sm:$0xf]
        %v461 = vld [vmem:[%s1 + $0x148] sm:$0xf]
        %v462 = vld [vmem:[%s1 + $0x14c] sm:$0xf]
        %v463 = vld [vmem:[%s1 + $0x150] sm:$0xf]
        %v464 = vld [vmem:[%s1 + $0x154] sm:$0xf]
        %v465 = vld [vmem:[%s1 + $0x158] sm:$0xf]
        %v466 = vld [vmem:[%s1 + $0x15c] sm:$0xf]
        %v467 = vld [vmem:[%s1 + $0x160] sm:$0xf]
        %v468 = vld [vmem:[%s1 + $0x164] sm:$0xf]
        %v469 = vld [vmem:[%s1 + $0x168] sm:$0xf]
        %v470 = vld [vmem:[%s1 + $0x16c] sm:$0xf]
        %v471 = vld [vmem:[%s1 + $0x170] sm:$0xf]
        %v472 = vld [vmem:[%s1 + $0x174] sm:$0xf]
        %v473 = vld [vmem:[%s1 + $0x178] sm:$0xf]
        %v474 = vld [vmem:[%s1 + $0x17c] sm:$0xf]
        %v475 = vld [vmem:[%s1 + $0x180] sm:$0xf]
        %v476 = vld [vmem:[%s1 + $0x184] sm:$0xf]
        %v477 = vld [vmem:[%s1 + $0x188] sm:$0xf]
        %v478 = vld [vmem:[%s1 + $0x18c] sm:$0xf]
        %v479 = vld [vmem:[%s1 + $0x190] sm:$0xf]
        %v480 = vld [vmem:[%s1 + $0x194] sm:$0xf]
        %v481 = vld [vmem:[%s1 + $0x198] sm:$0xf]
        %v482 = vld [vmem:[%s1 + $0x19c] sm:$0xf]
        %v483 = vld [vmem:[%s1 + $0x1a0] sm:$0xf]
        %v484 = vld [vmem:[%s1 + $0x1a4] sm:$0xf]
        %v485 = vld [vmem:[%s1 + $0x1a8] sm:$0xf]
        %v486 = vld [vmem:[%s1 + $0x1ac] sm:$0xf]
        %v487 = vld [vmem:[%s1 + $0x1b0] sm:$0xf]
        %v488 = vld [vmem:[%s1 + $0x1b4] sm:$0xf]
        %v489 = vld [vmem:[%s1 + $0x1b8] sm:$0xf]
        %v490 = vld [vmem:[%s1 + $0x1bc] sm:$0xf]
        %v491 = vld [vmem:[%s1 + $0x1c0] sm:$0xf]
        %v492 = vld [vmem:[%s1 + $0x1c4] sm:$0xf]
        %v493 = vld [vmem:[%s1 + $0x1c8] sm:$0xf]
        %v494 = vld [vmem:[%s1 + $0x1cc] sm:$0xf]
        %v495 = vld [vmem:[%s1 + $0x1d0] sm:$0xf]
        %v496 = vld [vmem:[%s1 + $0x1d4] sm:$0xf]
        %v497 = vld [vmem:[%s1 + $0x1d8] sm:$0xf]
        %v498 = vld [vmem:[%s1 + $0x1dc] sm:$0xf]
        %v499 = vld [vmem:[%s249 + $0x400] sm:$0xff]
        %v500 = vld [vmem:[%s249 + $0x408] sm:$0xff]
        %v501 = vld [vmem:[%s249 + $0x410] sm:$0xff]
        %v502 = vld [vmem:[%s249 + $0x418] sm:$0xff]
        %v503 = vld [vmem:[%s249 + $0x420] sm:$0xff]
        %v504 = vld [vmem:[%s249 + $0x428] sm:$0xff]
        %v505 = vld [vmem:[%s249 + $0x430] sm:$0xff]
        %v506 = vld [vmem:[%s249 + $0x438] sm:$0xff]
        %s507 = scalar_lea.vmem %s1, 480
        %v508 = vld [vmem:[%s507] sm:$0xf]
        %v509 = vld [vmem:[%s507 + $0x4] sm:$0xf]
        %v510 = vld [vmem:[%s507 + $0x8] sm:$0xf]
        %v511 = vld [vmem:[%s507 + $0xc] sm:$0xf]
        %v512 = vld [vmem:[%s507 + $0x10] sm:$0xf]
        %v513 = vld [vmem:[%s507 + $0x14] sm:$0xf]
        %v514 = vld [vmem:[%s507 + $0x18] sm:$0xf]
        %v515 = vld [vmem:[%s507 + $0x1c] sm:$0xf]
        %v516 = vld [vmem:[%s507 + $0x20] sm:$0xf]
        %v517 = vld [vmem:[%s507 + $0x24] sm:$0xf]
        %v518 = vld [vmem:[%s507 + $0x28] sm:$0xf]
        %v519 = vld [vmem:[%s507 + $0x2c] sm:$0xf]
        %v520 = vld [vmem:[%s507 + $0x30] sm:$0xf]
        %v521 = vld [vmem:[%s507 + $0x34] sm:$0xf]
        %v522 = vld [vmem:[%s507 + $0x38] sm:$0xf]
        %v523 = vld [vmem:[%s507 + $0x3c] sm:$0xf]
        %v524 = vld [vmem:[%s507 + $0x40] sm:$0xf]
        %v525 = vld [vmem:[%s507 + $0x44] sm:$0xf]
        %v526 = vld [vmem:[%s507 + $0x48] sm:$0xf]
        %v527 = vld [vmem:[%s507 + $0x4c] sm:$0xf]
        %v528 = vld [vmem:[%s507 + $0x50] sm:$0xf]
        %v529 = vld [vmem:[%s507 + $0x54] sm:$0xf]
        %v530 = vld [vmem:[%s507 + $0x58] sm:$0xf]
        %v531 = vld [vmem:[%s507 + $0x5c] sm:$0xf]
        %v532 = vld [vmem:[%s507 + $0x60] sm:$0xf]
        %v533 = vld [vmem:[%s507 + $0x64] sm:$0xf]
        %v534 = vld [vmem:[%s507 + $0x68] sm:$0xf]
        %v535 = vld [vmem:[%s507 + $0x6c] sm:$0xf]
        %v536 = vld [vmem:[%s507 + $0x70] sm:$0xf]
        %v537 = vld [vmem:[%s507 + $0x74] sm:$0xf]
        %v538 = vld [vmem:[%s507 + $0x78] sm:$0xf]
        %v539 = vld [vmem:[%s507 + $0x7c] sm:$0xf]
        %v540 = vld [vmem:[%s507 + $0x80] sm:$0xf]
        %v541 = vld [vmem:[%s507 + $0x84] sm:$0xf]
        %v542 = vld [vmem:[%s507 + $0x88] sm:$0xf]
        %v543 = vld [vmem:[%s507 + $0x8c] sm:$0xf]
        %v544 = vld [vmem:[%s507 + $0x90] sm:$0xf]
        %v545 = vld [vmem:[%s507 + $0x94] sm:$0xf]
        %v546 = vld [vmem:[%s507 + $0x98] sm:$0xf]
        %v547 = vld [vmem:[%s507 + $0x9c] sm:$0xf]
        %v548 = vld [vmem:[%s507 + $0xa0] sm:$0xf]
        %v549 = vld [vmem:[%s507 + $0xa4] sm:$0xf]
        %v550 = vld [vmem:[%s507 + $0xa8] sm:$0xf]
        %v551 = vld [vmem:[%s507 + $0xac] sm:$0xf]
        %v552 = vld [vmem:[%s507 + $0xb0] sm:$0xf]
        %v553 = vld [vmem:[%s507 + $0xb4] sm:$0xf]
        %v554 = vld [vmem:[%s507 + $0xb8] sm:$0xf]
        %v555 = vld [vmem:[%s507 + $0xbc] sm:$0xf]
        %v556 = vld [vmem:[%s507 + $0xc0] sm:$0xf]
        %v557 = vld [vmem:[%s507 + $0xc4] sm:$0xf]
        %v558 = vld [vmem:[%s507 + $0xc8] sm:$0xf]
        %v559 = vld [vmem:[%s507 + $0xcc] sm:$0xf]
        %v560 = vld [vmem:[%s507 + $0xd0] sm:$0xf]
        %v561 = vld [vmem:[%s507 + $0xd4] sm:$0xf]
        %v562 = vld [vmem:[%s507 + $0xd8] sm:$0xf]
        %v563 = vld [vmem:[%s507 + $0xdc] sm:$0xf]
        %v564 = vld [vmem:[%s507 + $0xe0] sm:$0xf]
        %v565 = vld [vmem:[%s507 + $0xe4] sm:$0xf]
        %v566 = vld [vmem:[%s507 + $0xe8] sm:$0xf]
        %v567 = vld [vmem:[%s507 + $0xec] sm:$0xf]
        %v568 = vld [vmem:[%s507 + $0xf0] sm:$0xf]
        %v569 = vld [vmem:[%s507 + $0xf4] sm:$0xf]
        %v570 = vld [vmem:[%s507 + $0xf8] sm:$0xf]
        %v571 = vld [vmem:[%s507 + $0xfc] sm:$0xf]
        %v572 = vld [vmem:[%s507 + $0x100] sm:$0xf]
        %v573 = vld [vmem:[%s507 + $0x104] sm:$0xf]
        %v574 = vld [vmem:[%s507 + $0x108] sm:$0xf]
        %v575 = vld [vmem:[%s507 + $0x10c] sm:$0xf]
        %v576 = vld [vmem:[%s507 + $0x110] sm:$0xf]
        %v577 = vld [vmem:[%s507 + $0x114] sm:$0xf]
        %v578 = vld [vmem:[%s507 + $0x118] sm:$0xf]
        %v579 = vld [vmem:[%s507 + $0x11c] sm:$0xf]
        %v580 = vld [vmem:[%s507 + $0x120] sm:$0xf]
        %v581 = vld [vmem:[%s507 + $0x124] sm:$0xf]
        %v582 = vld [vmem:[%s507 + $0x128] sm:$0xf]
        %v583 = vld [vmem:[%s507 + $0x12c] sm:$0xf]
        %v584 = vld [vmem:[%s507 + $0x130] sm:$0xf]
        %v585 = vld [vmem:[%s507 + $0x134] sm:$0xf]
        %v586 = vld [vmem:[%s507 + $0x138] sm:$0xf]
        %v587 = vld [vmem:[%s507 + $0x13c] sm:$0xf]
        %v588 = vld [vmem:[%s507 + $0x140] sm:$0xf]
        %v589 = vld [vmem:[%s507 + $0x144] sm:$0xf]
        %v590 = vld [vmem:[%s507 + $0x148] sm:$0xf]
        %v591 = vld [vmem:[%s507 + $0x14c] sm:$0xf]
        %v592 = vld [vmem:[%s507 + $0x150] sm:$0xf]
        %v593 = vld [vmem:[%s507 + $0x154] sm:$0xf]
        %v594 = vld [vmem:[%s507 + $0x158] sm:$0xf]
        %v595 = vld [vmem:[%s507 + $0x15c] sm:$0xf]
        %v596 = vld [vmem:[%s507 + $0x160] sm:$0xf]
        %v597 = vld [vmem:[%s507 + $0x164] sm:$0xf]
        %v598 = vld [vmem:[%s507 + $0x168] sm:$0xf]
        %v599 = vld [vmem:[%s507 + $0x16c] sm:$0xf]
        %v600 = vld [vmem:[%s507 + $0x170] sm:$0xf]
        %v601 = vld [vmem:[%s507 + $0x174] sm:$0xf]
        %v602 = vld [vmem:[%s507 + $0x178] sm:$0xf]
        %v603 = vld [vmem:[%s507 + $0x17c] sm:$0xf]
        %v604 = vld [vmem:[%s507 + $0x180] sm:$0xf]
        %v605 = vld [vmem:[%s507 + $0x184] sm:$0xf]
        %v606 = vld [vmem:[%s507 + $0x188] sm:$0xf]
        %v607 = vld [vmem:[%s507 + $0x18c] sm:$0xf]
        %v608 = vld [vmem:[%s507 + $0x190] sm:$0xf]
        %v609 = vld [vmem:[%s507 + $0x194] sm:$0xf]
        %v610 = vld [vmem:[%s507 + $0x198] sm:$0xf]
        %v611 = vld [vmem:[%s507 + $0x19c] sm:$0xf]
        %v612 = vld [vmem:[%s507 + $0x1a0] sm:$0xf]
        %v613 = vld [vmem:[%s507 + $0x1a4] sm:$0xf]
        %v614 = vld [vmem:[%s507 + $0x1a8] sm:$0xf]
        %v615 = vld [vmem:[%s507 + $0x1ac] sm:$0xf]
        %v616 = vld [vmem:[%s507 + $0x1b0] sm:$0xf]
        %v617 = vld [vmem:[%s507 + $0x1b4] sm:$0xf]
        %v618 = vld [vmem:[%s507 + $0x1b8] sm:$0xf]
        %v619 = vld [vmem:[%s507 + $0x1bc] sm:$0xf]
        %v620 = vld [vmem:[%s507 + $0x1c0] sm:$0xf]
        %v621 = vld [vmem:[%s507 + $0x1c4] sm:$0xf]
        %v622 = vld [vmem:[%s507 + $0x1c8] sm:$0xf]
        %v623 = vld [vmem:[%s507 + $0x1cc] sm:$0xf]
        %v624 = vld [vmem:[%s507 + $0x1d0] sm:$0xf]
        %v625 = vld [vmem:[%s507 + $0x1d4] sm:$0xf]
        %v626 = vld [vmem:[%s507 + $0x1d8] sm:$0xf]
        %v627 = vld [vmem:[%s507 + $0x1dc] sm:$0xf]
        %v756 = vunpack.c.l.b16 %v259
        %v757 = vunpack.c.h.b16 %v259
        %v758 = vunpack.c.l.b16 %v260
        %v759 = vunpack.c.h.b16 %v260
        %v760 = vunpack.c.l.b16 %v261
        %v761 = vunpack.c.h.b16 %v261
        %v762 = vunpack.c.l.b16 %v262
        %v763 = vunpack.c.h.b16 %v262
        %v764 = vunpack.c.l.b16 %v263
        %v765 = vunpack.c.h.b16 %v263
        %v766 = vunpack.c.l.b16 %v264
        %v767 = vunpack.c.h.b16 %v264
        %v768 = vunpack.c.l.b16 %v265
        %v769 = vunpack.c.h.b16 %v265
        %v770 = vunpack.c.l.b16 %v266
        %v771 = vunpack.c.h.b16 %v266
        %v772 = vunpack.c.l.b16 %v267
        %v773 = vunpack.c.h.b16 %v267
        %v774 = vunpack.c.l.b16 %v268
        %v775 = vunpack.c.h.b16 %v268
        %v776 = vunpack.c.l.b16 %v269
        %v777 = vunpack.c.h.b16 %v269
        %v778 = vunpack.c.l.b16 %v270
        %v779 = vunpack.c.h.b16 %v270
        %v780 = vunpack.c.l.b16 %v271
        %v781 = vunpack.c.h.b16 %v271
        %v782 = vunpack.c.l.b16 %v272
        %v783 = vunpack.c.h.b16 %v272
        %v784 = vunpack.c.l.b16 %v273
        %v785 = vunpack.c.h.b16 %v273
        %v786 = vunpack.c.l.b16 %v274
        %v787 = vunpack.c.h.b16 %v274
        %v788 = vunpack.c.l.b16 %v275
        %v789 = vunpack.c.h.b16 %v275
        %v790 = vunpack.c.l.b16 %v276
        %v791 = vunpack.c.h.b16 %v276
        %v792 = vunpack.c.l.b16 %v277
        %v793 = vunpack.c.h.b16 %v277
        %v794 = vunpack.c.l.b16 %v278
        %v795 = vunpack.c.h.b16 %v278
        %v796 = vunpack.c.l.b16 %v279
        %v797 = vunpack.c.h.b16 %v279
        %v798 = vunpack.c.l.b16 %v280
        %v799 = vunpack.c.h.b16 %v280
        %v800 = vunpack.c.l.b16 %v281
        %v801 = vunpack.c.h.b16 %v281
        %v802 = vunpack.c.l.b16 %v282
        %v803 = vunpack.c.h.b16 %v282
        %v804 = vunpack.c.l.b16 %v283
        %v805 = vunpack.c.h.b16 %v283
        %v806 = vunpack.c.l.b16 %v284
        %v807 = vunpack.c.h.b16 %v284
        %v808 = vunpack.c.l.b16 %v285
        %v809 = vunpack.c.h.b16 %v285
        %v810 = vunpack.c.l.b16 %v286
        %v811 = vunpack.c.h.b16 %v286
        %v812 = vunpack.c.l.b16 %v287
        %v813 = vunpack.c.h.b16 %v287
        %v814 = vunpack.c.l.b16 %v288
        %v815 = vunpack.c.h.b16 %v288
        %v816 = vunpack.c.l.b16 %v289
        %v817 = vunpack.c.h.b16 %v289
        %v818 = vunpack.c.l.b16 %v290
        %v819 = vunpack.c.h.b16 %v290
        %v820 = vunpack.c.l.b16 %v291
        %v821 = vunpack.c.h.b16 %v291
        %v822 = vunpack.c.l.b16 %v292
        %v823 = vunpack.c.h.b16 %v292
        %v824 = vunpack.c.l.b16 %v293
        %v825 = vunpack.c.h.b16 %v293
        %v826 = vunpack.c.l.b16 %v294
        %v827 = vunpack.c.h.b16 %v294
        %v828 = vunpack.c.l.b16 %v295
        %v829 = vunpack.c.h.b16 %v295
        %v830 = vunpack.c.l.b16 %v296
        %v831 = vunpack.c.h.b16 %v296
        %v832 = vunpack.c.l.b16 %v297
        %v833 = vunpack.c.h.b16 %v297
        %v834 = vunpack.c.l.b16 %v298
        %v835 = vunpack.c.h.b16 %v298
        %v836 = vunpack.c.l.b16 %v299
        %v837 = vunpack.c.h.b16 %v299
        %v838 = vunpack.c.l.b16 %v300
        %v839 = vunpack.c.h.b16 %v300
        %v840 = vunpack.c.l.b16 %v301
        %v841 = vunpack.c.h.b16 %v301
        %v842 = vunpack.c.l.b16 %v302
        %v843 = vunpack.c.h.b16 %v302
        %v844 = vunpack.c.l.b16 %v303
        %v845 = vunpack.c.h.b16 %v303
        %v846 = vunpack.c.l.b16 %v304
        %v847 = vunpack.c.h.b16 %v304
        %v848 = vunpack.c.l.b16 %v305
        %v849 = vunpack.c.h.b16 %v305
        %v850 = vunpack.c.l.b16 %v306
        %v851 = vunpack.c.h.b16 %v306
        %v852 = vunpack.c.l.b16 %v307
        %v853 = vunpack.c.h.b16 %v307
        %v854 = vunpack.c.l.b16 %v308
        %v855 = vunpack.c.h.b16 %v308
        %v856 = vunpack.c.l.b16 %v309
        %v857 = vunpack.c.h.b16 %v309
        %v858 = vunpack.c.l.b16 %v310
        %v859 = vunpack.c.h.b16 %v310
        %v860 = vunpack.c.l.b16 %v311
        %v861 = vunpack.c.h.b16 %v311
        %v862 = vunpack.c.l.b16 %v312
        %v863 = vunpack.c.h.b16 %v312
        %v864 = vunpack.c.l.b16 %v313
        %v865 = vunpack.c.h.b16 %v313
        %v866 = vunpack.c.l.b16 %v314
        %v867 = vunpack.c.h.b16 %v314
        %v868 = vunpack.c.l.b16 %v315
        %v869 = vunpack.c.h.b16 %v315
        %v870 = vunpack.c.l.b16 %v316
        %v871 = vunpack.c.h.b16 %v316
        %v872 = vunpack.c.l.b16 %v317
        %v873 = vunpack.c.h.b16 %v317
        %v874 = vunpack.c.l.b16 %v318
        %v875 = vunpack.c.h.b16 %v318
        %v876 = vunpack.c.l.b16 %v319
        %v877 = vunpack.c.h.b16 %v319
        %v878 = vunpack.c.l.b16 %v320
        %v879 = vunpack.c.h.b16 %v320
        %v880 = vunpack.c.l.b16 %v321
        %v881 = vunpack.c.h.b16 %v321
        %v882 = vunpack.c.l.b16 %v322
        %v883 = vunpack.c.h.b16 %v322
        %v884 = vunpack.c.l.b16 %v323
        %v885 = vunpack.c.h.b16 %v323
        %v886 = vunpack.c.l.b16 %v324
        %v887 = vunpack.c.h.b16 %v324
        %v888 = vunpack.c.l.b16 %v325
        %v889 = vunpack.c.h.b16 %v325
        %v890 = vunpack.c.l.b16 %v326
        %v891 = vunpack.c.h.b16 %v326
        %v892 = vunpack.c.l.b16 %v327
        %v893 = vunpack.c.h.b16 %v327
        %v894 = vunpack.c.l.b16 %v328
        %v895 = vunpack.c.h.b16 %v328
        %v896 = vunpack.c.l.b16 %v329
        %v897 = vunpack.c.h.b16 %v329
        %v898 = vunpack.c.l.b16 %v330
        %v899 = vunpack.c.h.b16 %v330
        %v900 = vunpack.c.l.b16 %v331
        %v901 = vunpack.c.h.b16 %v331
        %v902 = vunpack.c.l.b16 %v332
        %v903 = vunpack.c.h.b16 %v332
        %v904 = vunpack.c.l.b16 %v333
        %v905 = vunpack.c.h.b16 %v333
        %v906 = vunpack.c.l.b16 %v334
        %v907 = vunpack.c.h.b16 %v334
        %v908 = vunpack.c.l.b16 %v335
        %v909 = vunpack.c.h.b16 %v335
        %v910 = vunpack.c.l.b16 %v336
        %v911 = vunpack.c.h.b16 %v336
        %v912 = vunpack.c.l.b16 %v337
        %v913 = vunpack.c.h.b16 %v337
        %v914 = vunpack.c.l.b16 %v338
        %v915 = vunpack.c.h.b16 %v338
        %v916 = vunpack.c.l.b16 %v339
        %v917 = vunpack.c.h.b16 %v339
        %v918 = vunpack.c.l.b16 %v340
        %v919 = vunpack.c.h.b16 %v340
        %v920 = vunpack.c.l.b16 %v341
        %v921 = vunpack.c.h.b16 %v341
        %v922 = vunpack.c.l.b16 %v342
        %v923 = vunpack.c.h.b16 %v342
        %v924 = vunpack.c.l.b16 %v343
        %v925 = vunpack.c.h.b16 %v343
        %v926 = vunpack.c.l.b16 %v344
        %v927 = vunpack.c.h.b16 %v344
        %v928 = vunpack.c.l.b16 %v345
        %v929 = vunpack.c.h.b16 %v345
        %v930 = vunpack.c.l.b16 %v346
        %v931 = vunpack.c.h.b16 %v346
        %v932 = vunpack.c.l.b16 %v347
        %v933 = vunpack.c.h.b16 %v347
        %v934 = vunpack.c.l.b16 %v348
        %v935 = vunpack.c.h.b16 %v348
        %v936 = vunpack.c.l.b16 %v349
        %v937 = vunpack.c.h.b16 %v349
        %v938 = vunpack.c.l.b16 %v350
        %v939 = vunpack.c.h.b16 %v350
        %v940 = vunpack.c.l.b16 %v351
        %v941 = vunpack.c.h.b16 %v351
        %v942 = vunpack.c.l.b16 %v352
        %v943 = vunpack.c.h.b16 %v352
        %v944 = vunpack.c.l.b16 %v353
        %v945 = vunpack.c.h.b16 %v353
        %v946 = vunpack.c.l.b16 %v354
        %v947 = vunpack.c.h.b16 %v354
        %v948 = vunpack.c.l.b16 %v355
        %v949 = vunpack.c.h.b16 %v355
        %v950 = vunpack.c.l.b16 %v356
        %v951 = vunpack.c.h.b16 %v356
        %v952 = vunpack.c.l.b16 %v357
        %v953 = vunpack.c.h.b16 %v357
        %v954 = vunpack.c.l.b16 %v358
        %v955 = vunpack.c.h.b16 %v358
        %v956 = vunpack.c.l.b16 %v359
        %v957 = vunpack.c.h.b16 %v359
        %v958 = vunpack.c.l.b16 %v360
        %v959 = vunpack.c.h.b16 %v360
        %v960 = vunpack.c.l.b16 %v361
        %v961 = vunpack.c.h.b16 %v361
        %v962 = vunpack.c.l.b16 %v362
        %v963 = vunpack.c.h.b16 %v362
        %v964 = vunpack.c.l.b16 %v363
        %v965 = vunpack.c.h.b16 %v363
        %v966 = vunpack.c.l.b16 %v364
        %v967 = vunpack.c.h.b16 %v364
        %v968 = vunpack.c.l.b16 %v365
        %v969 = vunpack.c.h.b16 %v365
        %v970 = vunpack.c.l.b16 %v366
        %v971 = vunpack.c.h.b16 %v366
        %v972 = vunpack.c.l.b16 %v367
        %v973 = vunpack.c.h.b16 %v367
        %v974 = vunpack.c.l.b16 %v368
        %v975 = vunpack.c.h.b16 %v368
        %v976 = vunpack.c.l.b16 %v369
        %v977 = vunpack.c.h.b16 %v369
        %v978 = vunpack.c.l.b16 %v370
        %v979 = vunpack.c.h.b16 %v370
        %v980 = vunpack.c.l.b16 %v371
        %v981 = vunpack.c.h.b16 %v371
        %v982 = vunpack.c.l.b16 %v372
        %v983 = vunpack.c.h.b16 %v372
        %v984 = vunpack.c.l.b16 %v373
        %v985 = vunpack.c.h.b16 %v373
        %v986 = vunpack.c.l.b16 %v374
        %v987 = vunpack.c.h.b16 %v374
        %v988 = vunpack.c.l.b16 %v375
        %v989 = vunpack.c.h.b16 %v375
        %v990 = vunpack.c.l.b16 %v376
        %v991 = vunpack.c.h.b16 %v376
        %v992 = vunpack.c.l.b16 %v377
        %v993 = vunpack.c.h.b16 %v377
        %v994 = vunpack.c.l.b16 %v378
        %v995 = vunpack.c.h.b16 %v378
        %v996 = vunpack.c.l.b16 %v499
        %v997 = vunpack.c.h.b16 %v499
        %v998 = vunpack.c.l.b16 %v500
        %v999 = vunpack.c.h.b16 %v500
        %v1000 = vunpack.c.l.b16 %v501
        %v1001 = vunpack.c.h.b16 %v501
        %v1002 = vunpack.c.l.b16 %v502
        %v1003 = vunpack.c.h.b16 %v502
        %v1004 = vunpack.c.l.b16 %v503
        %v1005 = vunpack.c.h.b16 %v503
        %v1006 = vunpack.c.l.b16 %v504
        %v1007 = vunpack.c.h.b16 %v504
        %v1008 = vunpack.c.l.b16 %v505
        %v1009 = vunpack.c.h.b16 %v505
        %v1010 = vunpack.c.l.b16 %v506
        %v1011 = vunpack.c.h.b16 %v506
        %v1012 = vpack.c.b16 %v764, %v756
        %v1013 = vpack.c.b16 %v765, %v757
        %v1014 = vpack.c.b16 %v766, %v758
        %v1015 = vpack.c.b16 %v767, %v759
        %v1016 = vpack.c.b16 %v768, %v760
        %v1017 = vpack.c.b16 %v769, %v761
        %v1018 = vpack.c.b16 %v770, %v762
        %v1019 = vpack.c.b16 %v771, %v763
        %v1020 = vpack.c.b16 %v780, %v772
        %v1021 = vpack.c.b16 %v781, %v773
        %v1022 = vpack.c.b16 %v782, %v774
        %v1023 = vpack.c.b16 %v783, %v775
        %v1024 = vpack.c.b16 %v784, %v776
        %v1025 = vpack.c.b16 %v785, %v777
        %v1026 = vpack.c.b16 %v786, %v778
        %v1027 = vpack.c.b16 %v787, %v779
        %v1028 = vpack.c.b16 %v796, %v788
        %v1029 = vpack.c.b16 %v797, %v789
        %v1030 = vpack.c.b16 %v798, %v790
        %v1031 = vpack.c.b16 %v799, %v791
        %v1032 = vpack.c.b16 %v800, %v792
        %v1033 = vpack.c.b16 %v801, %v793
        %v1034 = vpack.c.b16 %v802, %v794
        %v1035 = vpack.c.b16 %v803, %v795
        %v1036 = vpack.c.b16 %v812, %v804
        %v1037 = vpack.c.b16 %v813, %v805
        %v1038 = vpack.c.b16 %v814, %v806
        %v1039 = vpack.c.b16 %v815, %v807
        %v1040 = vpack.c.b16 %v816, %v808
        %v1041 = vpack.c.b16 %v817, %v809
        %v1042 = vpack.c.b16 %v818, %v810
        %v1043 = vpack.c.b16 %v819, %v811
        %v1044 = vpack.c.b16 %v828, %v820
        %v1045 = vpack.c.b16 %v829, %v821
        %v1046 = vpack.c.b16 %v830, %v822
        %v1047 = vpack.c.b16 %v831, %v823
        %v1048 = vpack.c.b16 %v832, %v824
        %v1049 = vpack.c.b16 %v833, %v825
        %v1050 = vpack.c.b16 %v834, %v826
        %v1051 = vpack.c.b16 %v835, %v827
        %v1052 = vpack.c.b16 %v844, %v836
        %v1053 = vpack.c.b16 %v845, %v837
        %v1054 = vpack.c.b16 %v846, %v838
        %v1055 = vpack.c.b16 %v847, %v839
        %v1056 = vpack.c.b16 %v848, %v840
        %v1057 = vpack.c.b16 %v849, %v841
        %v1058 = vpack.c.b16 %v850, %v842
        %v1059 = vpack.c.b16 %v851, %v843
        %v1060 = vpack.c.b16 %v860, %v852
        %v1061 = vpack.c.b16 %v861, %v853
        %v1062 = vpack.c.b16 %v862, %v854
        %v1063 = vpack.c.b16 %v863, %v855
        %v1064 = vpack.c.b16 %v864, %v856
        %v1065 = vpack.c.b16 %v865, %v857
        %v1066 = vpack.c.b16 %v866, %v858
        %v1067 = vpack.c.b16 %v867, %v859
        %v1068 = vpack.c.b16 %v876, %v868
        %v1069 = vpack.c.b16 %v877, %v869
        %v1070 = vpack.c.b16 %v878, %v870
        %v1071 = vpack.c.b16 %v879, %v871
        %v1072 = vpack.c.b16 %v880, %v872
        %v1073 = vpack.c.b16 %v881, %v873
        %v1074 = vpack.c.b16 %v882, %v874
        %v1075 = vpack.c.b16 %v883, %v875
        %v1076 = vpack.c.b16 %v892, %v884
        %v1077 = vpack.c.b16 %v893, %v885
        %v1078 = vpack.c.b16 %v894, %v886
        %v1079 = vpack.c.b16 %v895, %v887
        %v1080 = vpack.c.b16 %v896, %v888
        %v1081 = vpack.c.b16 %v897, %v889
        %v1082 = vpack.c.b16 %v898, %v890
        %v1083 = vpack.c.b16 %v899, %v891
        %v1084 = vpack.c.b16 %v908, %v900
        %v1085 = vpack.c.b16 %v909, %v901
        %v1086 = vpack.c.b16 %v910, %v902
        %v1087 = vpack.c.b16 %v911, %v903
        %v1088 = vpack.c.b16 %v912, %v904
        %v1089 = vpack.c.b16 %v913, %v905
        %v1090 = vpack.c.b16 %v914, %v906
        %v1091 = vpack.c.b16 %v915, %v907
        %v1092 = vpack.c.b16 %v924, %v916
        %v1093 = vpack.c.b16 %v925, %v917
        %v1094 = vpack.c.b16 %v926, %v918
        %v1095 = vpack.c.b16 %v927, %v919
        %v1096 = vpack.c.b16 %v928, %v920
        %v1097 = vpack.c.b16 %v929, %v921
        %v1098 = vpack.c.b16 %v930, %v922
        %v1099 = vpack.c.b16 %v931, %v923
        %v1100 = vpack.c.b16 %v940, %v932
        %v1101 = vpack.c.b16 %v941, %v933
        %v1102 = vpack.c.b16 %v942, %v934
        %v1103 = vpack.c.b16 %v943, %v935
        %v1104 = vpack.c.b16 %v944, %v936
        %v1105 = vpack.c.b16 %v945, %v937
        %v1106 = vpack.c.b16 %v946, %v938
        %v1107 = vpack.c.b16 %v947, %v939
        %v1108 = vpack.c.b16 %v956, %v948
        %v1109 = vpack.c.b16 %v957, %v949
        %v1110 = vpack.c.b16 %v958, %v950
        %v1111 = vpack.c.b16 %v959, %v951
        %v1112 = vpack.c.b16 %v960, %v952
        %v1113 = vpack.c.b16 %v961, %v953
        %v1114 = vpack.c.b16 %v962, %v954
        %v1115 = vpack.c.b16 %v963, %v955
        %v1116 = vpack.c.b16 %v972, %v964
        %v1117 = vpack.c.b16 %v973, %v965
        %v1118 = vpack.c.b16 %v974, %v966
        %v1119 = vpack.c.b16 %v975, %v967
        %v1120 = vpack.c.b16 %v976, %v968
        %v1121 = vpack.c.b16 %v977, %v969
        %v1122 = vpack.c.b16 %v978, %v970
        %v1123 = vpack.c.b16 %v979, %v971
        %v1124 = vpack.c.b16 %v988, %v980
        %v1125 = vpack.c.b16 %v989, %v981
        %v1126 = vpack.c.b16 %v990, %v982
        %v1127 = vpack.c.b16 %v991, %v983
        %v1128 = vpack.c.b16 %v992, %v984
        %v1129 = vpack.c.b16 %v993, %v985
        %v1130 = vpack.c.b16 %v994, %v986
        %v1131 = vpack.c.b16 %v995, %v987
        %v1132 = vpack.c.b16 %v1004, %v996
        %v1133 = vpack.c.b16 %v1005, %v997
        %v1134 = vpack.c.b16 %v1006, %v998
        %v1135 = vpack.c.b16 %v1007, %v999
        %v1136 = vpack.c.b16 %v1008, %v1000
        %v1137 = vpack.c.b16 %v1009, %v1001
        %v1138 = vpack.c.b16 %v1010, %v1002
        %v1139 = vpack.c.b16 %v1011, %v1003
        %v1372 = vunpack.c.l.b16 %v508
        %v1373 = vunpack.c.l.b16 %v509
        %v1374 = vunpack.c.l.b16 %v510
        %v1375 = vunpack.c.l.b16 %v511
        %v1376 = vunpack.c.l.b16 %v512
        %v1377 = vunpack.c.l.b16 %v513
        %v1378 = vunpack.c.l.b16 %v514
        %v1379 = vunpack.c.l.b16 %v515
        %v1380 = vunpack.c.l.b16 %v516
        %v1381 = vunpack.c.l.b16 %v517
        %v1382 = vunpack.c.l.b16 %v518
        %v1383 = vunpack.c.l.b16 %v519
        %v1384 = vunpack.c.l.b16 %v520
        %v1385 = vunpack.c.l.b16 %v521
        %v1386 = vunpack.c.l.b16 %v522
        %v1387 = vunpack.c.l.b16 %v523
        %v1388 = vunpack.c.l.b16 %v524
        %v1389 = vunpack.c.l.b16 %v525
        %v1390 = vunpack.c.l.b16 %v526
        %v1391 = vunpack.c.l.b16 %v527
        %v1392 = vunpack.c.l.b16 %v528
        %v1393 = vunpack.c.l.b16 %v529
        %v1394 = vunpack.c.l.b16 %v530
        %v1395 = vunpack.c.l.b16 %v531
        %v1396 = vunpack.c.l.b16 %v532
        %v1397 = vunpack.c.l.b16 %v533
        %v1398 = vunpack.c.l.b16 %v534
        %v1399 = vunpack.c.l.b16 %v535
        %v1400 = vunpack.c.l.b16 %v536
        %v1401 = vunpack.c.l.b16 %v537
        %v1402 = vunpack.c.l.b16 %v538
        %v1403 = vunpack.c.l.b16 %v539
        %v1404 = vunpack.c.l.b16 %v540
        %v1405 = vunpack.c.l.b16 %v541
        %v1406 = vunpack.c.l.b16 %v542
        %v1407 = vunpack.c.l.b16 %v543
        %v1408 = vunpack.c.l.b16 %v544
        %v1409 = vunpack.c.l.b16 %v545
        %v1410 = vunpack.c.l.b16 %v546
        %v1411 = vunpack.c.l.b16 %v547
        %v1412 = vunpack.c.l.b16 %v548
        %v1413 = vunpack.c.l.b16 %v549
        %v1414 = vunpack.c.l.b16 %v550
        %v1415 = vunpack.c.l.b16 %v551
        %v1416 = vunpack.c.l.b16 %v552
        %v1417 = vunpack.c.l.b16 %v553
        %v1418 = vunpack.c.l.b16 %v554
        %v1419 = vunpack.c.l.b16 %v555
        %v1420 = vunpack.c.l.b16 %v556
        %v1421 = vunpack.c.l.b16 %v557
        %v1422 = vunpack.c.l.b16 %v558
        %v1423 = vunpack.c.l.b16 %v559
        %v1424 = vunpack.c.l.b16 %v560
        %v1425 = vunpack.c.l.b16 %v561
        %v1426 = vunpack.c.l.b16 %v562
        %v1427 = vunpack.c.l.b16 %v563
        %v1428 = vunpack.c.l.b16 %v564
        %v1429 = vunpack.c.l.b16 %v565
        %v1430 = vunpack.c.l.b16 %v566
        %v1431 = vunpack.c.l.b16 %v567
        %v1432 = vunpack.c.l.b16 %v568
        %v1433 = vunpack.c.l.b16 %v569
        %v1434 = vunpack.c.l.b16 %v570
        %v1435 = vunpack.c.l.b16 %v571
        %v1436 = vunpack.c.l.b16 %v572
        %v1437 = vunpack.c.l.b16 %v573
        %v1438 = vunpack.c.l.b16 %v574
        %v1439 = vunpack.c.l.b16 %v575
        %v1440 = vunpack.c.l.b16 %v576
        %v1441 = vunpack.c.l.b16 %v577
        %v1442 = vunpack.c.l.b16 %v578
        %v1443 = vunpack.c.l.b16 %v579
        %v1444 = vunpack.c.l.b16 %v580
        %v1445 = vunpack.c.l.b16 %v581
        %v1446 = vunpack.c.l.b16 %v582
        %v1447 = vunpack.c.l.b16 %v583
        %v1448 = vunpack.c.l.b16 %v584
        %v1449 = vunpack.c.l.b16 %v585
        %v1450 = vunpack.c.l.b16 %v586
        %v1451 = vunpack.c.l.b16 %v587
        %v1452 = vunpack.c.l.b16 %v588
        %v1453 = vunpack.c.l.b16 %v589
        %v1454 = vunpack.c.l.b16 %v590
        %v1455 = vunpack.c.l.b16 %v591
        %v1456 = vunpack.c.l.b16 %v592
        %v1457 = vunpack.c.l.b16 %v593
        %v1458 = vunpack.c.l.b16 %v594
        %v1459 = vunpack.c.l.b16 %v595
        %v1460 = vunpack.c.l.b16 %v596
        %v1461 = vunpack.c.l.b16 %v597
        %v1462 = vunpack.c.l.b16 %v598
        %v1463 = vunpack.c.l.b16 %v599
        %v1464 = vunpack.c.l.b16 %v600
        %v1465 = vunpack.c.l.b16 %v601
        %v1466 = vunpack.c.l.b16 %v602
        %v1467 = vunpack.c.l.b16 %v603
        %v1468 = vunpack.c.l.b16 %v604
        %v1469 = vunpack.c.l.b16 %v605
        %v1470 = vunpack.c.l.b16 %v606
        %v1471 = vunpack.c.l.b16 %v607
        %v1472 = vunpack.c.l.b16 %v608
        %v1473 = vunpack.c.l.b16 %v609
        %v1474 = vunpack.c.l.b16 %v610
        %v1475 = vunpack.c.l.b16 %v611
        %v1476 = vunpack.c.l.b16 %v612
        %v1477 = vunpack.c.l.b16 %v613
        %v1478 = vunpack.c.l.b16 %v614
        %v1479 = vunpack.c.l.b16 %v615
        %v1480 = vunpack.c.l.b16 %v616
        %v1481 = vunpack.c.l.b16 %v617
        %v1482 = vunpack.c.l.b16 %v618
        %v1483 = vunpack.c.l.b16 %v619
        %v1484 = vunpack.c.l.b16 %v620
        %v1485 = vunpack.c.l.b16 %v621
        %v1486 = vunpack.c.l.b16 %v622
        %v1487 = vunpack.c.l.b16 %v623
        %v1488 = vunpack.c.l.b16 %v624
        %v1489 = vunpack.c.l.b16 %v625
        %v1490 = vunpack.c.l.b16 %v626
        %v1491 = vunpack.c.l.b16 %v627
        %v1492 = vpack.c.b16 %v1373, %v1372
        %v1493 = vpack.c.b16 %v1375, %v1374
        %v1494 = vpack.c.b16 %v1377, %v1376
        %v1495 = vpack.c.b16 %v1379, %v1378
        %v1496 = vpack.c.b16 %v1381, %v1380
        %v1497 = vpack.c.b16 %v1383, %v1382
        %v1498 = vpack.c.b16 %v1385, %v1384
        %v1499 = vpack.c.b16 %v1387, %v1386
        %v1500 = vpack.c.b16 %v1389, %v1388
        %v1501 = vpack.c.b16 %v1391, %v1390
        %v1502 = vpack.c.b16 %v1393, %v1392
        %v1503 = vpack.c.b16 %v1395, %v1394
        %v1504 = vpack.c.b16 %v1397, %v1396
        %v1505 = vpack.c.b16 %v1399, %v1398
        %v1506 = vpack.c.b16 %v1401, %v1400
        %v1507 = vpack.c.b16 %v1403, %v1402
        %v1508 = vpack.c.b16 %v1405, %v1404
        %v1509 = vpack.c.b16 %v1407, %v1406
        %v1510 = vpack.c.b16 %v1409, %v1408
        %v1511 = vpack.c.b16 %v1411, %v1410
        %v1512 = vpack.c.b16 %v1413, %v1412
        %v1513 = vpack.c.b16 %v1415, %v1414
        %v1514 = vpack.c.b16 %v1417, %v1416
        %v1515 = vpack.c.b16 %v1419, %v1418
        %v1516 = vpack.c.b16 %v1421, %v1420
        %v1517 = vpack.c.b16 %v1423, %v1422
        %v1518 = vpack.c.b16 %v1425, %v1424
        %v1519 = vpack.c.b16 %v1427, %v1426
        %v1520 = vpack.c.b16 %v1429, %v1428
        %v1521 = vpack.c.b16 %v1431, %v1430
        %v1522 = vpack.c.b16 %v1433, %v1432
        %v1523 = vpack.c.b16 %v1435, %v1434
        %v1524 = vpack.c.b16 %v1437, %v1436
        %v1525 = vpack.c.b16 %v1439, %v1438
        %v1526 = vpack.c.b16 %v1441, %v1440
        %v1527 = vpack.c.b16 %v1443, %v1442
        %v1528 = vpack.c.b16 %v1445, %v1444
        %v1529 = vpack.c.b16 %v1447, %v1446
        %v1530 = vpack.c.b16 %v1449, %v1448
        %v1531 = vpack.c.b16 %v1451, %v1450
        %v1532 = vpack.c.b16 %v1453, %v1452
        %v1533 = vpack.c.b16 %v1455, %v1454
        %v1534 = vpack.c.b16 %v1457, %v1456
        %v1535 = vpack.c.b16 %v1459, %v1458
        %v1536 = vpack.c.b16 %v1461, %v1460
        %v1537 = vpack.c.b16 %v1463, %v1462
        %v1538 = vpack.c.b16 %v1465, %v1464
        %v1539 = vpack.c.b16 %v1467, %v1466
        %v1540 = vpack.c.b16 %v1469, %v1468
        %v1541 = vpack.c.b16 %v1471, %v1470
        %v1542 = vpack.c.b16 %v1473, %v1472
        %v1543 = vpack.c.b16 %v1475, %v1474
        %v1544 = vpack.c.b16 %v1477, %v1476
        %v1545 = vpack.c.b16 %v1479, %v1478
        %v1546 = vpack.c.b16 %v1481, %v1480
        %v1547 = vpack.c.b16 %v1483, %v1482
        %v1548 = vpack.c.b16 %v1485, %v1484
        %v1549 = vpack.c.b16 %v1487, %v1486
        %v1550 = vpack.c.b16 %v1489, %v1488
        %v1551 = vpack.c.b16 %v1491, %v1490
        %vm1612 = vcmask 523264
        %v1614 = vsel %vm1612, %v1019, 0
        %v1617 = vsel %vm1612, %v1027, 0
        %v1620 = vsel %vm1612, %v1035, 0
        %v1623 = vsel %vm1612, %v1043, 0
        %v1626 = vsel %vm1612, %v1051, 0
        %v1629 = vsel %vm1612, %v1059, 0
        %v1632 = vsel %vm1612, %v1067, 0
        %v1635 = vsel %vm1612, %v1075, 0
        %v1638 = vsel %vm1612, %v1083, 0
        %v1641 = vsel %vm1612, %v1091, 0
        %v1644 = vsel %vm1612, %v1099, 0
        %v1647 = vsel %vm1612, %v1107, 0
        %v1650 = vsel %vm1612, %v1115, 0
        %v1653 = vsel %vm1612, %v1123, 0
        %v1656 = vsel %vm1612, %v1131, 0
        %v1659 = vsel %vm1612, %v1139, 0
        %1661 = vmatprep.subr.bf16.mxu0 0
        %1662 = vmatpush1.bf16.msra.mxu0 %v1499
        %1663 = vmatprep.subr.bf16.mxu0 0
        %1664 = vmatpush1.bf16.msra.mxu0 %v1498
        %1665 = vmatprep.subr.bf16.mxu0 0
        %1666 = vmatpush1.bf16.msra.mxu0 %v1497
        %1667 = vmatprep.subr.bf16.mxu0 0
        %1668 = vmatpush1.bf16.msra.mxu0 %v1496
        %1669 = vmatprep.subr.bf16.mxu0 0
        %1670 = vmatpush1.bf16.msra.mxu0 %v1495
        %1671 = vmatprep.subr.bf16.mxu0 0
        %1672 = vmatpush1.bf16.msra.mxu0 %v1494
        %1673 = vmatprep.subr.bf16.mxu0 0
        %1674 = vmatpush1.bf16.msra.mxu0 %v1493
        %1675 = vmatprep.subr.bf16.mxu0 0
        %1676 = vmatpush1.bf16.msra.mxu0 %v1492
        %1677 = vmatprep.subr.bf16.mxu0 0
        %1678 = vmatpush2.bf16.msra.mxu0 %v1507
        %1679 = vmatprep.subr.bf16.mxu0 0
        %1680 = vmatpush2.bf16.msra.mxu0 %v1506
        %1681 = vmatprep.subr.bf16.mxu0 0
        %1682 = vmatpush2.bf16.msra.mxu0 %v1505
        %1683 = vmatprep.subr.bf16.mxu0 0
        %1684 = vmatpush2.bf16.msra.mxu0 %v1504
        %1685 = vmatprep.subr.bf16.mxu0 0
        %1686 = vmatpush2.bf16.msra.mxu0 %v1503
        %1687 = vmatprep.subr.bf16.mxu0 0
        %1688 = vmatpush2.bf16.msra.mxu0 %v1502
        %1689 = vmatprep.subr.bf16.mxu0 0
        %1690 = vmatpush2.bf16.msra.mxu0 %v1501
        %1691 = vmatprep.subr.bf16.mxu0 0
        %1692 = vmatpush2.bf16.msra.mxu0 %v1500
        %1693 = vmatprep.mubr.bf16.mxu0 %v1013
        %1694 = vmatmul.mubr.bf16.gmra.mxu0 %v1012
        %v1695 = vpop.f32.mrf.mxu0
        %v1696 = vadd.f32 0.0, %v1695
        %v1697 = vpop.f32.mrf.mxu0
        %v1698 = vpop.f32.mrf.mxu0
        %v1699 = vadd.f32 0.0, %v1698
        %v1700 = vpop.f32.mrf.mxu0
        %1701 = vmatprep.mubr.bf16.mxu0 %v1021
        %1702 = vmatmul.mubr.bf16.gmra.mxu0 %v1020
        %v1703 = vpop.f32.mrf.mxu0
        %v1704 = vadd.f32 0.0, %v1703
        %v1705 = vpop.f32.mrf.mxu0
        %v1706 = vpop.f32.mrf.mxu0
        %v1707 = vadd.f32 0.0, %v1706
        %v1708 = vpop.f32.mrf.mxu0
        %1709 = vmatprep.mubr.bf16.mxu0 %v1029
        %1710 = vmatmul.mubr.bf16.gmra.mxu0 %v1028
        %v1711 = vpop.f32.mrf.mxu0
        %v1712 = vadd.f32 0.0, %v1711
        %v1713 = vpop.f32.mrf.mxu0
        %v1714 = vpop.f32.mrf.mxu0
        %v1715 = vadd.f32 0.0, %v1714
        %v1716 = vpop.f32.mrf.mxu0
        %1717 = vmatprep.mubr.bf16.mxu0 %v1037
        %1718 = vmatmul.mubr.bf16.gmra.mxu0 %v1036
        %v1719 = vpop.f32.mrf.mxu0
        %v1720 = vadd.f32 0.0, %v1719
        %v1721 = vpop.f32.mrf.mxu0
        %v1722 = vpop.f32.mrf.mxu0
        %v1723 = vadd.f32 0.0, %v1722
        %v1724 = vpop.f32.mrf.mxu0
        %1725 = vmatprep.mubr.bf16.mxu0 %v1045
        %1726 = vmatmul.mubr.bf16.gmra.mxu0 %v1044
        %v1727 = vpop.f32.mrf.mxu0
        %v1728 = vadd.f32 0.0, %v1727
        %v1729 = vpop.f32.mrf.mxu0
        %v1730 = vpop.f32.mrf.mxu0
        %v1731 = vadd.f32 0.0, %v1730
        %v1732 = vpop.f32.mrf.mxu0
        %1733 = vmatprep.mubr.bf16.mxu0 %v1053
        %1734 = vmatmul.mubr.bf16.gmra.mxu0 %v1052
        %v1735 = vpop.f32.mrf.mxu0
        %v1736 = vadd.f32 0.0, %v1735
        %v1737 = vpop.f32.mrf.mxu0
        %v1738 = vpop.f32.mrf.mxu0
        %v1739 = vadd.f32 0.0, %v1738
        %v1740 = vpop.f32.mrf.mxu0
        %1741 = vmatprep.mubr.bf16.mxu0 %v1061
        %1742 = vmatmul.mubr.bf16.gmra.mxu0 %v1060
        %v1743 = vpop.f32.mrf.mxu0
        %v1744 = vadd.f32 0.0, %v1743
        %v1745 = vpop.f32.mrf.mxu0
        %v1746 = vpop.f32.mrf.mxu0
        %v1747 = vadd.f32 0.0, %v1746
        %v1748 = vpop.f32.mrf.mxu0
        %1749 = vmatprep.mubr.bf16.mxu0 %v1069
        %1750 = vmatmul.mubr.bf16.gmra.mxu0 %v1068
        %v1751 = vpop.f32.mrf.mxu0
        %v1752 = vadd.f32 0.0, %v1751
        %v1753 = vpop.f32.mrf.mxu0
        %v1754 = vpop.f32.mrf.mxu0
        %v1755 = vadd.f32 0.0, %v1754
        %v1756 = vpop.f32.mrf.mxu0
        %1757 = vmatprep.mubr.bf16.mxu0 %v1077
        %1758 = vmatmul.mubr.bf16.gmra.mxu0 %v1076
        %v1759 = vpop.f32.mrf.mxu0
        %v1760 = vadd.f32 0.0, %v1759
        %v1761 = vpop.f32.mrf.mxu0
        %v1762 = vpop.f32.mrf.mxu0
        %v1763 = vadd.f32 0.0, %v1762
        %v1764 = vpop.f32.mrf.mxu0
        %1765 = vmatprep.mubr.bf16.mxu0 %v1085
        %1766 = vmatmul.mubr.bf16.gmra.mxu0 %v1084
        %v1767 = vpop.f32.mrf.mxu0
        %v1768 = vadd.f32 0.0, %v1767
        %v1769 = vpop.f32.mrf.mxu0
        %v1770 = vpop.f32.mrf.mxu0
        %v1771 = vadd.f32 0.0, %v1770
        %v1772 = vpop.f32.mrf.mxu0
        %1773 = vmatprep.mubr.bf16.mxu0 %v1093
        %1774 = vmatmul.mubr.bf16.gmra.mxu0 %v1092
        %v1775 = vpop.f32.mrf.mxu0
        %v1776 = vadd.f32 0.0, %v1775
        %v1777 = vpop.f32.mrf.mxu0
        %v1778 = vpop.f32.mrf.mxu0
        %v1779 = vadd.f32 0.0, %v1778
        %v1780 = vpop.f32.mrf.mxu0
        %1781 = vmatprep.mubr.bf16.mxu0 %v1101
        %1782 = vmatmul.mubr.bf16.gmra.mxu0 %v1100
        %v1783 = vpop.f32.mrf.mxu0
        %v1784 = vadd.f32 0.0, %v1783
        %v1785 = vpop.f32.mrf.mxu0
        %v1786 = vpop.f32.mrf.mxu0
        %v1787 = vadd.f32 0.0, %v1786
        %v1788 = vpop.f32.mrf.mxu0
        %1789 = vmatprep.mubr.bf16.mxu0 %v1109
        %1790 = vmatmul.mubr.bf16.gmra.mxu0 %v1108
        %v1791 = vpop.f32.mrf.mxu0
        %v1792 = vadd.f32 0.0, %v1791
        %v1793 = vpop.f32.mrf.mxu0
        %v1794 = vpop.f32.mrf.mxu0
        %v1795 = vadd.f32 0.0, %v1794
        %v1796 = vpop.f32.mrf.mxu0
        %1797 = vmatprep.mubr.bf16.mxu0 %v1117
        %1798 = vmatmul.mubr.bf16.gmra.mxu0 %v1116
        %v1799 = vpop.f32.mrf.mxu0
        %v1800 = vadd.f32 0.0, %v1799
        %v1801 = vpop.f32.mrf.mxu0
        %v1802 = vpop.f32.mrf.mxu0
        %v1803 = vadd.f32 0.0, %v1802
        %v1804 = vpop.f32.mrf.mxu0
        %1805 = vmatprep.mubr.bf16.mxu0 %v1125
        %1806 = vmatmul.mubr.bf16.gmra.mxu0 %v1124
        %v1807 = vpop.f32.mrf.mxu0
        %v1808 = vadd.f32 0.0, %v1807
        %v1809 = vpop.f32.mrf.mxu0
        %v1810 = vpop.f32.mrf.mxu0
        %v1811 = vadd.f32 0.0, %v1810
        %v1812 = vpop.f32.mrf.mxu0
        %1813 = vmatprep.mubr.bf16.mxu0 %v1133
        %1814 = vmatmul.mubr.bf16.gmra.mxu0 %v1132
        %v1815 = vpop.f32.mrf.mxu0
        %v1816 = vadd.f32 0.0, %v1815
        %v1817 = vpop.f32.mrf.mxu0
        %v1818 = vpop.f32.mrf.mxu0
        %v1819 = vadd.f32 0.0, %v1818
        %v1820 = vpop.f32.mrf.mxu0
        %1821 = vdwg.mxu0
        %1822 = vmatprep.subr.bf16.mxu0 0
        %1823 = vmatpush1.bf16.msra.mxu0 %v1515
        %1824 = vmatprep.subr.bf16.mxu0 0
        %1825 = vmatpush1.bf16.msra.mxu0 %v1514
        %1826 = vmatprep.subr.bf16.mxu0 0
        %1827 = vmatpush1.bf16.msra.mxu0 %v1513
        %1828 = vmatprep.subr.bf16.mxu0 0
        %1829 = vmatpush1.bf16.msra.mxu0 %v1512
        %1830 = vmatprep.subr.bf16.mxu0 0
        %1831 = vmatpush1.bf16.msra.mxu0 %v1511
        %1832 = vmatprep.subr.bf16.mxu0 0
        %1833 = vmatpush1.bf16.msra.mxu0 %v1510
        %1834 = vmatprep.subr.bf16.mxu0 0
        %1835 = vmatpush1.bf16.msra.mxu0 %v1509
        %1836 = vmatprep.subr.bf16.mxu0 0
        %1837 = vmatpush1.bf16.msra.mxu0 %v1508
        %1838 = vmatprep.subr.bf16.mxu0 0
        %1839 = vmatpush2.bf16.msra.mxu0 %v1523
        %1840 = vmatprep.subr.bf16.mxu0 0
        %1841 = vmatpush2.bf16.msra.mxu0 %v1522
        %1842 = vmatprep.subr.bf16.mxu0 0
        %1843 = vmatpush2.bf16.msra.mxu0 %v1521
        %1844 = vmatprep.subr.bf16.mxu0 0
        %1845 = vmatpush2.bf16.msra.mxu0 %v1520
        %1846 = vmatprep.subr.bf16.mxu0 0
        %1847 = vmatpush2.bf16.msra.mxu0 %v1519
        %1848 = vmatprep.subr.bf16.mxu0 0
        %1849 = vmatpush2.bf16.msra.mxu0 %v1518
        %1850 = vmatprep.subr.bf16.mxu0 0
        %1851 = vmatpush2.bf16.msra.mxu0 %v1517
        %1852 = vmatprep.subr.bf16.mxu0 0
        %1853 = vmatpush2.bf16.msra.mxu0 %v1516
        %1854 = vmatprep.mubr.bf16.mxu0 %v1015
        %1855 = vmatmul.mubr.bf16.gmra.mxu0 %v1014
        %v1856 = vpop.f32.mrf.mxu0
        %v1857 = vadd.f32 %v1696, %v1856
        %v1858 = vpop.f32.mrf.mxu0
        %v1859 = vpop.f32.mrf.mxu0
        %v1860 = vadd.f32 %v1699, %v1859
        %v1861 = vpop.f32.mrf.mxu0
        %1862 = vmatprep.mubr.bf16.mxu0 %v1023
        %1863 = vmatmul.mubr.bf16.gmra.mxu0 %v1022
        %v1864 = vpop.f32.mrf.mxu0
        %v1865 = vadd.f32 %v1704, %v1864
        %v1866 = vpop.f32.mrf.mxu0
        %v1867 = vpop.f32.mrf.mxu0
        %v1868 = vadd.f32 %v1707, %v1867
        %v1869 = vpop.f32.mrf.mxu0
        %1870 = vmatprep.mubr.bf16.mxu0 %v1031
        %1871 = vmatmul.mubr.bf16.gmra.mxu0 %v1030
        %v1872 = vpop.f32.mrf.mxu0
        %v1873 = vadd.f32 %v1712, %v1872
        %v1874 = vpop.f32.mrf.mxu0
        %v1875 = vpop.f32.mrf.mxu0
        %v1876 = vadd.f32 %v1715, %v1875
        %v1877 = vpop.f32.mrf.mxu0
        %1878 = vmatprep.mubr.bf16.mxu0 %v1039
        %1879 = vmatmul.mubr.bf16.gmra.mxu0 %v1038
        %v1880 = vpop.f32.mrf.mxu0
        %v1881 = vadd.f32 %v1720, %v1880
        %v1882 = vpop.f32.mrf.mxu0
        %v1883 = vpop.f32.mrf.mxu0
        %v1884 = vadd.f32 %v1723, %v1883
        %v1885 = vpop.f32.mrf.mxu0
        %1886 = vmatprep.mubr.bf16.mxu0 %v1047
        %1887 = vmatmul.mubr.bf16.gmra.mxu0 %v1046
        %v1888 = vpop.f32.mrf.mxu0
        %v1889 = vadd.f32 %v1728, %v1888
        %v1890 = vpop.f32.mrf.mxu0
        %v1891 = vpop.f32.mrf.mxu0
        %v1892 = vadd.f32 %v1731, %v1891
        %v1893 = vpop.f32.mrf.mxu0
        %1894 = vmatprep.mubr.bf16.mxu0 %v1055
        %1895 = vmatmul.mubr.bf16.gmra.mxu0 %v1054
        %v1896 = vpop.f32.mrf.mxu0
        %v1897 = vadd.f32 %v1736, %v1896
        %v1898 = vpop.f32.mrf.mxu0
        %v1899 = vpop.f32.mrf.mxu0
        %v1900 = vadd.f32 %v1739, %v1899
        %v1901 = vpop.f32.mrf.mxu0
        %1902 = vmatprep.mubr.bf16.mxu0 %v1063
        %1903 = vmatmul.mubr.bf16.gmra.mxu0 %v1062
        %v1904 = vpop.f32.mrf.mxu0
        %v1905 = vadd.f32 %v1744, %v1904
        %v1906 = vpop.f32.mrf.mxu0
        %v1907 = vpop.f32.mrf.mxu0
        %v1908 = vadd.f32 %v1747, %v1907
        %v1909 = vpop.f32.mrf.mxu0
        %1910 = vmatprep.mubr.bf16.mxu0 %v1071
        %1911 = vmatmul.mubr.bf16.gmra.mxu0 %v1070
        %v1912 = vpop.f32.mrf.mxu0
        %v1913 = vadd.f32 %v1752, %v1912
        %v1914 = vpop.f32.mrf.mxu0
        %v1915 = vpop.f32.mrf.mxu0
        %v1916 = vadd.f32 %v1755, %v1915
        %v1917 = vpop.f32.mrf.mxu0
        %1918 = vmatprep.mubr.bf16.mxu0 %v1079
        %1919 = vmatmul.mubr.bf16.gmra.mxu0 %v1078
        %v1920 = vpop.f32.mrf.mxu0
        %v1921 = vadd.f32 %v1760, %v1920
        %v1922 = vpop.f32.mrf.mxu0
        %v1923 = vpop.f32.mrf.mxu0
        %v1924 = vadd.f32 %v1763, %v1923
        %v1925 = vpop.f32.mrf.mxu0
        %1926 = vmatprep.mubr.bf16.mxu0 %v1087
        %1927 = vmatmul.mubr.bf16.gmra.mxu0 %v1086
        %v1928 = vpop.f32.mrf.mxu0
        %v1929 = vadd.f32 %v1768, %v1928
        %v1930 = vpop.f32.mrf.mxu0
        %v1931 = vpop.f32.mrf.mxu0
        %v1932 = vadd.f32 %v1771, %v1931
        %v1933 = vpop.f32.mrf.mxu0
        %1934 = vmatprep.mubr.bf16.mxu0 %v1095
        %1935 = vmatmul.mubr.bf16.gmra.mxu0 %v1094
        %v1936 = vpop.f32.mrf.mxu0
        %v1937 = vadd.f32 %v1776, %v1936
        %v1938 = vpop.f32.mrf.mxu0
        %v1939 = vpop.f32.mrf.mxu0
        %v1940 = vadd.f32 %v1779, %v1939
        %v1941 = vpop.f32.mrf.mxu0
        %1942 = vmatprep.mubr.bf16.mxu0 %v1103
        %1943 = vmatmul.mubr.bf16.gmra.mxu0 %v1102
        %v1944 = vpop.f32.mrf.mxu0
        %v1945 = vadd.f32 %v1784, %v1944
        %v1946 = vpop.f32.mrf.mxu0
        %v1947 = vpop.f32.mrf.mxu0
        %v1948 = vadd.f32 %v1787, %v1947
        %v1949 = vpop.f32.mrf.mxu0
        %1950 = vmatprep.mubr.bf16.mxu0 %v1111
        %1951 = vmatmul.mubr.bf16.gmra.mxu0 %v1110
        %v1952 = vpop.f32.mrf.mxu0
        %v1953 = vadd.f32 %v1792, %v1952
        %v1954 = vpop.f32.mrf.mxu0
        %v1955 = vpop.f32.mrf.mxu0
        %v1956 = vadd.f32 %v1795, %v1955
        %v1957 = vpop.f32.mrf.mxu0
        %1958 = vmatprep.mubr.bf16.mxu0 %v1119
        %1959 = vmatmul.mubr.bf16.gmra.mxu0 %v1118
        %v1960 = vpop.f32.mrf.mxu0
        %v1961 = vadd.f32 %v1800, %v1960
        %v1962 = vpop.f32.mrf.mxu0
        %v1963 = vpop.f32.mrf.mxu0
        %v1964 = vadd.f32 %v1803, %v1963
        %v1965 = vpop.f32.mrf.mxu0
        %1966 = vmatprep.mubr.bf16.mxu0 %v1127
        %1967 = vmatmul.mubr.bf16.gmra.mxu0 %v1126
        %v1968 = vpop.f32.mrf.mxu0
        %v1969 = vadd.f32 %v1808, %v1968
        %v1970 = vpop.f32.mrf.mxu0
        %v1971 = vpop.f32.mrf.mxu0
        %v1972 = vadd.f32 %v1811, %v1971
        %v1973 = vpop.f32.mrf.mxu0
        %1974 = vmatprep.mubr.bf16.mxu0 %v1135
        %1975 = vmatmul.mubr.bf16.gmra.mxu0 %v1134
        %v1976 = vpop.f32.mrf.mxu0
        %v1977 = vadd.f32 %v1816, %v1976
        %v1978 = vpop.f32.mrf.mxu0
        %v1979 = vpop.f32.mrf.mxu0
        %v1980 = vadd.f32 %v1819, %v1979
        %v1981 = vpop.f32.mrf.mxu0
        %1982 = vdwg.mxu0
        %1983 = vmatprep.subr.bf16.mxu0 0
        %1984 = vmatpush1.bf16.msra.mxu0 %v1531
        %1985 = vmatprep.subr.bf16.mxu0 0
        %1986 = vmatpush1.bf16.msra.mxu0 %v1530
        %1987 = vmatprep.subr.bf16.mxu0 0
        %1988 = vmatpush1.bf16.msra.mxu0 %v1529
        %1989 = vmatprep.subr.bf16.mxu0 0
        %1990 = vmatpush1.bf16.msra.mxu0 %v1528
        %1991 = vmatprep.subr.bf16.mxu0 0
        %1992 = vmatpush1.bf16.msra.mxu0 %v1527
        %1993 = vmatprep.subr.bf16.mxu0 0
        %1994 = vmatpush1.bf16.msra.mxu0 %v1526
        %1995 = vmatprep.subr.bf16.mxu0 0
        %1996 = vmatpush1.bf16.msra.mxu0 %v1525
        %1997 = vmatprep.subr.bf16.mxu0 0
        %1998 = vmatpush1.bf16.msra.mxu0 %v1524
        %1999 = vmatprep.subr.bf16.mxu0 0
        %2000 = vmatpush2.bf16.msra.mxu0 %v1539
        %2001 = vmatprep.subr.bf16.mxu0 0
        %2002 = vmatpush2.bf16.msra.mxu0 %v1538
        %2003 = vmatprep.subr.bf16.mxu0 0
        %2004 = vmatpush2.bf16.msra.mxu0 %v1537
        %2005 = vmatprep.subr.bf16.mxu0 0
        %2006 = vmatpush2.bf16.msra.mxu0 %v1536
        %2007 = vmatprep.subr.bf16.mxu0 0
        %2008 = vmatpush2.bf16.msra.mxu0 %v1535
        %2009 = vmatprep.subr.bf16.mxu0 0
        %2010 = vmatpush2.bf16.msra.mxu0 %v1534
        %2011 = vmatprep.subr.bf16.mxu0 0
        %2012 = vmatpush2.bf16.msra.mxu0 %v1533
        %2013 = vmatprep.subr.bf16.mxu0 0
        %2014 = vmatpush2.bf16.msra.mxu0 %v1532
        %2015 = vmatprep.mubr.bf16.mxu0 %v1017
        %2016 = vmatmul.mubr.bf16.gmra.mxu0 %v1016
        %v2017 = vpop.f32.mrf.mxu0
        %v2018 = vadd.f32 %v1857, %v2017
        %v2019 = vpop.f32.mrf.mxu0
        %v2020 = vpop.f32.mrf.mxu0
        %v2021 = vadd.f32 %v1860, %v2020
        %v2022 = vpop.f32.mrf.mxu0
        %2023 = vmatprep.mubr.bf16.mxu0 %v1025
        %2024 = vmatmul.mubr.bf16.gmra.mxu0 %v1024
        %v2025 = vpop.f32.mrf.mxu0
        %v2026 = vadd.f32 %v1865, %v2025
        %v2027 = vpop.f32.mrf.mxu0
        %v2028 = vpop.f32.mrf.mxu0
        %v2029 = vadd.f32 %v1868, %v2028
        %v2030 = vpop.f32.mrf.mxu0
        %2031 = vmatprep.mubr.bf16.mxu0 %v1033
        %2032 = vmatmul.mubr.bf16.gmra.mxu0 %v1032
        %v2033 = vpop.f32.mrf.mxu0
        %v2034 = vadd.f32 %v1873, %v2033
        %v2035 = vpop.f32.mrf.mxu0
        %v2036 = vpop.f32.mrf.mxu0
        %v2037 = vadd.f32 %v1876, %v2036
        %v2038 = vpop.f32.mrf.mxu0
        %2039 = vmatprep.mubr.bf16.mxu0 %v1041
        %2040 = vmatmul.mubr.bf16.gmra.mxu0 %v1040
        %v2041 = vpop.f32.mrf.mxu0
        %v2042 = vadd.f32 %v1881, %v2041
        %v2043 = vpop.f32.mrf.mxu0
        %v2044 = vpop.f32.mrf.mxu0
        %v2045 = vadd.f32 %v1884, %v2044
        %v2046 = vpop.f32.mrf.mxu0
        %2047 = vmatprep.mubr.bf16.mxu0 %v1049
        %2048 = vmatmul.mubr.bf16.gmra.mxu0 %v1048
        %v2049 = vpop.f32.mrf.mxu0
        %v2050 = vadd.f32 %v1889, %v2049
        %v2051 = vpop.f32.mrf.mxu0
        %v2052 = vpop.f32.mrf.mxu0
        %v2053 = vadd.f32 %v1892, %v2052
        %v2054 = vpop.f32.mrf.mxu0
        %2055 = vmatprep.mubr.bf16.mxu0 %v1057
        %2056 = vmatmul.mubr.bf16.gmra.mxu0 %v1056
        %v2057 = vpop.f32.mrf.mxu0
        %v2058 = vadd.f32 %v1897, %v2057
        %v2059 = vpop.f32.mrf.mxu0
        %v2060 = vpop.f32.mrf.mxu0
        %v2061 = vadd.f32 %v1900, %v2060
        %v2062 = vpop.f32.mrf.mxu0
        %2063 = vmatprep.mubr.bf16.mxu0 %v1065
        %2064 = vmatmul.mubr.bf16.gmra.mxu0 %v1064
        %v2065 = vpop.f32.mrf.mxu0
        %v2066 = vadd.f32 %v1905, %v2065
        %v2067 = vpop.f32.mrf.mxu0
        %v2068 = vpop.f32.mrf.mxu0
        %v2069 = vadd.f32 %v1908, %v2068
        %v2070 = vpop.f32.mrf.mxu0
        %2071 = vmatprep.mubr.bf16.mxu0 %v1073
        %2072 = vmatmul.mubr.bf16.gmra.mxu0 %v1072
        %v2073 = vpop.f32.mrf.mxu0
        %v2074 = vadd.f32 %v1913, %v2073
        %v2075 = vpop.f32.mrf.mxu0
        %v2076 = vpop.f32.mrf.mxu0
        %v2077 = vadd.f32 %v1916, %v2076
        %v2078 = vpop.f32.mrf.mxu0
        %2079 = vmatprep.mubr.bf16.mxu0 %v1081
        %2080 = vmatmul.mubr.bf16.gmra.mxu0 %v1080
        %v2081 = vpop.f32.mrf.mxu0
        %v2082 = vadd.f32 %v1921, %v2081
        %v2083 = vpop.f32.mrf.mxu0
        %v2084 = vpop.f32.mrf.mxu0
        %v2085 = vadd.f32 %v1924, %v2084
        %v2086 = vpop.f32.mrf.mxu0
        %2087 = vmatprep.mubr.bf16.mxu0 %v1089
        %2088 = vmatmul.mubr.bf16.gmra.mxu0 %v1088
        %v2089 = vpop.f32.mrf.mxu0
        %v2090 = vadd.f32 %v1929, %v2089
        %v2091 = vpop.f32.mrf.mxu0
        %v2092 = vpop.f32.mrf.mxu0
        %v2093 = vadd.f32 %v1932, %v2092
        %v2094 = vpop.f32.mrf.mxu0
        %2095 = vmatprep.mubr.bf16.mxu0 %v1097
        %2096 = vmatmul.mubr.bf16.gmra.mxu0 %v1096
        %v2097 = vpop.f32.mrf.mxu0
        %v2098 = vadd.f32 %v1937, %v2097
        %v2099 = vpop.f32.mrf.mxu0
        %v2100 = vpop.f32.mrf.mxu0
        %v2101 = vadd.f32 %v1940, %v2100
        %v2102 = vpop.f32.mrf.mxu0
        %2103 = vmatprep.mubr.bf16.mxu0 %v1105
        %2104 = vmatmul.mubr.bf16.gmra.mxu0 %v1104
        %v2105 = vpop.f32.mrf.mxu0
        %v2106 = vadd.f32 %v1945, %v2105
        %v2107 = vpop.f32.mrf.mxu0
        %v2108 = vpop.f32.mrf.mxu0
        %v2109 = vadd.f32 %v1948, %v2108
        %v2110 = vpop.f32.mrf.mxu0
        %2111 = vmatprep.mubr.bf16.mxu0 %v1113
        %2112 = vmatmul.mubr.bf16.gmra.mxu0 %v1112
        %v2113 = vpop.f32.mrf.mxu0
        %v2114 = vadd.f32 %v1953, %v2113
        %v2115 = vpop.f32.mrf.mxu0
        %v2116 = vpop.f32.mrf.mxu0
        %v2117 = vadd.f32 %v1956, %v2116
        %v2118 = vpop.f32.mrf.mxu0
        %2119 = vmatprep.mubr.bf16.mxu0 %v1121
        %2120 = vmatmul.mubr.bf16.gmra.mxu0 %v1120
        %v2121 = vpop.f32.mrf.mxu0
        %v2122 = vadd.f32 %v1961, %v2121
        %v2123 = vpop.f32.mrf.mxu0
        %v2124 = vpop.f32.mrf.mxu0
        %v2125 = vadd.f32 %v1964, %v2124
        %v2126 = vpop.f32.mrf.mxu0
        %2127 = vmatprep.mubr.bf16.mxu0 %v1129
        %2128 = vmatmul.mubr.bf16.gmra.mxu0 %v1128
        %v2129 = vpop.f32.mrf.mxu0
        %v2130 = vadd.f32 %v1969, %v2129
        %v2131 = vpop.f32.mrf.mxu0
        %v2132 = vpop.f32.mrf.mxu0
        %v2133 = vadd.f32 %v1972, %v2132
        %v2134 = vpop.f32.mrf.mxu0
        %2135 = vmatprep.mubr.bf16.mxu0 %v1137
        %2136 = vmatmul.mubr.bf16.gmra.mxu0 %v1136
        %v2137 = vpop.f32.mrf.mxu0
        %v2138 = vadd.f32 %v1977, %v2137
        %v2139 = vpop.f32.mrf.mxu0
        %v2140 = vpop.f32.mrf.mxu0
        %v2141 = vadd.f32 %v1980, %v2140
        %v2142 = vpop.f32.mrf.mxu0
        %2143 = vdwg.mxu0
        %2144 = vmatprep.subr.bf16.mxu0 0
        %2145 = vmatpush1.bf16.msra.mxu0 %v1547
        %2146 = vmatprep.subr.bf16.mxu0 0
        %2147 = vmatpush1.bf16.msra.mxu0 %v1546
        %2148 = vmatprep.subr.bf16.mxu0 0
        %2149 = vmatpush1.bf16.msra.mxu0 %v1545
        %2150 = vmatprep.subr.bf16.mxu0 0
        %2151 = vmatpush1.bf16.msra.mxu0 %v1544
        %2152 = vmatprep.subr.bf16.mxu0 0
        %2153 = vmatpush1.bf16.msra.mxu0 %v1543
        %2154 = vmatprep.subr.bf16.mxu0 0
        %2155 = vmatpush1.bf16.msra.mxu0 %v1542
        %2156 = vmatprep.subr.bf16.mxu0 0
        %2157 = vmatpush1.bf16.msra.mxu0 %v1541
        %2158 = vmatprep.subr.bf16.mxu0 0
        %2159 = vmatpush1.bf16.msra.mxu0 %v1540
        %2160 = vmatprep.subr.bf16.mxu0 0
        %2161 = vmatpush2.bf16.msra.mxu0 0
        %2162 = vmatprep.subr.bf16.mxu0 0
        %2163 = vmatpush2.bf16.msra.mxu0 0
        %2164 = vmatprep.subr.bf16.mxu0 0
        %2165 = vmatpush2.bf16.msra.mxu0 0
        %2166 = vmatprep.subr.bf16.mxu0 0
        %2167 = vmatpush2.bf16.msra.mxu0 0
        %2168 = vmatprep.subr.bf16.mxu0 0
        %2169 = vmatpush2.bf16.msra.mxu0 %v1551
        %2170 = vmatprep.subr.bf16.mxu0 0
        %2171 = vmatpush2.bf16.msra.mxu0 %v1550
        %2172 = vmatprep.subr.bf16.mxu0 0
        %2173 = vmatpush2.bf16.msra.mxu0 %v1549
        %2174 = vmatprep.subr.bf16.mxu0 0
        %2175 = vmatpush2.bf16.msra.mxu0 %v1548
        %2176 = vmatprep.mubr.bf16.mxu0 %v1614
        %2177 = vmatmul.mubr.bf16.gmra.mxu0 %v1018
        %v2178 = vpop.f32.mrf.mxu0
        %v2179 = vadd.f32 %v2018, %v2178
        %v2180 = vpop.f32.mrf.mxu0
        %v2181 = vpop.f32.mrf.mxu0
        %v2182 = vadd.f32 %v2021, %v2181
        %v2183 = vpop.f32.mrf.mxu0
        %2184 = vmatprep.mubr.bf16.mxu0 %v1617
        %2185 = vmatmul.mubr.bf16.gmra.mxu0 %v1026
        %v2186 = vpop.f32.mrf.mxu0
        %v2187 = vadd.f32 %v2026, %v2186
        %v2188 = vpop.f32.mrf.mxu0
        %v2189 = vpop.f32.mrf.mxu0
        %v2190 = vadd.f32 %v2029, %v2189
        %v2191 = vpop.f32.mrf.mxu0
        %2192 = vmatprep.mubr.bf16.mxu0 %v1620
        %2193 = vmatmul.mubr.bf16.gmra.mxu0 %v1034
        %v2194 = vpop.f32.mrf.mxu0
        %v2195 = vadd.f32 %v2034, %v2194
        %v2196 = vpop.f32.mrf.mxu0
        %v2197 = vpop.f32.mrf.mxu0
        %v2198 = vadd.f32 %v2037, %v2197
        %v2199 = vpop.f32.mrf.mxu0
        %2200 = vmatprep.mubr.bf16.mxu0 %v1623
        %2201 = vmatmul.mubr.bf16.gmra.mxu0 %v1042
        %v2202 = vpop.f32.mrf.mxu0
        %v2203 = vadd.f32 %v2042, %v2202
        %v2204 = vpop.f32.mrf.mxu0
        %v2205 = vpop.f32.mrf.mxu0
        %v2206 = vadd.f32 %v2045, %v2205
        %v2207 = vpop.f32.mrf.mxu0
        %2208 = vmatprep.mubr.bf16.mxu0 %v1626
        %2209 = vmatmul.mubr.bf16.gmra.mxu0 %v1050
        %v2210 = vpop.f32.mrf.mxu0
        %v2211 = vadd.f32 %v2050, %v2210
        %v2212 = vpop.f32.mrf.mxu0
        %v2213 = vpop.f32.mrf.mxu0
        %v2214 = vadd.f32 %v2053, %v2213
        %v2215 = vpop.f32.mrf.mxu0
        %2216 = vmatprep.mubr.bf16.mxu0 %v1629
        %2217 = vmatmul.mubr.bf16.gmra.mxu0 %v1058
        %v2218 = vpop.f32.mrf.mxu0
        %v2219 = vadd.f32 %v2058, %v2218
        %v2220 = vpop.f32.mrf.mxu0
        %v2221 = vpop.f32.mrf.mxu0
        %v2222 = vadd.f32 %v2061, %v2221
        %v2223 = vpop.f32.mrf.mxu0
        %2224 = vmatprep.mubr.bf16.mxu0 %v1632
        %2225 = vmatmul.mubr.bf16.gmra.mxu0 %v1066
        %v2226 = vpop.f32.mrf.mxu0
        %v2227 = vadd.f32 %v2066, %v2226
        %v2228 = vpop.f32.mrf.mxu0
        %v2229 = vpop.f32.mrf.mxu0
        %v2230 = vadd.f32 %v2069, %v2229
        %v2231 = vpop.f32.mrf.mxu0
        %2232 = vmatprep.mubr.bf16.mxu0 %v1635
        %2233 = vmatmul.mubr.bf16.gmra.mxu0 %v1074
        %v2234 = vpop.f32.mrf.mxu0
        %v2235 = vadd.f32 %v2074, %v2234
        %v2236 = vpop.f32.mrf.mxu0
        %v2237 = vpop.f32.mrf.mxu0
        %v2238 = vadd.f32 %v2077, %v2237
        %v2239 = vpop.f32.mrf.mxu0
        %2240 = vmatprep.mubr.bf16.mxu0 %v1638
        %2241 = vmatmul.mubr.bf16.gmra.mxu0 %v1082
        %v2242 = vpop.f32.mrf.mxu0
        %v2243 = vadd.f32 %v2082, %v2242
        %v2244 = vpop.f32.mrf.mxu0
        %v2245 = vpop.f32.mrf.mxu0
        %v2246 = vadd.f32 %v2085, %v2245
        %v2247 = vpop.f32.mrf.mxu0
        %2248 = vmatprep.mubr.bf16.mxu0 %v1641
        %2249 = vmatmul.mubr.bf16.gmra.mxu0 %v1090
        %v2250 = vpop.f32.mrf.mxu0
        %v2251 = vadd.f32 %v2090, %v2250
        %v2252 = vpop.f32.mrf.mxu0
        %v2253 = vpop.f32.mrf.mxu0
        %v2254 = vadd.f32 %v2093, %v2253
        %v2255 = vpop.f32.mrf.mxu0
        %2256 = vmatprep.mubr.bf16.mxu0 %v1644
        %2257 = vmatmul.mubr.bf16.gmra.mxu0 %v1098
        %v2258 = vpop.f32.mrf.mxu0
        %v2259 = vadd.f32 %v2098, %v2258
        %v2260 = vpop.f32.mrf.mxu0
        %v2261 = vpop.f32.mrf.mxu0
        %v2262 = vadd.f32 %v2101, %v2261
        %v2263 = vpop.f32.mrf.mxu0
        %2264 = vmatprep.mubr.bf16.mxu0 %v1647
        %2265 = vmatmul.mubr.bf16.gmra.mxu0 %v1106
        %v2266 = vpop.f32.mrf.mxu0
        %v2267 = vadd.f32 %v2106, %v2266
        %v2268 = vpop.f32.mrf.mxu0
        %v2269 = vpop.f32.mrf.mxu0
        %v2270 = vadd.f32 %v2109, %v2269
        %v2271 = vpop.f32.mrf.mxu0
        %2272 = vmatprep.mubr.bf16.mxu0 %v1650
        %2273 = vmatmul.mubr.bf16.gmra.mxu0 %v1114
        %v2274 = vpop.f32.mrf.mxu0
        %v2275 = vadd.f32 %v2114, %v2274
        %v2276 = vpop.f32.mrf.mxu0
        %v2277 = vpop.f32.mrf.mxu0
        %v2278 = vadd.f32 %v2117, %v2277
        %v2279 = vpop.f32.mrf.mxu0
        %2280 = vmatprep.mubr.bf16.mxu0 %v1653
        %2281 = vmatmul.mubr.bf16.gmra.mxu0 %v1122
        %v2282 = vpop.f32.mrf.mxu0
        %v2283 = vadd.f32 %v2122, %v2282
        %v2284 = vpop.f32.mrf.mxu0
        %v2285 = vpop.f32.mrf.mxu0
        %v2286 = vadd.f32 %v2125, %v2285
        %v2287 = vpop.f32.mrf.mxu0
        %2288 = vmatprep.mubr.bf16.mxu0 %v1656
        %2289 = vmatmul.mubr.bf16.gmra.mxu0 %v1130
        %v2290 = vpop.f32.mrf.mxu0
        %v2291 = vadd.f32 %v2130, %v2290
        %v2292 = vpop.f32.mrf.mxu0
        %v2293 = vpop.f32.mrf.mxu0
        %v2294 = vadd.f32 %v2133, %v2293
        %v2295 = vpop.f32.mrf.mxu0
        %2296 = vmatprep.mubr.bf16.mxu0 %v1659
        %2297 = vmatmul.mubr.bf16.gmra.mxu0 %v1138
        %v2298 = vpop.f32.mrf.mxu0
        %v2299 = vadd.f32 %v2138, %v2298
        %v2300 = vpop.f32.mrf.mxu0
        %v2301 = vpop.f32.mrf.mxu0
        %v2302 = vadd.f32 %v2141, %v2301
        %v2303 = vpop.f32.mrf.mxu0
        %2304 = vdwg.mxu0
        %v2313 = vunpack.c.l.b16 %v251
        %v2314 = vunpack.c.h.b16 %v251
        %v2315 = vunpack.c.l.b16 %v252
        %v2316 = vunpack.c.h.b16 %v252
        %v2317 = vunpack.c.l.b16 %v253
        %v2318 = vunpack.c.h.b16 %v253
        %v2319 = vunpack.c.l.b16 %v254
        %v2320 = vunpack.c.h.b16 %v254
        %v2321 = vunpack.c.l.b16 %v255
        %v2322 = vunpack.c.h.b16 %v255
        %v2323 = vunpack.c.l.b16 %v256
        %v2324 = vunpack.c.h.b16 %v256
        %v2325 = vunpack.c.l.b16 %v257
        %v2326 = vunpack.c.h.b16 %v257
        %v2327 = vunpack.c.l.b16 %v258
        %v2328 = vunpack.c.h.b16 %v258
        %v2329 = vpack.c.b16 %v2321, %v2313
        %v2330 = vpack.c.b16 %v2322, %v2314
        %v2331 = vpack.c.b16 %v2323, %v2315
        %v2332 = vpack.c.b16 %v2324, %v2316
        %v2333 = vpack.c.b16 %v2325, %v2317
        %v2334 = vpack.c.b16 %v2326, %v2318
        %v2335 = vpack.c.b16 %v2327, %v2319
        %v2336 = vpack.c.b16 %v2328, %v2320
        %v2464 = vunpack.c.l.b16 %v379
        %v2465 = vunpack.c.l.b16 %v380
        %v2466 = vunpack.c.l.b16 %v381
        %v2467 = vunpack.c.l.b16 %v382
        %v2468 = vunpack.c.l.b16 %v383
        %v2469 = vunpack.c.l.b16 %v384
        %v2470 = vunpack.c.l.b16 %v385
        %v2471 = vunpack.c.l.b16 %v386
        %v2472 = vunpack.c.l.b16 %v387
        %v2473 = vunpack.c.l.b16 %v388
        %v2474 = vunpack.c.l.b16 %v389
        %v2475 = vunpack.c.l.b16 %v390
        %v2476 = vunpack.c.l.b16 %v391
        %v2477 = vunpack.c.l.b16 %v392
        %v2478 = vunpack.c.l.b16 %v393
        %v2479 = vunpack.c.l.b16 %v394
        %v2480 = vunpack.c.l.b16 %v395
        %v2481 = vunpack.c.l.b16 %v396
        %v2482 = vunpack.c.l.b16 %v397
        %v2483 = vunpack.c.l.b16 %v398
        %v2484 = vunpack.c.l.b16 %v399
        %v2485 = vunpack.c.l.b16 %v400
        %v2486 = vunpack.c.l.b16 %v401
        %v2487 = vunpack.c.l.b16 %v402
        %v2488 = vunpack.c.l.b16 %v403
        %v2489 = vunpack.c.l.b16 %v404
        %v2490 = vunpack.c.l.b16 %v405
        %v2491 = vunpack.c.l.b16 %v406
        %v2492 = vunpack.c.l.b16 %v407
        %v2493 = vunpack.c.l.b16 %v408
        %v2494 = vunpack.c.l.b16 %v409
        %v2495 = vunpack.c.l.b16 %v410
        %v2496 = vunpack.c.l.b16 %v411
        %v2497 = vunpack.c.l.b16 %v412
        %v2498 = vunpack.c.l.b16 %v413
        %v2499 = vunpack.c.l.b16 %v414
        %v2500 = vunpack.c.l.b16 %v415
        %v2501 = vunpack.c.l.b16 %v416
        %v2502 = vunpack.c.l.b16 %v417
        %v2503 = vunpack.c.l.b16 %v418
        %v2504 = vunpack.c.l.b16 %v419
        %v2505 = vunpack.c.l.b16 %v420
        %v2506 = vunpack.c.l.b16 %v421
        %v2507 = vunpack.c.l.b16 %v422
        %v2508 = vunpack.c.l.b16 %v423
        %v2509 = vunpack.c.l.b16 %v424
        %v2510 = vunpack.c.l.b16 %v425
        %v2511 = vunpack.c.l.b16 %v426
        %v2512 = vunpack.c.l.b16 %v427
        %v2513 = vunpack.c.l.b16 %v428
        %v2514 = vunpack.c.l.b16 %v429
        %v2515 = vunpack.c.l.b16 %v430
        %v2516 = vunpack.c.l.b16 %v431
        %v2517 = vunpack.c.l.b16 %v432
        %v2518 = vunpack.c.l.b16 %v433
        %v2519 = vunpack.c.l.b16 %v434
        %v2520 = vunpack.c.l.b16 %v435
        %v2521 = vunpack.c.l.b16 %v436
        %v2522 = vunpack.c.l.b16 %v437
        %v2523 = vunpack.c.l.b16 %v438
        %v2524 = vunpack.c.l.b16 %v439
        %v2525 = vunpack.c.l.b16 %v440
        %v2526 = vunpack.c.l.b16 %v441
        %v2527 = vunpack.c.l.b16 %v442
        %v2528 = vunpack.c.l.b16 %v443
        %v2529 = vunpack.c.l.b16 %v444
        %v2530 = vunpack.c.l.b16 %v445
        %v2531 = vunpack.c.l.b16 %v446
        %v2532 = vunpack.c.l.b16 %v447
        %v2533 = vunpack.c.l.b16 %v448
        %v2534 = vunpack.c.l.b16 %v449
        %v2535 = vunpack.c.l.b16 %v450
        %v2536 = vunpack.c.l.b16 %v451
        %v2537 = vunpack.c.l.b16 %v452
        %v2538 = vunpack.c.l.b16 %v453
        %v2539 = vunpack.c.l.b16 %v454
        %v2540 = vunpack.c.l.b16 %v455
        %v2541 = vunpack.c.l.b16 %v456
        %v2542 = vunpack.c.l.b16 %v457
        %v2543 = vunpack.c.l.b16 %v458
        %v2544 = vunpack.c.l.b16 %v459
        %v2545 = vunpack.c.l.b16 %v460
        %v2546 = vunpack.c.l.b16 %v461
        %v2547 = vunpack.c.l.b16 %v462
        %v2548 = vunpack.c.l.b16 %v463
        %v2549 = vunpack.c.l.b16 %v464
        %v2550 = vunpack.c.l.b16 %v465
        %v2551 = vunpack.c.l.b16 %v466
        %v2552 = vunpack.c.l.b16 %v467
        %v2553 = vunpack.c.l.b16 %v468
        %v2554 = vunpack.c.l.b16 %v469
        %v2555 = vunpack.c.l.b16 %v470
        %v2556 = vunpack.c.l.b16 %v471
        %v2557 = vunpack.c.l.b16 %v472
        %v2558 = vunpack.c.l.b16 %v473
        %v2559 = vunpack.c.l.b16 %v474
        %v2560 = vunpack.c.l.b16 %v475
        %v2561 = vunpack.c.l.b16 %v476
        %v2562 = vunpack.c.l.b16 %v477
        %v2563 = vunpack.c.l.b16 %v478
        %v2564 = vunpack.c.l.b16 %v479
        %v2565 = vunpack.c.l.b16 %v480
        %v2566 = vunpack.c.l.b16 %v481
        %v2567 = vunpack.c.l.b16 %v482
        %v2568 = vunpack.c.l.b16 %v483
        %v2569 = vunpack.c.l.b16 %v484
        %v2570 = vunpack.c.l.b16 %v485
        %v2571 = vunpack.c.l.b16 %v486
        %v2572 = vunpack.c.l.b16 %v487
        %v2573 = vunpack.c.l.b16 %v488
        %v2574 = vunpack.c.l.b16 %v489
        %v2575 = vunpack.c.l.b16 %v490
        %v2576 = vunpack.c.l.b16 %v491
        %v2577 = vunpack.c.l.b16 %v492
        %v2578 = vunpack.c.l.b16 %v493
        %v2579 = vunpack.c.l.b16 %v494
        %v2580 = vunpack.c.l.b16 %v495
        %v2581 = vunpack.c.l.b16 %v496
        %v2582 = vunpack.c.l.b16 %v497
        %v2583 = vunpack.c.l.b16 %v498
        %v2584 = vpack.c.b16 %v2465, %v2464
        %v2585 = vpack.c.b16 %v2467, %v2466
        %v2586 = vpack.c.b16 %v2469, %v2468
        %v2587 = vpack.c.b16 %v2471, %v2470
        %v2588 = vpack.c.b16 %v2473, %v2472
        %v2589 = vpack.c.b16 %v2475, %v2474
        %v2590 = vpack.c.b16 %v2477, %v2476
        %v2591 = vpack.c.b16 %v2479, %v2478
        %v2592 = vpack.c.b16 %v2481, %v2480
        %v2593 = vpack.c.b16 %v2483, %v2482
        %v2594 = vpack.c.b16 %v2485, %v2484
        %v2595 = vpack.c.b16 %v2487, %v2486
        %v2596 = vpack.c.b16 %v2489, %v2488
        %v2597 = vpack.c.b16 %v2491, %v2490
        %v2598 = vpack.c.b16 %v2493, %v2492
        %v2599 = vpack.c.b16 %v2495, %v2494
        %v2600 = vpack.c.b16 %v2497, %v2496
        %v2601 = vpack.c.b16 %v2499, %v2498
        %v2602 = vpack.c.b16 %v2501, %v2500
        %v2603 = vpack.c.b16 %v2503, %v2502
        %v2604 = vpack.c.b16 %v2505, %v2504
        %v2605 = vpack.c.b16 %v2507, %v2506
        %v2606 = vpack.c.b16 %v2509, %v2508
        %v2607 = vpack.c.b16 %v2511, %v2510
        %v2608 = vpack.c.b16 %v2513, %v2512
        %v2609 = vpack.c.b16 %v2515, %v2514
        %v2610 = vpack.c.b16 %v2517, %v2516
        %v2611 = vpack.c.b16 %v2519, %v2518
        %v2612 = vpack.c.b16 %v2521, %v2520
        %v2613 = vpack.c.b16 %v2523, %v2522
        %v2614 = vpack.c.b16 %v2525, %v2524
        %v2615 = vpack.c.b16 %v2527, %v2526
        %v2616 = vpack.c.b16 %v2529, %v2528
        %v2617 = vpack.c.b16 %v2531, %v2530
        %v2618 = vpack.c.b16 %v2533, %v2532
        %v2619 = vpack.c.b16 %v2535, %v2534
        %v2620 = vpack.c.b16 %v2537, %v2536
        %v2621 = vpack.c.b16 %v2539, %v2538
        %v2622 = vpack.c.b16 %v2541, %v2540
        %v2623 = vpack.c.b16 %v2543, %v2542
        %v2624 = vpack.c.b16 %v2545, %v2544
        %v2625 = vpack.c.b16 %v2547, %v2546
        %v2626 = vpack.c.b16 %v2549, %v2548
        %v2627 = vpack.c.b16 %v2551, %v2550
        %v2628 = vpack.c.b16 %v2553, %v2552
        %v2629 = vpack.c.b16 %v2555, %v2554
        %v2630 = vpack.c.b16 %v2557, %v2556
        %v2631 = vpack.c.b16 %v2559, %v2558
        %v2632 = vpack.c.b16 %v2561, %v2560
        %v2633 = vpack.c.b16 %v2563, %v2562
        %v2634 = vpack.c.b16 %v2565, %v2564
        %v2635 = vpack.c.b16 %v2567, %v2566
        %v2636 = vpack.c.b16 %v2569, %v2568
        %v2637 = vpack.c.b16 %v2571, %v2570
        %v2638 = vpack.c.b16 %v2573, %v2572
        %v2639 = vpack.c.b16 %v2575, %v2574
        %v2640 = vpack.c.b16 %v2577, %v2576
        %v2641 = vpack.c.b16 %v2579, %v2578
        %v2642 = vpack.c.b16 %v2581, %v2580
        %v2643 = vpack.c.b16 %v2583, %v2582
        %v2705 = vsel %vm1612, %v2336, 0
        %2707 = vmatprep.subr.bf16.mxu0 0
        %2708 = vmatpush1.bf16.msra.mxu0 %v2591
        %2709 = vmatprep.subr.bf16.mxu0 0
        %2710 = vmatpush1.bf16.msra.mxu0 %v2590
        %2711 = vmatprep.subr.bf16.mxu0 0
        %2712 = vmatpush1.bf16.msra.mxu0 %v2589
        %2713 = vmatprep.subr.bf16.mxu0 0
        %2714 = vmatpush1.bf16.msra.mxu0 %v2588
        %2715 = vmatprep.subr.bf16.mxu0 0
        %2716 = vmatpush1.bf16.msra.mxu0 %v2587
        %2717 = vmatprep.subr.bf16.mxu0 0
        %2718 = vmatpush1.bf16.msra.mxu0 %v2586
        %2719 = vmatprep.subr.bf16.mxu0 0
        %2720 = vmatpush1.bf16.msra.mxu0 %v2585
        %2721 = vmatprep.subr.bf16.mxu0 0
        %2722 = vmatpush1.bf16.msra.mxu0 %v2584
        %2723 = vmatprep.subr.bf16.mxu0 0
        %2724 = vmatpush2.bf16.msra.mxu0 %v2599
        %2725 = vmatprep.subr.bf16.mxu0 0
        %2726 = vmatpush2.bf16.msra.mxu0 %v2598
        %2727 = vmatprep.subr.bf16.mxu0 0
        %2728 = vmatpush2.bf16.msra.mxu0 %v2597
        %2729 = vmatprep.subr.bf16.mxu0 0
        %2730 = vmatpush2.bf16.msra.mxu0 %v2596
        %2731 = vmatprep.subr.bf16.mxu0 0
        %2732 = vmatpush2.bf16.msra.mxu0 %v2595
        %2733 = vmatprep.subr.bf16.mxu0 0
        %2734 = vmatpush2.bf16.msra.mxu0 %v2594
        %2735 = vmatprep.subr.bf16.mxu0 0
        %2736 = vmatpush2.bf16.msra.mxu0 %v2593
        %2737 = vmatprep.subr.bf16.mxu0 0
        %2738 = vmatpush2.bf16.msra.mxu0 %v2592
        %2739 = vmatprep.mubr.bf16.mxu0 %v2330
        %2740 = vmatmul.mubr.bf16.gmra.mxu0 %v2329
        %v2741 = vpop.f32.mrf.mxu0
        %v2742 = vadd.f32 %v2179, %v2741
        %v2743 = vpop.f32.mrf.mxu0
        %v2744 = vpop.f32.mrf.mxu0
        %v2745 = vadd.f32 %v2182, %v2744
        %v2746 = vpop.f32.mrf.mxu0
        %2747 = vmatprep.mubr.bf16.mxu0 %v1013
        %2748 = vmatmul.mubr.bf16.gmra.mxu0 %v1012
        %v2749 = vpop.f32.mrf.mxu0
        %v2750 = vadd.f32 %v2187, %v2749
        %v2751 = vpop.f32.mrf.mxu0
        %v2752 = vpop.f32.mrf.mxu0
        %v2753 = vadd.f32 %v2190, %v2752
        %v2754 = vpop.f32.mrf.mxu0
        %2755 = vmatprep.mubr.bf16.mxu0 %v1021
        %2756 = vmatmul.mubr.bf16.gmra.mxu0 %v1020
        %v2757 = vpop.f32.mrf.mxu0
        %v2758 = vadd.f32 %v2195, %v2757
        %v2759 = vpop.f32.mrf.mxu0
        %v2760 = vpop.f32.mrf.mxu0
        %v2761 = vadd.f32 %v2198, %v2760
        %v2762 = vpop.f32.mrf.mxu0
        %2763 = vmatprep.mubr.bf16.mxu0 %v1029
        %2764 = vmatmul.mubr.bf16.gmra.mxu0 %v1028
        %v2765 = vpop.f32.mrf.mxu0
        %v2766 = vadd.f32 %v2203, %v2765
        %v2767 = vpop.f32.mrf.mxu0
        %v2768 = vpop.f32.mrf.mxu0
        %v2769 = vadd.f32 %v2206, %v2768
        %v2770 = vpop.f32.mrf.mxu0
        %2771 = vmatprep.mubr.bf16.mxu0 %v1037
        %2772 = vmatmul.mubr.bf16.gmra.mxu0 %v1036
        %v2773 = vpop.f32.mrf.mxu0
        %v2774 = vadd.f32 %v2211, %v2773
        %v2775 = vpop.f32.mrf.mxu0
        %v2776 = vpop.f32.mrf.mxu0
        %v2777 = vadd.f32 %v2214, %v2776
        %v2778 = vpop.f32.mrf.mxu0
        %2779 = vmatprep.mubr.bf16.mxu0 %v1045
        %2780 = vmatmul.mubr.bf16.gmra.mxu0 %v1044
        %v2781 = vpop.f32.mrf.mxu0
        %v2782 = vadd.f32 %v2219, %v2781
        %v2783 = vpop.f32.mrf.mxu0
        %v2784 = vpop.f32.mrf.mxu0
        %v2785 = vadd.f32 %v2222, %v2784
        %v2786 = vpop.f32.mrf.mxu0
        %2787 = vmatprep.mubr.bf16.mxu0 %v1053
        %2788 = vmatmul.mubr.bf16.gmra.mxu0 %v1052
        %v2789 = vpop.f32.mrf.mxu0
        %v2790 = vadd.f32 %v2227, %v2789
        %v2791 = vpop.f32.mrf.mxu0
        %v2792 = vpop.f32.mrf.mxu0
        %v2793 = vadd.f32 %v2230, %v2792
        %v2794 = vpop.f32.mrf.mxu0
        %2795 = vmatprep.mubr.bf16.mxu0 %v1061
        %2796 = vmatmul.mubr.bf16.gmra.mxu0 %v1060
        %v2797 = vpop.f32.mrf.mxu0
        %v2798 = vadd.f32 %v2235, %v2797
        %v2799 = vpop.f32.mrf.mxu0
        %v2800 = vpop.f32.mrf.mxu0
        %v2801 = vadd.f32 %v2238, %v2800
        %v2802 = vpop.f32.mrf.mxu0
        %2803 = vmatprep.mubr.bf16.mxu0 %v1069
        %2804 = vmatmul.mubr.bf16.gmra.mxu0 %v1068
        %v2805 = vpop.f32.mrf.mxu0
        %v2806 = vadd.f32 %v2243, %v2805
        %v2807 = vpop.f32.mrf.mxu0
        %v2808 = vpop.f32.mrf.mxu0
        %v2809 = vadd.f32 %v2246, %v2808
        %v2810 = vpop.f32.mrf.mxu0
        %2811 = vmatprep.mubr.bf16.mxu0 %v1077
        %2812 = vmatmul.mubr.bf16.gmra.mxu0 %v1076
        %v2813 = vpop.f32.mrf.mxu0
        %v2814 = vadd.f32 %v2251, %v2813
        %v2815 = vpop.f32.mrf.mxu0
        %v2816 = vpop.f32.mrf.mxu0
        %v2817 = vadd.f32 %v2254, %v2816
        %v2818 = vpop.f32.mrf.mxu0
        %2819 = vmatprep.mubr.bf16.mxu0 %v1085
        %2820 = vmatmul.mubr.bf16.gmra.mxu0 %v1084
        %v2821 = vpop.f32.mrf.mxu0
        %v2822 = vadd.f32 %v2259, %v2821
        %v2823 = vpop.f32.mrf.mxu0
        %v2824 = vpop.f32.mrf.mxu0
        %v2825 = vadd.f32 %v2262, %v2824
        %v2826 = vpop.f32.mrf.mxu0
        %2827 = vmatprep.mubr.bf16.mxu0 %v1093
        %2828 = vmatmul.mubr.bf16.gmra.mxu0 %v1092
        %v2829 = vpop.f32.mrf.mxu0
        %v2830 = vadd.f32 %v2267, %v2829
        %v2831 = vpop.f32.mrf.mxu0
        %v2832 = vpop.f32.mrf.mxu0
        %v2833 = vadd.f32 %v2270, %v2832
        %v2834 = vpop.f32.mrf.mxu0
        %2835 = vmatprep.mubr.bf16.mxu0 %v1101
        %2836 = vmatmul.mubr.bf16.gmra.mxu0 %v1100
        %v2837 = vpop.f32.mrf.mxu0
        %v2838 = vadd.f32 %v2275, %v2837
        %v2839 = vpop.f32.mrf.mxu0
        %v2840 = vpop.f32.mrf.mxu0
        %v2841 = vadd.f32 %v2278, %v2840
        %v2842 = vpop.f32.mrf.mxu0
        %2843 = vmatprep.mubr.bf16.mxu0 %v1109
        %2844 = vmatmul.mubr.bf16.gmra.mxu0 %v1108
        %v2845 = vpop.f32.mrf.mxu0
        %v2846 = vadd.f32 %v2283, %v2845
        %v2847 = vpop.f32.mrf.mxu0
        %v2848 = vpop.f32.mrf.mxu0
        %v2849 = vadd.f32 %v2286, %v2848
        %v2850 = vpop.f32.mrf.mxu0
        %2851 = vmatprep.mubr.bf16.mxu0 %v1117
        %2852 = vmatmul.mubr.bf16.gmra.mxu0 %v1116
        %v2853 = vpop.f32.mrf.mxu0
        %v2854 = vadd.f32 %v2291, %v2853
        %v2855 = vpop.f32.mrf.mxu0
        %v2856 = vpop.f32.mrf.mxu0
        %v2857 = vadd.f32 %v2294, %v2856
        %v2858 = vpop.f32.mrf.mxu0
        %2859 = vmatprep.mubr.bf16.mxu0 %v1125
        %2860 = vmatmul.mubr.bf16.gmra.mxu0 %v1124
        %v2861 = vpop.f32.mrf.mxu0
        %v2862 = vadd.f32 %v2299, %v2861
        %v2863 = vpop.f32.mrf.mxu0
        %v2864 = vpop.f32.mrf.mxu0
        %v2865 = vadd.f32 %v2302, %v2864
        %v2866 = vpop.f32.mrf.mxu0
        %2867 = vdwg.mxu0
        %2868 = vmatprep.subr.bf16.mxu0 0
        %2869 = vmatpush1.bf16.msra.mxu0 %v2607
        %2870 = vmatprep.subr.bf16.mxu0 0
        %2871 = vmatpush1.bf16.msra.mxu0 %v2606
        %2872 = vmatprep.subr.bf16.mxu0 0
        %2873 = vmatpush1.bf16.msra.mxu0 %v2605
        %2874 = vmatprep.subr.bf16.mxu0 0
        %2875 = vmatpush1.bf16.msra.mxu0 %v2604
        %2876 = vmatprep.subr.bf16.mxu0 0
        %2877 = vmatpush1.bf16.msra.mxu0 %v2603
        %2878 = vmatprep.subr.bf16.mxu0 0
        %2879 = vmatpush1.bf16.msra.mxu0 %v2602
        %2880 = vmatprep.subr.bf16.mxu0 0
        %2881 = vmatpush1.bf16.msra.mxu0 %v2601
        %2882 = vmatprep.subr.bf16.mxu0 0
        %2883 = vmatpush1.bf16.msra.mxu0 %v2600
        %2884 = vmatprep.subr.bf16.mxu0 0
        %2885 = vmatpush2.bf16.msra.mxu0 %v2615
        %2886 = vmatprep.subr.bf16.mxu0 0
        %2887 = vmatpush2.bf16.msra.mxu0 %v2614
        %2888 = vmatprep.subr.bf16.mxu0 0
        %2889 = vmatpush2.bf16.msra.mxu0 %v2613
        %2890 = vmatprep.subr.bf16.mxu0 0
        %2891 = vmatpush2.bf16.msra.mxu0 %v2612
        %2892 = vmatprep.subr.bf16.mxu0 0
        %2893 = vmatpush2.bf16.msra.mxu0 %v2611
        %2894 = vmatprep.subr.bf16.mxu0 0
        %2895 = vmatpush2.bf16.msra.mxu0 %v2610
        %2896 = vmatprep.subr.bf16.mxu0 0
        %2897 = vmatpush2.bf16.msra.mxu0 %v2609
        %2898 = vmatprep.subr.bf16.mxu0 0
        %2899 = vmatpush2.bf16.msra.mxu0 %v2608
        %2900 = vmatprep.mubr.bf16.mxu0 %v2332
        %2901 = vmatmul.mubr.bf16.gmra.mxu0 %v2331
        %v2902 = vpop.f32.mrf.mxu0
        %v2903 = vadd.f32 %v2742, %v2902
        %v2904 = vpop.f32.mrf.mxu0
        %v2905 = vpop.f32.mrf.mxu0
        %v2906 = vadd.f32 %v2745, %v2905
        %v2907 = vpop.f32.mrf.mxu0
        %2908 = vmatprep.mubr.bf16.mxu0 %v1015
        %2909 = vmatmul.mubr.bf16.gmra.mxu0 %v1014
        %v2910 = vpop.f32.mrf.mxu0
        %v2911 = vadd.f32 %v2750, %v2910
        %v2912 = vpop.f32.mrf.mxu0
        %v2913 = vpop.f32.mrf.mxu0
        %v2914 = vadd.f32 %v2753, %v2913
        %v2915 = vpop.f32.mrf.mxu0
        %2916 = vmatprep.mubr.bf16.mxu0 %v1023
        %2917 = vmatmul.mubr.bf16.gmra.mxu0 %v1022
        %v2918 = vpop.f32.mrf.mxu0
        %v2919 = vadd.f32 %v2758, %v2918
        %v2920 = vpop.f32.mrf.mxu0
        %v2921 = vpop.f32.mrf.mxu0
        %v2922 = vadd.f32 %v2761, %v2921
        %v2923 = vpop.f32.mrf.mxu0
        %2924 = vmatprep.mubr.bf16.mxu0 %v1031
        %2925 = vmatmul.mubr.bf16.gmra.mxu0 %v1030
        %v2926 = vpop.f32.mrf.mxu0
        %v2927 = vadd.f32 %v2766, %v2926
        %v2928 = vpop.f32.mrf.mxu0
        %v2929 = vpop.f32.mrf.mxu0
        %v2930 = vadd.f32 %v2769, %v2929
        %v2931 = vpop.f32.mrf.mxu0
        %2932 = vmatprep.mubr.bf16.mxu0 %v1039
        %2933 = vmatmul.mubr.bf16.gmra.mxu0 %v1038
        %v2934 = vpop.f32.mrf.mxu0
        %v2935 = vadd.f32 %v2774, %v2934
        %v2936 = vpop.f32.mrf.mxu0
        %v2937 = vpop.f32.mrf.mxu0
        %v2938 = vadd.f32 %v2777, %v2937
        %v2939 = vpop.f32.mrf.mxu0
        %2940 = vmatprep.mubr.bf16.mxu0 %v1047
        %2941 = vmatmul.mubr.bf16.gmra.mxu0 %v1046
        %v2942 = vpop.f32.mrf.mxu0
        %v2943 = vadd.f32 %v2782, %v2942
        %v2944 = vpop.f32.mrf.mxu0
        %v2945 = vpop.f32.mrf.mxu0
        %v2946 = vadd.f32 %v2785, %v2945
        %v2947 = vpop.f32.mrf.mxu0
        %2948 = vmatprep.mubr.bf16.mxu0 %v1055
        %2949 = vmatmul.mubr.bf16.gmra.mxu0 %v1054
        %v2950 = vpop.f32.mrf.mxu0
        %v2951 = vadd.f32 %v2790, %v2950
        %v2952 = vpop.f32.mrf.mxu0
        %v2953 = vpop.f32.mrf.mxu0
        %v2954 = vadd.f32 %v2793, %v2953
        %v2955 = vpop.f32.mrf.mxu0
        %2956 = vmatprep.mubr.bf16.mxu0 %v1063
        %2957 = vmatmul.mubr.bf16.gmra.mxu0 %v1062
        %v2958 = vpop.f32.mrf.mxu0
        %v2959 = vadd.f32 %v2798, %v2958
        %v2960 = vpop.f32.mrf.mxu0
        %v2961 = vpop.f32.mrf.mxu0
        %v2962 = vadd.f32 %v2801, %v2961
        %v2963 = vpop.f32.mrf.mxu0
        %2964 = vmatprep.mubr.bf16.mxu0 %v1071
        %2965 = vmatmul.mubr.bf16.gmra.mxu0 %v1070
        %v2966 = vpop.f32.mrf.mxu0
        %v2967 = vadd.f32 %v2806, %v2966
        %v2968 = vpop.f32.mrf.mxu0
        %v2969 = vpop.f32.mrf.mxu0
        %v2970 = vadd.f32 %v2809, %v2969
        %v2971 = vpop.f32.mrf.mxu0
        %2972 = vmatprep.mubr.bf16.mxu0 %v1079
        %2973 = vmatmul.mubr.bf16.gmra.mxu0 %v1078
        %v2974 = vpop.f32.mrf.mxu0
        %v2975 = vadd.f32 %v2814, %v2974
        %v2976 = vpop.f32.mrf.mxu0
        %v2977 = vpop.f32.mrf.mxu0
        %v2978 = vadd.f32 %v2817, %v2977
        %v2979 = vpop.f32.mrf.mxu0
        %2980 = vmatprep.mubr.bf16.mxu0 %v1087
        %2981 = vmatmul.mubr.bf16.gmra.mxu0 %v1086
        %v2982 = vpop.f32.mrf.mxu0
        %v2983 = vadd.f32 %v2822, %v2982
        %v2984 = vpop.f32.mrf.mxu0
        %v2985 = vpop.f32.mrf.mxu0
        %v2986 = vadd.f32 %v2825, %v2985
        %v2987 = vpop.f32.mrf.mxu0
        %2988 = vmatprep.mubr.bf16.mxu0 %v1095
        %2989 = vmatmul.mubr.bf16.gmra.mxu0 %v1094
        %v2990 = vpop.f32.mrf.mxu0
        %v2991 = vadd.f32 %v2830, %v2990
        %v2992 = vpop.f32.mrf.mxu0
        %v2993 = vpop.f32.mrf.mxu0
        %v2994 = vadd.f32 %v2833, %v2993
        %v2995 = vpop.f32.mrf.mxu0
        %2996 = vmatprep.mubr.bf16.mxu0 %v1103
        %2997 = vmatmul.mubr.bf16.gmra.mxu0 %v1102
        %v2998 = vpop.f32.mrf.mxu0
        %v2999 = vadd.f32 %v2838, %v2998
        %v3000 = vpop.f32.mrf.mxu0
        %v3001 = vpop.f32.mrf.mxu0
        %v3002 = vadd.f32 %v2841, %v3001
        %v3003 = vpop.f32.mrf.mxu0
        %3004 = vmatprep.mubr.bf16.mxu0 %v1111
        %3005 = vmatmul.mubr.bf16.gmra.mxu0 %v1110
        %v3006 = vpop.f32.mrf.mxu0
        %v3007 = vadd.f32 %v2846, %v3006
        %v3008 = vpop.f32.mrf.mxu0
        %v3009 = vpop.f32.mrf.mxu0
        %v3010 = vadd.f32 %v2849, %v3009
        %v3011 = vpop.f32.mrf.mxu0
        %3012 = vmatprep.mubr.bf16.mxu0 %v1119
        %3013 = vmatmul.mubr.bf16.gmra.mxu0 %v1118
        %v3014 = vpop.f32.mrf.mxu0
        %v3015 = vadd.f32 %v2854, %v3014
        %v3016 = vpop.f32.mrf.mxu0
        %v3017 = vpop.f32.mrf.mxu0
        %v3018 = vadd.f32 %v2857, %v3017
        %v3019 = vpop.f32.mrf.mxu0
        %3020 = vmatprep.mubr.bf16.mxu0 %v1127
        %3021 = vmatmul.mubr.bf16.gmra.mxu0 %v1126
        %v3022 = vpop.f32.mrf.mxu0
        %v3023 = vadd.f32 %v2862, %v3022
        %v3024 = vpop.f32.mrf.mxu0
        %v3025 = vpop.f32.mrf.mxu0
        %v3026 = vadd.f32 %v2865, %v3025
        %v3027 = vpop.f32.mrf.mxu0
        %3028 = vdwg.mxu0
        %3029 = vmatprep.subr.bf16.mxu0 0
        %3030 = vmatpush1.bf16.msra.mxu0 %v2623
        %3031 = vmatprep.subr.bf16.mxu0 0
        %3032 = vmatpush1.bf16.msra.mxu0 %v2622
        %3033 = vmatprep.subr.bf16.mxu0 0
        %3034 = vmatpush1.bf16.msra.mxu0 %v2621
        %3035 = vmatprep.subr.bf16.mxu0 0
        %3036 = vmatpush1.bf16.msra.mxu0 %v2620
        %3037 = vmatprep.subr.bf16.mxu0 0
        %3038 = vmatpush1.bf16.msra.mxu0 %v2619
        %3039 = vmatprep.subr.bf16.mxu0 0
        %3040 = vmatpush1.bf16.msra.mxu0 %v2618
        %3041 = vmatprep.subr.bf16.mxu0 0
        %3042 = vmatpush1.bf16.msra.mxu0 %v2617
        %3043 = vmatprep.subr.bf16.mxu0 0
        %3044 = vmatpush1.bf16.msra.mxu0 %v2616
        %3045 = vmatprep.subr.bf16.mxu0 0
        %3046 = vmatpush2.bf16.msra.mxu0 %v2631
        %3047 = vmatprep.subr.bf16.mxu0 0
        %3048 = vmatpush2.bf16.msra.mxu0 %v2630
        %3049 = vmatprep.subr.bf16.mxu0 0
        %3050 = vmatpush2.bf16.msra.mxu0 %v2629
        %3051 = vmatprep.subr.bf16.mxu0 0
        %3052 = vmatpush2.bf16.msra.mxu0 %v2628
        %3053 = vmatprep.subr.bf16.mxu0 0
        %3054 = vmatpush2.bf16.msra.mxu0 %v2627
        %3055 = vmatprep.subr.bf16.mxu0 0
        %3056 = vmatpush2.bf16.msra.mxu0 %v2626
        %3057 = vmatprep.subr.bf16.mxu0 0
        %3058 = vmatpush2.bf16.msra.mxu0 %v2625
        %3059 = vmatprep.subr.bf16.mxu0 0
        %3060 = vmatpush2.bf16.msra.mxu0 %v2624
        %3061 = vmatprep.mubr.bf16.mxu0 %v2334
        %3062 = vmatmul.mubr.bf16.gmra.mxu0 %v2333
        %v3063 = vpop.f32.mrf.mxu0
        %v3064 = vadd.f32 %v2903, %v3063
        %v3065 = vpop.f32.mrf.mxu0
        %v3066 = vpop.f32.mrf.mxu0
        %v3067 = vadd.f32 %v2906, %v3066
        %v3068 = vpop.f32.mrf.mxu0
        %3069 = vmatprep.mubr.bf16.mxu0 %v1017
        %3070 = vmatmul.mubr.bf16.gmra.mxu0 %v1016
        %v3071 = vpop.f32.mrf.mxu0
        %v3072 = vadd.f32 %v2911, %v3071
        %v3073 = vpop.f32.mrf.mxu0
        %v3074 = vpop.f32.mrf.mxu0
        %v3075 = vadd.f32 %v2914, %v3074
        %v3076 = vpop.f32.mrf.mxu0
        %3077 = vmatprep.mubr.bf16.mxu0 %v1025
        %3078 = vmatmul.mubr.bf16.gmra.mxu0 %v1024
        %v3079 = vpop.f32.mrf.mxu0
        %v3080 = vadd.f32 %v2919, %v3079
        %v3081 = vpop.f32.mrf.mxu0
        %v3082 = vpop.f32.mrf.mxu0
        %v3083 = vadd.f32 %v2922, %v3082
        %v3084 = vpop.f32.mrf.mxu0
        %3085 = vmatprep.mubr.bf16.mxu0 %v1033
        %3086 = vmatmul.mubr.bf16.gmra.mxu0 %v1032
        %v3087 = vpop.f32.mrf.mxu0
        %v3088 = vadd.f32 %v2927, %v3087
        %v3089 = vpop.f32.mrf.mxu0
        %v3090 = vpop.f32.mrf.mxu0
        %v3091 = vadd.f32 %v2930, %v3090
        %v3092 = vpop.f32.mrf.mxu0
        %3093 = vmatprep.mubr.bf16.mxu0 %v1041
        %3094 = vmatmul.mubr.bf16.gmra.mxu0 %v1040
        %v3095 = vpop.f32.mrf.mxu0
        %v3096 = vadd.f32 %v2935, %v3095
        %v3097 = vpop.f32.mrf.mxu0
        %v3098 = vpop.f32.mrf.mxu0
        %v3099 = vadd.f32 %v2938, %v3098
        %v3100 = vpop.f32.mrf.mxu0
        %3101 = vmatprep.mubr.bf16.mxu0 %v1049
        %3102 = vmatmul.mubr.bf16.gmra.mxu0 %v1048
        %v3103 = vpop.f32.mrf.mxu0
        %v3104 = vadd.f32 %v2943, %v3103
        %v3105 = vpop.f32.mrf.mxu0
        %v3106 = vpop.f32.mrf.mxu0
        %v3107 = vadd.f32 %v2946, %v3106
        %v3108 = vpop.f32.mrf.mxu0
        %3109 = vmatprep.mubr.bf16.mxu0 %v1057
        %3110 = vmatmul.mubr.bf16.gmra.mxu0 %v1056
        %v3111 = vpop.f32.mrf.mxu0
        %v3112 = vadd.f32 %v2951, %v3111
        %v3113 = vpop.f32.mrf.mxu0
        %v3114 = vpop.f32.mrf.mxu0
        %v3115 = vadd.f32 %v2954, %v3114
        %v3116 = vpop.f32.mrf.mxu0
        %3117 = vmatprep.mubr.bf16.mxu0 %v1065
        %3118 = vmatmul.mubr.bf16.gmra.mxu0 %v1064
        %v3119 = vpop.f32.mrf.mxu0
        %v3120 = vadd.f32 %v2959, %v3119
        %v3121 = vpop.f32.mrf.mxu0
        %v3122 = vpop.f32.mrf.mxu0
        %v3123 = vadd.f32 %v2962, %v3122
        %v3124 = vpop.f32.mrf.mxu0
        %3125 = vmatprep.mubr.bf16.mxu0 %v1073
        %3126 = vmatmul.mubr.bf16.gmra.mxu0 %v1072
        %v3127 = vpop.f32.mrf.mxu0
        %v3128 = vadd.f32 %v2967, %v3127
        %v3129 = vpop.f32.mrf.mxu0
        %v3130 = vpop.f32.mrf.mxu0
        %v3131 = vadd.f32 %v2970, %v3130
        %v3132 = vpop.f32.mrf.mxu0
        %3133 = vmatprep.mubr.bf16.mxu0 %v1081
        %3134 = vmatmul.mubr.bf16.gmra.mxu0 %v1080
        %v3135 = vpop.f32.mrf.mxu0
        %v3136 = vadd.f32 %v2975, %v3135
        %v3137 = vpop.f32.mrf.mxu0
        %v3138 = vpop.f32.mrf.mxu0
        %v3139 = vadd.f32 %v2978, %v3138
        %v3140 = vpop.f32.mrf.mxu0
        %3141 = vmatprep.mubr.bf16.mxu0 %v1089
        %3142 = vmatmul.mubr.bf16.gmra.mxu0 %v1088
        %v3143 = vpop.f32.mrf.mxu0
        %v3144 = vadd.f32 %v2983, %v3143
        %v3145 = vpop.f32.mrf.mxu0
        %v3146 = vpop.f32.mrf.mxu0
        %v3147 = vadd.f32 %v2986, %v3146
        %v3148 = vpop.f32.mrf.mxu0
        %3149 = vmatprep.mubr.bf16.mxu0 %v1097
        %3150 = vmatmul.mubr.bf16.gmra.mxu0 %v1096
        %v3151 = vpop.f32.mrf.mxu0
        %v3152 = vadd.f32 %v2991, %v3151
        %v3153 = vpop.f32.mrf.mxu0
        %v3154 = vpop.f32.mrf.mxu0
        %v3155 = vadd.f32 %v2994, %v3154
        %v3156 = vpop.f32.mrf.mxu0
        %3157 = vmatprep.mubr.bf16.mxu0 %v1105
        %3158 = vmatmul.mubr.bf16.gmra.mxu0 %v1104
        %v3159 = vpop.f32.mrf.mxu0
        %v3160 = vadd.f32 %v2999, %v3159
        %v3161 = vpop.f32.mrf.mxu0
        %v3162 = vpop.f32.mrf.mxu0
        %v3163 = vadd.f32 %v3002, %v3162
        %v3164 = vpop.f32.mrf.mxu0
        %3165 = vmatprep.mubr.bf16.mxu0 %v1113
        %3166 = vmatmul.mubr.bf16.gmra.mxu0 %v1112
        %v3167 = vpop.f32.mrf.mxu0
        %v3168 = vadd.f32 %v3007, %v3167
        %v3169 = vpop.f32.mrf.mxu0
        %v3170 = vpop.f32.mrf.mxu0
        %v3171 = vadd.f32 %v3010, %v3170
        %v3172 = vpop.f32.mrf.mxu0
        %3173 = vmatprep.mubr.bf16.mxu0 %v1121
        %3174 = vmatmul.mubr.bf16.gmra.mxu0 %v1120
        %v3175 = vpop.f32.mrf.mxu0
        %v3176 = vadd.f32 %v3015, %v3175
        %v3177 = vpop.f32.mrf.mxu0
        %v3178 = vpop.f32.mrf.mxu0
        %v3179 = vadd.f32 %v3018, %v3178
        %v3180 = vpop.f32.mrf.mxu0
        %3181 = vmatprep.mubr.bf16.mxu0 %v1129
        %3182 = vmatmul.mubr.bf16.gmra.mxu0 %v1128
        %v3183 = vpop.f32.mrf.mxu0
        %v3184 = vadd.f32 %v3023, %v3183
        %v3185 = vpop.f32.mrf.mxu0
        %v3186 = vpop.f32.mrf.mxu0
        %v3187 = vadd.f32 %v3026, %v3186
        %v3188 = vpop.f32.mrf.mxu0
        %3189 = vdwg.mxu0
        %3190 = vmatprep.subr.bf16.mxu0 0
        %3191 = vmatpush1.bf16.msra.mxu0 %v2639
        %3192 = vmatprep.subr.bf16.mxu0 0
        %3193 = vmatpush1.bf16.msra.mxu0 %v2638
        %3194 = vmatprep.subr.bf16.mxu0 0
        %3195 = vmatpush1.bf16.msra.mxu0 %v2637
        %3196 = vmatprep.subr.bf16.mxu0 0
        %3197 = vmatpush1.bf16.msra.mxu0 %v2636
        %3198 = vmatprep.subr.bf16.mxu0 0
        %3199 = vmatpush1.bf16.msra.mxu0 %v2635
        %3200 = vmatprep.subr.bf16.mxu0 0
        %3201 = vmatpush1.bf16.msra.mxu0 %v2634
        %3202 = vmatprep.subr.bf16.mxu0 0
        %3203 = vmatpush1.bf16.msra.mxu0 %v2633
        %3204 = vmatprep.subr.bf16.mxu0 0
        %3205 = vmatpush1.bf16.msra.mxu0 %v2632
        %3206 = vmatprep.subr.bf16.mxu0 0
        %3207 = vmatpush2.bf16.msra.mxu0 0
        %3208 = vmatprep.subr.bf16.mxu0 0
        %3209 = vmatpush2.bf16.msra.mxu0 0
        %3210 = vmatprep.subr.bf16.mxu0 0
        %3211 = vmatpush2.bf16.msra.mxu0 0
        %3212 = vmatprep.subr.bf16.mxu0 0
        %3213 = vmatpush2.bf16.msra.mxu0 0
        %3214 = vmatprep.subr.bf16.mxu0 0
        %3215 = vmatpush2.bf16.msra.mxu0 %v2643
        %3216 = vmatprep.subr.bf16.mxu0 0
        %3217 = vmatpush2.bf16.msra.mxu0 %v2642
        %3218 = vmatprep.subr.bf16.mxu0 0
        %3219 = vmatpush2.bf16.msra.mxu0 %v2641
        %3220 = vmatprep.subr.bf16.mxu0 0
        %3221 = vmatpush2.bf16.msra.mxu0 %v2640
        %3222 = vmatprep.mubr.bf16.mxu0 %v2705
        %3223 = vmatmul.mubr.bf16.gmra.mxu0 %v2335
        %v3224 = vpop.f32.mrf.mxu0
        %v3225 = vadd.f32 %v3064, %v3224
        %v3226 = vpop.f32.mrf.mxu0
        %v3227 = vpop.f32.mrf.mxu0
        %v3228 = vadd.f32 %v3067, %v3227
        %v3229 = vpop.f32.mrf.mxu0
        %3230 = vmatprep.mubr.bf16.mxu0 %v1614
        %3231 = vmatmul.mubr.bf16.gmra.mxu0 %v1018
        %v3232 = vpop.f32.mrf.mxu0
        %v3233 = vadd.f32 %v3072, %v3232
        %v3234 = vpop.f32.mrf.mxu0
        %v3235 = vpop.f32.mrf.mxu0
        %v3236 = vadd.f32 %v3075, %v3235
        %v3237 = vpop.f32.mrf.mxu0
        %3238 = vmatprep.mubr.bf16.mxu0 %v1617
        %3239 = vmatmul.mubr.bf16.gmra.mxu0 %v1026
        %v3240 = vpop.f32.mrf.mxu0
        %v3241 = vadd.f32 %v3080, %v3240
        %v3242 = vpop.f32.mrf.mxu0
        %v3243 = vpop.f32.mrf.mxu0
        %v3244 = vadd.f32 %v3083, %v3243
        %v3245 = vpop.f32.mrf.mxu0
        %3246 = vmatprep.mubr.bf16.mxu0 %v1620
        %3247 = vmatmul.mubr.bf16.gmra.mxu0 %v1034
        %v3248 = vpop.f32.mrf.mxu0
        %v3249 = vadd.f32 %v3088, %v3248
        %v3250 = vpop.f32.mrf.mxu0
        %v3251 = vpop.f32.mrf.mxu0
        %v3252 = vadd.f32 %v3091, %v3251
        %v3253 = vpop.f32.mrf.mxu0
        %3254 = vmatprep.mubr.bf16.mxu0 %v1623
        %3255 = vmatmul.mubr.bf16.gmra.mxu0 %v1042
        %v3256 = vpop.f32.mrf.mxu0
        %v3257 = vadd.f32 %v3096, %v3256
        %v3258 = vpop.f32.mrf.mxu0
        %v3259 = vpop.f32.mrf.mxu0
        %v3260 = vadd.f32 %v3099, %v3259
        %v3261 = vpop.f32.mrf.mxu0
        %3262 = vmatprep.mubr.bf16.mxu0 %v1626
        %3263 = vmatmul.mubr.bf16.gmra.mxu0 %v1050
        %v3264 = vpop.f32.mrf.mxu0
        %v3265 = vadd.f32 %v3104, %v3264
        %v3266 = vpop.f32.mrf.mxu0
        %v3267 = vpop.f32.mrf.mxu0
        %v3268 = vadd.f32 %v3107, %v3267
        %v3269 = vpop.f32.mrf.mxu0
        %3270 = vmatprep.mubr.bf16.mxu0 %v1629
        %3271 = vmatmul.mubr.bf16.gmra.mxu0 %v1058
        %v3272 = vpop.f32.mrf.mxu0
        %v3273 = vadd.f32 %v3112, %v3272
        %v3274 = vpop.f32.mrf.mxu0
        %v3275 = vpop.f32.mrf.mxu0
        %v3276 = vadd.f32 %v3115, %v3275
        %v3277 = vpop.f32.mrf.mxu0
        %3278 = vmatprep.mubr.bf16.mxu0 %v1632
        %3279 = vmatmul.mubr.bf16.gmra.mxu0 %v1066
        %v3280 = vpop.f32.mrf.mxu0
        %v3281 = vadd.f32 %v3120, %v3280
        %v3282 = vpop.f32.mrf.mxu0
        %v3283 = vpop.f32.mrf.mxu0
        %v3284 = vadd.f32 %v3123, %v3283
        %v3285 = vpop.f32.mrf.mxu0
        %3286 = vmatprep.mubr.bf16.mxu0 %v1635
        %3287 = vmatmul.mubr.bf16.gmra.mxu0 %v1074
        %v3288 = vpop.f32.mrf.mxu0
        %v3289 = vadd.f32 %v3128, %v3288
        %v3290 = vpop.f32.mrf.mxu0
        %v3291 = vpop.f32.mrf.mxu0
        %v3292 = vadd.f32 %v3131, %v3291
        %v3293 = vpop.f32.mrf.mxu0
        %3294 = vmatprep.mubr.bf16.mxu0 %v1638
        %3295 = vmatmul.mubr.bf16.gmra.mxu0 %v1082
        %v3296 = vpop.f32.mrf.mxu0
        %v3297 = vadd.f32 %v3136, %v3296
        %v3298 = vpop.f32.mrf.mxu0
        %v3299 = vpop.f32.mrf.mxu0
        %v3300 = vadd.f32 %v3139, %v3299
        %v3301 = vpop.f32.mrf.mxu0
        %3302 = vmatprep.mubr.bf16.mxu0 %v1641
        %3303 = vmatmul.mubr.bf16.gmra.mxu0 %v1090
        %v3304 = vpop.f32.mrf.mxu0
        %v3305 = vadd.f32 %v3144, %v3304
        %v3306 = vpop.f32.mrf.mxu0
        %v3307 = vpop.f32.mrf.mxu0
        %v3308 = vadd.f32 %v3147, %v3307
        %v3309 = vpop.f32.mrf.mxu0
        %3310 = vmatprep.mubr.bf16.mxu0 %v1644
        %3311 = vmatmul.mubr.bf16.gmra.mxu0 %v1098
        %v3312 = vpop.f32.mrf.mxu0
        %v3313 = vadd.f32 %v3152, %v3312
        %v3314 = vpop.f32.mrf.mxu0
        %v3315 = vpop.f32.mrf.mxu0
        %v3316 = vadd.f32 %v3155, %v3315
        %v3317 = vpop.f32.mrf.mxu0
        %3318 = vmatprep.mubr.bf16.mxu0 %v1647
        %3319 = vmatmul.mubr.bf16.gmra.mxu0 %v1106
        %v3320 = vpop.f32.mrf.mxu0
        %v3321 = vadd.f32 %v3160, %v3320
        %v3322 = vpop.f32.mrf.mxu0
        %v3323 = vpop.f32.mrf.mxu0
        %v3324 = vadd.f32 %v3163, %v3323
        %v3325 = vpop.f32.mrf.mxu0
        %3326 = vmatprep.mubr.bf16.mxu0 %v1650
        %3327 = vmatmul.mubr.bf16.gmra.mxu0 %v1114
        %v3328 = vpop.f32.mrf.mxu0
        %v3329 = vadd.f32 %v3168, %v3328
        %v3330 = vpop.f32.mrf.mxu0
        %v3331 = vpop.f32.mrf.mxu0
        %v3332 = vadd.f32 %v3171, %v3331
        %v3333 = vpop.f32.mrf.mxu0
        %3334 = vmatprep.mubr.bf16.mxu0 %v1653
        %3335 = vmatmul.mubr.bf16.gmra.mxu0 %v1122
        %v3336 = vpop.f32.mrf.mxu0
        %v3337 = vadd.f32 %v3176, %v3336
        %v3338 = vpop.f32.mrf.mxu0
        %v3339 = vpop.f32.mrf.mxu0
        %v3340 = vadd.f32 %v3179, %v3339
        %v3341 = vpop.f32.mrf.mxu0
        %3342 = vmatprep.mubr.bf16.mxu0 %v1656
        %3343 = vmatmul.mubr.bf16.gmra.mxu0 %v1130
        %v3344 = vpop.f32.mrf.mxu0
        %v3345 = vadd.f32 %v3184, %v3344
        %v3346 = vpop.f32.mrf.mxu0
        %v3347 = vpop.f32.mrf.mxu0
        %v3348 = vadd.f32 %v3187, %v3347
        %v3349 = vpop.f32.mrf.mxu0
        %3350 = vdwg.mxu0
        %v3351 = vld [vmem:[%s249 + $0x80] sm:$0xff]
        %v3352 = vld [vmem:[%s249 + $0x88] sm:$0xff]
        %v3353 = vld [vmem:[%s249 + $0x90] sm:$0xff]
        %v3354 = vld [vmem:[%s249 + $0x98] sm:$0xff]
        %v3355 = vld [vmem:[%s249 + $0xa0] sm:$0xff]
        %v3356 = vld [vmem:[%s249 + $0xa8] sm:$0xff]
        %v3357 = vld [vmem:[%s249 + $0xb0] sm:$0xff]
        %v3358 = vld [vmem:[%s249 + $0xb8] sm:$0xff]
        %v3359 = vld [vmem:[%s249 + $0xc0] sm:$0xff]
        %v3360 = vld [vmem:[%s249 + $0xc8] sm:$0xff]
        %v3361 = vld [vmem:[%s249 + $0xd0] sm:$0xff]
        %v3362 = vld [vmem:[%s249 + $0xd8] sm:$0xff]
        %v3363 = vld [vmem:[%s249 + $0xe0] sm:$0xff]
        %v3364 = vld [vmem:[%s249 + $0xe8] sm:$0xff]
        %v3365 = vld [vmem:[%s249 + $0xf0] sm:$0xff]
        %v3366 = vld [vmem:[%s249 + $0xf8] sm:$0xff]
        %v3367 = vld [vmem:[%s249 + $0x100] sm:$0xff]
        %v3368 = vld [vmem:[%s249 + $0x108] sm:$0xff]
        %v3369 = vld [vmem:[%s249 + $0x110] sm:$0xff]
        %v3370 = vld [vmem:[%s249 + $0x118] sm:$0xff]
        %v3371 = vld [vmem:[%s249 + $0x120] sm:$0xff]
        %v3372 = vld [vmem:[%s249 + $0x128] sm:$0xff]
        %v3373 = vld [vmem:[%s249 + $0x130] sm:$0xff]
        %v3374 = vld [vmem:[%s249 + $0x138] sm:$0xff]
        %v3375 = vld [vmem:[%s249 + $0x140] sm:$0xff]
        %v3376 = vld [vmem:[%s249 + $0x148] sm:$0xff]
        %v3377 = vld [vmem:[%s249 + $0x150] sm:$0xff]
        %v3378 = vld [vmem:[%s249 + $0x158] sm:$0xff]
        %v3379 = vld [vmem:[%s249 + $0x160] sm:$0xff]
        %v3380 = vld [vmem:[%s249 + $0x168] sm:$0xff]
        %v3381 = vld [vmem:[%s249 + $0x170] sm:$0xff]
        %v3382 = vld [vmem:[%s249 + $0x178] sm:$0xff]
        %v3383 = vld [vmem:[%s249 + $0x180] sm:$0xff]
        %v3384 = vld [vmem:[%s249 + $0x188] sm:$0xff]
        %v3385 = vld [vmem:[%s249 + $0x190] sm:$0xff]
        %v3386 = vld [vmem:[%s249 + $0x198] sm:$0xff]
        %v3387 = vld [vmem:[%s249 + $0x1a0] sm:$0xff]
        %v3388 = vld [vmem:[%s249 + $0x1a8] sm:$0xff]
        %v3389 = vld [vmem:[%s249 + $0x1b0] sm:$0xff]
        %v3390 = vld [vmem:[%s249 + $0x1b8] sm:$0xff]
        %v3391 = vld [vmem:[%s249 + $0x1c0] sm:$0xff]
        %v3392 = vld [vmem:[%s249 + $0x1c8] sm:$0xff]
        %v3393 = vld [vmem:[%s249 + $0x1d0] sm:$0xff]
        %v3394 = vld [vmem:[%s249 + $0x1d8] sm:$0xff]
        %v3395 = vld [vmem:[%s249 + $0x1e0] sm:$0xff]
        %v3396 = vld [vmem:[%s249 + $0x1e8] sm:$0xff]
        %v3397 = vld [vmem:[%s249 + $0x1f0] sm:$0xff]
        %v3398 = vld [vmem:[%s249 + $0x1f8] sm:$0xff]
        %v3399 = vld [vmem:[%s249 + $0x200] sm:$0xff]
        %v3400 = vld [vmem:[%s249 + $0x208] sm:$0xff]
        %v3401 = vld [vmem:[%s249 + $0x210] sm:$0xff]
        %v3402 = vld [vmem:[%s249 + $0x218] sm:$0xff]
        %v3403 = vld [vmem:[%s249 + $0x220] sm:$0xff]
        %v3404 = vld [vmem:[%s249 + $0x228] sm:$0xff]
        %v3405 = vld [vmem:[%s249 + $0x230] sm:$0xff]
        %v3406 = vld [vmem:[%s249 + $0x238] sm:$0xff]
        %v3407 = vld [vmem:[%s249 + $0x240] sm:$0xff]
        %v3408 = vld [vmem:[%s249 + $0x248] sm:$0xff]
        %v3409 = vld [vmem:[%s249 + $0x250] sm:$0xff]
        %v3410 = vld [vmem:[%s249 + $0x258] sm:$0xff]
        %v3411 = vld [vmem:[%s249 + $0x260] sm:$0xff]
        %v3412 = vld [vmem:[%s249 + $0x268] sm:$0xff]
        %v3413 = vld [vmem:[%s249 + $0x270] sm:$0xff]
        %v3414 = vld [vmem:[%s249 + $0x278] sm:$0xff]
        %v3415 = vld [vmem:[%s249 + $0x280] sm:$0xff]
        %v3416 = vld [vmem:[%s249 + $0x288] sm:$0xff]
        %v3417 = vld [vmem:[%s249 + $0x290] sm:$0xff]
        %v3418 = vld [vmem:[%s249 + $0x298] sm:$0xff]
        %v3419 = vld [vmem:[%s249 + $0x2a0] sm:$0xff]
        %v3420 = vld [vmem:[%s249 + $0x2a8] sm:$0xff]
        %v3421 = vld [vmem:[%s249 + $0x2b0] sm:$0xff]
        %v3422 = vld [vmem:[%s249 + $0x2b8] sm:$0xff]
        %v3423 = vld [vmem:[%s249 + $0x2c0] sm:$0xff]
        %v3424 = vld [vmem:[%s249 + $0x2c8] sm:$0xff]
        %v3425 = vld [vmem:[%s249 + $0x2d0] sm:$0xff]
        %v3426 = vld [vmem:[%s249 + $0x2d8] sm:$0xff]
        %v3427 = vld [vmem:[%s249 + $0x2e0] sm:$0xff]
        %v3428 = vld [vmem:[%s249 + $0x2e8] sm:$0xff]
        %v3429 = vld [vmem:[%s249 + $0x2f0] sm:$0xff]
        %v3430 = vld [vmem:[%s249 + $0x2f8] sm:$0xff]
        %v3431 = vld [vmem:[%s249 + $0x300] sm:$0xff]
        %v3432 = vld [vmem:[%s249 + $0x308] sm:$0xff]
        %v3433 = vld [vmem:[%s249 + $0x310] sm:$0xff]
        %v3434 = vld [vmem:[%s249 + $0x318] sm:$0xff]
        %v3435 = vld [vmem:[%s249 + $0x320] sm:$0xff]
        %v3436 = vld [vmem:[%s249 + $0x328] sm:$0xff]
        %v3437 = vld [vmem:[%s249 + $0x330] sm:$0xff]
        %v3438 = vld [vmem:[%s249 + $0x338] sm:$0xff]
        %v3439 = vld [vmem:[%s249 + $0x340] sm:$0xff]
        %v3440 = vld [vmem:[%s249 + $0x348] sm:$0xff]
        %v3441 = vld [vmem:[%s249 + $0x350] sm:$0xff]
        %v3442 = vld [vmem:[%s249 + $0x358] sm:$0xff]
        %v3443 = vld [vmem:[%s249 + $0x360] sm:$0xff]
        %v3444 = vld [vmem:[%s249 + $0x368] sm:$0xff]
        %v3445 = vld [vmem:[%s249 + $0x370] sm:$0xff]
        %v3446 = vld [vmem:[%s249 + $0x378] sm:$0xff]
        %v3447 = vld [vmem:[%s249 + $0x380] sm:$0xff]
        %v3448 = vld [vmem:[%s249 + $0x388] sm:$0xff]
        %v3449 = vld [vmem:[%s249 + $0x390] sm:$0xff]
        %v3450 = vld [vmem:[%s249 + $0x398] sm:$0xff]
        %v3451 = vld [vmem:[%s249 + $0x3a0] sm:$0xff]
        %v3452 = vld [vmem:[%s249 + $0x3a8] sm:$0xff]
        %v3453 = vld [vmem:[%s249 + $0x3b0] sm:$0xff]
        %v3454 = vld [vmem:[%s249 + $0x3b8] sm:$0xff]
        %v3455 = vld [vmem:[%s249 + $0x3c0] sm:$0xff]
        %v3456 = vld [vmem:[%s249 + $0x3c8] sm:$0xff]
        %v3457 = vld [vmem:[%s249 + $0x3d0] sm:$0xff]
        %v3458 = vld [vmem:[%s249 + $0x3d8] sm:$0xff]
        %v3459 = vld [vmem:[%s249 + $0x3e0] sm:$0xff]
        %v3460 = vld [vmem:[%s249 + $0x3e8] sm:$0xff]
        %v3461 = vld [vmem:[%s249 + $0x3f0] sm:$0xff]
        %v3462 = vld [vmem:[%s249 + $0x3f8] sm:$0xff]
        %v3463 = vld [vmem:[%s249 + $0x400] sm:$0xff]
        %v3464 = vld [vmem:[%s249 + $0x408] sm:$0xff]
        %v3465 = vld [vmem:[%s249 + $0x410] sm:$0xff]
        %v3466 = vld [vmem:[%s249 + $0x418] sm:$0xff]
        %v3467 = vld [vmem:[%s249 + $0x420] sm:$0xff]
        %v3468 = vld [vmem:[%s249 + $0x428] sm:$0xff]
        %v3469 = vld [vmem:[%s249 + $0x430] sm:$0xff]
        %v3470 = vld [vmem:[%s249 + $0x438] sm:$0xff]
        %v3471 = vld [vmem:[%s249 + $0x440] sm:$0xff]
        %v3472 = vld [vmem:[%s249 + $0x448] sm:$0xff]
        %v3473 = vld [vmem:[%s249 + $0x450] sm:$0xff]
        %v3474 = vld [vmem:[%s249 + $0x458] sm:$0xff]
        %v3475 = vld [vmem:[%s249 + $0x460] sm:$0xff]
        %v3476 = vld [vmem:[%s249 + $0x468] sm:$0xff]
        %v3477 = vld [vmem:[%s249 + $0x470] sm:$0xff]
        %v3478 = vld [vmem:[%s249 + $0x478] sm:$0xff]
        %s3479 = scalar_lea.vmem %s1, 960
        %v3480 = vld [vmem:[%s3479] sm:$0xf]
        %v3481 = vld [vmem:[%s3479 + $0x4] sm:$0xf]
        %v3482 = vld [vmem:[%s3479 + $0x8] sm:$0xf]
        %v3483 = vld [vmem:[%s3479 + $0xc] sm:$0xf]
        %v3484 = vld [vmem:[%s3479 + $0x10] sm:$0xf]
        %v3485 = vld [vmem:[%s3479 + $0x14] sm:$0xf]
        %v3486 = vld [vmem:[%s3479 + $0x18] sm:$0xf]
        %v3487 = vld [vmem:[%s3479 + $0x1c] sm:$0xf]
        %v3488 = vld [vmem:[%s3479 + $0x20] sm:$0xf]
        %v3489 = vld [vmem:[%s3479 + $0x24] sm:$0xf]
        %v3490 = vld [vmem:[%s3479 + $0x28] sm:$0xf]
        %v3491 = vld [vmem:[%s3479 + $0x2c] sm:$0xf]
        %v3492 = vld [vmem:[%s3479 + $0x30] sm:$0xf]
        %v3493 = vld [vmem:[%s3479 + $0x34] sm:$0xf]
        %v3494 = vld [vmem:[%s3479 + $0x38] sm:$0xf]
        %v3495 = vld [vmem:[%s3479 + $0x3c] sm:$0xf]
        %v3496 = vld [vmem:[%s3479 + $0x40] sm:$0xf]
        %v3497 = vld [vmem:[%s3479 + $0x44] sm:$0xf]
        %v3498 = vld [vmem:[%s3479 + $0x48] sm:$0xf]
        %v3499 = vld [vmem:[%s3479 + $0x4c] sm:$0xf]
        %v3500 = vld [vmem:[%s3479 + $0x50] sm:$0xf]
        %v3501 = vld [vmem:[%s3479 + $0x54] sm:$0xf]
        %v3502 = vld [vmem:[%s3479 + $0x58] sm:$0xf]
        %v3503 = vld [vmem:[%s3479 + $0x5c] sm:$0xf]
        %v3504 = vld [vmem:[%s3479 + $0x60] sm:$0xf]
        %v3505 = vld [vmem:[%s3479 + $0x64] sm:$0xf]
        %v3506 = vld [vmem:[%s3479 + $0x68] sm:$0xf]
        %v3507 = vld [vmem:[%s3479 + $0x6c] sm:$0xf]
        %v3508 = vld [vmem:[%s3479 + $0x70] sm:$0xf]
        %v3509 = vld [vmem:[%s3479 + $0x74] sm:$0xf]
        %v3510 = vld [vmem:[%s3479 + $0x78] sm:$0xf]
        %v3511 = vld [vmem:[%s3479 + $0x7c] sm:$0xf]
        %v3512 = vld [vmem:[%s3479 + $0x80] sm:$0xf]
        %v3513 = vld [vmem:[%s3479 + $0x84] sm:$0xf]
        %v3514 = vld [vmem:[%s3479 + $0x88] sm:$0xf]
        %v3515 = vld [vmem:[%s3479 + $0x8c] sm:$0xf]
        %v3516 = vld [vmem:[%s3479 + $0x90] sm:$0xf]
        %v3517 = vld [vmem:[%s3479 + $0x94] sm:$0xf]
        %v3518 = vld [vmem:[%s3479 + $0x98] sm:$0xf]
        %v3519 = vld [vmem:[%s3479 + $0x9c] sm:$0xf]
        %v3520 = vld [vmem:[%s3479 + $0xa0] sm:$0xf]
        %v3521 = vld [vmem:[%s3479 + $0xa4] sm:$0xf]
        %v3522 = vld [vmem:[%s3479 + $0xa8] sm:$0xf]
        %v3523 = vld [vmem:[%s3479 + $0xac] sm:$0xf]
        %v3524 = vld [vmem:[%s3479 + $0xb0] sm:$0xf]
        %v3525 = vld [vmem:[%s3479 + $0xb4] sm:$0xf]
        %v3526 = vld [vmem:[%s3479 + $0xb8] sm:$0xf]
        %v3527 = vld [vmem:[%s3479 + $0xbc] sm:$0xf]
        %v3528 = vld [vmem:[%s3479 + $0xc0] sm:$0xf]
        %v3529 = vld [vmem:[%s3479 + $0xc4] sm:$0xf]
        %v3530 = vld [vmem:[%s3479 + $0xc8] sm:$0xf]
        %v3531 = vld [vmem:[%s3479 + $0xcc] sm:$0xf]
        %v3532 = vld [vmem:[%s3479 + $0xd0] sm:$0xf]
        %v3533 = vld [vmem:[%s3479 + $0xd4] sm:$0xf]
        %v3534 = vld [vmem:[%s3479 + $0xd8] sm:$0xf]
        %v3535 = vld [vmem:[%s3479 + $0xdc] sm:$0xf]
        %v3536 = vld [vmem:[%s3479 + $0xe0] sm:$0xf]
        %v3537 = vld [vmem:[%s3479 + $0xe4] sm:$0xf]
        %v3538 = vld [vmem:[%s3479 + $0xe8] sm:$0xf]
        %v3539 = vld [vmem:[%s3479 + $0xec] sm:$0xf]
        %v3540 = vld [vmem:[%s3479 + $0xf0] sm:$0xf]
        %v3541 = vld [vmem:[%s3479 + $0xf4] sm:$0xf]
        %v3542 = vld [vmem:[%s3479 + $0xf8] sm:$0xf]
        %v3543 = vld [vmem:[%s3479 + $0xfc] sm:$0xf]
        %v3544 = vld [vmem:[%s3479 + $0x100] sm:$0xf]
        %v3545 = vld [vmem:[%s3479 + $0x104] sm:$0xf]
        %v3546 = vld [vmem:[%s3479 + $0x108] sm:$0xf]
        %v3547 = vld [vmem:[%s3479 + $0x10c] sm:$0xf]
        %v3548 = vld [vmem:[%s3479 + $0x110] sm:$0xf]
        %v3549 = vld [vmem:[%s3479 + $0x114] sm:$0xf]
        %v3550 = vld [vmem:[%s3479 + $0x118] sm:$0xf]
        %v3551 = vld [vmem:[%s3479 + $0x11c] sm:$0xf]
        %v3552 = vld [vmem:[%s3479 + $0x120] sm:$0xf]
        %v3553 = vld [vmem:[%s3479 + $0x124] sm:$0xf]
        %v3554 = vld [vmem:[%s3479 + $0x128] sm:$0xf]
        %v3555 = vld [vmem:[%s3479 + $0x12c] sm:$0xf]
        %v3556 = vld [vmem:[%s3479 + $0x130] sm:$0xf]
        %v3557 = vld [vmem:[%s3479 + $0x134] sm:$0xf]
        %v3558 = vld [vmem:[%s3479 + $0x138] sm:$0xf]
        %v3559 = vld [vmem:[%s3479 + $0x13c] sm:$0xf]
        %v3560 = vld [vmem:[%s3479 + $0x140] sm:$0xf]
        %v3561 = vld [vmem:[%s3479 + $0x144] sm:$0xf]
        %v3562 = vld [vmem:[%s3479 + $0x148] sm:$0xf]
        %v3563 = vld [vmem:[%s3479 + $0x14c] sm:$0xf]
        %v3564 = vld [vmem:[%s3479 + $0x150] sm:$0xf]
        %v3565 = vld [vmem:[%s3479 + $0x154] sm:$0xf]
        %v3566 = vld [vmem:[%s3479 + $0x158] sm:$0xf]
        %v3567 = vld [vmem:[%s3479 + $0x15c] sm:$0xf]
        %v3568 = vld [vmem:[%s3479 + $0x160] sm:$0xf]
        %v3569 = vld [vmem:[%s3479 + $0x164] sm:$0xf]
        %v3570 = vld [vmem:[%s3479 + $0x168] sm:$0xf]
        %v3571 = vld [vmem:[%s3479 + $0x16c] sm:$0xf]
        %v3572 = vld [vmem:[%s3479 + $0x170] sm:$0xf]
        %v3573 = vld [vmem:[%s3479 + $0x174] sm:$0xf]
        %v3574 = vld [vmem:[%s3479 + $0x178] sm:$0xf]
        %v3575 = vld [vmem:[%s3479 + $0x17c] sm:$0xf]
        %v3576 = vld [vmem:[%s3479 + $0x180] sm:$0xf]
        %v3577 = vld [vmem:[%s3479 + $0x184] sm:$0xf]
        %v3578 = vld [vmem:[%s3479 + $0x188] sm:$0xf]
        %v3579 = vld [vmem:[%s3479 + $0x18c] sm:$0xf]
        %v3580 = vld [vmem:[%s3479 + $0x190] sm:$0xf]
        %v3581 = vld [vmem:[%s3479 + $0x194] sm:$0xf]
        %v3582 = vld [vmem:[%s3479 + $0x198] sm:$0xf]
        %v3583 = vld [vmem:[%s3479 + $0x19c] sm:$0xf]
        %v3584 = vld [vmem:[%s3479 + $0x1a0] sm:$0xf]
        %v3585 = vld [vmem:[%s3479 + $0x1a4] sm:$0xf]
        %v3586 = vld [vmem:[%s3479 + $0x1a8] sm:$0xf]
        %v3587 = vld [vmem:[%s3479 + $0x1ac] sm:$0xf]
        %v3588 = vld [vmem:[%s3479 + $0x1b0] sm:$0xf]
        %v3589 = vld [vmem:[%s3479 + $0x1b4] sm:$0xf]
        %v3590 = vld [vmem:[%s3479 + $0x1b8] sm:$0xf]
        %v3591 = vld [vmem:[%s3479 + $0x1bc] sm:$0xf]
        %v3592 = vld [vmem:[%s3479 + $0x1c0] sm:$0xf]
        %v3593 = vld [vmem:[%s3479 + $0x1c4] sm:$0xf]
        %v3594 = vld [vmem:[%s3479 + $0x1c8] sm:$0xf]
        %v3595 = vld [vmem:[%s3479 + $0x1cc] sm:$0xf]
        %v3596 = vld [vmem:[%s3479 + $0x1d0] sm:$0xf]
        %v3597 = vld [vmem:[%s3479 + $0x1d4] sm:$0xf]
        %v3598 = vld [vmem:[%s3479 + $0x1d8] sm:$0xf]
        %v3599 = vld [vmem:[%s3479 + $0x1dc] sm:$0xf]
        %v3728 = vunpack.c.l.b16 %v3351
        %v3729 = vunpack.c.h.b16 %v3351
        %v3730 = vunpack.c.l.b16 %v3352
        %v3731 = vunpack.c.h.b16 %v3352
        %v3732 = vunpack.c.l.b16 %v3353
        %v3733 = vunpack.c.h.b16 %v3353
        %v3734 = vunpack.c.l.b16 %v3354
        %v3735 = vunpack.c.h.b16 %v3354
        %v3736 = vunpack.c.l.b16 %v3355
        %v3737 = vunpack.c.h.b16 %v3355
        %v3738 = vunpack.c.l.b16 %v3356
        %v3739 = vunpack.c.h.b16 %v3356
        %v3740 = vunpack.c.l.b16 %v3357
        %v3741 = vunpack.c.h.b16 %v3357
        %v3742 = vunpack.c.l.b16 %v3358
        %v3743 = vunpack.c.h.b16 %v3358
        %v3744 = vunpack.c.l.b16 %v3359
        %v3745 = vunpack.c.h.b16 %v3359
        %v3746 = vunpack.c.l.b16 %v3360
        %v3747 = vunpack.c.h.b16 %v3360
        %v3748 = vunpack.c.l.b16 %v3361
        %v3749 = vunpack.c.h.b16 %v3361
        %v3750 = vunpack.c.l.b16 %v3362
        %v3751 = vunpack.c.h.b16 %v3362
        %v3752 = vunpack.c.l.b16 %v3363
        %v3753 = vunpack.c.h.b16 %v3363
        %v3754 = vunpack.c.l.b16 %v3364
        %v3755 = vunpack.c.h.b16 %v3364
        %v3756 = vunpack.c.l.b16 %v3365
        %v3757 = vunpack.c.h.b16 %v3365
        %v3758 = vunpack.c.l.b16 %v3366
        %v3759 = vunpack.c.h.b16 %v3366
        %v3760 = vunpack.c.l.b16 %v3367
        %v3761 = vunpack.c.h.b16 %v3367
        %v3762 = vunpack.c.l.b16 %v3368
        %v3763 = vunpack.c.h.b16 %v3368
        %v3764 = vunpack.c.l.b16 %v3369
        %v3765 = vunpack.c.h.b16 %v3369
        %v3766 = vunpack.c.l.b16 %v3370
        %v3767 = vunpack.c.h.b16 %v3370
        %v3768 = vunpack.c.l.b16 %v3371
        %v3769 = vunpack.c.h.b16 %v3371
        %v3770 = vunpack.c.l.b16 %v3372
        %v3771 = vunpack.c.h.b16 %v3372
        %v3772 = vunpack.c.l.b16 %v3373
        %v3773 = vunpack.c.h.b16 %v3373
        %v3774 = vunpack.c.l.b16 %v3374
        %v3775 = vunpack.c.h.b16 %v3374
        %v3776 = vunpack.c.l.b16 %v3375
        %v3777 = vunpack.c.h.b16 %v3375
        %v3778 = vunpack.c.l.b16 %v3376
        %v3779 = vunpack.c.h.b16 %v3376
        %v3780 = vunpack.c.l.b16 %v3377
        %v3781 = vunpack.c.h.b16 %v3377
        %v3782 = vunpack.c.l.b16 %v3378
        %v3783 = vunpack.c.h.b16 %v3378
        %v3784 = vunpack.c.l.b16 %v3379
        %v3785 = vunpack.c.h.b16 %v3379
        %v3786 = vunpack.c.l.b16 %v3380
        %v3787 = vunpack.c.h.b16 %v3380
        %v3788 = vunpack.c.l.b16 %v3381
        %v3789 = vunpack.c.h.b16 %v3381
        %v3790 = vunpack.c.l.b16 %v3382
        %v3791 = vunpack.c.h.b16 %v3382
        %v3792 = vunpack.c.l.b16 %v3383
        %v3793 = vunpack.c.h.b16 %v3383
        %v3794 = vunpack.c.l.b16 %v3384
        %v3795 = vunpack.c.h.b16 %v3384
        %v3796 = vunpack.c.l.b16 %v3385
        %v3797 = vunpack.c.h.b16 %v3385
        %v3798 = vunpack.c.l.b16 %v3386
        %v3799 = vunpack.c.h.b16 %v3386
        %v3800 = vunpack.c.l.b16 %v3387
        %v3801 = vunpack.c.h.b16 %v3387
        %v3802 = vunpack.c.l.b16 %v3388
        %v3803 = vunpack.c.h.b16 %v3388
        %v3804 = vunpack.c.l.b16 %v3389
        %v3805 = vunpack.c.h.b16 %v3389
        %v3806 = vunpack.c.l.b16 %v3390
        %v3807 = vunpack.c.h.b16 %v3390
        %v3808 = vunpack.c.l.b16 %v3391
        %v3809 = vunpack.c.h.b16 %v3391
        %v3810 = vunpack.c.l.b16 %v3392
        %v3811 = vunpack.c.h.b16 %v3392
        %v3812 = vunpack.c.l.b16 %v3393
        %v3813 = vunpack.c.h.b16 %v3393
        %v3814 = vunpack.c.l.b16 %v3394
        %v3815 = vunpack.c.h.b16 %v3394
        %v3816 = vunpack.c.l.b16 %v3395
        %v3817 = vunpack.c.h.b16 %v3395
        %v3818 = vunpack.c.l.b16 %v3396
        %v3819 = vunpack.c.h.b16 %v3396
        %v3820 = vunpack.c.l.b16 %v3397
        %v3821 = vunpack.c.h.b16 %v3397
        %v3822 = vunpack.c.l.b16 %v3398
        %v3823 = vunpack.c.h.b16 %v3398
        %v3824 = vunpack.c.l.b16 %v3399
        %v3825 = vunpack.c.h.b16 %v3399
        %v3826 = vunpack.c.l.b16 %v3400
        %v3827 = vunpack.c.h.b16 %v3400
        %v3828 = vunpack.c.l.b16 %v3401
        %v3829 = vunpack.c.h.b16 %v3401
        %v3830 = vunpack.c.l.b16 %v3402
        %v3831 = vunpack.c.h.b16 %v3402
        %v3832 = vunpack.c.l.b16 %v3403
        %v3833 = vunpack.c.h.b16 %v3403
        %v3834 = vunpack.c.l.b16 %v3404
        %v3835 = vunpack.c.h.b16 %v3404
        %v3836 = vunpack.c.l.b16 %v3405
        %v3837 = vunpack.c.h.b16 %v3405
        %v3838 = vunpack.c.l.b16 %v3406
        %v3839 = vunpack.c.h.b16 %v3406
        %v3840 = vunpack.c.l.b16 %v3407
        %v3841 = vunpack.c.h.b16 %v3407
        %v3842 = vunpack.c.l.b16 %v3408
        %v3843 = vunpack.c.h.b16 %v3408
        %v3844 = vunpack.c.l.b16 %v3409
        %v3845 = vunpack.c.h.b16 %v3409
        %v3846 = vunpack.c.l.b16 %v3410
        %v3847 = vunpack.c.h.b16 %v3410
        %v3848 = vunpack.c.l.b16 %v3411
        %v3849 = vunpack.c.h.b16 %v3411
        %v3850 = vunpack.c.l.b16 %v3412
        %v3851 = vunpack.c.h.b16 %v3412
        %v3852 = vunpack.c.l.b16 %v3413
        %v3853 = vunpack.c.h.b16 %v3413
        %v3854 = vunpack.c.l.b16 %v3414
        %v3855 = vunpack.c.h.b16 %v3414
        %v3856 = vunpack.c.l.b16 %v3415
        %v3857 = vunpack.c.h.b16 %v3415
        %v3858 = vunpack.c.l.b16 %v3416
        %v3859 = vunpack.c.h.b16 %v3416
        %v3860 = vunpack.c.l.b16 %v3417
        %v3861 = vunpack.c.h.b16 %v3417
        %v3862 = vunpack.c.l.b16 %v3418
        %v3863 = vunpack.c.h.b16 %v3418
        %v3864 = vunpack.c.l.b16 %v3419
        %v3865 = vunpack.c.h.b16 %v3419
        %v3866 = vunpack.c.l.b16 %v3420
        %v3867 = vunpack.c.h.b16 %v3420
        %v3868 = vunpack.c.l.b16 %v3421
        %v3869 = vunpack.c.h.b16 %v3421
        %v3870 = vunpack.c.l.b16 %v3422
        %v3871 = vunpack.c.h.b16 %v3422
        %v3872 = vunpack.c.l.b16 %v3423
        %v3873 = vunpack.c.h.b16 %v3423
        %v3874 = vunpack.c.l.b16 %v3424
        %v3875 = vunpack.c.h.b16 %v3424
        %v3876 = vunpack.c.l.b16 %v3425
        %v3877 = vunpack.c.h.b16 %v3425
        %v3878 = vunpack.c.l.b16 %v3426
        %v3879 = vunpack.c.h.b16 %v3426
        %v3880 = vunpack.c.l.b16 %v3427
        %v3881 = vunpack.c.h.b16 %v3427
        %v3882 = vunpack.c.l.b16 %v3428
        %v3883 = vunpack.c.h.b16 %v3428
        %v3884 = vunpack.c.l.b16 %v3429
        %v3885 = vunpack.c.h.b16 %v3429
        %v3886 = vunpack.c.l.b16 %v3430
        %v3887 = vunpack.c.h.b16 %v3430
        %v3888 = vunpack.c.l.b16 %v3431
        %v3889 = vunpack.c.h.b16 %v3431
        %v3890 = vunpack.c.l.b16 %v3432
        %v3891 = vunpack.c.h.b16 %v3432
        %v3892 = vunpack.c.l.b16 %v3433
        %v3893 = vunpack.c.h.b16 %v3433
        %v3894 = vunpack.c.l.b16 %v3434
        %v3895 = vunpack.c.h.b16 %v3434
        %v3896 = vunpack.c.l.b16 %v3435
        %v3897 = vunpack.c.h.b16 %v3435
        %v3898 = vunpack.c.l.b16 %v3436
        %v3899 = vunpack.c.h.b16 %v3436
        %v3900 = vunpack.c.l.b16 %v3437
        %v3901 = vunpack.c.h.b16 %v3437
        %v3902 = vunpack.c.l.b16 %v3438
        %v3903 = vunpack.c.h.b16 %v3438
        %v3904 = vunpack.c.l.b16 %v3439
        %v3905 = vunpack.c.h.b16 %v3439
        %v3906 = vunpack.c.l.b16 %v3440
        %v3907 = vunpack.c.h.b16 %v3440
        %v3908 = vunpack.c.l.b16 %v3441
        %v3909 = vunpack.c.h.b16 %v3441
        %v3910 = vunpack.c.l.b16 %v3442
        %v3911 = vunpack.c.h.b16 %v3442
        %v3912 = vunpack.c.l.b16 %v3443
        %v3913 = vunpack.c.h.b16 %v3443
        %v3914 = vunpack.c.l.b16 %v3444
        %v3915 = vunpack.c.h.b16 %v3444
        %v3916 = vunpack.c.l.b16 %v3445
        %v3917 = vunpack.c.h.b16 %v3445
        %v3918 = vunpack.c.l.b16 %v3446
        %v3919 = vunpack.c.h.b16 %v3446
        %v3920 = vunpack.c.l.b16 %v3447
        %v3921 = vunpack.c.h.b16 %v3447
        %v3922 = vunpack.c.l.b16 %v3448
        %v3923 = vunpack.c.h.b16 %v3448
        %v3924 = vunpack.c.l.b16 %v3449
        %v3925 = vunpack.c.h.b16 %v3449
        %v3926 = vunpack.c.l.b16 %v3450
        %v3927 = vunpack.c.h.b16 %v3450
        %v3928 = vunpack.c.l.b16 %v3451
        %v3929 = vunpack.c.h.b16 %v3451
        %v3930 = vunpack.c.l.b16 %v3452
        %v3931 = vunpack.c.h.b16 %v3452
        %v3932 = vunpack.c.l.b16 %v3453
        %v3933 = vunpack.c.h.b16 %v3453
        %v3934 = vunpack.c.l.b16 %v3454
        %v3935 = vunpack.c.h.b16 %v3454
        %v3936 = vunpack.c.l.b16 %v3455
        %v3937 = vunpack.c.h.b16 %v3455
        %v3938 = vunpack.c.l.b16 %v3456
        %v3939 = vunpack.c.h.b16 %v3456
        %v3940 = vunpack.c.l.b16 %v3457
        %v3941 = vunpack.c.h.b16 %v3457
        %v3942 = vunpack.c.l.b16 %v3458
        %v3943 = vunpack.c.h.b16 %v3458
        %v3944 = vunpack.c.l.b16 %v3459
        %v3945 = vunpack.c.h.b16 %v3459
        %v3946 = vunpack.c.l.b16 %v3460
        %v3947 = vunpack.c.h.b16 %v3460
        %v3948 = vunpack.c.l.b16 %v3461
        %v3949 = vunpack.c.h.b16 %v3461
        %v3950 = vunpack.c.l.b16 %v3462
        %v3951 = vunpack.c.h.b16 %v3462
        %v3952 = vunpack.c.l.b16 %v3463
        %v3953 = vunpack.c.h.b16 %v3463
        %v3954 = vunpack.c.l.b16 %v3464
        %v3955 = vunpack.c.h.b16 %v3464
        %v3956 = vunpack.c.l.b16 %v3465
        %v3957 = vunpack.c.h.b16 %v3465
        %v3958 = vunpack.c.l.b16 %v3466
        %v3959 = vunpack.c.h.b16 %v3466
        %v3960 = vunpack.c.l.b16 %v3467
        %v3961 = vunpack.c.h.b16 %v3467
        %v3962 = vunpack.c.l.b16 %v3468
        %v3963 = vunpack.c.h.b16 %v3468
        %v3964 = vunpack.c.l.b16 %v3469
        %v3965 = vunpack.c.h.b16 %v3469
        %v3966 = vunpack.c.l.b16 %v3470
        %v3967 = vunpack.c.h.b16 %v3470
        %v3968 = vunpack.c.l.b16 %v3471
        %v3969 = vunpack.c.h.b16 %v3471
        %v3970 = vunpack.c.l.b16 %v3472
        %v3971 = vunpack.c.h.b16 %v3472
        %v3972 = vunpack.c.l.b16 %v3473
        %v3973 = vunpack.c.h.b16 %v3473
        %v3974 = vunpack.c.l.b16 %v3474
        %v3975 = vunpack.c.h.b16 %v3474
        %v3976 = vunpack.c.l.b16 %v3475
        %v3977 = vunpack.c.h.b16 %v3475
        %v3978 = vunpack.c.l.b16 %v3476
        %v3979 = vunpack.c.h.b16 %v3476
        %v3980 = vunpack.c.l.b16 %v3477
        %v3981 = vunpack.c.h.b16 %v3477
        %v3982 = vunpack.c.l.b16 %v3478
        %v3983 = vunpack.c.h.b16 %v3478
        %v3984 = vpack.c.b16 %v3736, %v3728
        %v3985 = vpack.c.b16 %v3737, %v3729
        %v3986 = vpack.c.b16 %v3738, %v3730
        %v3987 = vpack.c.b16 %v3739, %v3731
        %v3988 = vpack.c.b16 %v3740, %v3732
        %v3989 = vpack.c.b16 %v3741, %v3733
        %v3990 = vpack.c.b16 %v3742, %v3734
        %v3991 = vpack.c.b16 %v3743, %v3735
        %v3992 = vpack.c.b16 %v3752, %v3744
        %v3993 = vpack.c.b16 %v3753, %v3745
        %v3994 = vpack.c.b16 %v3754, %v3746
        %v3995 = vpack.c.b16 %v3755, %v3747
        %v3996 = vpack.c.b16 %v3756, %v3748
        %v3997 = vpack.c.b16 %v3757, %v3749
        %v3998 = vpack.c.b16 %v3758, %v3750
        %v3999 = vpack.c.b16 %v3759, %v3751
        %v4000 = vpack.c.b16 %v3768, %v3760
        %v4001 = vpack.c.b16 %v3769, %v3761
        %v4002 = vpack.c.b16 %v3770, %v3762
        %v4003 = vpack.c.b16 %v3771, %v3763
        %v4004 = vpack.c.b16 %v3772, %v3764
        %v4005 = vpack.c.b16 %v3773, %v3765
        %v4006 = vpack.c.b16 %v3774, %v3766
        %v4007 = vpack.c.b16 %v3775, %v3767
        %v4008 = vpack.c.b16 %v3784, %v3776
        %v4009 = vpack.c.b16 %v3785, %v3777
        %v4010 = vpack.c.b16 %v3786, %v3778
        %v4011 = vpack.c.b16 %v3787, %v3779
        %v4012 = vpack.c.b16 %v3788, %v3780
        %v4013 = vpack.c.b16 %v3789, %v3781
        %v4014 = vpack.c.b16 %v3790, %v3782
        %v4015 = vpack.c.b16 %v3791, %v3783
        %v4016 = vpack.c.b16 %v3800, %v3792
        %v4017 = vpack.c.b16 %v3801, %v3793
        %v4018 = vpack.c.b16 %v3802, %v3794
        %v4019 = vpack.c.b16 %v3803, %v3795
        %v4020 = vpack.c.b16 %v3804, %v3796
        %v4021 = vpack.c.b16 %v3805, %v3797
        %v4022 = vpack.c.b16 %v3806, %v3798
        %v4023 = vpack.c.b16 %v3807, %v3799
        %v4024 = vpack.c.b16 %v3816, %v3808
        %v4025 = vpack.c.b16 %v3817, %v3809
        %v4026 = vpack.c.b16 %v3818, %v3810
        %v4027 = vpack.c.b16 %v3819, %v3811
        %v4028 = vpack.c.b16 %v3820, %v3812
        %v4029 = vpack.c.b16 %v3821, %v3813
        %v4030 = vpack.c.b16 %v3822, %v3814
        %v4031 = vpack.c.b16 %v3823, %v3815
        %v4032 = vpack.c.b16 %v3832, %v3824
        %v4033 = vpack.c.b16 %v3833, %v3825
        %v4034 = vpack.c.b16 %v3834, %v3826
        %v4035 = vpack.c.b16 %v3835, %v3827
        %v4036 = vpack.c.b16 %v3836, %v3828
        %v4037 = vpack.c.b16 %v3837, %v3829
        %v4038 = vpack.c.b16 %v3838, %v3830
        %v4039 = vpack.c.b16 %v3839, %v3831
        %v4040 = vpack.c.b16 %v3848, %v3840
        %v4041 = vpack.c.b16 %v3849, %v3841
        %v4042 = vpack.c.b16 %v3850, %v3842
        %v4043 = vpack.c.b16 %v3851, %v3843
        %v4044 = vpack.c.b16 %v3852, %v3844
        %v4045 = vpack.c.b16 %v3853, %v3845
        %v4046 = vpack.c.b16 %v3854, %v3846
        %v4047 = vpack.c.b16 %v3855, %v3847
        %v4048 = vpack.c.b16 %v3864, %v3856
        %v4049 = vpack.c.b16 %v3865, %v3857
        %v4050 = vpack.c.b16 %v3866, %v3858
        %v4051 = vpack.c.b16 %v3867, %v3859
        %v4052 = vpack.c.b16 %v3868, %v3860
        %v4053 = vpack.c.b16 %v3869, %v3861
        %v4054 = vpack.c.b16 %v3870, %v3862
        %v4055 = vpack.c.b16 %v3871, %v3863
        %v4056 = vpack.c.b16 %v3880, %v3872
        %v4057 = vpack.c.b16 %v3881, %v3873
        %v4058 = vpack.c.b16 %v3882, %v3874
        %v4059 = vpack.c.b16 %v3883, %v3875
        %v4060 = vpack.c.b16 %v3884, %v3876
        %v4061 = vpack.c.b16 %v3885, %v3877
        %v4062 = vpack.c.b16 %v3886, %v3878
        %v4063 = vpack.c.b16 %v3887, %v3879
        %v4064 = vpack.c.b16 %v3896, %v3888
        %v4065 = vpack.c.b16 %v3897, %v3889
        %v4066 = vpack.c.b16 %v3898, %v3890
        %v4067 = vpack.c.b16 %v3899, %v3891
        %v4068 = vpack.c.b16 %v3900, %v3892
        %v4069 = vpack.c.b16 %v3901, %v3893
        %v4070 = vpack.c.b16 %v3902, %v3894
        %v4071 = vpack.c.b16 %v3903, %v3895
        %v4072 = vpack.c.b16 %v3912, %v3904
        %v4073 = vpack.c.b16 %v3913, %v3905
        %v4074 = vpack.c.b16 %v3914, %v3906
        %v4075 = vpack.c.b16 %v3915, %v3907
        %v4076 = vpack.c.b16 %v3916, %v3908
        %v4077 = vpack.c.b16 %v3917, %v3909
        %v4078 = vpack.c.b16 %v3918, %v3910
        %v4079 = vpack.c.b16 %v3919, %v3911
        %v4080 = vpack.c.b16 %v3928, %v3920
        %v4081 = vpack.c.b16 %v3929, %v3921
        %v4082 = vpack.c.b16 %v3930, %v3922
        %v4083 = vpack.c.b16 %v3931, %v3923
        %v4084 = vpack.c.b16 %v3932, %v3924
        %v4085 = vpack.c.b16 %v3933, %v3925
        %v4086 = vpack.c.b16 %v3934, %v3926
        %v4087 = vpack.c.b16 %v3935, %v3927
        %v4088 = vpack.c.b16 %v3944, %v3936
        %v4089 = vpack.c.b16 %v3945, %v3937
        %v4090 = vpack.c.b16 %v3946, %v3938
        %v4091 = vpack.c.b16 %v3947, %v3939
        %v4092 = vpack.c.b16 %v3948, %v3940
        %v4093 = vpack.c.b16 %v3949, %v3941
        %v4094 = vpack.c.b16 %v3950, %v3942
        %v4095 = vpack.c.b16 %v3951, %v3943
        %v4096 = vpack.c.b16 %v3960, %v3952
        %v4097 = vpack.c.b16 %v3961, %v3953
        %v4098 = vpack.c.b16 %v3962, %v3954
        %v4099 = vpack.c.b16 %v3963, %v3955
        %v4100 = vpack.c.b16 %v3964, %v3956
        %v4101 = vpack.c.b16 %v3965, %v3957
        %v4102 = vpack.c.b16 %v3966, %v3958
        %v4103 = vpack.c.b16 %v3967, %v3959
        %v4104 = vpack.c.b16 %v3976, %v3968
        %v4105 = vpack.c.b16 %v3977, %v3969
        %v4106 = vpack.c.b16 %v3978, %v3970
        %v4107 = vpack.c.b16 %v3979, %v3971
        %v4108 = vpack.c.b16 %v3980, %v3972
        %v4109 = vpack.c.b16 %v3981, %v3973
        %v4110 = vpack.c.b16 %v3982, %v3974
        %v4111 = vpack.c.b16 %v3983, %v3975
        %v4344 = vunpack.c.l.b16 %v3480
        %v4345 = vunpack.c.l.b16 %v3481
        %v4346 = vunpack.c.l.b16 %v3482
        %v4347 = vunpack.c.l.b16 %v3483
        %v4348 = vunpack.c.l.b16 %v3484
        %v4349 = vunpack.c.l.b16 %v3485
        %v4350 = vunpack.c.l.b16 %v3486
        %v4351 = vunpack.c.l.b16 %v3487
        %v4352 = vunpack.c.l.b16 %v3488
        %v4353 = vunpack.c.l.b16 %v3489
        %v4354 = vunpack.c.l.b16 %v3490
        %v4355 = vunpack.c.l.b16 %v3491
        %v4356 = vunpack.c.l.b16 %v3492
        %v4357 = vunpack.c.l.b16 %v3493
        %v4358 = vunpack.c.l.b16 %v3494
        %v4359 = vunpack.c.l.b16 %v3495
        %v4360 = vunpack.c.l.b16 %v3496
        %v4361 = vunpack.c.l.b16 %v3497
        %v4362 = vunpack.c.l.b16 %v3498
        %v4363 = vunpack.c.l.b16 %v3499
        %v4364 = vunpack.c.l.b16 %v3500
        %v4365 = vunpack.c.l.b16 %v3501
        %v4366 = vunpack.c.l.b16 %v3502
        %v4367 = vunpack.c.l.b16 %v3503
        %v4368 = vunpack.c.l.b16 %v3504
        %v4369 = vunpack.c.l.b16 %v3505
        %v4370 = vunpack.c.l.b16 %v3506
        %v4371 = vunpack.c.l.b16 %v3507
        %v4372 = vunpack.c.l.b16 %v3508
        %v4373 = vunpack.c.l.b16 %v3509
        %v4374 = vunpack.c.l.b16 %v3510
        %v4375 = vunpack.c.l.b16 %v3511
        %v4376 = vunpack.c.l.b16 %v3512
        %v4377 = vunpack.c.l.b16 %v3513
        %v4378 = vunpack.c.l.b16 %v3514
        %v4379 = vunpack.c.l.b16 %v3515
        %v4380 = vunpack.c.l.b16 %v3516
        %v4381 = vunpack.c.l.b16 %v3517
        %v4382 = vunpack.c.l.b16 %v3518
        %v4383 = vunpack.c.l.b16 %v3519
        %v4384 = vunpack.c.l.b16 %v3520
        %v4385 = vunpack.c.l.b16 %v3521
        %v4386 = vunpack.c.l.b16 %v3522
        %v4387 = vunpack.c.l.b16 %v3523
        %v4388 = vunpack.c.l.b16 %v3524
        %v4389 = vunpack.c.l.b16 %v3525
        %v4390 = vunpack.c.l.b16 %v3526
        %v4391 = vunpack.c.l.b16 %v3527
        %v4392 = vunpack.c.l.b16 %v3528
        %v4393 = vunpack.c.l.b16 %v3529
        %v4394 = vunpack.c.l.b16 %v3530
        %v4395 = vunpack.c.l.b16 %v3531
        %v4396 = vunpack.c.l.b16 %v3532
        %v4397 = vunpack.c.l.b16 %v3533
        %v4398 = vunpack.c.l.b16 %v3534
        %v4399 = vunpack.c.l.b16 %v3535
        %v4400 = vunpack.c.l.b16 %v3536
        %v4401 = vunpack.c.l.b16 %v3537
        %v4402 = vunpack.c.l.b16 %v3538
        %v4403 = vunpack.c.l.b16 %v3539
        %v4404 = vunpack.c.l.b16 %v3540
        %v4405 = vunpack.c.l.b16 %v3541
        %v4406 = vunpack.c.l.b16 %v3542
        %v4407 = vunpack.c.l.b16 %v3543
        %v4408 = vunpack.c.l.b16 %v3544
        %v4409 = vunpack.c.l.b16 %v3545
        %v4410 = vunpack.c.l.b16 %v3546
        %v4411 = vunpack.c.l.b16 %v3547
        %v4412 = vunpack.c.l.b16 %v3548
        %v4413 = vunpack.c.l.b16 %v3549
        %v4414 = vunpack.c.l.b16 %v3550
        %v4415 = vunpack.c.l.b16 %v3551
        %v4416 = vunpack.c.l.b16 %v3552
        %v4417 = vunpack.c.l.b16 %v3553
        %v4418 = vunpack.c.l.b16 %v3554
        %v4419 = vunpack.c.l.b16 %v3555
        %v4420 = vunpack.c.l.b16 %v3556
        %v4421 = vunpack.c.l.b16 %v3557
        %v4422 = vunpack.c.l.b16 %v3558
        %v4423 = vunpack.c.l.b16 %v3559
        %v4424 = vunpack.c.l.b16 %v3560
        %v4425 = vunpack.c.l.b16 %v3561
        %v4426 = vunpack.c.l.b16 %v3562
        %v4427 = vunpack.c.l.b16 %v3563
        %v4428 = vunpack.c.l.b16 %v3564
        %v4429 = vunpack.c.l.b16 %v3565
        %v4430 = vunpack.c.l.b16 %v3566
        %v4431 = vunpack.c.l.b16 %v3567
        %v4432 = vunpack.c.l.b16 %v3568
        %v4433 = vunpack.c.l.b16 %v3569
        %v4434 = vunpack.c.l.b16 %v3570
        %v4435 = vunpack.c.l.b16 %v3571
        %v4436 = vunpack.c.l.b16 %v3572
        %v4437 = vunpack.c.l.b16 %v3573
        %v4438 = vunpack.c.l.b16 %v3574
        %v4439 = vunpack.c.l.b16 %v3575
        %v4440 = vunpack.c.l.b16 %v3576
        %v4441 = vunpack.c.l.b16 %v3577
        %v4442 = vunpack.c.l.b16 %v3578
        %v4443 = vunpack.c.l.b16 %v3579
        %v4444 = vunpack.c.l.b16 %v3580
        %v4445 = vunpack.c.l.b16 %v3581
        %v4446 = vunpack.c.l.b16 %v3582
        %v4447 = vunpack.c.l.b16 %v3583
        %v4448 = vunpack.c.l.b16 %v3584
        %v4449 = vunpack.c.l.b16 %v3585
        %v4450 = vunpack.c.l.b16 %v3586
        %v4451 = vunpack.c.l.b16 %v3587
        %v4452 = vunpack.c.l.b16 %v3588
        %v4453 = vunpack.c.l.b16 %v3589
        %v4454 = vunpack.c.l.b16 %v3590
        %v4455 = vunpack.c.l.b16 %v3591
        %v4456 = vunpack.c.l.b16 %v3592
        %v4457 = vunpack.c.l.b16 %v3593
        %v4458 = vunpack.c.l.b16 %v3594
        %v4459 = vunpack.c.l.b16 %v3595
        %v4460 = vunpack.c.l.b16 %v3596
        %v4461 = vunpack.c.l.b16 %v3597
        %v4462 = vunpack.c.l.b16 %v3598
        %v4463 = vunpack.c.l.b16 %v3599
        %v4464 = vpack.c.b16 %v4345, %v4344
        %v4465 = vpack.c.b16 %v4347, %v4346
        %v4466 = vpack.c.b16 %v4349, %v4348
        %v4467 = vpack.c.b16 %v4351, %v4350
        %v4468 = vpack.c.b16 %v4353, %v4352
        %v4469 = vpack.c.b16 %v4355, %v4354
        %v4470 = vpack.c.b16 %v4357, %v4356
        %v4471 = vpack.c.b16 %v4359, %v4358
        %v4472 = vpack.c.b16 %v4361, %v4360
        %v4473 = vpack.c.b16 %v4363, %v4362
        %v4474 = vpack.c.b16 %v4365, %v4364
        %v4475 = vpack.c.b16 %v4367, %v4366
        %v4476 = vpack.c.b16 %v4369, %v4368
        %v4477 = vpack.c.b16 %v4371, %v4370
        %v4478 = vpack.c.b16 %v4373, %v4372
        %v4479 = vpack.c.b16 %v4375, %v4374
        %v4480 = vpack.c.b16 %v4377, %v4376
        %v4481 = vpack.c.b16 %v4379, %v4378
        %v4482 = vpack.c.b16 %v4381, %v4380
        %v4483 = vpack.c.b16 %v4383, %v4382
        %v4484 = vpack.c.b16 %v4385, %v4384
        %v4485 = vpack.c.b16 %v4387, %v4386
        %v4486 = vpack.c.b16 %v4389, %v4388
        %v4487 = vpack.c.b16 %v4391, %v4390
        %v4488 = vpack.c.b16 %v4393, %v4392
        %v4489 = vpack.c.b16 %v4395, %v4394
        %v4490 = vpack.c.b16 %v4397, %v4396
        %v4491 = vpack.c.b16 %v4399, %v4398
        %v4492 = vpack.c.b16 %v4401, %v4400
        %v4493 = vpack.c.b16 %v4403, %v4402
        %v4494 = vpack.c.b16 %v4405, %v4404
        %v4495 = vpack.c.b16 %v4407, %v4406
        %v4496 = vpack.c.b16 %v4409, %v4408
        %v4497 = vpack.c.b16 %v4411, %v4410
        %v4498 = vpack.c.b16 %v4413, %v4412
        %v4499 = vpack.c.b16 %v4415, %v4414
        %v4500 = vpack.c.b16 %v4417, %v4416
        %v4501 = vpack.c.b16 %v4419, %v4418
        %v4502 = vpack.c.b16 %v4421, %v4420
        %v4503 = vpack.c.b16 %v4423, %v4422
        %v4504 = vpack.c.b16 %v4425, %v4424
        %v4505 = vpack.c.b16 %v4427, %v4426
        %v4506 = vpack.c.b16 %v4429, %v4428
        %v4507 = vpack.c.b16 %v4431, %v4430
        %v4508 = vpack.c.b16 %v4433, %v4432
        %v4509 = vpack.c.b16 %v4435, %v4434
        %v4510 = vpack.c.b16 %v4437, %v4436
        %v4511 = vpack.c.b16 %v4439, %v4438
        %v4512 = vpack.c.b16 %v4441, %v4440
        %v4513 = vpack.c.b16 %v4443, %v4442
        %v4514 = vpack.c.b16 %v4445, %v4444
        %v4515 = vpack.c.b16 %v4447, %v4446
        %v4516 = vpack.c.b16 %v4449, %v4448
        %v4517 = vpack.c.b16 %v4451, %v4450
        %v4518 = vpack.c.b16 %v4453, %v4452
        %v4519 = vpack.c.b16 %v4455, %v4454
        %v4520 = vpack.c.b16 %v4457, %v4456
        %v4521 = vpack.c.b16 %v4459, %v4458
        %v4522 = vpack.c.b16 %v4461, %v4460
        %v4523 = vpack.c.b16 %v4463, %v4462
        %v4585 = vsel %vm1612, %v3991, 0
        %v4588 = vsel %vm1612, %v3999, 0
        %v4591 = vsel %vm1612, %v4007, 0
        %v4594 = vsel %vm1612, %v4015, 0
        %v4597 = vsel %vm1612, %v4023, 0
        %v4600 = vsel %vm1612, %v4031, 0
        %v4603 = vsel %vm1612, %v4039, 0
        %v4606 = vsel %vm1612, %v4047, 0
        %v4609 = vsel %vm1612, %v4055, 0
        %v4612 = vsel %vm1612, %v4063, 0
        %v4615 = vsel %vm1612, %v4071, 0
        %v4618 = vsel %vm1612, %v4079, 0
        %v4621 = vsel %vm1612, %v4087, 0
        %v4624 = vsel %vm1612, %v4095, 0
        %v4627 = vsel %vm1612, %v4103, 0
        %v4630 = vsel %vm1612, %v4111, 0
        %4632 = vmatprep.subr.bf16.mxu0 0
        %4633 = vmatpush1.bf16.msra.mxu0 %v4471
        %4634 = vmatprep.subr.bf16.mxu0 0
        %4635 = vmatpush1.bf16.msra.mxu0 %v4470
        %4636 = vmatprep.subr.bf16.mxu0 0
        %4637 = vmatpush1.bf16.msra.mxu0 %v4469
        %4638 = vmatprep.subr.bf16.mxu0 0
        %4639 = vmatpush1.bf16.msra.mxu0 %v4468
        %4640 = vmatprep.subr.bf16.mxu0 0
        %4641 = vmatpush1.bf16.msra.mxu0 %v4467
        %4642 = vmatprep.subr.bf16.mxu0 0
        %4643 = vmatpush1.bf16.msra.mxu0 %v4466
        %4644 = vmatprep.subr.bf16.mxu0 0
        %4645 = vmatpush1.bf16.msra.mxu0 %v4465
        %4646 = vmatprep.subr.bf16.mxu0 0
        %4647 = vmatpush1.bf16.msra.mxu0 %v4464
        %4648 = vmatprep.subr.bf16.mxu0 0
        %4649 = vmatpush2.bf16.msra.mxu0 %v4479
        %4650 = vmatprep.subr.bf16.mxu0 0
        %4651 = vmatpush2.bf16.msra.mxu0 %v4478
        %4652 = vmatprep.subr.bf16.mxu0 0
        %4653 = vmatpush2.bf16.msra.mxu0 %v4477
        %4654 = vmatprep.subr.bf16.mxu0 0
        %4655 = vmatpush2.bf16.msra.mxu0 %v4476
        %4656 = vmatprep.subr.bf16.mxu0 0
        %4657 = vmatpush2.bf16.msra.mxu0 %v4475
        %4658 = vmatprep.subr.bf16.mxu0 0
        %4659 = vmatpush2.bf16.msra.mxu0 %v4474
        %4660 = vmatprep.subr.bf16.mxu0 0
        %4661 = vmatpush2.bf16.msra.mxu0 %v4473
        %4662 = vmatprep.subr.bf16.mxu0 0
        %4663 = vmatpush2.bf16.msra.mxu0 %v4472
        %4664 = vmatprep.mubr.bf16.mxu0 %v3985
        %4665 = vmatmul.mubr.bf16.gmra.mxu0 %v3984
        %v4666 = vpop.f32.mrf.mxu0
        %v4667 = vadd.f32 0.0, %v4666
        %v4668 = vpop.f32.mrf.mxu0
        %v4669 = vpop.f32.mrf.mxu0
        %v4670 = vadd.f32 0.0, %v4669
        %v4671 = vpop.f32.mrf.mxu0
        %4672 = vmatprep.mubr.bf16.mxu0 %v3993
        %4673 = vmatmul.mubr.bf16.gmra.mxu0 %v3992
        %v4674 = vpop.f32.mrf.mxu0
        %v4675 = vadd.f32 0.0, %v4674
        %v4676 = vpop.f32.mrf.mxu0
        %v4677 = vpop.f32.mrf.mxu0
        %v4678 = vadd.f32 0.0, %v4677
        %v4679 = vpop.f32.mrf.mxu0
        %4680 = vmatprep.mubr.bf16.mxu0 %v4001
        %4681 = vmatmul.mubr.bf16.gmra.mxu0 %v4000
        %v4682 = vpop.f32.mrf.mxu0
        %v4683 = vadd.f32 0.0, %v4682
        %v4684 = vpop.f32.mrf.mxu0
        %v4685 = vpop.f32.mrf.mxu0
        %v4686 = vadd.f32 0.0, %v4685
        %v4687 = vpop.f32.mrf.mxu0
        %4688 = vmatprep.mubr.bf16.mxu0 %v4009
        %4689 = vmatmul.mubr.bf16.gmra.mxu0 %v4008
        %v4690 = vpop.f32.mrf.mxu0
        %v4691 = vadd.f32 0.0, %v4690
        %v4692 = vpop.f32.mrf.mxu0
        %v4693 = vpop.f32.mrf.mxu0
        %v4694 = vadd.f32 0.0, %v4693
        %v4695 = vpop.f32.mrf.mxu0
        %4696 = vmatprep.mubr.bf16.mxu0 %v4017
        %4697 = vmatmul.mubr.bf16.gmra.mxu0 %v4016
        %v4698 = vpop.f32.mrf.mxu0
        %v4699 = vadd.f32 0.0, %v4698
        %v4700 = vpop.f32.mrf.mxu0
        %v4701 = vpop.f32.mrf.mxu0
        %v4702 = vadd.f32 0.0, %v4701
        %v4703 = vpop.f32.mrf.mxu0
        %4704 = vmatprep.mubr.bf16.mxu0 %v4025
        %4705 = vmatmul.mubr.bf16.gmra.mxu0 %v4024
        %v4706 = vpop.f32.mrf.mxu0
        %v4707 = vadd.f32 0.0, %v4706
        %v4708 = vpop.f32.mrf.mxu0
        %v4709 = vpop.f32.mrf.mxu0
        %v4710 = vadd.f32 0.0, %v4709
        %v4711 = vpop.f32.mrf.mxu0
        %4712 = vmatprep.mubr.bf16.mxu0 %v4033
        %4713 = vmatmul.mubr.bf16.gmra.mxu0 %v4032
        %v4714 = vpop.f32.mrf.mxu0
        %v4715 = vadd.f32 0.0, %v4714
        %v4716 = vpop.f32.mrf.mxu0
        %v4717 = vpop.f32.mrf.mxu0
        %v4718 = vadd.f32 0.0, %v4717
        %v4719 = vpop.f32.mrf.mxu0
        %4720 = vmatprep.mubr.bf16.mxu0 %v4041
        %4721 = vmatmul.mubr.bf16.gmra.mxu0 %v4040
        %v4722 = vpop.f32.mrf.mxu0
        %v4723 = vadd.f32 0.0, %v4722
        %v4724 = vpop.f32.mrf.mxu0
        %v4725 = vpop.f32.mrf.mxu0
        %v4726 = vadd.f32 0.0, %v4725
        %v4727 = vpop.f32.mrf.mxu0
        %4728 = vmatprep.mubr.bf16.mxu0 %v4049
        %4729 = vmatmul.mubr.bf16.gmra.mxu0 %v4048
        %v4730 = vpop.f32.mrf.mxu0
        %v4731 = vadd.f32 0.0, %v4730
        %v4732 = vpop.f32.mrf.mxu0
        %v4733 = vpop.f32.mrf.mxu0
        %v4734 = vadd.f32 0.0, %v4733
        %v4735 = vpop.f32.mrf.mxu0
        %4736 = vmatprep.mubr.bf16.mxu0 %v4057
        %4737 = vmatmul.mubr.bf16.gmra.mxu0 %v4056
        %v4738 = vpop.f32.mrf.mxu0
        %v4739 = vadd.f32 0.0, %v4738
        %v4740 = vpop.f32.mrf.mxu0
        %v4741 = vpop.f32.mrf.mxu0
        %v4742 = vadd.f32 0.0, %v4741
        %v4743 = vpop.f32.mrf.mxu0
        %4744 = vmatprep.mubr.bf16.mxu0 %v4065
        %4745 = vmatmul.mubr.bf16.gmra.mxu0 %v4064
        %v4746 = vpop.f32.mrf.mxu0
        %v4747 = vadd.f32 0.0, %v4746
        %v4748 = vpop.f32.mrf.mxu0
        %v4749 = vpop.f32.mrf.mxu0
        %v4750 = vadd.f32 0.0, %v4749
        %v4751 = vpop.f32.mrf.mxu0
        %4752 = vmatprep.mubr.bf16.mxu0 %v4073
        %4753 = vmatmul.mubr.bf16.gmra.mxu0 %v4072
        %v4754 = vpop.f32.mrf.mxu0
        %v4755 = vadd.f32 0.0, %v4754
        %v4756 = vpop.f32.mrf.mxu0
        %v4757 = vpop.f32.mrf.mxu0
        %v4758 = vadd.f32 0.0, %v4757
        %v4759 = vpop.f32.mrf.mxu0
        %4760 = vmatprep.mubr.bf16.mxu0 %v4081
        %4761 = vmatmul.mubr.bf16.gmra.mxu0 %v4080
        %v4762 = vpop.f32.mrf.mxu0
        %v4763 = vadd.f32 0.0, %v4762
        %v4764 = vpop.f32.mrf.mxu0
        %v4765 = vpop.f32.mrf.mxu0
        %v4766 = vadd.f32 0.0, %v4765
        %v4767 = vpop.f32.mrf.mxu0
        %4768 = vmatprep.mubr.bf16.mxu0 %v4089
        %4769 = vmatmul.mubr.bf16.gmra.mxu0 %v4088
        %v4770 = vpop.f32.mrf.mxu0
        %v4771 = vadd.f32 0.0, %v4770
        %v4772 = vpop.f32.mrf.mxu0
        %v4773 = vpop.f32.mrf.mxu0
        %v4774 = vadd.f32 0.0, %v4773
        %v4775 = vpop.f32.mrf.mxu0
        %4776 = vmatprep.mubr.bf16.mxu0 %v4097
        %4777 = vmatmul.mubr.bf16.gmra.mxu0 %v4096
        %v4778 = vpop.f32.mrf.mxu0
        %v4779 = vadd.f32 0.0, %v4778
        %v4780 = vpop.f32.mrf.mxu0
        %v4781 = vpop.f32.mrf.mxu0
        %v4782 = vadd.f32 0.0, %v4781
        %v4783 = vpop.f32.mrf.mxu0
        %4784 = vmatprep.mubr.bf16.mxu0 %v4105
        %4785 = vmatmul.mubr.bf16.gmra.mxu0 %v4104
        %v4786 = vpop.f32.mrf.mxu0
        %v4787 = vadd.f32 0.0, %v4786
        %v4788 = vpop.f32.mrf.mxu0
        %v4789 = vpop.f32.mrf.mxu0
        %v4790 = vadd.f32 0.0, %v4789
        %v4791 = vpop.f32.mrf.mxu0
        %4792 = vdwg.mxu0
        %4793 = vmatprep.subr.bf16.mxu0 0
        %4794 = vmatpush1.bf16.msra.mxu0 %v4487
        %4795 = vmatprep.subr.bf16.mxu0 0
        %4796 = vmatpush1.bf16.msra.mxu0 %v4486
        %4797 = vmatprep.subr.bf16.mxu0 0
        %4798 = vmatpush1.bf16.msra.mxu0 %v4485
        %4799 = vmatprep.subr.bf16.mxu0 0
        %4800 = vmatpush1.bf16.msra.mxu0 %v4484
        %4801 = vmatprep.subr.bf16.mxu0 0
        %4802 = vmatpush1.bf16.msra.mxu0 %v4483
        %4803 = vmatprep.subr.bf16.mxu0 0
        %4804 = vmatpush1.bf16.msra.mxu0 %v4482
        %4805 = vmatprep.subr.bf16.mxu0 0
        %4806 = vmatpush1.bf16.msra.mxu0 %v4481
        %4807 = vmatprep.subr.bf16.mxu0 0
        %4808 = vmatpush1.bf16.msra.mxu0 %v4480
        %4809 = vmatprep.subr.bf16.mxu0 0
        %4810 = vmatpush2.bf16.msra.mxu0 %v4495
        %4811 = vmatprep.subr.bf16.mxu0 0
        %4812 = vmatpush2.bf16.msra.mxu0 %v4494
        %4813 = vmatprep.subr.bf16.mxu0 0
        %4814 = vmatpush2.bf16.msra.mxu0 %v4493
        %4815 = vmatprep.subr.bf16.mxu0 0
        %4816 = vmatpush2.bf16.msra.mxu0 %v4492
        %4817 = vmatprep.subr.bf16.mxu0 0
        %4818 = vmatpush2.bf16.msra.mxu0 %v4491
        %4819 = vmatprep.subr.bf16.mxu0 0
        %4820 = vmatpush2.bf16.msra.mxu0 %v4490
        %4821 = vmatprep.subr.bf16.mxu0 0
        %4822 = vmatpush2.bf16.msra.mxu0 %v4489
        %4823 = vmatprep.subr.bf16.mxu0 0
        %4824 = vmatpush2.bf16.msra.mxu0 %v4488
        %4825 = vmatprep.mubr.bf16.mxu0 %v3987
        %4826 = vmatmul.mubr.bf16.gmra.mxu0 %v3986
        %v4827 = vpop.f32.mrf.mxu0
        %v4828 = vadd.f32 %v4667, %v4827
        %v4829 = vpop.f32.mrf.mxu0
        %v4830 = vpop.f32.mrf.mxu0
        %v4831 = vadd.f32 %v4670, %v4830
        %v4832 = vpop.f32.mrf.mxu0
        %4833 = vmatprep.mubr.bf16.mxu0 %v3995
        %4834 = vmatmul.mubr.bf16.gmra.mxu0 %v3994
        %v4835 = vpop.f32.mrf.mxu0
        %v4836 = vadd.f32 %v4675, %v4835
        %v4837 = vpop.f32.mrf.mxu0
        %v4838 = vpop.f32.mrf.mxu0
        %v4839 = vadd.f32 %v4678, %v4838
        %v4840 = vpop.f32.mrf.mxu0
        %4841 = vmatprep.mubr.bf16.mxu0 %v4003
        %4842 = vmatmul.mubr.bf16.gmra.mxu0 %v4002
        %v4843 = vpop.f32.mrf.mxu0
        %v4844 = vadd.f32 %v4683, %v4843
        %v4845 = vpop.f32.mrf.mxu0
        %v4846 = vpop.f32.mrf.mxu0
        %v4847 = vadd.f32 %v4686, %v4846
        %v4848 = vpop.f32.mrf.mxu0
        %4849 = vmatprep.mubr.bf16.mxu0 %v4011
        %4850 = vmatmul.mubr.bf16.gmra.mxu0 %v4010
        %v4851 = vpop.f32.mrf.mxu0
        %v4852 = vadd.f32 %v4691, %v4851
        %v4853 = vpop.f32.mrf.mxu0
        %v4854 = vpop.f32.mrf.mxu0
        %v4855 = vadd.f32 %v4694, %v4854
        %v4856 = vpop.f32.mrf.mxu0
        %4857 = vmatprep.mubr.bf16.mxu0 %v4019
        %4858 = vmatmul.mubr.bf16.gmra.mxu0 %v4018
        %v4859 = vpop.f32.mrf.mxu0
        %v4860 = vadd.f32 %v4699, %v4859
        %v4861 = vpop.f32.mrf.mxu0
        %v4862 = vpop.f32.mrf.mxu0
        %v4863 = vadd.f32 %v4702, %v4862
        %v4864 = vpop.f32.mrf.mxu0
        %4865 = vmatprep.mubr.bf16.mxu0 %v4027
        %4866 = vmatmul.mubr.bf16.gmra.mxu0 %v4026
        %v4867 = vpop.f32.mrf.mxu0
        %v4868 = vadd.f32 %v4707, %v4867
        %v4869 = vpop.f32.mrf.mxu0
        %v4870 = vpop.f32.mrf.mxu0
        %v4871 = vadd.f32 %v4710, %v4870
        %v4872 = vpop.f32.mrf.mxu0
        %4873 = vmatprep.mubr.bf16.mxu0 %v4035
        %4874 = vmatmul.mubr.bf16.gmra.mxu0 %v4034
        %v4875 = vpop.f32.mrf.mxu0
        %v4876 = vadd.f32 %v4715, %v4875
        %v4877 = vpop.f32.mrf.mxu0
        %v4878 = vpop.f32.mrf.mxu0
        %v4879 = vadd.f32 %v4718, %v4878
        %v4880 = vpop.f32.mrf.mxu0
        %4881 = vmatprep.mubr.bf16.mxu0 %v4043
        %4882 = vmatmul.mubr.bf16.gmra.mxu0 %v4042
        %v4883 = vpop.f32.mrf.mxu0
        %v4884 = vadd.f32 %v4723, %v4883
        %v4885 = vpop.f32.mrf.mxu0
        %v4886 = vpop.f32.mrf.mxu0
        %v4887 = vadd.f32 %v4726, %v4886
        %v4888 = vpop.f32.mrf.mxu0
        %4889 = vmatprep.mubr.bf16.mxu0 %v4051
        %4890 = vmatmul.mubr.bf16.gmra.mxu0 %v4050
        %v4891 = vpop.f32.mrf.mxu0
        %v4892 = vadd.f32 %v4731, %v4891
        %v4893 = vpop.f32.mrf.mxu0
        %v4894 = vpop.f32.mrf.mxu0
        %v4895 = vadd.f32 %v4734, %v4894
        %v4896 = vpop.f32.mrf.mxu0
        %4897 = vmatprep.mubr.bf16.mxu0 %v4059
        %4898 = vmatmul.mubr.bf16.gmra.mxu0 %v4058
        %v4899 = vpop.f32.mrf.mxu0
        %v4900 = vadd.f32 %v4739, %v4899
        %v4901 = vpop.f32.mrf.mxu0
        %v4902 = vpop.f32.mrf.mxu0
        %v4903 = vadd.f32 %v4742, %v4902
        %v4904 = vpop.f32.mrf.mxu0
        %4905 = vmatprep.mubr.bf16.mxu0 %v4067
        %4906 = vmatmul.mubr.bf16.gmra.mxu0 %v4066
        %v4907 = vpop.f32.mrf.mxu0
        %v4908 = vadd.f32 %v4747, %v4907
        %v4909 = vpop.f32.mrf.mxu0
        %v4910 = vpop.f32.mrf.mxu0
        %v4911 = vadd.f32 %v4750, %v4910
        %v4912 = vpop.f32.mrf.mxu0
        %4913 = vmatprep.mubr.bf16.mxu0 %v4075
        %4914 = vmatmul.mubr.bf16.gmra.mxu0 %v4074
        %v4915 = vpop.f32.mrf.mxu0
        %v4916 = vadd.f32 %v4755, %v4915
        %v4917 = vpop.f32.mrf.mxu0
        %v4918 = vpop.f32.mrf.mxu0
        %v4919 = vadd.f32 %v4758, %v4918
        %v4920 = vpop.f32.mrf.mxu0
        %4921 = vmatprep.mubr.bf16.mxu0 %v4083
        %4922 = vmatmul.mubr.bf16.gmra.mxu0 %v4082
        %v4923 = vpop.f32.mrf.mxu0
        %v4924 = vadd.f32 %v4763, %v4923
        %v4925 = vpop.f32.mrf.mxu0
        %v4926 = vpop.f32.mrf.mxu0
        %v4927 = vadd.f32 %v4766, %v4926
        %v4928 = vpop.f32.mrf.mxu0
        %4929 = vmatprep.mubr.bf16.mxu0 %v4091
        %4930 = vmatmul.mubr.bf16.gmra.mxu0 %v4090
        %v4931 = vpop.f32.mrf.mxu0
        %v4932 = vadd.f32 %v4771, %v4931
        %v4933 = vpop.f32.mrf.mxu0
        %v4934 = vpop.f32.mrf.mxu0
        %v4935 = vadd.f32 %v4774, %v4934
        %v4936 = vpop.f32.mrf.mxu0
        %4937 = vmatprep.mubr.bf16.mxu0 %v4099
        %4938 = vmatmul.mubr.bf16.gmra.mxu0 %v4098
        %v4939 = vpop.f32.mrf.mxu0
        %v4940 = vadd.f32 %v4779, %v4939
        %v4941 = vpop.f32.mrf.mxu0
        %v4942 = vpop.f32.mrf.mxu0
        %v4943 = vadd.f32 %v4782, %v4942
        %v4944 = vpop.f32.mrf.mxu0
        %4945 = vmatprep.mubr.bf16.mxu0 %v4107
        %4946 = vmatmul.mubr.bf16.gmra.mxu0 %v4106
        %v4947 = vpop.f32.mrf.mxu0
        %v4948 = vadd.f32 %v4787, %v4947
        %v4949 = vpop.f32.mrf.mxu0
        %v4950 = vpop.f32.mrf.mxu0
        %v4951 = vadd.f32 %v4790, %v4950
        %v4952 = vpop.f32.mrf.mxu0
        %4953 = vdwg.mxu0
        %4954 = vmatprep.subr.bf16.mxu0 0
        %4955 = vmatpush1.bf16.msra.mxu0 %v4503
        %4956 = vmatprep.subr.bf16.mxu0 0
        %4957 = vmatpush1.bf16.msra.mxu0 %v4502
        %4958 = vmatprep.subr.bf16.mxu0 0
        %4959 = vmatpush1.bf16.msra.mxu0 %v4501
        %4960 = vmatprep.subr.bf16.mxu0 0
        %4961 = vmatpush1.bf16.msra.mxu0 %v4500
        %4962 = vmatprep.subr.bf16.mxu0 0
        %4963 = vmatpush1.bf16.msra.mxu0 %v4499
        %4964 = vmatprep.subr.bf16.mxu0 0
        %4965 = vmatpush1.bf16.msra.mxu0 %v4498
        %4966 = vmatprep.subr.bf16.mxu0 0
        %4967 = vmatpush1.bf16.msra.mxu0 %v4497
        %4968 = vmatprep.subr.bf16.mxu0 0
        %4969 = vmatpush1.bf16.msra.mxu0 %v4496
        %4970 = vmatprep.subr.bf16.mxu0 0
        %4971 = vmatpush2.bf16.msra.mxu0 %v4511
        %4972 = vmatprep.subr.bf16.mxu0 0
        %4973 = vmatpush2.bf16.msra.mxu0 %v4510
        %4974 = vmatprep.subr.bf16.mxu0 0
        %4975 = vmatpush2.bf16.msra.mxu0 %v4509
        %4976 = vmatprep.subr.bf16.mxu0 0
        %4977 = vmatpush2.bf16.msra.mxu0 %v4508
        %4978 = vmatprep.subr.bf16.mxu0 0
        %4979 = vmatpush2.bf16.msra.mxu0 %v4507
        %4980 = vmatprep.subr.bf16.mxu0 0
        %4981 = vmatpush2.bf16.msra.mxu0 %v4506
        %4982 = vmatprep.subr.bf16.mxu0 0
        %4983 = vmatpush2.bf16.msra.mxu0 %v4505
        %4984 = vmatprep.subr.bf16.mxu0 0
        %4985 = vmatpush2.bf16.msra.mxu0 %v4504
        %4986 = vmatprep.mubr.bf16.mxu0 %v3989
        %4987 = vmatmul.mubr.bf16.gmra.mxu0 %v3988
        %v4988 = vpop.f32.mrf.mxu0
        %v4989 = vadd.f32 %v4828, %v4988
        %v4990 = vpop.f32.mrf.mxu0
        %v4991 = vpop.f32.mrf.mxu0
        %v4992 = vadd.f32 %v4831, %v4991
        %v4993 = vpop.f32.mrf.mxu0
        %4994 = vmatprep.mubr.bf16.mxu0 %v3997
        %4995 = vmatmul.mubr.bf16.gmra.mxu0 %v3996
        %v4996 = vpop.f32.mrf.mxu0
        %v4997 = vadd.f32 %v4836, %v4996
        %v4998 = vpop.f32.mrf.mxu0
        %v4999 = vpop.f32.mrf.mxu0
        %v5000 = vadd.f32 %v4839, %v4999
        %v5001 = vpop.f32.mrf.mxu0
        %5002 = vmatprep.mubr.bf16.mxu0 %v4005
        %5003 = vmatmul.mubr.bf16.gmra.mxu0 %v4004
        %v5004 = vpop.f32.mrf.mxu0
        %v5005 = vadd.f32 %v4844, %v5004
        %v5006 = vpop.f32.mrf.mxu0
        %v5007 = vpop.f32.mrf.mxu0
        %v5008 = vadd.f32 %v4847, %v5007
        %v5009 = vpop.f32.mrf.mxu0
        %5010 = vmatprep.mubr.bf16.mxu0 %v4013
        %5011 = vmatmul.mubr.bf16.gmra.mxu0 %v4012
        %v5012 = vpop.f32.mrf.mxu0
        %v5013 = vadd.f32 %v4852, %v5012
        %v5014 = vpop.f32.mrf.mxu0
        %v5015 = vpop.f32.mrf.mxu0
        %v5016 = vadd.f32 %v4855, %v5015
        %v5017 = vpop.f32.mrf.mxu0
        %5018 = vmatprep.mubr.bf16.mxu0 %v4021
        %5019 = vmatmul.mubr.bf16.gmra.mxu0 %v4020
        %v5020 = vpop.f32.mrf.mxu0
        %v5021 = vadd.f32 %v4860, %v5020
        %v5022 = vpop.f32.mrf.mxu0
        %v5023 = vpop.f32.mrf.mxu0
        %v5024 = vadd.f32 %v4863, %v5023
        %v5025 = vpop.f32.mrf.mxu0
        %5026 = vmatprep.mubr.bf16.mxu0 %v4029
        %5027 = vmatmul.mubr.bf16.gmra.mxu0 %v4028
        %v5028 = vpop.f32.mrf.mxu0
        %v5029 = vadd.f32 %v4868, %v5028
        %v5030 = vpop.f32.mrf.mxu0
        %v5031 = vpop.f32.mrf.mxu0
        %v5032 = vadd.f32 %v4871, %v5031
        %v5033 = vpop.f32.mrf.mxu0
        %5034 = vmatprep.mubr.bf16.mxu0 %v4037
        %5035 = vmatmul.mubr.bf16.gmra.mxu0 %v4036
        %v5036 = vpop.f32.mrf.mxu0
        %v5037 = vadd.f32 %v4876, %v5036
        %v5038 = vpop.f32.mrf.mxu0
        %v5039 = vpop.f32.mrf.mxu0
        %v5040 = vadd.f32 %v4879, %v5039
        %v5041 = vpop.f32.mrf.mxu0
        %5042 = vmatprep.mubr.bf16.mxu0 %v4045
        %5043 = vmatmul.mubr.bf16.gmra.mxu0 %v4044
        %v5044 = vpop.f32.mrf.mxu0
        %v5045 = vadd.f32 %v4884, %v5044
        %v5046 = vpop.f32.mrf.mxu0
        %v5047 = vpop.f32.mrf.mxu0
        %v5048 = vadd.f32 %v4887, %v5047
        %v5049 = vpop.f32.mrf.mxu0
        %5050 = vmatprep.mubr.bf16.mxu0 %v4053
        %5051 = vmatmul.mubr.bf16.gmra.mxu0 %v4052
        %v5052 = vpop.f32.mrf.mxu0
        %v5053 = vadd.f32 %v4892, %v5052
        %v5054 = vpop.f32.mrf.mxu0
        %v5055 = vpop.f32.mrf.mxu0
        %v5056 = vadd.f32 %v4895, %v5055
        %v5057 = vpop.f32.mrf.mxu0
        %5058 = vmatprep.mubr.bf16.mxu0 %v4061
        %5059 = vmatmul.mubr.bf16.gmra.mxu0 %v4060
        %v5060 = vpop.f32.mrf.mxu0
        %v5061 = vadd.f32 %v4900, %v5060
        %v5062 = vpop.f32.mrf.mxu0
        %v5063 = vpop.f32.mrf.mxu0
        %v5064 = vadd.f32 %v4903, %v5063
        %v5065 = vpop.f32.mrf.mxu0
        %5066 = vmatprep.mubr.bf16.mxu0 %v4069
        %5067 = vmatmul.mubr.bf16.gmra.mxu0 %v4068
        %v5068 = vpop.f32.mrf.mxu0
        %v5069 = vadd.f32 %v4908, %v5068
        %v5070 = vpop.f32.mrf.mxu0
        %v5071 = vpop.f32.mrf.mxu0
        %v5072 = vadd.f32 %v4911, %v5071
        %v5073 = vpop.f32.mrf.mxu0
        %5074 = vmatprep.mubr.bf16.mxu0 %v4077
        %5075 = vmatmul.mubr.bf16.gmra.mxu0 %v4076
        %v5076 = vpop.f32.mrf.mxu0
        %v5077 = vadd.f32 %v4916, %v5076
        %v5078 = vpop.f32.mrf.mxu0
        %v5079 = vpop.f32.mrf.mxu0
        %v5080 = vadd.f32 %v4919, %v5079
        %v5081 = vpop.f32.mrf.mxu0
        %5082 = vmatprep.mubr.bf16.mxu0 %v4085
        %5083 = vmatmul.mubr.bf16.gmra.mxu0 %v4084
        %v5084 = vpop.f32.mrf.mxu0
        %v5085 = vadd.f32 %v4924, %v5084
        %v5086 = vpop.f32.mrf.mxu0
        %v5087 = vpop.f32.mrf.mxu0
        %v5088 = vadd.f32 %v4927, %v5087
        %v5089 = vpop.f32.mrf.mxu0
        %5090 = vmatprep.mubr.bf16.mxu0 %v4093
        %5091 = vmatmul.mubr.bf16.gmra.mxu0 %v4092
        %v5092 = vpop.f32.mrf.mxu0
        %v5093 = vadd.f32 %v4932, %v5092
        %v5094 = vpop.f32.mrf.mxu0
        %v5095 = vpop.f32.mrf.mxu0
        %v5096 = vadd.f32 %v4935, %v5095
        %v5097 = vpop.f32.mrf.mxu0
        %5098 = vmatprep.mubr.bf16.mxu0 %v4101
        %5099 = vmatmul.mubr.bf16.gmra.mxu0 %v4100
        %v5100 = vpop.f32.mrf.mxu0
        %v5101 = vadd.f32 %v4940, %v5100
        %v5102 = vpop.f32.mrf.mxu0
        %v5103 = vpop.f32.mrf.mxu0
        %v5104 = vadd.f32 %v4943, %v5103
        %v5105 = vpop.f32.mrf.mxu0
        %5106 = vmatprep.mubr.bf16.mxu0 %v4109
        %5107 = vmatmul.mubr.bf16.gmra.mxu0 %v4108
        %v5108 = vpop.f32.mrf.mxu0
        %v5109 = vadd.f32 %v4948, %v5108
        %v5110 = vpop.f32.mrf.mxu0
        %v5111 = vpop.f32.mrf.mxu0
        %v5112 = vadd.f32 %v4951, %v5111
        %v5113 = vpop.f32.mrf.mxu0
        %5114 = vdwg.mxu0
        %5115 = vmatprep.subr.bf16.mxu0 0
        %5116 = vmatpush1.bf16.msra.mxu0 %v4519
        %5117 = vmatprep.subr.bf16.mxu0 0
        %5118 = vmatpush1.bf16.msra.mxu0 %v4518
        %5119 = vmatprep.subr.bf16.mxu0 0
        %5120 = vmatpush1.bf16.msra.mxu0 %v4517
        %5121 = vmatprep.subr.bf16.mxu0 0
        %5122 = vmatpush1.bf16.msra.mxu0 %v4516
        %5123 = vmatprep.subr.bf16.mxu0 0
        %5124 = vmatpush1.bf16.msra.mxu0 %v4515
        %5125 = vmatprep.subr.bf16.mxu0 0
        %5126 = vmatpush1.bf16.msra.mxu0 %v4514
        %5127 = vmatprep.subr.bf16.mxu0 0
        %5128 = vmatpush1.bf16.msra.mxu0 %v4513
        %5129 = vmatprep.subr.bf16.mxu0 0
        %5130 = vmatpush1.bf16.msra.mxu0 %v4512
        %5131 = vmatprep.subr.bf16.mxu0 0
        %5132 = vmatpush2.bf16.msra.mxu0 0
        %5133 = vmatprep.subr.bf16.mxu0 0
        %5134 = vmatpush2.bf16.msra.mxu0 0
        %5135 = vmatprep.subr.bf16.mxu0 0
        %5136 = vmatpush2.bf16.msra.mxu0 0
        %5137 = vmatprep.subr.bf16.mxu0 0
        %5138 = vmatpush2.bf16.msra.mxu0 0
        %5139 = vmatprep.subr.bf16.mxu0 0
        %5140 = vmatpush2.bf16.msra.mxu0 %v4523
        %5141 = vmatprep.subr.bf16.mxu0 0
        %5142 = vmatpush2.bf16.msra.mxu0 %v4522
        %5143 = vmatprep.subr.bf16.mxu0 0
        %5144 = vmatpush2.bf16.msra.mxu0 %v4521
        %5145 = vmatprep.subr.bf16.mxu0 0
        %5146 = vmatpush2.bf16.msra.mxu0 %v4520
        %5147 = vmatprep.mubr.bf16.mxu0 %v4585
        %5148 = vmatmul.mubr.bf16.gmra.mxu0 %v3990
        %v5149 = vpop.f32.mrf.mxu0
        %v5150 = vadd.f32 %v4989, %v5149
        %v5151 = vpop.f32.mrf.mxu0
        %v5152 = vpop.f32.mrf.mxu0
        %v5153 = vadd.f32 %v4992, %v5152
        %v5154 = vpop.f32.mrf.mxu0
        %5155 = vmatprep.mubr.bf16.mxu0 %v4588
        %5156 = vmatmul.mubr.bf16.gmra.mxu0 %v3998
        %v5157 = vpop.f32.mrf.mxu0
        %v5158 = vadd.f32 %v4997, %v5157
        %v5159 = vpop.f32.mrf.mxu0
        %v5160 = vpop.f32.mrf.mxu0
        %v5161 = vadd.f32 %v5000, %v5160
        %v5162 = vpop.f32.mrf.mxu0
        %5163 = vmatprep.mubr.bf16.mxu0 %v4591
        %5164 = vmatmul.mubr.bf16.gmra.mxu0 %v4006
        %v5165 = vpop.f32.mrf.mxu0
        %v5166 = vadd.f32 %v5005, %v5165
        %v5167 = vpop.f32.mrf.mxu0
        %v5168 = vpop.f32.mrf.mxu0
        %v5169 = vadd.f32 %v5008, %v5168
        %v5170 = vpop.f32.mrf.mxu0
        %5171 = vmatprep.mubr.bf16.mxu0 %v4594
        %5172 = vmatmul.mubr.bf16.gmra.mxu0 %v4014
        %v5173 = vpop.f32.mrf.mxu0
        %v5174 = vadd.f32 %v5013, %v5173
        %v5175 = vpop.f32.mrf.mxu0
        %v5176 = vpop.f32.mrf.mxu0
        %v5177 = vadd.f32 %v5016, %v5176
        %v5178 = vpop.f32.mrf.mxu0
        %5179 = vmatprep.mubr.bf16.mxu0 %v4597
        %5180 = vmatmul.mubr.bf16.gmra.mxu0 %v4022
        %v5181 = vpop.f32.mrf.mxu0
        %v5182 = vadd.f32 %v5021, %v5181
        %v5183 = vpop.f32.mrf.mxu0
        %v5184 = vpop.f32.mrf.mxu0
        %v5185 = vadd.f32 %v5024, %v5184
        %v5186 = vpop.f32.mrf.mxu0
        %5187 = vmatprep.mubr.bf16.mxu0 %v4600
        %5188 = vmatmul.mubr.bf16.gmra.mxu0 %v4030
        %v5189 = vpop.f32.mrf.mxu0
        %v5190 = vadd.f32 %v5029, %v5189
        %v5191 = vpop.f32.mrf.mxu0
        %v5192 = vpop.f32.mrf.mxu0
        %v5193 = vadd.f32 %v5032, %v5192
        %v5194 = vpop.f32.mrf.mxu0
        %5195 = vmatprep.mubr.bf16.mxu0 %v4603
        %5196 = vmatmul.mubr.bf16.gmra.mxu0 %v4038
        %v5197 = vpop.f32.mrf.mxu0
        %v5198 = vadd.f32 %v5037, %v5197
        %v5199 = vpop.f32.mrf.mxu0
        %v5200 = vpop.f32.mrf.mxu0
        %v5201 = vadd.f32 %v5040, %v5200
        %v5202 = vpop.f32.mrf.mxu0
        %5203 = vmatprep.mubr.bf16.mxu0 %v4606
        %5204 = vmatmul.mubr.bf16.gmra.mxu0 %v4046
        %v5205 = vpop.f32.mrf.mxu0
        %v5206 = vadd.f32 %v5045, %v5205
        %v5207 = vpop.f32.mrf.mxu0
        %v5208 = vpop.f32.mrf.mxu0
        %v5209 = vadd.f32 %v5048, %v5208
        %v5210 = vpop.f32.mrf.mxu0
        %5211 = vmatprep.mubr.bf16.mxu0 %v4609
        %5212 = vmatmul.mubr.bf16.gmra.mxu0 %v4054
        %v5213 = vpop.f32.mrf.mxu0
        %v5214 = vadd.f32 %v5053, %v5213
        %v5215 = vpop.f32.mrf.mxu0
        %v5216 = vpop.f32.mrf.mxu0
        %v5217 = vadd.f32 %v5056, %v5216
        %v5218 = vpop.f32.mrf.mxu0
        %5219 = vmatprep.mubr.bf16.mxu0 %v4612
        %5220 = vmatmul.mubr.bf16.gmra.mxu0 %v4062
        %v5221 = vpop.f32.mrf.mxu0
        %v5222 = vadd.f32 %v5061, %v5221
        %v5223 = vpop.f32.mrf.mxu0
        %v5224 = vpop.f32.mrf.mxu0
        %v5225 = vadd.f32 %v5064, %v5224
        %v5226 = vpop.f32.mrf.mxu0
        %5227 = vmatprep.mubr.bf16.mxu0 %v4615
        %5228 = vmatmul.mubr.bf16.gmra.mxu0 %v4070
        %v5229 = vpop.f32.mrf.mxu0
        %v5230 = vadd.f32 %v5069, %v5229
        %v5231 = vpop.f32.mrf.mxu0
        %v5232 = vpop.f32.mrf.mxu0
        %v5233 = vadd.f32 %v5072, %v5232
        %v5234 = vpop.f32.mrf.mxu0
        %5235 = vmatprep.mubr.bf16.mxu0 %v4618
        %5236 = vmatmul.mubr.bf16.gmra.mxu0 %v4078
        %v5237 = vpop.f32.mrf.mxu0
        %v5238 = vadd.f32 %v5077, %v5237
        %v5239 = vpop.f32.mrf.mxu0
        %v5240 = vpop.f32.mrf.mxu0
        %v5241 = vadd.f32 %v5080, %v5240
        %v5242 = vpop.f32.mrf.mxu0
        %5243 = vmatprep.mubr.bf16.mxu0 %v4621
        %5244 = vmatmul.mubr.bf16.gmra.mxu0 %v4086
        %v5245 = vpop.f32.mrf.mxu0
        %v5246 = vadd.f32 %v5085, %v5245
        %v5247 = vpop.f32.mrf.mxu0
        %v5248 = vpop.f32.mrf.mxu0
        %v5249 = vadd.f32 %v5088, %v5248
        %v5250 = vpop.f32.mrf.mxu0
        %5251 = vmatprep.mubr.bf16.mxu0 %v4624
        %5252 = vmatmul.mubr.bf16.gmra.mxu0 %v4094
        %v5253 = vpop.f32.mrf.mxu0
        %v5254 = vadd.f32 %v5093, %v5253
        %v5255 = vpop.f32.mrf.mxu0
        %v5256 = vpop.f32.mrf.mxu0
        %v5257 = vadd.f32 %v5096, %v5256
        %v5258 = vpop.f32.mrf.mxu0
        %5259 = vmatprep.mubr.bf16.mxu0 %v4627
        %5260 = vmatmul.mubr.bf16.gmra.mxu0 %v4102
        %v5261 = vpop.f32.mrf.mxu0
        %v5262 = vadd.f32 %v5101, %v5261
        %v5263 = vpop.f32.mrf.mxu0
        %v5264 = vpop.f32.mrf.mxu0
        %v5265 = vadd.f32 %v5104, %v5264
        %v5266 = vpop.f32.mrf.mxu0
        %5267 = vmatprep.mubr.bf16.mxu0 %v4630
        %5268 = vmatmul.mubr.bf16.gmra.mxu0 %v4110
        %v5269 = vpop.f32.mrf.mxu0
        %v5270 = vadd.f32 %v5109, %v5269
        %v5271 = vpop.f32.mrf.mxu0
        %v5272 = vpop.f32.mrf.mxu0
        %v5273 = vadd.f32 %v5112, %v5272
        %v5274 = vpop.f32.mrf.mxu0
        %5275 = vdwg.mxu0
        %v5276 = vadd.f32 %v3225, %v5150
        %v5277 = vadd.f32 %v3228, %v5153
        %v5278 = vadd.f32 %v3233, %v5158
        %v5279 = vadd.f32 %v3236, %v5161
        %v5280 = vadd.f32 %v3241, %v5166
        %v5281 = vadd.f32 %v3244, %v5169
        %v5282 = vadd.f32 %v3249, %v5174
        %v5283 = vadd.f32 %v3252, %v5177
        %v5284 = vadd.f32 %v3257, %v5182
        %v5285 = vadd.f32 %v3260, %v5185
        %v5286 = vadd.f32 %v3265, %v5190
        %v5287 = vadd.f32 %v3268, %v5193
        %v5288 = vadd.f32 %v3273, %v5198
        %v5289 = vadd.f32 %v3276, %v5201
        %v5290 = vadd.f32 %v3281, %v5206
        %v5291 = vadd.f32 %v3284, %v5209
        %v5292 = vadd.f32 %v3289, %v5214
        %v5293 = vadd.f32 %v3292, %v5217
        %v5294 = vadd.f32 %v3297, %v5222
        %v5295 = vadd.f32 %v3300, %v5225
        %v5296 = vadd.f32 %v3305, %v5230
        %v5297 = vadd.f32 %v3308, %v5233
        %v5298 = vadd.f32 %v3313, %v5238
        %v5299 = vadd.f32 %v3316, %v5241
        %v5300 = vadd.f32 %v3321, %v5246
        %v5301 = vadd.f32 %v3324, %v5249
        %v5302 = vadd.f32 %v3329, %v5254
        %v5303 = vadd.f32 %v3332, %v5257
        %v5304 = vadd.f32 %v3337, %v5262
        %v5305 = vadd.f32 %v3340, %v5265
        %v5306 = vadd.f32 %v3345, %v5270
        %v5307 = vadd.f32 %v3348, %v5273
        %v5308 = vld [vmem:[%s2] sm:$0x1]
        %v5310 = vlaneseq
        %v5311 = vshrl.u32 %v5310, 7
        %v5312 = vsub.s32 0, %v5311
        %v5313 = vrot.slane %v5308, %v5312
        %v5315 = vadd.f32 %v5276, %v5313
        %v5316 = vadd.f32 %v5277, %v5313
        %v5317 = vadd.f32 %v5278, %v5313
        %v5318 = vadd.f32 %v5279, %v5313
        %v5319 = vadd.f32 %v5280, %v5313
        %v5320 = vadd.f32 %v5281, %v5313
        %v5321 = vadd.f32 %v5282, %v5313
        %v5322 = vadd.f32 %v5283, %v5313
        %v5323 = vadd.f32 %v5284, %v5313
        %v5324 = vadd.f32 %v5285, %v5313
        %v5325 = vadd.f32 %v5286, %v5313
        %v5326 = vadd.f32 %v5287, %v5313
        %v5327 = vadd.f32 %v5288, %v5313
        %v5328 = vadd.f32 %v5289, %v5313
        %v5329 = vadd.f32 %v5290, %v5313
        %v5330 = vadd.f32 %v5291, %v5313
        %v5331 = vadd.f32 %v5292, %v5313
        %v5332 = vadd.f32 %v5293, %v5313
        %v5333 = vadd.f32 %v5294, %v5313
        %v5334 = vadd.f32 %v5295, %v5313
        %v5335 = vadd.f32 %v5296, %v5313
        %v5336 = vadd.f32 %v5297, %v5313
        %v5337 = vadd.f32 %v5298, %v5313
        %v5338 = vadd.f32 %v5299, %v5313
        %v5339 = vadd.f32 %v5300, %v5313
        %v5340 = vadd.f32 %v5301, %v5313
        %v5341 = vadd.f32 %v5302, %v5313
        %v5342 = vadd.f32 %v5303, %v5313
        %v5343 = vadd.f32 %v5304, %v5313
        %v5344 = vadd.f32 %v5305, %v5313
        %v5345 = vadd.f32 %v5306, %v5313
        %v5346 = vadd.f32 %v5307, %v5313
        %v5347 = vmul.f32 %v5315, 0.2
        %v5348 = vmul.f32 %v5316, 0.2
        %v5349 = vmul.f32 %v5317, 0.2
        %v5350 = vmul.f32 %v5318, 0.2
        %v5351 = vmul.f32 %v5319, 0.2
        %v5352 = vmul.f32 %v5320, 0.2
        %v5353 = vmul.f32 %v5321, 0.2
        %v5354 = vmul.f32 %v5322, 0.2
        %v5355 = vmul.f32 %v5323, 0.2
        %v5356 = vmul.f32 %v5324, 0.2
        %v5357 = vmul.f32 %v5325, 0.2
        %v5358 = vmul.f32 %v5326, 0.2
        %v5359 = vmul.f32 %v5327, 0.2
        %v5360 = vmul.f32 %v5328, 0.2
        %v5361 = vmul.f32 %v5329, 0.2
        %v5362 = vmul.f32 %v5330, 0.2
        %v5363 = vmul.f32 %v5331, 0.2
        %v5364 = vmul.f32 %v5332, 0.2
        %v5365 = vmul.f32 %v5333, 0.2
        %v5366 = vmul.f32 %v5334, 0.2
        %v5367 = vmul.f32 %v5335, 0.2
        %v5368 = vmul.f32 %v5336, 0.2
        %v5369 = vmul.f32 %v5337, 0.2
        %v5370 = vmul.f32 %v5338, 0.2
        %v5371 = vmul.f32 %v5339, 0.2
        %v5372 = vmul.f32 %v5340, 0.2
        %v5373 = vmul.f32 %v5341, 0.2
        %v5374 = vmul.f32 %v5342, 0.2
        %v5375 = vmul.f32 %v5343, 0.2
        %v5376 = vmul.f32 %v5344, 0.2
        %v5377 = vmul.f32 %v5345, 0.2
        %v5378 = vmul.f32 %v5346, 0.2
        %v5379 = vmax.f32 %v5315, %v5347
        %v5380 = vmax.f32 %v5316, %v5348
        %v5381 = vmax.f32 %v5317, %v5349
        %v5382 = vmax.f32 %v5318, %v5350
        %v5383 = vmax.f32 %v5319, %v5351
        %v5384 = vmax.f32 %v5320, %v5352
        %v5385 = vmax.f32 %v5321, %v5353
        %v5386 = vmax.f32 %v5322, %v5354
        %v5387 = vmax.f32 %v5323, %v5355
        %v5388 = vmax.f32 %v5324, %v5356
        %v5389 = vmax.f32 %v5325, %v5357
        %v5390 = vmax.f32 %v5326, %v5358
        %v5391 = vmax.f32 %v5327, %v5359
        %v5392 = vmax.f32 %v5328, %v5360
        %v5393 = vmax.f32 %v5329, %v5361
        %v5394 = vmax.f32 %v5330, %v5362
        %v5395 = vmax.f32 %v5331, %v5363
        %v5396 = vmax.f32 %v5332, %v5364
        %v5397 = vmax.f32 %v5333, %v5365
        %v5398 = vmax.f32 %v5334, %v5366
        %v5399 = vmax.f32 %v5335, %v5367
        %v5400 = vmax.f32 %v5336, %v5368
        %v5401 = vmax.f32 %v5337, %v5369
        %v5402 = vmax.f32 %v5338, %v5370
        %v5403 = vmax.f32 %v5339, %v5371
        %v5404 = vmax.f32 %v5340, %v5372
        %v5405 = vmax.f32 %v5341, %v5373
        %v5406 = vmax.f32 %v5342, %v5374
        %v5407 = vmax.f32 %v5343, %v5375
        %v5408 = vmax.f32 %v5344, %v5376
        %v5409 = vmax.f32 %v5345, %v5377
        %v5410 = vmax.f32 %v5346, %v5378
        %v5411 = vpack.c.bf16 %v5380, %v5379
        %v5412 = vpack.c.bf16 %v5382, %v5381
        %v5413 = vpack.c.bf16 %v5384, %v5383
        %v5414 = vpack.c.bf16 %v5386, %v5385
        %v5415 = vpack.c.bf16 %v5388, %v5387
        %v5416 = vpack.c.bf16 %v5390, %v5389
        %v5417 = vpack.c.bf16 %v5392, %v5391
        %v5418 = vpack.c.bf16 %v5394, %v5393
        %v5419 = vpack.c.bf16 %v5396, %v5395
        %v5420 = vpack.c.bf16 %v5398, %v5397
        %v5421 = vpack.c.bf16 %v5400, %v5399
        %v5422 = vpack.c.bf16 %v5402, %v5401
        %v5423 = vpack.c.bf16 %v5404, %v5403
        %v5424 = vpack.c.bf16 %v5406, %v5405
        %v5425 = vpack.c.bf16 %v5408, %v5407
        %v5426 = vpack.c.bf16 %v5410, %v5409
        %v5427 = vld [vmem:[%s3] sm:$0xf]
        %v5428 = vld [vmem:[%s3 + $0x4] sm:$0xf]
        %v5429 = vld [vmem:[%s3 + $0x8] sm:$0xf]
        %v5430 = vld [vmem:[%s3 + $0xc] sm:$0xf]
        %v5435 = vunpack.c.l.b16 %v5427
        %v5436 = vunpack.c.l.b16 %v5428
        %v5437 = vunpack.c.l.b16 %v5429
        %v5438 = vunpack.c.l.b16 %v5430
        %v5439 = vpack.c.b16 %v5436, %v5435
        %v5440 = vpack.c.b16 %v5438, %v5437
        %vm5441 = vcmask 130048
        %v5443 = vsel %vm5441, %v5439, 0
        %v5446 = vsel %vm5441, %v5440, 0
        %5448 = vmatprep.subr.bf16.mxu0 0
        %5449 = vmatpush1.bf16.msra.mxu0 0
        %5450 = vmatprep.subr.bf16.mxu0 0
        %5451 = vmatpush1.bf16.msra.mxu0 0
        %5452 = vmatprep.subr.bf16.mxu0 0
        %5453 = vmatpush1.bf16.msra.mxu0 0
        %5454 = vmatprep.subr.bf16.mxu0 0
        %5455 = vmatpush1.bf16.msra.mxu0 0
        %5456 = vmatprep.subr.bf16.mxu0 0
        %5457 = vmatpush1.bf16.msra.mxu0 0
        %5458 = vmatprep.subr.bf16.mxu0 0
        %5459 = vmatpush1.bf16.msra.mxu0 0
        %5460 = vmatprep.subr.bf16.mxu0 0
        %5461 = vmatpush1.bf16.msra.mxu0 0
        %5462 = vmatprep.subr.bf16.mxu0 0
        %5463 = vmatpush1.bf16.msra.mxu0 %v5411
        %5464 = vmatprep.subr.bf16.mxu0 0
        %5465 = vmatpush2.bf16.msra.mxu0 0
        %5466 = vmatprep.subr.bf16.mxu0 0
        %5467 = vmatpush2.bf16.msra.mxu0 0
        %5468 = vmatprep.subr.bf16.mxu0 0
        %5469 = vmatpush2.bf16.msra.mxu0 0
        %5470 = vmatprep.subr.bf16.mxu0 0
        %5471 = vmatpush2.bf16.msra.mxu0 0
        %5472 = vmatprep.subr.bf16.mxu0 0
        %5473 = vmatpush2.bf16.msra.mxu0 0
        %5474 = vmatprep.subr.bf16.mxu0 0
        %5475 = vmatpush2.bf16.msra.mxu0 0
        %5476 = vmatprep.subr.bf16.mxu0 0
        %5477 = vmatpush2.bf16.msra.mxu0 0
        %5478 = vmatprep.subr.bf16.mxu0 0
        %5479 = vmatpush2.bf16.msra.mxu0 0
        %5480 = vmatprep.mubr.bf16.mxu0 0
        %5481 = vmatmul.mubr.bf16.gmra.mxu0 %v5443
        %v5482 = vpop.f32.mrf.mxu0
        %v5483 = vadd.f32 0.0, %v5482
        %v5484 = vpop.f32.mrf.mxu0
        %v5485 = vpop.f32.mrf.mxu0
        %v5486 = vadd.f32 0.0, %v5485
        %v5487 = vpop.f32.mrf.mxu0
        %5488 = vmatprep.mubr.bf16.mxu0 0
        %5489 = vmatmul.mubr.bf16.gmra.mxu0 %v5446
        %v5490 = vpop.f32.mrf.mxu0
        %v5491 = vadd.f32 0.0, %v5490
        %v5492 = vpop.f32.mrf.mxu0
        %v5493 = vpop.f32.mrf.mxu0
        %v5494 = vadd.f32 0.0, %v5493
        %v5495 = vpop.f32.mrf.mxu0
        %5496 = vdwg.mxu0
        %5497 = vmatprep.subr.bf16.mxu0 0
        %5498 = vmatpush1.bf16.msra.mxu0 0
        %5499 = vmatprep.subr.bf16.mxu0 0
        %5500 = vmatpush1.bf16.msra.mxu0 0
        %5501 = vmatprep.subr.bf16.mxu0 0
        %5502 = vmatpush1.bf16.msra.mxu0 0
        %5503 = vmatprep.subr.bf16.mxu0 0
        %5504 = vmatpush1.bf16.msra.mxu0 0
        %5505 = vmatprep.subr.bf16.mxu0 0
        %5506 = vmatpush1.bf16.msra.mxu0 0
        %5507 = vmatprep.subr.bf16.mxu0 0
        %5508 = vmatpush1.bf16.msra.mxu0 0
        %5509 = vmatprep.subr.bf16.mxu0 0
        %5510 = vmatpush1.bf16.msra.mxu0 0
        %5511 = vmatprep.subr.bf16.mxu0 0
        %5512 = vmatpush1.bf16.msra.mxu0 %v5412
        %5513 = vmatprep.subr.bf16.mxu0 0
        %5514 = vmatpush2.bf16.msra.mxu0 0
        %5515 = vmatprep.subr.bf16.mxu0 0
        %5516 = vmatpush2.bf16.msra.mxu0 0
        %5517 = vmatprep.subr.bf16.mxu0 0
        %5518 = vmatpush2.bf16.msra.mxu0 0
        %5519 = vmatprep.subr.bf16.mxu0 0
        %5520 = vmatpush2.bf16.msra.mxu0 0
        %5521 = vmatprep.subr.bf16.mxu0 0
        %5522 = vmatpush2.bf16.msra.mxu0 0
        %5523 = vmatprep.subr.bf16.mxu0 0
        %5524 = vmatpush2.bf16.msra.mxu0 0
        %5525 = vmatprep.subr.bf16.mxu0 0
        %5526 = vmatpush2.bf16.msra.mxu0 0
        %5527 = vmatprep.subr.bf16.mxu0 0
        %5528 = vmatpush2.bf16.msra.mxu0 0
        %5529 = vmatprep.mubr.bf16.mxu0 0
        %5530 = vmatmul.mubr.bf16.gmra.mxu0 %v5443
        %v5531 = vpop.f32.mrf.mxu0
        %v5532 = vadd.f32 0.0, %v5531
        %v5533 = vpop.f32.mrf.mxu0
        %v5534 = vpop.f32.mrf.mxu0
        %v5535 = vadd.f32 0.0, %v5534
        %v5536 = vpop.f32.mrf.mxu0
        %5537 = vmatprep.mubr.bf16.mxu0 0
        %5538 = vmatmul.mubr.bf16.gmra.mxu0 %v5446
        %v5539 = vpop.f32.mrf.mxu0
        %v5540 = vadd.f32 0.0, %v5539
        %v5541 = vpop.f32.mrf.mxu0
        %v5542 = vpop.f32.mrf.mxu0
        %v5543 = vadd.f32 0.0, %v5542
        %v5544 = vpop.f32.mrf.mxu0
        %5545 = vdwg.mxu0
        %5546 = vmatprep.subr.bf16.mxu0 0
        %5547 = vmatpush1.bf16.msra.mxu0 0
        %5548 = vmatprep.subr.bf16.mxu0 0
        %5549 = vmatpush1.bf16.msra.mxu0 0
        %5550 = vmatprep.subr.bf16.mxu0 0
        %5551 = vmatpush1.bf16.msra.mxu0 0
        %5552 = vmatprep.subr.bf16.mxu0 0
        %5553 = vmatpush1.bf16.msra.mxu0 0
        %5554 = vmatprep.subr.bf16.mxu0 0
        %5555 = vmatpush1.bf16.msra.mxu0 0
        %5556 = vmatprep.subr.bf16.mxu0 0
        %5557 = vmatpush1.bf16.msra.mxu0 0
        %5558 = vmatprep.subr.bf16.mxu0 0
        %5559 = vmatpush1.bf16.msra.mxu0 0
        %5560 = vmatprep.subr.bf16.mxu0 0
        %5561 = vmatpush1.bf16.msra.mxu0 %v5413
        %5562 = vmatprep.subr.bf16.mxu0 0
        %5563 = vmatpush2.bf16.msra.mxu0 0
        %5564 = vmatprep.subr.bf16.mxu0 0
        %5565 = vmatpush2.bf16.msra.mxu0 0
        %5566 = vmatprep.subr.bf16.mxu0 0
        %5567 = vmatpush2.bf16.msra.mxu0 0
        %5568 = vmatprep.subr.bf16.mxu0 0
        %5569 = vmatpush2.bf16.msra.mxu0 0
        %5570 = vmatprep.subr.bf16.mxu0 0
        %5571 = vmatpush2.bf16.msra.mxu0 0
        %5572 = vmatprep.subr.bf16.mxu0 0
        %5573 = vmatpush2.bf16.msra.mxu0 0
        %5574 = vmatprep.subr.bf16.mxu0 0
        %5575 = vmatpush2.bf16.msra.mxu0 0
        %5576 = vmatprep.subr.bf16.mxu0 0
        %5577 = vmatpush2.bf16.msra.mxu0 0
        %5578 = vmatprep.mubr.bf16.mxu0 0
        %5579 = vmatmul.mubr.bf16.gmra.mxu0 %v5443
        %v5580 = vpop.f32.mrf.mxu0
        %v5581 = vadd.f32 0.0, %v5580
        %v5582 = vpop.f32.mrf.mxu0
        %v5583 = vpop.f32.mrf.mxu0
        %v5584 = vadd.f32 0.0, %v5583
        %v5585 = vpop.f32.mrf.mxu0
        %5586 = vmatprep.mubr.bf16.mxu0 0
        %5587 = vmatmul.mubr.bf16.gmra.mxu0 %v5446
        %v5588 = vpop.f32.mrf.mxu0
        %v5589 = vadd.f32 0.0, %v5588
        %v5590 = vpop.f32.mrf.mxu0
        %v5591 = vpop.f32.mrf.mxu0
        %v5592 = vadd.f32 0.0, %v5591
        %v5593 = vpop.f32.mrf.mxu0
        %5594 = vdwg.mxu0
        %5595 = vmatprep.subr.bf16.mxu0 0
        %5596 = vmatpush1.bf16.msra.mxu0 0
        %5597 = vmatprep.subr.bf16.mxu0 0
        %5598 = vmatpush1.bf16.msra.mxu0 0
        %5599 = vmatprep.subr.bf16.mxu0 0
        %5600 = vmatpush1.bf16.msra.mxu0 0
        %5601 = vmatprep.subr.bf16.mxu0 0
        %5602 = vmatpush1.bf16.msra.mxu0 0
        %5603 = vmatprep.subr.bf16.mxu0 0
        %5604 = vmatpush1.bf16.msra.mxu0 0
        %5605 = vmatprep.subr.bf16.mxu0 0
        %5606 = vmatpush1.bf16.msra.mxu0 0
        %5607 = vmatprep.subr.bf16.mxu0 0
        %5608 = vmatpush1.bf16.msra.mxu0 0
        %5609 = vmatprep.subr.bf16.mxu0 0
        %5610 = vmatpush1.bf16.msra.mxu0 %v5414
        %5611 = vmatprep.subr.bf16.mxu0 0
        %5612 = vmatpush2.bf16.msra.mxu0 0
        %5613 = vmatprep.subr.bf16.mxu0 0
        %5614 = vmatpush2.bf16.msra.mxu0 0
        %5615 = vmatprep.subr.bf16.mxu0 0
        %5616 = vmatpush2.bf16.msra.mxu0 0
        %5617 = vmatprep.subr.bf16.mxu0 0
        %5618 = vmatpush2.bf16.msra.mxu0 0
        %5619 = vmatprep.subr.bf16.mxu0 0
        %5620 = vmatpush2.bf16.msra.mxu0 0
        %5621 = vmatprep.subr.bf16.mxu0 0
        %5622 = vmatpush2.bf16.msra.mxu0 0
        %5623 = vmatprep.subr.bf16.mxu0 0
        %5624 = vmatpush2.bf16.msra.mxu0 0
        %5625 = vmatprep.subr.bf16.mxu0 0
        %5626 = vmatpush2.bf16.msra.mxu0 0
        %5627 = vmatprep.mubr.bf16.mxu0 0
        %5628 = vmatmul.mubr.bf16.gmra.mxu0 %v5443
        %v5629 = vpop.f32.mrf.mxu0
        %v5630 = vadd.f32 0.0, %v5629
        %v5631 = vpop.f32.mrf.mxu0
        %v5632 = vpop.f32.mrf.mxu0
        %v5633 = vadd.f32 0.0, %v5632
        %v5634 = vpop.f32.mrf.mxu0
        %5635 = vmatprep.mubr.bf16.mxu0 0
        %5636 = vmatmul.mubr.bf16.gmra.mxu0 %v5446
        %v5637 = vpop.f32.mrf.mxu0
        %v5638 = vadd.f32 0.0, %v5637
        %v5639 = vpop.f32.mrf.mxu0
        %v5640 = vpop.f32.mrf.mxu0
        %v5641 = vadd.f32 0.0, %v5640
        %v5642 = vpop.f32.mrf.mxu0
        %5643 = vdwg.mxu0
        %5644 = vmatprep.subr.bf16.mxu0 0
        %5645 = vmatpush1.bf16.msra.mxu0 0
        %5646 = vmatprep.subr.bf16.mxu0 0
        %5647 = vmatpush1.bf16.msra.mxu0 0
        %5648 = vmatprep.subr.bf16.mxu0 0
        %5649 = vmatpush1.bf16.msra.mxu0 0
        %5650 = vmatprep.subr.bf16.mxu0 0
        %5651 = vmatpush1.bf16.msra.mxu0 0
        %5652 = vmatprep.subr.bf16.mxu0 0
        %5653 = vmatpush1.bf16.msra.mxu0 0
        %5654 = vmatprep.subr.bf16.mxu0 0
        %5655 = vmatpush1.bf16.msra.mxu0 0
        %5656 = vmatprep.subr.bf16.mxu0 0
        %5657 = vmatpush1.bf16.msra.mxu0 0
        %5658 = vmatprep.subr.bf16.mxu0 0
        %5659 = vmatpush1.bf16.msra.mxu0 %v5415
        %5660 = vmatprep.subr.bf16.mxu0 0
        %5661 = vmatpush2.bf16.msra.mxu0 0
        %5662 = vmatprep.subr.bf16.mxu0 0
        %5663 = vmatpush2.bf16.msra.mxu0 0
        %5664 = vmatprep.subr.bf16.mxu0 0
        %5665 = vmatpush2.bf16.msra.mxu0 0
        %5666 = vmatprep.subr.bf16.mxu0 0
        %5667 = vmatpush2.bf16.msra.mxu0 0
        %5668 = vmatprep.subr.bf16.mxu0 0
        %5669 = vmatpush2.bf16.msra.mxu0 0
        %5670 = vmatprep.subr.bf16.mxu0 0
        %5671 = vmatpush2.bf16.msra.mxu0 0
        %5672 = vmatprep.subr.bf16.mxu0 0
        %5673 = vmatpush2.bf16.msra.mxu0 0
        %5674 = vmatprep.subr.bf16.mxu0 0
        %5675 = vmatpush2.bf16.msra.mxu0 0
        %5676 = vmatprep.mubr.bf16.mxu0 0
        %5677 = vmatmul.mubr.bf16.gmra.mxu0 %v5443
        %v5678 = vpop.f32.mrf.mxu0
        %v5679 = vadd.f32 0.0, %v5678
        %v5680 = vpop.f32.mrf.mxu0
        %v5681 = vpop.f32.mrf.mxu0
        %v5682 = vadd.f32 0.0, %v5681
        %v5683 = vpop.f32.mrf.mxu0
        %5684 = vmatprep.mubr.bf16.mxu0 0
        %5685 = vmatmul.mubr.bf16.gmra.mxu0 %v5446
        %v5686 = vpop.f32.mrf.mxu0
        %v5687 = vadd.f32 0.0, %v5686
        %v5688 = vpop.f32.mrf.mxu0
        %v5689 = vpop.f32.mrf.mxu0
        %v5690 = vadd.f32 0.0, %v5689
        %v5691 = vpop.f32.mrf.mxu0
        %5692 = vdwg.mxu0
        %5693 = vmatprep.subr.bf16.mxu0 0
        %5694 = vmatpush1.bf16.msra.mxu0 0
        %5695 = vmatprep.subr.bf16.mxu0 0
        %5696 = vmatpush1.bf16.msra.mxu0 0
        %5697 = vmatprep.subr.bf16.mxu0 0
        %5698 = vmatpush1.bf16.msra.mxu0 0
        %5699 = vmatprep.subr.bf16.mxu0 0
        %5700 = vmatpush1.bf16.msra.mxu0 0
        %5701 = vmatprep.subr.bf16.mxu0 0
        %5702 = vmatpush1.bf16.msra.mxu0 0
        %5703 = vmatprep.subr.bf16.mxu0 0
        %5704 = vmatpush1.bf16.msra.mxu0 0
        %5705 = vmatprep.subr.bf16.mxu0 0
        %5706 = vmatpush1.bf16.msra.mxu0 0
        %5707 = vmatprep.subr.bf16.mxu0 0
        %5708 = vmatpush1.bf16.msra.mxu0 %v5416
        %5709 = vmatprep.subr.bf16.mxu0 0
        %5710 = vmatpush2.bf16.msra.mxu0 0
        %5711 = vmatprep.subr.bf16.mxu0 0
        %5712 = vmatpush2.bf16.msra.mxu0 0
        %5713 = vmatprep.subr.bf16.mxu0 0
        %5714 = vmatpush2.bf16.msra.mxu0 0
        %5715 = vmatprep.subr.bf16.mxu0 0
        %5716 = vmatpush2.bf16.msra.mxu0 0
        %5717 = vmatprep.subr.bf16.mxu0 0
        %5718 = vmatpush2.bf16.msra.mxu0 0
        %5719 = vmatprep.subr.bf16.mxu0 0
        %5720 = vmatpush2.bf16.msra.mxu0 0
        %5721 = vmatprep.subr.bf16.mxu0 0
        %5722 = vmatpush2.bf16.msra.mxu0 0
        %5723 = vmatprep.subr.bf16.mxu0 0
        %5724 = vmatpush2.bf16.msra.mxu0 0
        %5725 = vmatprep.mubr.bf16.mxu0 0
        %5726 = vmatmul.mubr.bf16.gmra.mxu0 %v5443
        %v5727 = vpop.f32.mrf.mxu0
        %v5728 = vadd.f32 0.0, %v5727
        %v5729 = vpop.f32.mrf.mxu0
        %v5730 = vpop.f32.mrf.mxu0
        %v5731 = vadd.f32 0.0, %v5730
        %v5732 = vpop.f32.mrf.mxu0
        %5733 = vmatprep.mubr.bf16.mxu0 0
        %5734 = vmatmul.mubr.bf16.gmra.mxu0 %v5446
        %v5735 = vpop.f32.mrf.mxu0
        %v5736 = vadd.f32 0.0, %v5735
        %v5737 = vpop.f32.mrf.mxu0
        %v5738 = vpop.f32.mrf.mxu0
        %v5739 = vadd.f32 0.0, %v5738
        %v5740 = vpop.f32.mrf.mxu0
        %5741 = vdwg.mxu0
        %5742 = vmatprep.subr.bf16.mxu0 0
        %5743 = vmatpush1.bf16.msra.mxu0 0
        %5744 = vmatprep.subr.bf16.mxu0 0
        %5745 = vmatpush1.bf16.msra.mxu0 0
        %5746 = vmatprep.subr.bf16.mxu0 0
        %5747 = vmatpush1.bf16.msra.mxu0 0
        %5748 = vmatprep.subr.bf16.mxu0 0
        %5749 = vmatpush1.bf16.msra.mxu0 0
        %5750 = vmatprep.subr.bf16.mxu0 0
        %5751 = vmatpush1.bf16.msra.mxu0 0
        %5752 = vmatprep.subr.bf16.mxu0 0
        %5753 = vmatpush1.bf16.msra.mxu0 0
        %5754 = vmatprep.subr.bf16.mxu0 0
        %5755 = vmatpush1.bf16.msra.mxu0 0
        %5756 = vmatprep.subr.bf16.mxu0 0
        %5757 = vmatpush1.bf16.msra.mxu0 %v5417
        %5758 = vmatprep.subr.bf16.mxu0 0
        %5759 = vmatpush2.bf16.msra.mxu0 0
        %5760 = vmatprep.subr.bf16.mxu0 0
        %5761 = vmatpush2.bf16.msra.mxu0 0
        %5762 = vmatprep.subr.bf16.mxu0 0
        %5763 = vmatpush2.bf16.msra.mxu0 0
        %5764 = vmatprep.subr.bf16.mxu0 0
        %5765 = vmatpush2.bf16.msra.mxu0 0
        %5766 = vmatprep.subr.bf16.mxu0 0
        %5767 = vmatpush2.bf16.msra.mxu0 0
        %5768 = vmatprep.subr.bf16.mxu0 0
        %5769 = vmatpush2.bf16.msra.mxu0 0
        %5770 = vmatprep.subr.bf16.mxu0 0
        %5771 = vmatpush2.bf16.msra.mxu0 0
        %5772 = vmatprep.subr.bf16.mxu0 0
        %5773 = vmatpush2.bf16.msra.mxu0 0
        %5774 = vmatprep.mubr.bf16.mxu0 0
        %5775 = vmatmul.mubr.bf16.gmra.mxu0 %v5443
        %v5776 = vpop.f32.mrf.mxu0
        %v5777 = vadd.f32 0.0, %v5776
        %v5778 = vpop.f32.mrf.mxu0
        %v5779 = vpop.f32.mrf.mxu0
        %v5780 = vadd.f32 0.0, %v5779
        %v5781 = vpop.f32.mrf.mxu0
        %5782 = vmatprep.mubr.bf16.mxu0 0
        %5783 = vmatmul.mubr.bf16.gmra.mxu0 %v5446
        %v5784 = vpop.f32.mrf.mxu0
        %v5785 = vadd.f32 0.0, %v5784
        %v5786 = vpop.f32.mrf.mxu0
        %v5787 = vpop.f32.mrf.mxu0
        %v5788 = vadd.f32 0.0, %v5787
        %v5789 = vpop.f32.mrf.mxu0
        %5790 = vdwg.mxu0
        %5791 = vmatprep.subr.bf16.mxu0 0
        %5792 = vmatpush1.bf16.msra.mxu0 0
        %5793 = vmatprep.subr.bf16.mxu0 0
        %5794 = vmatpush1.bf16.msra.mxu0 0
        %5795 = vmatprep.subr.bf16.mxu0 0
        %5796 = vmatpush1.bf16.msra.mxu0 0
        %5797 = vmatprep.subr.bf16.mxu0 0
        %5798 = vmatpush1.bf16.msra.mxu0 0
        %5799 = vmatprep.subr.bf16.mxu0 0
        %5800 = vmatpush1.bf16.msra.mxu0 0
        %5801 = vmatprep.subr.bf16.mxu0 0
        %5802 = vmatpush1.bf16.msra.mxu0 0
        %5803 = vmatprep.subr.bf16.mxu0 0
        %5804 = vmatpush1.bf16.msra.mxu0 0
        %5805 = vmatprep.subr.bf16.mxu0 0
        %5806 = vmatpush1.bf16.msra.mxu0 %v5418
        %5807 = vmatprep.subr.bf16.mxu0 0
        %5808 = vmatpush2.bf16.msra.mxu0 0
        %5809 = vmatprep.subr.bf16.mxu0 0
        %5810 = vmatpush2.bf16.msra.mxu0 0
        %5811 = vmatprep.subr.bf16.mxu0 0
        %5812 = vmatpush2.bf16.msra.mxu0 0
        %5813 = vmatprep.subr.bf16.mxu0 0
        %5814 = vmatpush2.bf16.msra.mxu0 0
        %5815 = vmatprep.subr.bf16.mxu0 0
        %5816 = vmatpush2.bf16.msra.mxu0 0
        %5817 = vmatprep.subr.bf16.mxu0 0
        %5818 = vmatpush2.bf16.msra.mxu0 0
        %5819 = vmatprep.subr.bf16.mxu0 0
        %5820 = vmatpush2.bf16.msra.mxu0 0
        %5821 = vmatprep.subr.bf16.mxu0 0
        %5822 = vmatpush2.bf16.msra.mxu0 0
        %5823 = vmatprep.mubr.bf16.mxu0 0
        %5824 = vmatmul.mubr.bf16.gmra.mxu0 %v5443
        %v5825 = vpop.f32.mrf.mxu0
        %v5826 = vadd.f32 0.0, %v5825
        %v5827 = vpop.f32.mrf.mxu0
        %v5828 = vpop.f32.mrf.mxu0
        %v5829 = vadd.f32 0.0, %v5828
        %v5830 = vpop.f32.mrf.mxu0
        %5831 = vmatprep.mubr.bf16.mxu0 0
        %5832 = vmatmul.mubr.bf16.gmra.mxu0 %v5446
        %v5833 = vpop.f32.mrf.mxu0
        %v5834 = vadd.f32 0.0, %v5833
        %v5835 = vpop.f32.mrf.mxu0
        %v5836 = vpop.f32.mrf.mxu0
        %v5837 = vadd.f32 0.0, %v5836
        %v5838 = vpop.f32.mrf.mxu0
        %5839 = vdwg.mxu0
        %5840 = vmatprep.subr.bf16.mxu0 0
        %5841 = vmatpush1.bf16.msra.mxu0 0
        %5842 = vmatprep.subr.bf16.mxu0 0
        %5843 = vmatpush1.bf16.msra.mxu0 0
        %5844 = vmatprep.subr.bf16.mxu0 0
        %5845 = vmatpush1.bf16.msra.mxu0 0
        %5846 = vmatprep.subr.bf16.mxu0 0
        %5847 = vmatpush1.bf16.msra.mxu0 0
        %5848 = vmatprep.subr.bf16.mxu0 0
        %5849 = vmatpush1.bf16.msra.mxu0 0
        %5850 = vmatprep.subr.bf16.mxu0 0
        %5851 = vmatpush1.bf16.msra.mxu0 0
        %5852 = vmatprep.subr.bf16.mxu0 0
        %5853 = vmatpush1.bf16.msra.mxu0 0
        %5854 = vmatprep.subr.bf16.mxu0 0
        %5855 = vmatpush1.bf16.msra.mxu0 %v5419
        %5856 = vmatprep.subr.bf16.mxu0 0
        %5857 = vmatpush2.bf16.msra.mxu0 0
        %5858 = vmatprep.subr.bf16.mxu0 0
        %5859 = vmatpush2.bf16.msra.mxu0 0
        %5860 = vmatprep.subr.bf16.mxu0 0
        %5861 = vmatpush2.bf16.msra.mxu0 0
        %5862 = vmatprep.subr.bf16.mxu0 0
        %5863 = vmatpush2.bf16.msra.mxu0 0
        %5864 = vmatprep.subr.bf16.mxu0 0
        %5865 = vmatpush2.bf16.msra.mxu0 0
        %5866 = vmatprep.subr.bf16.mxu0 0
        %5867 = vmatpush2.bf16.msra.mxu0 0
        %5868 = vmatprep.subr.bf16.mxu0 0
        %5869 = vmatpush2.bf16.msra.mxu0 0
        %5870 = vmatprep.subr.bf16.mxu0 0
        %5871 = vmatpush2.bf16.msra.mxu0 0
        %5872 = vmatprep.mubr.bf16.mxu0 0
        %5873 = vmatmul.mubr.bf16.gmra.mxu0 %v5443
        %v5874 = vpop.f32.mrf.mxu0
        %v5875 = vadd.f32 0.0, %v5874
        %v5876 = vpop.f32.mrf.mxu0
        %v5877 = vpop.f32.mrf.mxu0
        %v5878 = vadd.f32 0.0, %v5877
        %v5879 = vpop.f32.mrf.mxu0
        %5880 = vmatprep.mubr.bf16.mxu0 0
        %5881 = vmatmul.mubr.bf16.gmra.mxu0 %v5446
        %v5882 = vpop.f32.mrf.mxu0
        %v5883 = vadd.f32 0.0, %v5882
        %v5884 = vpop.f32.mrf.mxu0
        %v5885 = vpop.f32.mrf.mxu0
        %v5886 = vadd.f32 0.0, %v5885
        %v5887 = vpop.f32.mrf.mxu0
        %5888 = vdwg.mxu0
        %5889 = vmatprep.subr.bf16.mxu0 0
        %5890 = vmatpush1.bf16.msra.mxu0 0
        %5891 = vmatprep.subr.bf16.mxu0 0
        %5892 = vmatpush1.bf16.msra.mxu0 0
        %5893 = vmatprep.subr.bf16.mxu0 0
        %5894 = vmatpush1.bf16.msra.mxu0 0
        %5895 = vmatprep.subr.bf16.mxu0 0
        %5896 = vmatpush1.bf16.msra.mxu0 0
        %5897 = vmatprep.subr.bf16.mxu0 0
        %5898 = vmatpush1.bf16.msra.mxu0 0
        %5899 = vmatprep.subr.bf16.mxu0 0
        %5900 = vmatpush1.bf16.msra.mxu0 0
        %5901 = vmatprep.subr.bf16.mxu0 0
        %5902 = vmatpush1.bf16.msra.mxu0 0
        %5903 = vmatprep.subr.bf16.mxu0 0
        %5904 = vmatpush1.bf16.msra.mxu0 %v5420
        %5905 = vmatprep.subr.bf16.mxu0 0
        %5906 = vmatpush2.bf16.msra.mxu0 0
        %5907 = vmatprep.subr.bf16.mxu0 0
        %5908 = vmatpush2.bf16.msra.mxu0 0
        %5909 = vmatprep.subr.bf16.mxu0 0
        %5910 = vmatpush2.bf16.msra.mxu0 0
        %5911 = vmatprep.subr.bf16.mxu0 0
        %5912 = vmatpush2.bf16.msra.mxu0 0
        %5913 = vmatprep.subr.bf16.mxu0 0
        %5914 = vmatpush2.bf16.msra.mxu0 0
        %5915 = vmatprep.subr.bf16.mxu0 0
        %5916 = vmatpush2.bf16.msra.mxu0 0
        %5917 = vmatprep.subr.bf16.mxu0 0
        %5918 = vmatpush2.bf16.msra.mxu0 0
        %5919 = vmatprep.subr.bf16.mxu0 0
        %5920 = vmatpush2.bf16.msra.mxu0 0
        %5921 = vmatprep.mubr.bf16.mxu0 0
        %5922 = vmatmul.mubr.bf16.gmra.mxu0 %v5443
        %v5923 = vpop.f32.mrf.mxu0
        %v5924 = vadd.f32 0.0, %v5923
        %v5925 = vpop.f32.mrf.mxu0
        %v5926 = vpop.f32.mrf.mxu0
        %v5927 = vadd.f32 0.0, %v5926
        %v5928 = vpop.f32.mrf.mxu0
        %5929 = vmatprep.mubr.bf16.mxu0 0
        %5930 = vmatmul.mubr.bf16.gmra.mxu0 %v5446
        %v5931 = vpop.f32.mrf.mxu0
        %v5932 = vadd.f32 0.0, %v5931
        %v5933 = vpop.f32.mrf.mxu0
        %v5934 = vpop.f32.mrf.mxu0
        %v5935 = vadd.f32 0.0, %v5934
        %v5936 = vpop.f32.mrf.mxu0
        %5937 = vdwg.mxu0
        %5938 = vmatprep.subr.bf16.mxu0 0
        %5939 = vmatpush1.bf16.msra.mxu0 0
        %5940 = vmatprep.subr.bf16.mxu0 0
        %5941 = vmatpush1.bf16.msra.mxu0 0
        %5942 = vmatprep.subr.bf16.mxu0 0
        %5943 = vmatpush1.bf16.msra.mxu0 0
        %5944 = vmatprep.subr.bf16.mxu0 0
        %5945 = vmatpush1.bf16.msra.mxu0 0
        %5946 = vmatprep.subr.bf16.mxu0 0
        %5947 = vmatpush1.bf16.msra.mxu0 0
        %5948 = vmatprep.subr.bf16.mxu0 0
        %5949 = vmatpush1.bf16.msra.mxu0 0
        %5950 = vmatprep.subr.bf16.mxu0 0
        %5951 = vmatpush1.bf16.msra.mxu0 0
        %5952 = vmatprep.subr.bf16.mxu0 0
        %5953 = vmatpush1.bf16.msra.mxu0 %v5421
        %5954 = vmatprep.subr.bf16.mxu0 0
        %5955 = vmatpush2.bf16.msra.mxu0 0
        %5956 = vmatprep.subr.bf16.mxu0 0
        %5957 = vmatpush2.bf16.msra.mxu0 0
        %5958 = vmatprep.subr.bf16.mxu0 0
        %5959 = vmatpush2.bf16.msra.mxu0 0
        %5960 = vmatprep.subr.bf16.mxu0 0
        %5961 = vmatpush2.bf16.msra.mxu0 0
        %5962 = vmatprep.subr.bf16.mxu0 0
        %5963 = vmatpush2.bf16.msra.mxu0 0
        %5964 = vmatprep.subr.bf16.mxu0 0
        %5965 = vmatpush2.bf16.msra.mxu0 0
        %5966 = vmatprep.subr.bf16.mxu0 0
        %5967 = vmatpush2.bf16.msra.mxu0 0
        %5968 = vmatprep.subr.bf16.mxu0 0
        %5969 = vmatpush2.bf16.msra.mxu0 0
        %5970 = vmatprep.mubr.bf16.mxu0 0
        %5971 = vmatmul.mubr.bf16.gmra.mxu0 %v5443
        %v5972 = vpop.f32.mrf.mxu0
        %v5973 = vadd.f32 0.0, %v5972
        %v5974 = vpop.f32.mrf.mxu0
        %v5975 = vpop.f32.mrf.mxu0
        %v5976 = vadd.f32 0.0, %v5975
        %v5977 = vpop.f32.mrf.mxu0
        %5978 = vmatprep.mubr.bf16.mxu0 0
        %5979 = vmatmul.mubr.bf16.gmra.mxu0 %v5446
        %v5980 = vpop.f32.mrf.mxu0
        %v5981 = vadd.f32 0.0, %v5980
        %v5982 = vpop.f32.mrf.mxu0
        %v5983 = vpop.f32.mrf.mxu0
        %v5984 = vadd.f32 0.0, %v5983
        %v5985 = vpop.f32.mrf.mxu0
        %5986 = vdwg.mxu0
        %5987 = vmatprep.subr.bf16.mxu0 0
        %5988 = vmatpush1.bf16.msra.mxu0 0
        %5989 = vmatprep.subr.bf16.mxu0 0
        %5990 = vmatpush1.bf16.msra.mxu0 0
        %5991 = vmatprep.subr.bf16.mxu0 0
        %5992 = vmatpush1.bf16.msra.mxu0 0
        %5993 = vmatprep.subr.bf16.mxu0 0
        %5994 = vmatpush1.bf16.msra.mxu0 0
        %5995 = vmatprep.subr.bf16.mxu0 0
        %5996 = vmatpush1.bf16.msra.mxu0 0
        %5997 = vmatprep.subr.bf16.mxu0 0
        %5998 = vmatpush1.bf16.msra.mxu0 0
        %5999 = vmatprep.subr.bf16.mxu0 0
        %6000 = vmatpush1.bf16.msra.mxu0 0
        %6001 = vmatprep.subr.bf16.mxu0 0
        %6002 = vmatpush1.bf16.msra.mxu0 %v5422
        %6003 = vmatprep.subr.bf16.mxu0 0
        %6004 = vmatpush2.bf16.msra.mxu0 0
        %6005 = vmatprep.subr.bf16.mxu0 0
        %6006 = vmatpush2.bf16.msra.mxu0 0
        %6007 = vmatprep.subr.bf16.mxu0 0
        %6008 = vmatpush2.bf16.msra.mxu0 0
        %6009 = vmatprep.subr.bf16.mxu0 0
        %6010 = vmatpush2.bf16.msra.mxu0 0
        %6011 = vmatprep.subr.bf16.mxu0 0
        %6012 = vmatpush2.bf16.msra.mxu0 0
        %6013 = vmatprep.subr.bf16.mxu0 0
        %6014 = vmatpush2.bf16.msra.mxu0 0
        %6015 = vmatprep.subr.bf16.mxu0 0
        %6016 = vmatpush2.bf16.msra.mxu0 0
        %6017 = vmatprep.subr.bf16.mxu0 0
        %6018 = vmatpush2.bf16.msra.mxu0 0
        %6019 = vmatprep.mubr.bf16.mxu0 0
        %6020 = vmatmul.mubr.bf16.gmra.mxu0 %v5443
        %v6021 = vpop.f32.mrf.mxu0
        %v6022 = vadd.f32 0.0, %v6021
        %v6023 = vpop.f32.mrf.mxu0
        %v6024 = vpop.f32.mrf.mxu0
        %v6025 = vadd.f32 0.0, %v6024
        %v6026 = vpop.f32.mrf.mxu0
        %6027 = vmatprep.mubr.bf16.mxu0 0
        %6028 = vmatmul.mubr.bf16.gmra.mxu0 %v5446
        %v6029 = vpop.f32.mrf.mxu0
        %v6030 = vadd.f32 0.0, %v6029
        %v6031 = vpop.f32.mrf.mxu0
        %v6032 = vpop.f32.mrf.mxu0
        %v6033 = vadd.f32 0.0, %v6032
        %v6034 = vpop.f32.mrf.mxu0
        %6035 = vdwg.mxu0
        %6036 = vmatprep.subr.bf16.mxu0 0
        %6037 = vmatpush1.bf16.msra.mxu0 0
        %6038 = vmatprep.subr.bf16.mxu0 0
        %6039 = vmatpush1.bf16.msra.mxu0 0
        %6040 = vmatprep.subr.bf16.mxu0 0
        %6041 = vmatpush1.bf16.msra.mxu0 0
        %6042 = vmatprep.subr.bf16.mxu0 0
        %6043 = vmatpush1.bf16.msra.mxu0 0
        %6044 = vmatprep.subr.bf16.mxu0 0
        %6045 = vmatpush1.bf16.msra.mxu0 0
        %6046 = vmatprep.subr.bf16.mxu0 0
        %6047 = vmatpush1.bf16.msra.mxu0 0
        %6048 = vmatprep.subr.bf16.mxu0 0
        %6049 = vmatpush1.bf16.msra.mxu0 0
        %6050 = vmatprep.subr.bf16.mxu0 0
        %6051 = vmatpush1.bf16.msra.mxu0 %v5423
        %6052 = vmatprep.subr.bf16.mxu0 0
        %6053 = vmatpush2.bf16.msra.mxu0 0
        %6054 = vmatprep.subr.bf16.mxu0 0
        %6055 = vmatpush2.bf16.msra.mxu0 0
        %6056 = vmatprep.subr.bf16.mxu0 0
        %6057 = vmatpush2.bf16.msra.mxu0 0
        %6058 = vmatprep.subr.bf16.mxu0 0
        %6059 = vmatpush2.bf16.msra.mxu0 0
        %6060 = vmatprep.subr.bf16.mxu0 0
        %6061 = vmatpush2.bf16.msra.mxu0 0
        %6062 = vmatprep.subr.bf16.mxu0 0
        %6063 = vmatpush2.bf16.msra.mxu0 0
        %6064 = vmatprep.subr.bf16.mxu0 0
        %6065 = vmatpush2.bf16.msra.mxu0 0
        %6066 = vmatprep.subr.bf16.mxu0 0
        %6067 = vmatpush2.bf16.msra.mxu0 0
        %6068 = vmatprep.mubr.bf16.mxu0 0
        %6069 = vmatmul.mubr.bf16.gmra.mxu0 %v5443
        %v6070 = vpop.f32.mrf.mxu0
        %v6071 = vadd.f32 0.0, %v6070
        %v6072 = vpop.f32.mrf.mxu0
        %v6073 = vpop.f32.mrf.mxu0
        %v6074 = vadd.f32 0.0, %v6073
        %v6075 = vpop.f32.mrf.mxu0
        %6076 = vmatprep.mubr.bf16.mxu0 0
        %6077 = vmatmul.mubr.bf16.gmra.mxu0 %v5446
        %v6078 = vpop.f32.mrf.mxu0
        %v6079 = vadd.f32 0.0, %v6078
        %v6080 = vpop.f32.mrf.mxu0
        %v6081 = vpop.f32.mrf.mxu0
        %v6082 = vadd.f32 0.0, %v6081
        %v6083 = vpop.f32.mrf.mxu0
        %6084 = vdwg.mxu0
        %6085 = vmatprep.subr.bf16.mxu0 0
        %6086 = vmatpush1.bf16.msra.mxu0 0
        %6087 = vmatprep.subr.bf16.mxu0 0
        %6088 = vmatpush1.bf16.msra.mxu0 0
        %6089 = vmatprep.subr.bf16.mxu0 0
        %6090 = vmatpush1.bf16.msra.mxu0 0
        %6091 = vmatprep.subr.bf16.mxu0 0
        %6092 = vmatpush1.bf16.msra.mxu0 0
        %6093 = vmatprep.subr.bf16.mxu0 0
        %6094 = vmatpush1.bf16.msra.mxu0 0
        %6095 = vmatprep.subr.bf16.mxu0 0
        %6096 = vmatpush1.bf16.msra.mxu0 0
        %6097 = vmatprep.subr.bf16.mxu0 0
        %6098 = vmatpush1.bf16.msra.mxu0 0
        %6099 = vmatprep.subr.bf16.mxu0 0
        %6100 = vmatpush1.bf16.msra.mxu0 %v5424
        %6101 = vmatprep.subr.bf16.mxu0 0
        %6102 = vmatpush2.bf16.msra.mxu0 0
        %6103 = vmatprep.subr.bf16.mxu0 0
        %6104 = vmatpush2.bf16.msra.mxu0 0
        %6105 = vmatprep.subr.bf16.mxu0 0
        %6106 = vmatpush2.bf16.msra.mxu0 0
        %6107 = vmatprep.subr.bf16.mxu0 0
        %6108 = vmatpush2.bf16.msra.mxu0 0
        %6109 = vmatprep.subr.bf16.mxu0 0
        %6110 = vmatpush2.bf16.msra.mxu0 0
        %6111 = vmatprep.subr.bf16.mxu0 0
        %6112 = vmatpush2.bf16.msra.mxu0 0
        %6113 = vmatprep.subr.bf16.mxu0 0
        %6114 = vmatpush2.bf16.msra.mxu0 0
        %6115 = vmatprep.subr.bf16.mxu0 0
        %6116 = vmatpush2.bf16.msra.mxu0 0
        %6117 = vmatprep.mubr.bf16.mxu0 0
        %6118 = vmatmul.mubr.bf16.gmra.mxu0 %v5443
        %v6119 = vpop.f32.mrf.mxu0
        %v6120 = vadd.f32 0.0, %v6119
        %v6121 = vpop.f32.mrf.mxu0
        %v6122 = vpop.f32.mrf.mxu0
        %v6123 = vadd.f32 0.0, %v6122
        %v6124 = vpop.f32.mrf.mxu0
        %6125 = vmatprep.mubr.bf16.mxu0 0
        %6126 = vmatmul.mubr.bf16.gmra.mxu0 %v5446
        %v6127 = vpop.f32.mrf.mxu0
        %v6128 = vadd.f32 0.0, %v6127
        %v6129 = vpop.f32.mrf.mxu0
        %v6130 = vpop.f32.mrf.mxu0
        %v6131 = vadd.f32 0.0, %v6130
        %v6132 = vpop.f32.mrf.mxu0
        %6133 = vdwg.mxu0
        %6134 = vmatprep.subr.bf16.mxu0 0
        %6135 = vmatpush1.bf16.msra.mxu0 0
        %6136 = vmatprep.subr.bf16.mxu0 0
        %6137 = vmatpush1.bf16.msra.mxu0 0
        %6138 = vmatprep.subr.bf16.mxu0 0
        %6139 = vmatpush1.bf16.msra.mxu0 0
        %6140 = vmatprep.subr.bf16.mxu0 0
        %6141 = vmatpush1.bf16.msra.mxu0 0
        %6142 = vmatprep.subr.bf16.mxu0 0
        %6143 = vmatpush1.bf16.msra.mxu0 0
        %6144 = vmatprep.subr.bf16.mxu0 0
        %6145 = vmatpush1.bf16.msra.mxu0 0
        %6146 = vmatprep.subr.bf16.mxu0 0
        %6147 = vmatpush1.bf16.msra.mxu0 0
        %6148 = vmatprep.subr.bf16.mxu0 0
        %6149 = vmatpush1.bf16.msra.mxu0 %v5425
        %6150 = vmatprep.subr.bf16.mxu0 0
        %6151 = vmatpush2.bf16.msra.mxu0 0
        %6152 = vmatprep.subr.bf16.mxu0 0
        %6153 = vmatpush2.bf16.msra.mxu0 0
        %6154 = vmatprep.subr.bf16.mxu0 0
        %6155 = vmatpush2.bf16.msra.mxu0 0
        %6156 = vmatprep.subr.bf16.mxu0 0
        %6157 = vmatpush2.bf16.msra.mxu0 0
        %6158 = vmatprep.subr.bf16.mxu0 0
        %6159 = vmatpush2.bf16.msra.mxu0 0
        %6160 = vmatprep.subr.bf16.mxu0 0
        %6161 = vmatpush2.bf16.msra.mxu0 0
        %6162 = vmatprep.subr.bf16.mxu0 0
        %6163 = vmatpush2.bf16.msra.mxu0 0
        %6164 = vmatprep.subr.bf16.mxu0 0
        %6165 = vmatpush2.bf16.msra.mxu0 0
        %6166 = vmatprep.mubr.bf16.mxu0 0
        %6167 = vmatmul.mubr.bf16.gmra.mxu0 %v5443
        %v6168 = vpop.f32.mrf.mxu0
        %v6169 = vadd.f32 0.0, %v6168
        %v6170 = vpop.f32.mrf.mxu0
        %v6171 = vpop.f32.mrf.mxu0
        %v6172 = vadd.f32 0.0, %v6171
        %v6173 = vpop.f32.mrf.mxu0
        %6174 = vmatprep.mubr.bf16.mxu0 0
        %6175 = vmatmul.mubr.bf16.gmra.mxu0 %v5446
        %v6176 = vpop.f32.mrf.mxu0
        %v6177 = vadd.f32 0.0, %v6176
        %v6178 = vpop.f32.mrf.mxu0
        %v6179 = vpop.f32.mrf.mxu0
        %v6180 = vadd.f32 0.0, %v6179
        %v6181 = vpop.f32.mrf.mxu0
        %6182 = vdwg.mxu0
        %6183 = vmatprep.subr.bf16.mxu0 0
        %6184 = vmatpush1.bf16.msra.mxu0 0
        %6185 = vmatprep.subr.bf16.mxu0 0
        %6186 = vmatpush1.bf16.msra.mxu0 0
        %6187 = vmatprep.subr.bf16.mxu0 0
        %6188 = vmatpush1.bf16.msra.mxu0 0
        %6189 = vmatprep.subr.bf16.mxu0 0
        %6190 = vmatpush1.bf16.msra.mxu0 0
        %6191 = vmatprep.subr.bf16.mxu0 0
        %6192 = vmatpush1.bf16.msra.mxu0 0
        %6193 = vmatprep.subr.bf16.mxu0 0
        %6194 = vmatpush1.bf16.msra.mxu0 0
        %6195 = vmatprep.subr.bf16.mxu0 0
        %6196 = vmatpush1.bf16.msra.mxu0 0
        %6197 = vmatprep.subr.bf16.mxu0 0
        %6198 = vmatpush1.bf16.msra.mxu0 %v5426
        %6199 = vmatprep.subr.bf16.mxu0 0
        %6200 = vmatpush2.bf16.msra.mxu0 0
        %6201 = vmatprep.subr.bf16.mxu0 0
        %6202 = vmatpush2.bf16.msra.mxu0 0
        %6203 = vmatprep.subr.bf16.mxu0 0
        %6204 = vmatpush2.bf16.msra.mxu0 0
        %6205 = vmatprep.subr.bf16.mxu0 0
        %6206 = vmatpush2.bf16.msra.mxu0 0
        %6207 = vmatprep.subr.bf16.mxu0 0
        %6208 = vmatpush2.bf16.msra.mxu0 0
        %6209 = vmatprep.subr.bf16.mxu0 0
        %6210 = vmatpush2.bf16.msra.mxu0 0
        %6211 = vmatprep.subr.bf16.mxu0 0
        %6212 = vmatpush2.bf16.msra.mxu0 0
        %6213 = vmatprep.subr.bf16.mxu0 0
        %6214 = vmatpush2.bf16.msra.mxu0 0
        %6215 = vmatprep.mubr.bf16.mxu0 0
        %6216 = vmatmul.mubr.bf16.gmra.mxu0 %v5443
        %v6217 = vpop.f32.mrf.mxu0
        %v6218 = vadd.f32 0.0, %v6217
        %v6219 = vpop.f32.mrf.mxu0
        %v6220 = vpop.f32.mrf.mxu0
        %v6221 = vadd.f32 0.0, %v6220
        %v6222 = vpop.f32.mrf.mxu0
        %6223 = vmatprep.mubr.bf16.mxu0 0
        %6224 = vmatmul.mubr.bf16.gmra.mxu0 %v5446
        %v6225 = vpop.f32.mrf.mxu0
        %v6226 = vadd.f32 0.0, %v6225
        %v6227 = vpop.f32.mrf.mxu0
        %v6228 = vpop.f32.mrf.mxu0
        %v6229 = vadd.f32 0.0, %v6228
        %v6230 = vpop.f32.mrf.mxu0
        %6231 = vdwg.mxu0
        %v6232 = vpack.c.bf16 %v5532, 0.0
        %v6233 = vpack.c.bf16 %v5535, 0.0
        %v6234 = vpack.c.bf16 %v5540, 0.0
        %v6235 = vpack.c.bf16 %v5543, 0.0
        %v6236 = vpack.c.bf16 %v5581, %v5483
        %v6237 = vpack.c.bf16 %v5584, %v5486
        %v6238 = vpack.c.bf16 %v5589, %v5491
        %v6239 = vpack.c.bf16 %v5592, %v5494
        %v6240 = vpack.c.bf16 %v5630, %v5532
        %v6241 = vpack.c.bf16 %v5633, %v5535
        %v6242 = vpack.c.bf16 %v5638, %v5540
        %v6243 = vpack.c.bf16 %v5641, %v5543
        %v6244 = vpack.c.bf16 %v5679, %v5581
        %v6245 = vpack.c.bf16 %v5682, %v5584
        %v6246 = vpack.c.bf16 %v5687, %v5589
        %v6247 = vpack.c.bf16 %v5690, %v5592
        %v6248 = vpack.c.bf16 %v5728, %v5630
        %v6249 = vpack.c.bf16 %v5731, %v5633
        %v6250 = vpack.c.bf16 %v5736, %v5638
        %v6251 = vpack.c.bf16 %v5739, %v5641
        %v6252 = vpack.c.bf16 %v5777, %v5679
        %v6253 = vpack.c.bf16 %v5780, %v5682
        %v6254 = vpack.c.bf16 %v5785, %v5687
        %v6255 = vpack.c.bf16 %v5788, %v5690
        %v6256 = vpack.c.bf16 %v5826, %v5728
        %v6257 = vpack.c.bf16 %v5829, %v5731
        %v6258 = vpack.c.bf16 %v5834, %v5736
        %v6259 = vpack.c.bf16 %v5837, %v5739
        %v6260 = vpack.c.bf16 %v5875, %v5777
        %v6261 = vpack.c.bf16 %v5878, %v5780
        %v6262 = vpack.c.bf16 %v5883, %v5785
        %v6263 = vpack.c.bf16 %v5886, %v5788
        %v6264 = vpack.c.bf16 %v5924, %v5826
        %v6265 = vpack.c.bf16 %v5927, %v5829
        %v6266 = vpack.c.bf16 %v5932, %v5834
        %v6267 = vpack.c.bf16 %v5935, %v5837
        %v6268 = vpack.c.bf16 %v5973, %v5875
        %v6269 = vpack.c.bf16 %v5976, %v5878
        %v6270 = vpack.c.bf16 %v5981, %v5883
        %v6271 = vpack.c.bf16 %v5984, %v5886
        %v6272 = vpack.c.bf16 %v6022, %v5924
        %v6273 = vpack.c.bf16 %v6025, %v5927
        %v6274 = vpack.c.bf16 %v6030, %v5932
        %v6275 = vpack.c.bf16 %v6033, %v5935
        %v6276 = vpack.c.bf16 %v6071, %v5973
        %v6277 = vpack.c.bf16 %v6074, %v5976
        %v6278 = vpack.c.bf16 %v6079, %v5981
        %v6279 = vpack.c.bf16 %v6082, %v5984
        %v6280 = vpack.c.bf16 %v6120, %v6022
        %v6281 = vpack.c.bf16 %v6123, %v6025
        %v6282 = vpack.c.bf16 %v6128, %v6030
        %v6283 = vpack.c.bf16 %v6131, %v6033
        %v6284 = vpack.c.bf16 %v6169, %v6071
        %v6285 = vpack.c.bf16 %v6172, %v6074
        %v6286 = vpack.c.bf16 %v6177, %v6079
        %v6287 = vpack.c.bf16 %v6180, %v6082
        %v6288 = vpack.c.bf16 %v6218, %v6120
        %v6289 = vpack.c.bf16 %v6221, %v6123
        %v6290 = vpack.c.bf16 %v6226, %v6128
        %v6291 = vpack.c.bf16 %v6229, %v6131
        %v6292 = vpack.c.bf16 0.0, %v6169
        %v6293 = vpack.c.bf16 0.0, %v6172
        %v6294 = vpack.c.bf16 0.0, %v6177
        %v6295 = vpack.c.bf16 0.0, %v6180
        %v6296 = vld [vmem:[%s4] sm:$0xf]
        %v6297 = vld [vmem:[%s4 + $0x4] sm:$0xf]
        %v6298 = vld [vmem:[%s4 + $0x8] sm:$0xf]
        %v6299 = vld [vmem:[%s4 + $0xc] sm:$0xf]
        %v6300 = vld [vmem:[%s4 + $0x10] sm:$0xf]
        %v6301 = vld [vmem:[%s4 + $0x14] sm:$0xf]
        %v6302 = vld [vmem:[%s4 + $0x18] sm:$0xf]
        %v6303 = vld [vmem:[%s4 + $0x1c] sm:$0xf]
        %v6304 = vld [vmem:[%s4 + $0x20] sm:$0xf]
        %v6305 = vld [vmem:[%s4 + $0x24] sm:$0xf]
        %v6306 = vld [vmem:[%s4 + $0x28] sm:$0xf]
        %v6307 = vld [vmem:[%s4 + $0x2c] sm:$0xf]
        %v6308 = vld [vmem:[%s4 + $0x30] sm:$0xf]
        %v6309 = vld [vmem:[%s4 + $0x34] sm:$0xf]
        %v6310 = vld [vmem:[%s4 + $0x38] sm:$0xf]
        %v6311 = vld [vmem:[%s4 + $0x3c] sm:$0xf]
        %v6312 = vld [vmem:[%s4 + $0x40] sm:$0xf]
        %v6313 = vld [vmem:[%s4 + $0x44] sm:$0xf]
        %v6314 = vld [vmem:[%s4 + $0x48] sm:$0xf]
        %v6315 = vld [vmem:[%s4 + $0x4c] sm:$0xf]
        %v6316 = vld [vmem:[%s4 + $0x50] sm:$0xf]
        %v6317 = vld [vmem:[%s4 + $0x54] sm:$0xf]
        %v6318 = vld [vmem:[%s4 + $0x58] sm:$0xf]
        %v6319 = vld [vmem:[%s4 + $0x5c] sm:$0xf]
        %v6320 = vld [vmem:[%s4 + $0x60] sm:$0xf]
        %v6321 = vld [vmem:[%s4 + $0x64] sm:$0xf]
        %v6322 = vld [vmem:[%s4 + $0x68] sm:$0xf]
        %v6323 = vld [vmem:[%s4 + $0x6c] sm:$0xf]
        %v6324 = vld [vmem:[%s4 + $0x70] sm:$0xf]
        %v6325 = vld [vmem:[%s4 + $0x74] sm:$0xf]
        %v6326 = vld [vmem:[%s4 + $0x78] sm:$0xf]
        %v6327 = vld [vmem:[%s4 + $0x7c] sm:$0xf]
        %v6328 = vld [vmem:[%s4 + $0x80] sm:$0xf]
        %v6329 = vld [vmem:[%s4 + $0x84] sm:$0xf]
        %v6330 = vld [vmem:[%s4 + $0x88] sm:$0xf]
        %v6331 = vld [vmem:[%s4 + $0x8c] sm:$0xf]
        %v6332 = vld [vmem:[%s4 + $0x90] sm:$0xf]
        %v6333 = vld [vmem:[%s4 + $0x94] sm:$0xf]
        %v6334 = vld [vmem:[%s4 + $0x98] sm:$0xf]
        %v6335 = vld [vmem:[%s4 + $0x9c] sm:$0xf]
        %v6336 = vld [vmem:[%s4 + $0xa0] sm:$0xf]
        %v6337 = vld [vmem:[%s4 + $0xa4] sm:$0xf]
        %v6338 = vld [vmem:[%s4 + $0xa8] sm:$0xf]
        %v6339 = vld [vmem:[%s4 + $0xac] sm:$0xf]
        %v6340 = vld [vmem:[%s4 + $0xb0] sm:$0xf]
        %v6341 = vld [vmem:[%s4 + $0xb4] sm:$0xf]
        %v6342 = vld [vmem:[%s4 + $0xb8] sm:$0xf]
        %v6343 = vld [vmem:[%s4 + $0xbc] sm:$0xf]
        %v6344 = vld [vmem:[%s4 + $0xc0] sm:$0xf]
        %v6345 = vld [vmem:[%s4 + $0xc4] sm:$0xf]
        %v6346 = vld [vmem:[%s4 + $0xc8] sm:$0xf]
        %v6347 = vld [vmem:[%s4 + $0xcc] sm:$0xf]
        %v6348 = vld [vmem:[%s4 + $0xd0] sm:$0xf]
        %v6349 = vld [vmem:[%s4 + $0xd4] sm:$0xf]
        %v6350 = vld [vmem:[%s4 + $0xd8] sm:$0xf]
        %v6351 = vld [vmem:[%s4 + $0xdc] sm:$0xf]
        %v6352 = vld [vmem:[%s4 + $0xe0] sm:$0xf]
        %v6353 = vld [vmem:[%s4 + $0xe4] sm:$0xf]
        %v6354 = vld [vmem:[%s4 + $0xe8] sm:$0xf]
        %v6355 = vld [vmem:[%s4 + $0xec] sm:$0xf]
        %v6356 = vld [vmem:[%s4 + $0xf0] sm:$0xf]
        %v6357 = vld [vmem:[%s4 + $0xf4] sm:$0xf]
        %v6358 = vld [vmem:[%s4 + $0xf8] sm:$0xf]
        %v6359 = vld [vmem:[%s4 + $0xfc] sm:$0xf]
        %v6360 = vld [vmem:[%s4 + $0x100] sm:$0xf]
        %v6361 = vld [vmem:[%s4 + $0x104] sm:$0xf]
        %v6362 = vld [vmem:[%s4 + $0x108] sm:$0xf]
        %v6363 = vld [vmem:[%s4 + $0x10c] sm:$0xf]
        %v6364 = vld [vmem:[%s4 + $0x110] sm:$0xf]
        %v6365 = vld [vmem:[%s4 + $0x114] sm:$0xf]
        %v6366 = vld [vmem:[%s4 + $0x118] sm:$0xf]
        %v6367 = vld [vmem:[%s4 + $0x11c] sm:$0xf]
        %v6368 = vld [vmem:[%s4 + $0x120] sm:$0xf]
        %v6369 = vld [vmem:[%s4 + $0x124] sm:$0xf]
        %v6370 = vld [vmem:[%s4 + $0x128] sm:$0xf]
        %v6371 = vld [vmem:[%s4 + $0x12c] sm:$0xf]
        %v6372 = vld [vmem:[%s4 + $0x130] sm:$0xf]
        %v6373 = vld [vmem:[%s4 + $0x134] sm:$0xf]
        %v6374 = vld [vmem:[%s4 + $0x138] sm:$0xf]
        %v6375 = vld [vmem:[%s4 + $0x13c] sm:$0xf]
        %v6376 = vld [vmem:[%s4 + $0x140] sm:$0xf]
        %v6377 = vld [vmem:[%s4 + $0x144] sm:$0xf]
        %v6378 = vld [vmem:[%s4 + $0x148] sm:$0xf]
        %v6379 = vld [vmem:[%s4 + $0x14c] sm:$0xf]
        %v6380 = vld [vmem:[%s4 + $0x150] sm:$0xf]
        %v6381 = vld [vmem:[%s4 + $0x154] sm:$0xf]
        %v6382 = vld [vmem:[%s4 + $0x158] sm:$0xf]
        %v6383 = vld [vmem:[%s4 + $0x15c] sm:$0xf]
        %v6384 = vld [vmem:[%s4 + $0x160] sm:$0xf]
        %v6385 = vld [vmem:[%s4 + $0x164] sm:$0xf]
        %v6386 = vld [vmem:[%s4 + $0x168] sm:$0xf]
        %v6387 = vld [vmem:[%s4 + $0x16c] sm:$0xf]
        %v6388 = vld [vmem:[%s4 + $0x170] sm:$0xf]
        %v6389 = vld [vmem:[%s4 + $0x174] sm:$0xf]
        %v6390 = vld [vmem:[%s4 + $0x178] sm:$0xf]
        %v6391 = vld [vmem:[%s4 + $0x17c] sm:$0xf]
        %v6392 = vld [vmem:[%s4 + $0x180] sm:$0xf]
        %v6393 = vld [vmem:[%s4 + $0x184] sm:$0xf]
        %v6394 = vld [vmem:[%s4 + $0x188] sm:$0xf]
        %v6395 = vld [vmem:[%s4 + $0x18c] sm:$0xf]
        %v6396 = vld [vmem:[%s4 + $0x190] sm:$0xf]
        %v6397 = vld [vmem:[%s4 + $0x194] sm:$0xf]
        %v6398 = vld [vmem:[%s4 + $0x198] sm:$0xf]
        %v6399 = vld [vmem:[%s4 + $0x19c] sm:$0xf]
        %v6400 = vld [vmem:[%s4 + $0x1a0] sm:$0xf]
        %v6401 = vld [vmem:[%s4 + $0x1a4] sm:$0xf]
        %v6402 = vld [vmem:[%s4 + $0x1a8] sm:$0xf]
        %v6403 = vld [vmem:[%s4 + $0x1ac] sm:$0xf]
        %v6404 = vld [vmem:[%s4 + $0x1b0] sm:$0xf]
        %v6405 = vld [vmem:[%s4 + $0x1b4] sm:$0xf]
        %v6406 = vld [vmem:[%s4 + $0x1b8] sm:$0xf]
        %v6407 = vld [vmem:[%s4 + $0x1bc] sm:$0xf]
        %v6408 = vld [vmem:[%s4 + $0x1c0] sm:$0xf]
        %v6409 = vld [vmem:[%s4 + $0x1c4] sm:$0xf]
        %v6410 = vld [vmem:[%s4 + $0x1c8] sm:$0xf]
        %v6411 = vld [vmem:[%s4 + $0x1cc] sm:$0xf]
        %v6412 = vld [vmem:[%s4 + $0x1d0] sm:$0xf]
        %v6413 = vld [vmem:[%s4 + $0x1d4] sm:$0xf]
        %v6414 = vld [vmem:[%s4 + $0x1d8] sm:$0xf]
        %v6415 = vld [vmem:[%s4 + $0x1dc] sm:$0xf]
        %v6416 = vld [vmem:[%s4 + $0x1e0] sm:$0xf]
        %v6417 = vld [vmem:[%s4 + $0x1e4] sm:$0xf]
        %v6418 = vld [vmem:[%s4 + $0x1e8] sm:$0xf]
        %v6419 = vld [vmem:[%s4 + $0x1ec] sm:$0xf]
        %v6420 = vld [vmem:[%s4 + $0x1f0] sm:$0xf]
        %v6421 = vld [vmem:[%s4 + $0x1f4] sm:$0xf]
        %v6422 = vld [vmem:[%s4 + $0x1f8] sm:$0xf]
        %v6423 = vld [vmem:[%s4 + $0x1fc] sm:$0xf]
        %v6424 = vld [vmem:[%s4 + $0x200] sm:$0xf]
        %v6425 = vld [vmem:[%s4 + $0x204] sm:$0xf]
        %v6426 = vld [vmem:[%s4 + $0x208] sm:$0xf]
        %v6427 = vld [vmem:[%s4 + $0x20c] sm:$0xf]
        %v6428 = vld [vmem:[%s4 + $0x210] sm:$0xf]
        %v6429 = vld [vmem:[%s4 + $0x214] sm:$0xf]
        %v6430 = vld [vmem:[%s4 + $0x218] sm:$0xf]
        %v6431 = vld [vmem:[%s4 + $0x21c] sm:$0xf]
        %v6432 = vld [vmem:[%s4 + $0x220] sm:$0xf]
        %v6433 = vld [vmem:[%s4 + $0x224] sm:$0xf]
        %v6434 = vld [vmem:[%s4 + $0x228] sm:$0xf]
        %v6435 = vld [vmem:[%s4 + $0x22c] sm:$0xf]
        %v6436 = vld [vmem:[%s4 + $0x230] sm:$0xf]
        %v6437 = vld [vmem:[%s4 + $0x234] sm:$0xf]
        %v6438 = vld [vmem:[%s4 + $0x238] sm:$0xf]
        %v6439 = vld [vmem:[%s4 + $0x23c] sm:$0xf]
        %v6440 = vld [vmem:[%s4 + $0x240] sm:$0xf]
        %v6441 = vld [vmem:[%s4 + $0x244] sm:$0xf]
        %v6442 = vld [vmem:[%s4 + $0x248] sm:$0xf]
        %v6443 = vld [vmem:[%s4 + $0x24c] sm:$0xf]
        %v6444 = vld [vmem:[%s4 + $0x250] sm:$0xf]
        %v6445 = vld [vmem:[%s4 + $0x254] sm:$0xf]
        %v6446 = vld [vmem:[%s4 + $0x258] sm:$0xf]
        %v6447 = vld [vmem:[%s4 + $0x25c] sm:$0xf]
        %v6448 = vld [vmem:[%s4 + $0x260] sm:$0xf]
        %v6449 = vld [vmem:[%s4 + $0x264] sm:$0xf]
        %v6450 = vld [vmem:[%s4 + $0x268] sm:$0xf]
        %v6451 = vld [vmem:[%s4 + $0x26c] sm:$0xf]
        %v6452 = vld [vmem:[%s4 + $0x270] sm:$0xf]
        %v6453 = vld [vmem:[%s4 + $0x274] sm:$0xf]
        %v6454 = vld [vmem:[%s4 + $0x278] sm:$0xf]
        %v6455 = vld [vmem:[%s4 + $0x27c] sm:$0xf]
        %v6456 = vld [vmem:[%s4 + $0x280] sm:$0xf]
        %v6457 = vld [vmem:[%s4 + $0x284] sm:$0xf]
        %v6458 = vld [vmem:[%s4 + $0x288] sm:$0xf]
        %v6459 = vld [vmem:[%s4 + $0x28c] sm:$0xf]
        %v6460 = vld [vmem:[%s4 + $0x290] sm:$0xf]
        %v6461 = vld [vmem:[%s4 + $0x294] sm:$0xf]
        %v6462 = vld [vmem:[%s4 + $0x298] sm:$0xf]
        %v6463 = vld [vmem:[%s4 + $0x29c] sm:$0xf]
        %v6464 = vld [vmem:[%s4 + $0x2a0] sm:$0xf]
        %v6465 = vld [vmem:[%s4 + $0x2a4] sm:$0xf]
        %v6466 = vld [vmem:[%s4 + $0x2a8] sm:$0xf]
        %v6467 = vld [vmem:[%s4 + $0x2ac] sm:$0xf]
        %v6468 = vld [vmem:[%s4 + $0x2b0] sm:$0xf]
        %v6469 = vld [vmem:[%s4 + $0x2b4] sm:$0xf]
        %v6470 = vld [vmem:[%s4 + $0x2b8] sm:$0xf]
        %v6471 = vld [vmem:[%s4 + $0x2bc] sm:$0xf]
        %v6472 = vld [vmem:[%s4 + $0x2c0] sm:$0xf]
        %v6473 = vld [vmem:[%s4 + $0x2c4] sm:$0xf]
        %v6474 = vld [vmem:[%s4 + $0x2c8] sm:$0xf]
        %v6475 = vld [vmem:[%s4 + $0x2cc] sm:$0xf]
        %v6476 = vld [vmem:[%s4 + $0x2d0] sm:$0xf]
        %v6477 = vld [vmem:[%s4 + $0x2d4] sm:$0xf]
        %v6478 = vld [vmem:[%s4 + $0x2d8] sm:$0xf]
        %v6479 = vld [vmem:[%s4 + $0x2dc] sm:$0xf]
        %v6480 = vld [vmem:[%s4 + $0x2e0] sm:$0xf]
        %v6481 = vld [vmem:[%s4 + $0x2e4] sm:$0xf]
        %v6482 = vld [vmem:[%s4 + $0x2e8] sm:$0xf]
        %v6483 = vld [vmem:[%s4 + $0x2ec] sm:$0xf]
        %v6484 = vld [vmem:[%s4 + $0x2f0] sm:$0xf]
        %v6485 = vld [vmem:[%s4 + $0x2f4] sm:$0xf]
        %v6486 = vld [vmem:[%s4 + $0x2f8] sm:$0xf]
        %v6487 = vld [vmem:[%s4 + $0x2fc] sm:$0xf]
        %v6488 = vld [vmem:[%s4 + $0x300] sm:$0xf]
        %v6489 = vld [vmem:[%s4 + $0x304] sm:$0xf]
        %v6490 = vld [vmem:[%s4 + $0x308] sm:$0xf]
        %v6491 = vld [vmem:[%s4 + $0x30c] sm:$0xf]
        %v6492 = vld [vmem:[%s4 + $0x310] sm:$0xf]
        %v6493 = vld [vmem:[%s4 + $0x314] sm:$0xf]
        %v6494 = vld [vmem:[%s4 + $0x318] sm:$0xf]
        %v6495 = vld [vmem:[%s4 + $0x31c] sm:$0xf]
        %v6496 = vld [vmem:[%s4 + $0x320] sm:$0xf]
        %v6497 = vld [vmem:[%s4 + $0x324] sm:$0xf]
        %v6498 = vld [vmem:[%s4 + $0x328] sm:$0xf]
        %v6499 = vld [vmem:[%s4 + $0x32c] sm:$0xf]
        %v6500 = vld [vmem:[%s4 + $0x330] sm:$0xf]
        %v6501 = vld [vmem:[%s4 + $0x334] sm:$0xf]
        %v6502 = vld [vmem:[%s4 + $0x338] sm:$0xf]
        %v6503 = vld [vmem:[%s4 + $0x33c] sm:$0xf]
        %v6504 = vld [vmem:[%s4 + $0x340] sm:$0xf]
        %v6505 = vld [vmem:[%s4 + $0x344] sm:$0xf]
        %v6506 = vld [vmem:[%s4 + $0x348] sm:$0xf]
        %v6507 = vld [vmem:[%s4 + $0x34c] sm:$0xf]
        %v6508 = vld [vmem:[%s4 + $0x350] sm:$0xf]
        %v6509 = vld [vmem:[%s4 + $0x354] sm:$0xf]
        %v6510 = vld [vmem:[%s4 + $0x358] sm:$0xf]
        %v6511 = vld [vmem:[%s4 + $0x35c] sm:$0xf]
        %v6512 = vld [vmem:[%s4 + $0x360] sm:$0xf]
        %v6513 = vld [vmem:[%s4 + $0x364] sm:$0xf]
        %v6514 = vld [vmem:[%s4 + $0x368] sm:$0xf]
        %v6515 = vld [vmem:[%s4 + $0x36c] sm:$0xf]
        %v6516 = vld [vmem:[%s4 + $0x370] sm:$0xf]
        %v6517 = vld [vmem:[%s4 + $0x374] sm:$0xf]
        %v6518 = vld [vmem:[%s4 + $0x378] sm:$0xf]
        %v6519 = vld [vmem:[%s4 + $0x37c] sm:$0xf]
        %v6520 = vld [vmem:[%s4 + $0x380] sm:$0xf]
        %v6521 = vld [vmem:[%s4 + $0x384] sm:$0xf]
        %v6522 = vld [vmem:[%s4 + $0x388] sm:$0xf]
        %v6523 = vld [vmem:[%s4 + $0x38c] sm:$0xf]
        %v6524 = vld [vmem:[%s4 + $0x390] sm:$0xf]
        %v6525 = vld [vmem:[%s4 + $0x394] sm:$0xf]
        %v6526 = vld [vmem:[%s4 + $0x398] sm:$0xf]
        %v6527 = vld [vmem:[%s4 + $0x39c] sm:$0xf]
        %v6528 = vld [vmem:[%s4 + $0x3a0] sm:$0xf]
        %v6529 = vld [vmem:[%s4 + $0x3a4] sm:$0xf]
        %v6530 = vld [vmem:[%s4 + $0x3a8] sm:$0xf]
        %v6531 = vld [vmem:[%s4 + $0x3ac] sm:$0xf]
        %v6532 = vld [vmem:[%s4 + $0x3b0] sm:$0xf]
        %v6533 = vld [vmem:[%s4 + $0x3b4] sm:$0xf]
        %v6534 = vld [vmem:[%s4 + $0x3b8] sm:$0xf]
        %v6535 = vld [vmem:[%s4 + $0x3bc] sm:$0xf]
        %v6536 = vld [vmem:[%s4 + $0x3c0] sm:$0xf]
        %v6537 = vld [vmem:[%s4 + $0x3c4] sm:$0xf]
        %v6538 = vld [vmem:[%s4 + $0x3c8] sm:$0xf]
        %v6539 = vld [vmem:[%s4 + $0x3cc] sm:$0xf]
        %v6540 = vld [vmem:[%s4 + $0x3d0] sm:$0xf]
        %v6541 = vld [vmem:[%s4 + $0x3d4] sm:$0xf]
        %v6542 = vld [vmem:[%s4 + $0x3d8] sm:$0xf]
        %v6543 = vld [vmem:[%s4 + $0x3dc] sm:$0xf]
        %v6544 = vld [vmem:[%s4 + $0x3e0] sm:$0xf]
        %v6545 = vld [vmem:[%s4 + $0x3e4] sm:$0xf]
        %v6546 = vld [vmem:[%s4 + $0x3e8] sm:$0xf]
        %v6547 = vld [vmem:[%s4 + $0x3ec] sm:$0xf]
        %v6548 = vld [vmem:[%s4 + $0x3f0] sm:$0xf]
        %v6549 = vld [vmem:[%s4 + $0x3f4] sm:$0xf]
        %v6550 = vld [vmem:[%s4 + $0x3f8] sm:$0xf]
        %v6551 = vld [vmem:[%s4 + $0x3fc] sm:$0xf]
        %v6552 = vld [vmem:[%s5] sm:$0x1]
        %v6554 = vlaneseq
        %v6555 = vshrl.u32 %v6554, 7
        %v6556 = vsub.s32 0, %v6555
        %v6557 = vrot.slane %v6552, %v6556
        %v6815 = vunpack.c.l.b16 %v6296
        %v6816 = vunpack.c.l.b16 %v6297
        %v6817 = vunpack.c.l.b16 %v6298
        %v6818 = vunpack.c.l.b16 %v6299
        %v6819 = vunpack.c.l.b16 %v6300
        %v6820 = vunpack.c.l.b16 %v6301
        %v6821 = vunpack.c.l.b16 %v6302
        %v6822 = vunpack.c.l.b16 %v6303
        %v6823 = vunpack.c.l.b16 %v6304
        %v6824 = vunpack.c.l.b16 %v6305
        %v6825 = vunpack.c.l.b16 %v6306
        %v6826 = vunpack.c.l.b16 %v6307
        %v6827 = vunpack.c.l.b16 %v6308
        %v6828 = vunpack.c.l.b16 %v6309
        %v6829 = vunpack.c.l.b16 %v6310
        %v6830 = vunpack.c.l.b16 %v6311
        %v6831 = vunpack.c.l.b16 %v6312
        %v6832 = vunpack.c.l.b16 %v6313
        %v6833 = vunpack.c.l.b16 %v6314
        %v6834 = vunpack.c.l.b16 %v6315
        %v6835 = vunpack.c.l.b16 %v6316
        %v6836 = vunpack.c.l.b16 %v6317
        %v6837 = vunpack.c.l.b16 %v6318
        %v6838 = vunpack.c.l.b16 %v6319
        %v6839 = vunpack.c.l.b16 %v6320
        %v6840 = vunpack.c.l.b16 %v6321
        %v6841 = vunpack.c.l.b16 %v6322
        %v6842 = vunpack.c.l.b16 %v6323
        %v6843 = vunpack.c.l.b16 %v6324
        %v6844 = vunpack.c.l.b16 %v6325
        %v6845 = vunpack.c.l.b16 %v6326
        %v6846 = vunpack.c.l.b16 %v6327
        %v6847 = vunpack.c.l.b16 %v6328
        %v6848 = vunpack.c.l.b16 %v6329
        %v6849 = vunpack.c.l.b16 %v6330
        %v6850 = vunpack.c.l.b16 %v6331
        %v6851 = vunpack.c.l.b16 %v6332
        %v6852 = vunpack.c.l.b16 %v6333
        %v6853 = vunpack.c.l.b16 %v6334
        %v6854 = vunpack.c.l.b16 %v6335
        %v6855 = vunpack.c.l.b16 %v6336
        %v6856 = vunpack.c.l.b16 %v6337
        %v6857 = vunpack.c.l.b16 %v6338
        %v6858 = vunpack.c.l.b16 %v6339
        %v6859 = vunpack.c.l.b16 %v6340
        %v6860 = vunpack.c.l.b16 %v6341
        %v6861 = vunpack.c.l.b16 %v6342
        %v6862 = vunpack.c.l.b16 %v6343
        %v6863 = vunpack.c.l.b16 %v6344
        %v6864 = vunpack.c.l.b16 %v6345
        %v6865 = vunpack.c.l.b16 %v6346
        %v6866 = vunpack.c.l.b16 %v6347
        %v6867 = vunpack.c.l.b16 %v6348
        %v6868 = vunpack.c.l.b16 %v6349
        %v6869 = vunpack.c.l.b16 %v6350
        %v6870 = vunpack.c.l.b16 %v6351
        %v6871 = vunpack.c.l.b16 %v6352
        %v6872 = vunpack.c.l.b16 %v6353
        %v6873 = vunpack.c.l.b16 %v6354
        %v6874 = vunpack.c.l.b16 %v6355
        %v6875 = vunpack.c.l.b16 %v6356
        %v6876 = vunpack.c.l.b16 %v6357
        %v6877 = vunpack.c.l.b16 %v6358
        %v6878 = vunpack.c.l.b16 %v6359
        %v6879 = vunpack.c.l.b16 %v6360
        %v6880 = vunpack.c.l.b16 %v6361
        %v6881 = vunpack.c.l.b16 %v6362
        %v6882 = vunpack.c.l.b16 %v6363
        %v6883 = vunpack.c.l.b16 %v6364
        %v6884 = vunpack.c.l.b16 %v6365
        %v6885 = vunpack.c.l.b16 %v6366
        %v6886 = vunpack.c.l.b16 %v6367
        %v6887 = vunpack.c.l.b16 %v6368
        %v6888 = vunpack.c.l.b16 %v6369
        %v6889 = vunpack.c.l.b16 %v6370
        %v6890 = vunpack.c.l.b16 %v6371
        %v6891 = vunpack.c.l.b16 %v6372
        %v6892 = vunpack.c.l.b16 %v6373
        %v6893 = vunpack.c.l.b16 %v6374
        %v6894 = vunpack.c.l.b16 %v6375
        %v6895 = vunpack.c.l.b16 %v6376
        %v6896 = vunpack.c.l.b16 %v6377
        %v6897 = vunpack.c.l.b16 %v6378
        %v6898 = vunpack.c.l.b16 %v6379
        %v6899 = vunpack.c.l.b16 %v6380
        %v6900 = vunpack.c.l.b16 %v6381
        %v6901 = vunpack.c.l.b16 %v6382
        %v6902 = vunpack.c.l.b16 %v6383
        %v6903 = vunpack.c.l.b16 %v6384
        %v6904 = vunpack.c.l.b16 %v6385
        %v6905 = vunpack.c.l.b16 %v6386
        %v6906 = vunpack.c.l.b16 %v6387
        %v6907 = vunpack.c.l.b16 %v6388
        %v6908 = vunpack.c.l.b16 %v6389
        %v6909 = vunpack.c.l.b16 %v6390
        %v6910 = vunpack.c.l.b16 %v6391
        %v6911 = vunpack.c.l.b16 %v6392
        %v6912 = vunpack.c.l.b16 %v6393
        %v6913 = vunpack.c.l.b16 %v6394
        %v6914 = vunpack.c.l.b16 %v6395
        %v6915 = vunpack.c.l.b16 %v6396
        %v6916 = vunpack.c.l.b16 %v6397
        %v6917 = vunpack.c.l.b16 %v6398
        %v6918 = vunpack.c.l.b16 %v6399
        %v6919 = vunpack.c.l.b16 %v6400
        %v6920 = vunpack.c.l.b16 %v6401
        %v6921 = vunpack.c.l.b16 %v6402
        %v6922 = vunpack.c.l.b16 %v6403
        %v6923 = vunpack.c.l.b16 %v6404
        %v6924 = vunpack.c.l.b16 %v6405
        %v6925 = vunpack.c.l.b16 %v6406
        %v6926 = vunpack.c.l.b16 %v6407
        %v6927 = vunpack.c.l.b16 %v6408
        %v6928 = vunpack.c.l.b16 %v6409
        %v6929 = vunpack.c.l.b16 %v6410
        %v6930 = vunpack.c.l.b16 %v6411
        %v6931 = vunpack.c.l.b16 %v6412
        %v6932 = vunpack.c.l.b16 %v6413
        %v6933 = vunpack.c.l.b16 %v6414
        %v6934 = vunpack.c.l.b16 %v6415
        %v6935 = vunpack.c.l.b16 %v6416
        %v6936 = vunpack.c.l.b16 %v6417
        %v6937 = vunpack.c.l.b16 %v6418
        %v6938 = vunpack.c.l.b16 %v6419
        %v6939 = vunpack.c.l.b16 %v6420
        %v6940 = vunpack.c.l.b16 %v6421
        %v6941 = vunpack.c.l.b16 %v6422
        %v6942 = vunpack.c.l.b16 %v6423
        %v6943 = vunpack.c.l.b16 %v6424
        %v6944 = vunpack.c.l.b16 %v6425
        %v6945 = vunpack.c.l.b16 %v6426
        %v6946 = vunpack.c.l.b16 %v6427
        %v6947 = vunpack.c.l.b16 %v6428
        %v6948 = vunpack.c.l.b16 %v6429
        %v6949 = vunpack.c.l.b16 %v6430
        %v6950 = vunpack.c.l.b16 %v6431
        %v6951 = vunpack.c.l.b16 %v6432
        %v6952 = vunpack.c.l.b16 %v6433
        %v6953 = vunpack.c.l.b16 %v6434
        %v6954 = vunpack.c.l.b16 %v6435
        %v6955 = vunpack.c.l.b16 %v6436
        %v6956 = vunpack.c.l.b16 %v6437
        %v6957 = vunpack.c.l.b16 %v6438
        %v6958 = vunpack.c.l.b16 %v6439
        %v6959 = vunpack.c.l.b16 %v6440
        %v6960 = vunpack.c.l.b16 %v6441
        %v6961 = vunpack.c.l.b16 %v6442
        %v6962 = vunpack.c.l.b16 %v6443
        %v6963 = vunpack.c.l.b16 %v6444
        %v6964 = vunpack.c.l.b16 %v6445
        %v6965 = vunpack.c.l.b16 %v6446
        %v6966 = vunpack.c.l.b16 %v6447
        %v6967 = vunpack.c.l.b16 %v6448
        %v6968 = vunpack.c.l.b16 %v6449
        %v6969 = vunpack.c.l.b16 %v6450
        %v6970 = vunpack.c.l.b16 %v6451
        %v6971 = vunpack.c.l.b16 %v6452
        %v6972 = vunpack.c.l.b16 %v6453
        %v6973 = vunpack.c.l.b16 %v6454
        %v6974 = vunpack.c.l.b16 %v6455
        %v6975 = vunpack.c.l.b16 %v6456
        %v6976 = vunpack.c.l.b16 %v6457
        %v6977 = vunpack.c.l.b16 %v6458
        %v6978 = vunpack.c.l.b16 %v6459
        %v6979 = vunpack.c.l.b16 %v6460
        %v6980 = vunpack.c.l.b16 %v6461
        %v6981 = vunpack.c.l.b16 %v6462
        %v6982 = vunpack.c.l.b16 %v6463
        %v6983 = vunpack.c.l.b16 %v6464
        %v6984 = vunpack.c.l.b16 %v6465
        %v6985 = vunpack.c.l.b16 %v6466
        %v6986 = vunpack.c.l.b16 %v6467
        %v6987 = vunpack.c.l.b16 %v6468
        %v6988 = vunpack.c.l.b16 %v6469
        %v6989 = vunpack.c.l.b16 %v6470
        %v6990 = vunpack.c.l.b16 %v6471
        %v6991 = vunpack.c.l.b16 %v6472
        %v6992 = vunpack.c.l.b16 %v6473
        %v6993 = vunpack.c.l.b16 %v6474
        %v6994 = vunpack.c.l.b16 %v6475
        %v6995 = vunpack.c.l.b16 %v6476
        %v6996 = vunpack.c.l.b16 %v6477
        %v6997 = vunpack.c.l.b16 %v6478
        %v6998 = vunpack.c.l.b16 %v6479
        %v6999 = vunpack.c.l.b16 %v6480
        %v7000 = vunpack.c.l.b16 %v6481
        %v7001 = vunpack.c.l.b16 %v6482
        %v7002 = vunpack.c.l.b16 %v6483
        %v7003 = vunpack.c.l.b16 %v6484
        %v7004 = vunpack.c.l.b16 %v6485
        %v7005 = vunpack.c.l.b16 %v6486
        %v7006 = vunpack.c.l.b16 %v6487
        %v7007 = vunpack.c.l.b16 %v6488
        %v7008 = vunpack.c.l.b16 %v6489
        %v7009 = vunpack.c.l.b16 %v6490
        %v7010 = vunpack.c.l.b16 %v6491
        %v7011 = vunpack.c.l.b16 %v6492
        %v7012 = vunpack.c.l.b16 %v6493
        %v7013 = vunpack.c.l.b16 %v6494
        %v7014 = vunpack.c.l.b16 %v6495
        %v7015 = vunpack.c.l.b16 %v6496
        %v7016 = vunpack.c.l.b16 %v6497
        %v7017 = vunpack.c.l.b16 %v6498
        %v7018 = vunpack.c.l.b16 %v6499
        %v7019 = vunpack.c.l.b16 %v6500
        %v7020 = vunpack.c.l.b16 %v6501
        %v7021 = vunpack.c.l.b16 %v6502
        %v7022 = vunpack.c.l.b16 %v6503
        %v7023 = vunpack.c.l.b16 %v6504
        %v7024 = vunpack.c.l.b16 %v6505
        %v7025 = vunpack.c.l.b16 %v6506
        %v7026 = vunpack.c.l.b16 %v6507
        %v7027 = vunpack.c.l.b16 %v6508
        %v7028 = vunpack.c.l.b16 %v6509
        %v7029 = vunpack.c.l.b16 %v6510
        %v7030 = vunpack.c.l.b16 %v6511
        %v7031 = vunpack.c.l.b16 %v6512
        %v7032 = vunpack.c.l.b16 %v6513
        %v7033 = vunpack.c.l.b16 %v6514
        %v7034 = vunpack.c.l.b16 %v6515
        %v7035 = vunpack.c.l.b16 %v6516
        %v7036 = vunpack.c.l.b16 %v6517
        %v7037 = vunpack.c.l.b16 %v6518
        %v7038 = vunpack.c.l.b16 %v6519
        %v7039 = vunpack.c.l.b16 %v6520
        %v7040 = vunpack.c.l.b16 %v6521
        %v7041 = vunpack.c.l.b16 %v6522
        %v7042 = vunpack.c.l.b16 %v6523
        %v7043 = vunpack.c.l.b16 %v6524
        %v7044 = vunpack.c.l.b16 %v6525
        %v7045 = vunpack.c.l.b16 %v6526
        %v7046 = vunpack.c.l.b16 %v6527
        %v7047 = vunpack.c.l.b16 %v6528
        %v7048 = vunpack.c.l.b16 %v6529
        %v7049 = vunpack.c.l.b16 %v6530
        %v7050 = vunpack.c.l.b16 %v6531
        %v7051 = vunpack.c.l.b16 %v6532
        %v7052 = vunpack.c.l.b16 %v6533
        %v7053 = vunpack.c.l.b16 %v6534
        %v7054 = vunpack.c.l.b16 %v6535
        %v7055 = vunpack.c.l.b16 %v6536
        %v7056 = vunpack.c.l.b16 %v6537
        %v7057 = vunpack.c.l.b16 %v6538
        %v7058 = vunpack.c.l.b16 %v6539
        %v7059 = vunpack.c.l.b16 %v6540
        %v7060 = vunpack.c.l.b16 %v6541
        %v7061 = vunpack.c.l.b16 %v6542
        %v7062 = vunpack.c.l.b16 %v6543
        %v7063 = vunpack.c.l.b16 %v6544
        %v7064 = vunpack.c.l.b16 %v6545
        %v7065 = vunpack.c.l.b16 %v6546
        %v7066 = vunpack.c.l.b16 %v6547
        %v7067 = vunpack.c.l.b16 %v6548
        %v7068 = vunpack.c.l.b16 %v6549
        %v7069 = vunpack.c.l.b16 %v6550
        %v7070 = vunpack.c.l.b16 %v6551
        %v7071 = vpack.c.b16 %v6816, %v6815
        %v7072 = vpack.c.b16 %v6818, %v6817
        %v7073 = vpack.c.b16 %v6820, %v6819
        %v7074 = vpack.c.b16 %v6822, %v6821
        %v7075 = vpack.c.b16 %v6824, %v6823
        %v7076 = vpack.c.b16 %v6826, %v6825
        %v7077 = vpack.c.b16 %v6828, %v6827
        %v7078 = vpack.c.b16 %v6830, %v6829
        %v7079 = vpack.c.b16 %v6832, %v6831
        %v7080 = vpack.c.b16 %v6834, %v6833
        %v7081 = vpack.c.b16 %v6836, %v6835
        %v7082 = vpack.c.b16 %v6838, %v6837
        %v7083 = vpack.c.b16 %v6840, %v6839
        %v7084 = vpack.c.b16 %v6842, %v6841
        %v7085 = vpack.c.b16 %v6844, %v6843
        %v7086 = vpack.c.b16 %v6846, %v6845
        %v7087 = vpack.c.b16 %v6848, %v6847
        %v7088 = vpack.c.b16 %v6850, %v6849
        %v7089 = vpack.c.b16 %v6852, %v6851
        %v7090 = vpack.c.b16 %v6854, %v6853
        %v7091 = vpack.c.b16 %v6856, %v6855
        %v7092 = vpack.c.b16 %v6858, %v6857
        %v7093 = vpack.c.b16 %v6860, %v6859
        %v7094 = vpack.c.b16 %v6862, %v6861
        %v7095 = vpack.c.b16 %v6864, %v6863
        %v7096 = vpack.c.b16 %v6866, %v6865
        %v7097 = vpack.c.b16 %v6868, %v6867
        %v7098 = vpack.c.b16 %v6870, %v6869
        %v7099 = vpack.c.b16 %v6872, %v6871
        %v7100 = vpack.c.b16 %v6874, %v6873
        %v7101 = vpack.c.b16 %v6876, %v6875
        %v7102 = vpack.c.b16 %v6878, %v6877
        %v7103 = vpack.c.b16 %v6880, %v6879
        %v7104 = vpack.c.b16 %v6882, %v6881
        %v7105 = vpack.c.b16 %v6884, %v6883
        %v7106 = vpack.c.b16 %v6886, %v6885
        %v7107 = vpack.c.b16 %v6888, %v6887
        %v7108 = vpack.c.b16 %v6890, %v6889
        %v7109 = vpack.c.b16 %v6892, %v6891
        %v7110 = vpack.c.b16 %v6894, %v6893
        %v7111 = vpack.c.b16 %v6896, %v6895
        %v7112 = vpack.c.b16 %v6898, %v6897
        %v7113 = vpack.c.b16 %v6900, %v6899
        %v7114 = vpack.c.b16 %v6902, %v6901
        %v7115 = vpack.c.b16 %v6904, %v6903
        %v7116 = vpack.c.b16 %v6906, %v6905
        %v7117 = vpack.c.b16 %v6908, %v6907
        %v7118 = vpack.c.b16 %v6910, %v6909
        %v7119 = vpack.c.b16 %v6912, %v6911
        %v7120 = vpack.c.b16 %v6914, %v6913
        %v7121 = vpack.c.b16 %v6916, %v6915
        %v7122 = vpack.c.b16 %v6918, %v6917
        %v7123 = vpack.c.b16 %v6920, %v6919
        %v7124 = vpack.c.b16 %v6922, %v6921
        %v7125 = vpack.c.b16 %v6924, %v6923
        %v7126 = vpack.c.b16 %v6926, %v6925
        %v7127 = vpack.c.b16 %v6928, %v6927
        %v7128 = vpack.c.b16 %v6930, %v6929
        %v7129 = vpack.c.b16 %v6932, %v6931
        %v7130 = vpack.c.b16 %v6934, %v6933
        %v7131 = vpack.c.b16 %v6936, %v6935
        %v7132 = vpack.c.b16 %v6938, %v6937
        %v7133 = vpack.c.b16 %v6940, %v6939
        %v7134 = vpack.c.b16 %v6942, %v6941
        %v7135 = vpack.c.b16 %v6944, %v6943
        %v7136 = vpack.c.b16 %v6946, %v6945
        %v7137 = vpack.c.b16 %v6948, %v6947
        %v7138 = vpack.c.b16 %v6950, %v6949
        %v7139 = vpack.c.b16 %v6952, %v6951
        %v7140 = vpack.c.b16 %v6954, %v6953
        %v7141 = vpack.c.b16 %v6956, %v6955
        %v7142 = vpack.c.b16 %v6958, %v6957
        %v7143 = vpack.c.b16 %v6960, %v6959
        %v7144 = vpack.c.b16 %v6962, %v6961
        %v7145 = vpack.c.b16 %v6964, %v6963
        %v7146 = vpack.c.b16 %v6966, %v6965
        %v7147 = vpack.c.b16 %v6968, %v6967
        %v7148 = vpack.c.b16 %v6970, %v6969
        %v7149 = vpack.c.b16 %v6972, %v6971
        %v7150 = vpack.c.b16 %v6974, %v6973
        %v7151 = vpack.c.b16 %v6976, %v6975
        %v7152 = vpack.c.b16 %v6978, %v6977
        %v7153 = vpack.c.b16 %v6980, %v6979
        %v7154 = vpack.c.b16 %v6982, %v6981
        %v7155 = vpack.c.b16 %v6984, %v6983
        %v7156 = vpack.c.b16 %v6986, %v6985
        %v7157 = vpack.c.b16 %v6988, %v6987
        %v7158 = vpack.c.b16 %v6990, %v6989
        %v7159 = vpack.c.b16 %v6992, %v6991
        %v7160 = vpack.c.b16 %v6994, %v6993
        %v7161 = vpack.c.b16 %v6996, %v6995
        %v7162 = vpack.c.b16 %v6998, %v6997
        %v7163 = vpack.c.b16 %v7000, %v6999
        %v7164 = vpack.c.b16 %v7002, %v7001
        %v7165 = vpack.c.b16 %v7004, %v7003
        %v7166 = vpack.c.b16 %v7006, %v7005
        %v7167 = vpack.c.b16 %v7008, %v7007
        %v7168 = vpack.c.b16 %v7010, %v7009
        %v7169 = vpack.c.b16 %v7012, %v7011
        %v7170 = vpack.c.b16 %v7014, %v7013
        %v7171 = vpack.c.b16 %v7016, %v7015
        %v7172 = vpack.c.b16 %v7018, %v7017
        %v7173 = vpack.c.b16 %v7020, %v7019
        %v7174 = vpack.c.b16 %v7022, %v7021
        %v7175 = vpack.c.b16 %v7024, %v7023
        %v7176 = vpack.c.b16 %v7026, %v7025
        %v7177 = vpack.c.b16 %v7028, %v7027
        %v7178 = vpack.c.b16 %v7030, %v7029
        %v7179 = vpack.c.b16 %v7032, %v7031
        %v7180 = vpack.c.b16 %v7034, %v7033
        %v7181 = vpack.c.b16 %v7036, %v7035
        %v7182 = vpack.c.b16 %v7038, %v7037
        %v7183 = vpack.c.b16 %v7040, %v7039
        %v7184 = vpack.c.b16 %v7042, %v7041
        %v7185 = vpack.c.b16 %v7044, %v7043
        %v7186 = vpack.c.b16 %v7046, %v7045
        %v7187 = vpack.c.b16 %v7048, %v7047
        %v7188 = vpack.c.b16 %v7050, %v7049
        %v7189 = vpack.c.b16 %v7052, %v7051
        %v7190 = vpack.c.b16 %v7054, %v7053
        %v7191 = vpack.c.b16 %v7056, %v7055
        %v7192 = vpack.c.b16 %v7058, %v7057
        %v7193 = vpack.c.b16 %v7060, %v7059
        %v7194 = vpack.c.b16 %v7062, %v7061
        %v7195 = vpack.c.b16 %v7064, %v7063
        %v7196 = vpack.c.b16 %v7066, %v7065
        %v7197 = vpack.c.b16 %v7068, %v7067
        %v7198 = vpack.c.b16 %v7070, %v7069
        %7327 = vmatprep.subr.bf16.mxu0 0
        %7328 = vmatpush1.bf16.msra.mxu0 %v7078
        %7329 = vmatprep.subr.bf16.mxu0 0
        %7330 = vmatpush1.bf16.msra.mxu0 %v7077
        %7331 = vmatprep.subr.bf16.mxu0 0
        %7332 = vmatpush1.bf16.msra.mxu0 %v7076
        %7333 = vmatprep.subr.bf16.mxu0 0
        %7334 = vmatpush1.bf16.msra.mxu0 %v7075
        %7335 = vmatprep.subr.bf16.mxu0 0
        %7336 = vmatpush1.bf16.msra.mxu0 %v7074
        %7337 = vmatprep.subr.bf16.mxu0 0
        %7338 = vmatpush1.bf16.msra.mxu0 %v7073
        %7339 = vmatprep.subr.bf16.mxu0 0
        %7340 = vmatpush1.bf16.msra.mxu0 %v7072
        %7341 = vmatprep.subr.bf16.mxu0 0
        %7342 = vmatpush1.bf16.msra.mxu0 %v7071
        %7343 = vmatprep.subr.bf16.mxu0 0
        %7344 = vmatpush2.bf16.msra.mxu0 %v7086
        %7345 = vmatprep.subr.bf16.mxu0 0
        %7346 = vmatpush2.bf16.msra.mxu0 %v7085
        %7347 = vmatprep.subr.bf16.mxu0 0
        %7348 = vmatpush2.bf16.msra.mxu0 %v7084
        %7349 = vmatprep.subr.bf16.mxu0 0
        %7350 = vmatpush2.bf16.msra.mxu0 %v7083
        %7351 = vmatprep.subr.bf16.mxu0 0
        %7352 = vmatpush2.bf16.msra.mxu0 %v7082
        %7353 = vmatprep.subr.bf16.mxu0 0
        %7354 = vmatpush2.bf16.msra.mxu0 %v7081
        %7355 = vmatprep.subr.bf16.mxu0 0
        %7356 = vmatpush2.bf16.msra.mxu0 %v7080
        %7357 = vmatprep.subr.bf16.mxu0 0
        %7358 = vmatpush2.bf16.msra.mxu0 %v7079
        %7359 = vmatprep.mubr.bf16.mxu0 %v6233
        %7360 = vmatmul.mubr.bf16.gmra.mxu0 %v6232
        %v7361 = vpop.f32.mrf.mxu0
        %v7362 = vadd.f32 %v6557, %v7361
        %v7363 = vpop.f32.mrf.mxu0
        %v7364 = vpop.f32.mrf.mxu0
        %v7365 = vadd.f32 %v6557, %v7364
        %v7366 = vpop.f32.mrf.mxu0
        %7367 = vmatprep.mubr.bf16.mxu0 %v6249
        %7368 = vmatmul.mubr.bf16.gmra.mxu0 %v6248
        %v7369 = vpop.f32.mrf.mxu0
        %v7370 = vadd.f32 %v6557, %v7369
        %v7371 = vpop.f32.mrf.mxu0
        %v7372 = vpop.f32.mrf.mxu0
        %v7373 = vadd.f32 %v6557, %v7372
        %v7374 = vpop.f32.mrf.mxu0
        %7375 = vmatprep.mubr.bf16.mxu0 %v6265
        %7376 = vmatmul.mubr.bf16.gmra.mxu0 %v6264
        %v7377 = vpop.f32.mrf.mxu0
        %v7378 = vadd.f32 %v6557, %v7377
        %v7379 = vpop.f32.mrf.mxu0
        %v7380 = vpop.f32.mrf.mxu0
        %v7381 = vadd.f32 %v6557, %v7380
        %v7382 = vpop.f32.mrf.mxu0
        %7383 = vmatprep.mubr.bf16.mxu0 %v6281
        %7384 = vmatmul.mubr.bf16.gmra.mxu0 %v6280
        %v7385 = vpop.f32.mrf.mxu0
        %v7386 = vadd.f32 %v6557, %v7385
        %v7387 = vpop.f32.mrf.mxu0
        %v7388 = vpop.f32.mrf.mxu0
        %v7389 = vadd.f32 %v6557, %v7388
        %v7390 = vpop.f32.mrf.mxu0
        %7391 = vdwg.mxu0
        %7392 = vmatprep.subr.bf16.mxu0 0
        %7393 = vmatpush1.bf16.msra.mxu0 %v7094
        %7394 = vmatprep.subr.bf16.mxu0 0
        %7395 = vmatpush1.bf16.msra.mxu0 %v7093
        %7396 = vmatprep.subr.bf16.mxu0 0
        %7397 = vmatpush1.bf16.msra.mxu0 %v7092
        %7398 = vmatprep.subr.bf16.mxu0 0
        %7399 = vmatpush1.bf16.msra.mxu0 %v7091
        %7400 = vmatprep.subr.bf16.mxu0 0
        %7401 = vmatpush1.bf16.msra.mxu0 %v7090
        %7402 = vmatprep.subr.bf16.mxu0 0
        %7403 = vmatpush1.bf16.msra.mxu0 %v7089
        %7404 = vmatprep.subr.bf16.mxu0 0
        %7405 = vmatpush1.bf16.msra.mxu0 %v7088
        %7406 = vmatprep.subr.bf16.mxu0 0
        %7407 = vmatpush1.bf16.msra.mxu0 %v7087
        %7408 = vmatprep.subr.bf16.mxu0 0
        %7409 = vmatpush2.bf16.msra.mxu0 %v7102
        %7410 = vmatprep.subr.bf16.mxu0 0
        %7411 = vmatpush2.bf16.msra.mxu0 %v7101
        %7412 = vmatprep.subr.bf16.mxu0 0
        %7413 = vmatpush2.bf16.msra.mxu0 %v7100
        %7414 = vmatprep.subr.bf16.mxu0 0
        %7415 = vmatpush2.bf16.msra.mxu0 %v7099
        %7416 = vmatprep.subr.bf16.mxu0 0
        %7417 = vmatpush2.bf16.msra.mxu0 %v7098
        %7418 = vmatprep.subr.bf16.mxu0 0
        %7419 = vmatpush2.bf16.msra.mxu0 %v7097
        %7420 = vmatprep.subr.bf16.mxu0 0
        %7421 = vmatpush2.bf16.msra.mxu0 %v7096
        %7422 = vmatprep.subr.bf16.mxu0 0
        %7423 = vmatpush2.bf16.msra.mxu0 %v7095
        %7424 = vmatprep.mubr.bf16.mxu0 %v6235
        %7425 = vmatmul.mubr.bf16.gmra.mxu0 %v6234
        %v7426 = vpop.f32.mrf.mxu0
        %v7427 = vadd.f32 %v7362, %v7426
        %v7428 = vpop.f32.mrf.mxu0
        %v7429 = vpop.f32.mrf.mxu0
        %v7430 = vadd.f32 %v7365, %v7429
        %v7431 = vpop.f32.mrf.mxu0
        %7432 = vmatprep.mubr.bf16.mxu0 %v6251
        %7433 = vmatmul.mubr.bf16.gmra.mxu0 %v6250
        %v7434 = vpop.f32.mrf.mxu0
        %v7435 = vadd.f32 %v7370, %v7434
        %v7436 = vpop.f32.mrf.mxu0
        %v7437 = vpop.f32.mrf.mxu0
        %v7438 = vadd.f32 %v7373, %v7437
        %v7439 = vpop.f32.mrf.mxu0
        %7440 = vmatprep.mubr.bf16.mxu0 %v6267
        %7441 = vmatmul.mubr.bf16.gmra.mxu0 %v6266
        %v7442 = vpop.f32.mrf.mxu0
        %v7443 = vadd.f32 %v7378, %v7442
        %v7444 = vpop.f32.mrf.mxu0
        %v7445 = vpop.f32.mrf.mxu0
        %v7446 = vadd.f32 %v7381, %v7445
        %v7447 = vpop.f32.mrf.mxu0
        %7448 = vmatprep.mubr.bf16.mxu0 %v6283
        %7449 = vmatmul.mubr.bf16.gmra.mxu0 %v6282
        %v7450 = vpop.f32.mrf.mxu0
        %v7451 = vadd.f32 %v7386, %v7450
        %v7452 = vpop.f32.mrf.mxu0
        %v7453 = vpop.f32.mrf.mxu0
        %v7454 = vadd.f32 %v7389, %v7453
        %v7455 = vpop.f32.mrf.mxu0
        %7456 = vdwg.mxu0
        %7457 = vmatprep.subr.bf16.mxu0 0
        %7458 = vmatpush1.bf16.msra.mxu0 %v7110
        %7459 = vmatprep.subr.bf16.mxu0 0
        %7460 = vmatpush1.bf16.msra.mxu0 %v7109
        %7461 = vmatprep.subr.bf16.mxu0 0
        %7462 = vmatpush1.bf16.msra.mxu0 %v7108
        %7463 = vmatprep.subr.bf16.mxu0 0
        %7464 = vmatpush1.bf16.msra.mxu0 %v7107
        %7465 = vmatprep.subr.bf16.mxu0 0
        %7466 = vmatpush1.bf16.msra.mxu0 %v7106
        %7467 = vmatprep.subr.bf16.mxu0 0
        %7468 = vmatpush1.bf16.msra.mxu0 %v7105
        %7469 = vmatprep.subr.bf16.mxu0 0
        %7470 = vmatpush1.bf16.msra.mxu0 %v7104
        %7471 = vmatprep.subr.bf16.mxu0 0
        %7472 = vmatpush1.bf16.msra.mxu0 %v7103
        %7473 = vmatprep.subr.bf16.mxu0 0
        %7474 = vmatpush2.bf16.msra.mxu0 %v7118
        %7475 = vmatprep.subr.bf16.mxu0 0
        %7476 = vmatpush2.bf16.msra.mxu0 %v7117
        %7477 = vmatprep.subr.bf16.mxu0 0
        %7478 = vmatpush2.bf16.msra.mxu0 %v7116
        %7479 = vmatprep.subr.bf16.mxu0 0
        %7480 = vmatpush2.bf16.msra.mxu0 %v7115
        %7481 = vmatprep.subr.bf16.mxu0 0
        %7482 = vmatpush2.bf16.msra.mxu0 %v7114
        %7483 = vmatprep.subr.bf16.mxu0 0
        %7484 = vmatpush2.bf16.msra.mxu0 %v7113
        %7485 = vmatprep.subr.bf16.mxu0 0
        %7486 = vmatpush2.bf16.msra.mxu0 %v7112
        %7487 = vmatprep.subr.bf16.mxu0 0
        %7488 = vmatpush2.bf16.msra.mxu0 %v7111
        %7489 = vmatprep.mubr.bf16.mxu0 %v6237
        %7490 = vmatmul.mubr.bf16.gmra.mxu0 %v6236
        %v7491 = vpop.f32.mrf.mxu0
        %v7492 = vadd.f32 %v7427, %v7491
        %v7493 = vpop.f32.mrf.mxu0
        %v7494 = vpop.f32.mrf.mxu0
        %v7495 = vadd.f32 %v7430, %v7494
        %v7496 = vpop.f32.mrf.mxu0
        %7497 = vmatprep.mubr.bf16.mxu0 %v6253
        %7498 = vmatmul.mubr.bf16.gmra.mxu0 %v6252
        %v7499 = vpop.f32.mrf.mxu0
        %v7500 = vadd.f32 %v7435, %v7499
        %v7501 = vpop.f32.mrf.mxu0
        %v7502 = vpop.f32.mrf.mxu0
        %v7503 = vadd.f32 %v7438, %v7502
        %v7504 = vpop.f32.mrf.mxu0
        %7505 = vmatprep.mubr.bf16.mxu0 %v6269
        %7506 = vmatmul.mubr.bf16.gmra.mxu0 %v6268
        %v7507 = vpop.f32.mrf.mxu0
        %v7508 = vadd.f32 %v7443, %v7507
        %v7509 = vpop.f32.mrf.mxu0
        %v7510 = vpop.f32.mrf.mxu0
        %v7511 = vadd.f32 %v7446, %v7510
        %v7512 = vpop.f32.mrf.mxu0
        %7513 = vmatprep.mubr.bf16.mxu0 %v6285
        %7514 = vmatmul.mubr.bf16.gmra.mxu0 %v6284
        %v7515 = vpop.f32.mrf.mxu0
        %v7516 = vadd.f32 %v7451, %v7515
        %v7517 = vpop.f32.mrf.mxu0
        %v7518 = vpop.f32.mrf.mxu0
        %v7519 = vadd.f32 %v7454, %v7518
        %v7520 = vpop.f32.mrf.mxu0
        %7521 = vdwg.mxu0
        %7522 = vmatprep.subr.bf16.mxu0 0
        %7523 = vmatpush1.bf16.msra.mxu0 %v7126
        %7524 = vmatprep.subr.bf16.mxu0 0
        %7525 = vmatpush1.bf16.msra.mxu0 %v7125
        %7526 = vmatprep.subr.bf16.mxu0 0
        %7527 = vmatpush1.bf16.msra.mxu0 %v7124
        %7528 = vmatprep.subr.bf16.mxu0 0
        %7529 = vmatpush1.bf16.msra.mxu0 %v7123
        %7530 = vmatprep.subr.bf16.mxu0 0
        %7531 = vmatpush1.bf16.msra.mxu0 %v7122
        %7532 = vmatprep.subr.bf16.mxu0 0
        %7533 = vmatpush1.bf16.msra.mxu0 %v7121
        %7534 = vmatprep.subr.bf16.mxu0 0
        %7535 = vmatpush1.bf16.msra.mxu0 %v7120
        %7536 = vmatprep.subr.bf16.mxu0 0
        %7537 = vmatpush1.bf16.msra.mxu0 %v7119
        %7538 = vmatprep.subr.bf16.mxu0 0
        %7539 = vmatpush2.bf16.msra.mxu0 %v7134
        %7540 = vmatprep.subr.bf16.mxu0 0
        %7541 = vmatpush2.bf16.msra.mxu0 %v7133
        %7542 = vmatprep.subr.bf16.mxu0 0
        %7543 = vmatpush2.bf16.msra.mxu0 %v7132
        %7544 = vmatprep.subr.bf16.mxu0 0
        %7545 = vmatpush2.bf16.msra.mxu0 %v7131
        %7546 = vmatprep.subr.bf16.mxu0 0
        %7547 = vmatpush2.bf16.msra.mxu0 %v7130
        %7548 = vmatprep.subr.bf16.mxu0 0
        %7549 = vmatpush2.bf16.msra.mxu0 %v7129
        %7550 = vmatprep.subr.bf16.mxu0 0
        %7551 = vmatpush2.bf16.msra.mxu0 %v7128
        %7552 = vmatprep.subr.bf16.mxu0 0
        %7553 = vmatpush2.bf16.msra.mxu0 %v7127
        %7554 = vmatprep.mubr.bf16.mxu0 %v6239
        %7555 = vmatmul.mubr.bf16.gmra.mxu0 %v6238
        %v7556 = vpop.f32.mrf.mxu0
        %v7557 = vadd.f32 %v7492, %v7556
        %v7558 = vpop.f32.mrf.mxu0
        %v7559 = vpop.f32.mrf.mxu0
        %v7560 = vadd.f32 %v7495, %v7559
        %v7561 = vpop.f32.mrf.mxu0
        %7562 = vmatprep.mubr.bf16.mxu0 %v6255
        %7563 = vmatmul.mubr.bf16.gmra.mxu0 %v6254
        %v7564 = vpop.f32.mrf.mxu0
        %v7565 = vadd.f32 %v7500, %v7564
        %v7566 = vpop.f32.mrf.mxu0
        %v7567 = vpop.f32.mrf.mxu0
        %v7568 = vadd.f32 %v7503, %v7567
        %v7569 = vpop.f32.mrf.mxu0
        %7570 = vmatprep.mubr.bf16.mxu0 %v6271
        %7571 = vmatmul.mubr.bf16.gmra.mxu0 %v6270
        %v7572 = vpop.f32.mrf.mxu0
        %v7573 = vadd.f32 %v7508, %v7572
        %v7574 = vpop.f32.mrf.mxu0
        %v7575 = vpop.f32.mrf.mxu0
        %v7576 = vadd.f32 %v7511, %v7575
        %v7577 = vpop.f32.mrf.mxu0
        %7578 = vmatprep.mubr.bf16.mxu0 %v6287
        %7579 = vmatmul.mubr.bf16.gmra.mxu0 %v6286
        %v7580 = vpop.f32.mrf.mxu0
        %v7581 = vadd.f32 %v7516, %v7580
        %v7582 = vpop.f32.mrf.mxu0
        %v7583 = vpop.f32.mrf.mxu0
        %v7584 = vadd.f32 %v7519, %v7583
        %v7585 = vpop.f32.mrf.mxu0
        %7586 = vdwg.mxu0
        %7587 = vmatprep.subr.bf16.mxu0 0
        %7588 = vmatpush1.bf16.msra.mxu0 %v7142
        %7589 = vmatprep.subr.bf16.mxu0 0
        %7590 = vmatpush1.bf16.msra.mxu0 %v7141
        %7591 = vmatprep.subr.bf16.mxu0 0
        %7592 = vmatpush1.bf16.msra.mxu0 %v7140
        %7593 = vmatprep.subr.bf16.mxu0 0
        %7594 = vmatpush1.bf16.msra.mxu0 %v7139
        %7595 = vmatprep.subr.bf16.mxu0 0
        %7596 = vmatpush1.bf16.msra.mxu0 %v7138
        %7597 = vmatprep.subr.bf16.mxu0 0
        %7598 = vmatpush1.bf16.msra.mxu0 %v7137
        %7599 = vmatprep.subr.bf16.mxu0 0
        %7600 = vmatpush1.bf16.msra.mxu0 %v7136
        %7601 = vmatprep.subr.bf16.mxu0 0
        %7602 = vmatpush1.bf16.msra.mxu0 %v7135
        %7603 = vmatprep.subr.bf16.mxu0 0
        %7604 = vmatpush2.bf16.msra.mxu0 %v7150
        %7605 = vmatprep.subr.bf16.mxu0 0
        %7606 = vmatpush2.bf16.msra.mxu0 %v7149
        %7607 = vmatprep.subr.bf16.mxu0 0
        %7608 = vmatpush2.bf16.msra.mxu0 %v7148
        %7609 = vmatprep.subr.bf16.mxu0 0
        %7610 = vmatpush2.bf16.msra.mxu0 %v7147
        %7611 = vmatprep.subr.bf16.mxu0 0
        %7612 = vmatpush2.bf16.msra.mxu0 %v7146
        %7613 = vmatprep.subr.bf16.mxu0 0
        %7614 = vmatpush2.bf16.msra.mxu0 %v7145
        %7615 = vmatprep.subr.bf16.mxu0 0
        %7616 = vmatpush2.bf16.msra.mxu0 %v7144
        %7617 = vmatprep.subr.bf16.mxu0 0
        %7618 = vmatpush2.bf16.msra.mxu0 %v7143
        %7619 = vmatprep.mubr.bf16.mxu0 %v6241
        %7620 = vmatmul.mubr.bf16.gmra.mxu0 %v6240
        %v7621 = vpop.f32.mrf.mxu0
        %v7622 = vadd.f32 %v7557, %v7621
        %v7623 = vpop.f32.mrf.mxu0
        %v7624 = vpop.f32.mrf.mxu0
        %v7625 = vadd.f32 %v7560, %v7624
        %v7626 = vpop.f32.mrf.mxu0
        %7627 = vmatprep.mubr.bf16.mxu0 %v6257
        %7628 = vmatmul.mubr.bf16.gmra.mxu0 %v6256
        %v7629 = vpop.f32.mrf.mxu0
        %v7630 = vadd.f32 %v7565, %v7629
        %v7631 = vpop.f32.mrf.mxu0
        %v7632 = vpop.f32.mrf.mxu0
        %v7633 = vadd.f32 %v7568, %v7632
        %v7634 = vpop.f32.mrf.mxu0
        %7635 = vmatprep.mubr.bf16.mxu0 %v6273
        %7636 = vmatmul.mubr.bf16.gmra.mxu0 %v6272
        %v7637 = vpop.f32.mrf.mxu0
        %v7638 = vadd.f32 %v7573, %v7637
        %v7639 = vpop.f32.mrf.mxu0
        %v7640 = vpop.f32.mrf.mxu0
        %v7641 = vadd.f32 %v7576, %v7640
        %v7642 = vpop.f32.mrf.mxu0
        %7643 = vmatprep.mubr.bf16.mxu0 %v6289
        %7644 = vmatmul.mubr.bf16.gmra.mxu0 %v6288
        %v7645 = vpop.f32.mrf.mxu0
        %v7646 = vadd.f32 %v7581, %v7645
        %v7647 = vpop.f32.mrf.mxu0
        %v7648 = vpop.f32.mrf.mxu0
        %v7649 = vadd.f32 %v7584, %v7648
        %v7650 = vpop.f32.mrf.mxu0
        %7651 = vdwg.mxu0
        %7652 = vmatprep.subr.bf16.mxu0 0
        %7653 = vmatpush1.bf16.msra.mxu0 %v7158
        %7654 = vmatprep.subr.bf16.mxu0 0
        %7655 = vmatpush1.bf16.msra.mxu0 %v7157
        %7656 = vmatprep.subr.bf16.mxu0 0
        %7657 = vmatpush1.bf16.msra.mxu0 %v7156
        %7658 = vmatprep.subr.bf16.mxu0 0
        %7659 = vmatpush1.bf16.msra.mxu0 %v7155
        %7660 = vmatprep.subr.bf16.mxu0 0
        %7661 = vmatpush1.bf16.msra.mxu0 %v7154
        %7662 = vmatprep.subr.bf16.mxu0 0
        %7663 = vmatpush1.bf16.msra.mxu0 %v7153
        %7664 = vmatprep.subr.bf16.mxu0 0
        %7665 = vmatpush1.bf16.msra.mxu0 %v7152
        %7666 = vmatprep.subr.bf16.mxu0 0
        %7667 = vmatpush1.bf16.msra.mxu0 %v7151
        %7668 = vmatprep.subr.bf16.mxu0 0
        %7669 = vmatpush2.bf16.msra.mxu0 %v7166
        %7670 = vmatprep.subr.bf16.mxu0 0
        %7671 = vmatpush2.bf16.msra.mxu0 %v7165
        %7672 = vmatprep.subr.bf16.mxu0 0
        %7673 = vmatpush2.bf16.msra.mxu0 %v7164
        %7674 = vmatprep.subr.bf16.mxu0 0
        %7675 = vmatpush2.bf16.msra.mxu0 %v7163
        %7676 = vmatprep.subr.bf16.mxu0 0
        %7677 = vmatpush2.bf16.msra.mxu0 %v7162
        %7678 = vmatprep.subr.bf16.mxu0 0
        %7679 = vmatpush2.bf16.msra.mxu0 %v7161
        %7680 = vmatprep.subr.bf16.mxu0 0
        %7681 = vmatpush2.bf16.msra.mxu0 %v7160
        %7682 = vmatprep.subr.bf16.mxu0 0
        %7683 = vmatpush2.bf16.msra.mxu0 %v7159
        %7684 = vmatprep.mubr.bf16.mxu0 %v6243
        %7685 = vmatmul.mubr.bf16.gmra.mxu0 %v6242
        %v7686 = vpop.f32.mrf.mxu0
        %v7687 = vadd.f32 %v7622, %v7686
        %v7688 = vpop.f32.mrf.mxu0
        %v7689 = vpop.f32.mrf.mxu0
        %v7690 = vadd.f32 %v7625, %v7689
        %v7691 = vpop.f32.mrf.mxu0
        %7692 = vmatprep.mubr.bf16.mxu0 %v6259
        %7693 = vmatmul.mubr.bf16.gmra.mxu0 %v6258
        %v7694 = vpop.f32.mrf.mxu0
        %v7695 = vadd.f32 %v7630, %v7694
        %v7696 = vpop.f32.mrf.mxu0
        %v7697 = vpop.f32.mrf.mxu0
        %v7698 = vadd.f32 %v7633, %v7697
        %v7699 = vpop.f32.mrf.mxu0
        %7700 = vmatprep.mubr.bf16.mxu0 %v6275
        %7701 = vmatmul.mubr.bf16.gmra.mxu0 %v6274
        %v7702 = vpop.f32.mrf.mxu0
        %v7703 = vadd.f32 %v7638, %v7702
        %v7704 = vpop.f32.mrf.mxu0
        %v7705 = vpop.f32.mrf.mxu0
        %v7706 = vadd.f32 %v7641, %v7705
        %v7707 = vpop.f32.mrf.mxu0
        %7708 = vmatprep.mubr.bf16.mxu0 %v6291
        %7709 = vmatmul.mubr.bf16.gmra.mxu0 %v6290
        %v7710 = vpop.f32.mrf.mxu0
        %v7711 = vadd.f32 %v7646, %v7710
        %v7712 = vpop.f32.mrf.mxu0
        %v7713 = vpop.f32.mrf.mxu0
        %v7714 = vadd.f32 %v7649, %v7713
        %v7715 = vpop.f32.mrf.mxu0
        %7716 = vdwg.mxu0
        %7717 = vmatprep.subr.bf16.mxu0 0
        %7718 = vmatpush1.bf16.msra.mxu0 %v7174
        %7719 = vmatprep.subr.bf16.mxu0 0
        %7720 = vmatpush1.bf16.msra.mxu0 %v7173
        %7721 = vmatprep.subr.bf16.mxu0 0
        %7722 = vmatpush1.bf16.msra.mxu0 %v7172
        %7723 = vmatprep.subr.bf16.mxu0 0
        %7724 = vmatpush1.bf16.msra.mxu0 %v7171
        %7725 = vmatprep.subr.bf16.mxu0 0
        %7726 = vmatpush1.bf16.msra.mxu0 %v7170
        %7727 = vmatprep.subr.bf16.mxu0 0
        %7728 = vmatpush1.bf16.msra.mxu0 %v7169
        %7729 = vmatprep.subr.bf16.mxu0 0
        %7730 = vmatpush1.bf16.msra.mxu0 %v7168
        %7731 = vmatprep.subr.bf16.mxu0 0
        %7732 = vmatpush1.bf16.msra.mxu0 %v7167
        %7733 = vmatprep.subr.bf16.mxu0 0
        %7734 = vmatpush2.bf16.msra.mxu0 %v7182
        %7735 = vmatprep.subr.bf16.mxu0 0
        %7736 = vmatpush2.bf16.msra.mxu0 %v7181
        %7737 = vmatprep.subr.bf16.mxu0 0
        %7738 = vmatpush2.bf16.msra.mxu0 %v7180
        %7739 = vmatprep.subr.bf16.mxu0 0
        %7740 = vmatpush2.bf16.msra.mxu0 %v7179
        %7741 = vmatprep.subr.bf16.mxu0 0
        %7742 = vmatpush2.bf16.msra.mxu0 %v7178
        %7743 = vmatprep.subr.bf16.mxu0 0
        %7744 = vmatpush2.bf16.msra.mxu0 %v7177
        %7745 = vmatprep.subr.bf16.mxu0 0
        %7746 = vmatpush2.bf16.msra.mxu0 %v7176
        %7747 = vmatprep.subr.bf16.mxu0 0
        %7748 = vmatpush2.bf16.msra.mxu0 %v7175
        %7749 = vmatprep.mubr.bf16.mxu0 %v6245
        %7750 = vmatmul.mubr.bf16.gmra.mxu0 %v6244
        %v7751 = vpop.f32.mrf.mxu0
        %v7752 = vadd.f32 %v7687, %v7751
        %v7753 = vpop.f32.mrf.mxu0
        %v7754 = vpop.f32.mrf.mxu0
        %v7755 = vadd.f32 %v7690, %v7754
        %v7756 = vpop.f32.mrf.mxu0
        %7757 = vmatprep.mubr.bf16.mxu0 %v6261
        %7758 = vmatmul.mubr.bf16.gmra.mxu0 %v6260
        %v7759 = vpop.f32.mrf.mxu0
        %v7760 = vadd.f32 %v7695, %v7759
        %v7761 = vpop.f32.mrf.mxu0
        %v7762 = vpop.f32.mrf.mxu0
        %v7763 = vadd.f32 %v7698, %v7762
        %v7764 = vpop.f32.mrf.mxu0
        %7765 = vmatprep.mubr.bf16.mxu0 %v6277
        %7766 = vmatmul.mubr.bf16.gmra.mxu0 %v6276
        %v7767 = vpop.f32.mrf.mxu0
        %v7768 = vadd.f32 %v7703, %v7767
        %v7769 = vpop.f32.mrf.mxu0
        %v7770 = vpop.f32.mrf.mxu0
        %v7771 = vadd.f32 %v7706, %v7770
        %v7772 = vpop.f32.mrf.mxu0
        %7773 = vmatprep.mubr.bf16.mxu0 %v6293
        %7774 = vmatmul.mubr.bf16.gmra.mxu0 %v6292
        %v7775 = vpop.f32.mrf.mxu0
        %v7776 = vadd.f32 %v7711, %v7775
        %v7777 = vpop.f32.mrf.mxu0
        %v7778 = vpop.f32.mrf.mxu0
        %v7779 = vadd.f32 %v7714, %v7778
        %v7780 = vpop.f32.mrf.mxu0
        %7781 = vdwg.mxu0
        %7782 = vmatprep.subr.bf16.mxu0 0
        %7783 = vmatpush1.bf16.msra.mxu0 %v7190
        %7784 = vmatprep.subr.bf16.mxu0 0
        %7785 = vmatpush1.bf16.msra.mxu0 %v7189
        %7786 = vmatprep.subr.bf16.mxu0 0
        %7787 = vmatpush1.bf16.msra.mxu0 %v7188
        %7788 = vmatprep.subr.bf16.mxu0 0
        %7789 = vmatpush1.bf16.msra.mxu0 %v7187
        %7790 = vmatprep.subr.bf16.mxu0 0
        %7791 = vmatpush1.bf16.msra.mxu0 %v7186
        %7792 = vmatprep.subr.bf16.mxu0 0
        %7793 = vmatpush1.bf16.msra.mxu0 %v7185
        %7794 = vmatprep.subr.bf16.mxu0 0
        %7795 = vmatpush1.bf16.msra.mxu0 %v7184
        %7796 = vmatprep.subr.bf16.mxu0 0
        %7797 = vmatpush1.bf16.msra.mxu0 %v7183
        %7798 = vmatprep.subr.bf16.mxu0 0
        %7799 = vmatpush2.bf16.msra.mxu0 %v7198
        %7800 = vmatprep.subr.bf16.mxu0 0
        %7801 = vmatpush2.bf16.msra.mxu0 %v7197
        %7802 = vmatprep.subr.bf16.mxu0 0
        %7803 = vmatpush2.bf16.msra.mxu0 %v7196
        %7804 = vmatprep.subr.bf16.mxu0 0
        %7805 = vmatpush2.bf16.msra.mxu0 %v7195
        %7806 = vmatprep.subr.bf16.mxu0 0
        %7807 = vmatpush2.bf16.msra.mxu0 %v7194
        %7808 = vmatprep.subr.bf16.mxu0 0
        %7809 = vmatpush2.bf16.msra.mxu0 %v7193
        %7810 = vmatprep.subr.bf16.mxu0 0
        %7811 = vmatpush2.bf16.msra.mxu0 %v7192
        %7812 = vmatprep.subr.bf16.mxu0 0
        %7813 = vmatpush2.bf16.msra.mxu0 %v7191
        %7814 = vmatprep.mubr.bf16.mxu0 %v6247
        %7815 = vmatmul.mubr.bf16.gmra.mxu0 %v6246
        %v7816 = vpop.f32.mrf.mxu0
        %v7817 = vadd.f32 %v7752, %v7816
        %v7818 = vpop.f32.mrf.mxu0
        %v7819 = vpop.f32.mrf.mxu0
        %v7820 = vadd.f32 %v7755, %v7819
        %v7821 = vpop.f32.mrf.mxu0
        %7822 = vmatprep.mubr.bf16.mxu0 %v6263
        %7823 = vmatmul.mubr.bf16.gmra.mxu0 %v6262
        %v7824 = vpop.f32.mrf.mxu0
        %v7825 = vadd.f32 %v7760, %v7824
        %v7826 = vpop.f32.mrf.mxu0
        %v7827 = vpop.f32.mrf.mxu0
        %v7828 = vadd.f32 %v7763, %v7827
        %v7829 = vpop.f32.mrf.mxu0
        %7830 = vmatprep.mubr.bf16.mxu0 %v6279
        %7831 = vmatmul.mubr.bf16.gmra.mxu0 %v6278
        %v7832 = vpop.f32.mrf.mxu0
        %v7833 = vadd.f32 %v7768, %v7832
        %v7834 = vpop.f32.mrf.mxu0
        %v7835 = vpop.f32.mrf.mxu0
        %v7836 = vadd.f32 %v7771, %v7835
        %v7837 = vpop.f32.mrf.mxu0
        %7838 = vmatprep.mubr.bf16.mxu0 %v6295
        %7839 = vmatmul.mubr.bf16.gmra.mxu0 %v6294
        %v7840 = vpop.f32.mrf.mxu0
        %v7841 = vadd.f32 %v7776, %v7840
        %v7842 = vpop.f32.mrf.mxu0
        %v7843 = vpop.f32.mrf.mxu0
        %v7844 = vadd.f32 %v7779, %v7843
        %v7845 = vpop.f32.mrf.mxu0
        %7846 = vdwg.mxu0
        %7847 = vst [vmem:[%s244] sm:$0xff] %v7817
        %7848 = vst [vmem:[%s244 + $0x8] sm:$0xff] %v7820
        %7849 = vst [vmem:[%s244 + $0x10] sm:$0xff] %v7825
        %7850 = vst [vmem:[%s244 + $0x18] sm:$0xff] %v7828
        %7851 = vst [vmem:[%s244 + $0x20] sm:$0xff] %v7833
        %7852 = vst [vmem:[%s244 + $0x28] sm:$0xff] %v7836
        %7853 = vst [vmem:[%s244 + $0x30] sm:$0xff] %v7841
        %7854 = vst [vmem:[%s244 + $0x38] sm:$0xff] %v7844
        %s7855 = sand.u32 %s159, 1
        %s7856 = scalar_lea.sflag [#allocation3], %s7855
        %s7857 = sand.u32 %s159, 1
        %s7858 = smul.addr %s7857, 64
        %s7859 = scalar_lea.vmem [#allocation2], %s7858
        // Predicated region
        $region45: #{analysis_prior_forward.1} parent=43 // pred_check
          %p7860 = pneg %p169
        $region46: #{analysis_prior_forward.1} parent=43 // pred_check_branch
          %7862 = sbr.rel (%p7860) target = $region48
        $region47: #{analysis_prior_forward.1} parent=43 // pred_region
          %s7864 = ssub.s32 1024, 1024
          %7865 = vsyncadd %s7856, %s7864
          %s7866 = smul.addr %s20, 8
          %s7867 = smul.addr %s7866, 128
          %s7868 = scalar_lea.hbm %s6, %s7867
          %s7869 = sshll.u32 %s7859, 4
          %s7870 = int_to_ptr.vmem [resolvable:$true] %s7869
          %7875 = dma.vmem_to_hbm [thread:$0]  %s7870, 1024, %s7868, %s7856, 128, 128, 8
        $region48: #{analysis_prior_forward.1} parent=43 // pred_fallthru
          _
      $region44: #{analysis_prior_forward.1} parent=5 // pred_fallthru
        _
      %p7876 = scmp.le.s32.totalorder 2, %s15
      // Predicated region
      $region49: #{analysis_prior_forward.1} parent=5 // pred_check
        %p7877 = pneg %p7876
      $region50: #{analysis_prior_forward.1} parent=5 // pred_check_branch
        %7879 = sbr.rel (%p7877) target = $region52
      $region51: #{analysis_prior_forward.1} parent=5 // pred_region
        %s7880 = ssub.s32 %s15, 2
        // Predicated region
        $region53: #{analysis_prior_forward.1} parent=51 // pred_check
          %p7881 = pneg %p175
        $region54: #{analysis_prior_forward.1} parent=51 // pred_check_branch
          %7883 = sbr.rel (%p7881) target = $region56
        $region55: #{analysis_prior_forward.1} parent=51 // pred_region
          %s7884 = sand.u32 %s160, 1
          %s7885 = scalar_lea.sflag [#allocation3], %s7884
          %s7886 = sand.u32 %s160, 1
          %s7887 = smul.addr %s7886, 64
          %s7888 = scalar_lea.vmem [#allocation2], %s7887
          %7889 = dma.done %s7885, 1024
        $region56: #{analysis_prior_forward.1} parent=51 // pred_fallthru
          _
      $region52: #{analysis_prior_forward.1} parent=5 // pred_fallthru
        _
    $region6: #{analysis_prior_forward.1} parent=1 // loop_footer
      %s19 = sadd.s32 1, %s15
    $region7: #{analysis_prior_forward.1} parent=1 // loop_footer_branch
      %14 = sbr.rel target = $region3
    $region8: #{analysis_prior_forward.1} parent=1 // loop_exit
      _
    %7890 = vsyncpa [#allocation3], 1
    %s7891 = scalar_lea.sflag [#allocation3], 1
    %7892 = vsyncpa %s7891, 1

</llo_original>
